<compile_context>
chip_gen: v7x
topology: tpu7x:2x2x1
jax: 0.10.0
libtpu: 0.0.40
codegen_flags: <defaults>
</compile_context>

<pallas_src>
import jax
import jax.numpy as jnp
from jax.experimental import pallas as pl
from jax.experimental.pallas import tpu as pltpu

_VMEM = pl.BlockSpec(memory_space=pltpu.MemorySpace.VMEM)

LANES = 128   # padded channel width (lane tile) for all intermediate tensors
B8 = 8        # sublane-padded batch
CP1 = 8       # padded input-channel count for layer 1 (input_nc <= 8)

# (Cout, K, stride, pad) -- fixed by the PyTorch module
_CONV_CFG = [
    (96, 7, 4, 1),
    (64, 5, 2, 1),
    (32, 3, 2, 1),
    (32, 1, 1, 1),
    (2, 1, 1, 1),
]
_POOL_K, _POOL_S, _POOL_P = 3, 2, 1


# ------------------------------------------------------------ model setup ---
def init_params(key, input_nc):
    """Deterministic PyTorch-default-style init (U(-1/sqrt(fan_in), +...))."""
    shapes = [(c, (input_nc if i == 0 else _CONV_CFG[i - 1][0]), k, k)
              for i, (c, k, _, _) in enumerate(_CONV_CFG)]
    params = []
    for s in shapes:
        key, kw, kb = jax.random.split(key, 3)
        fan_in = s[1] * s[2] * s[3]
        bound = float(fan_in) ** -0.5
        w = jax.random.uniform(kw, s, jnp.float32, -bound, bound)
        b = jax.random.uniform(kb, (s[0],), jnp.float32, -bound, bound)
        params.append((w, b))
    return params


# ----------------------------------------------------- one-time weight pack --
def pack_weights(params):
    """Host-side weight packing; call ONCE per parameter set (not per forward)."""
    f32, bf16 = jnp.float32, jnp.bfloat16
    C1, K1, S1, _ = _CONV_CFG[0]

    # --- conv1: one-hot phase embedding + per-block pre-sum -------------------
    w1, b1 = params[0]
    cin = w1.shape[1]
    w1t = jnp.transpose(w1.astype(f32), (2, 3, 1, 0))                  # (7,7,Cin,96)
    w1t = jnp.pad(w1t, ((0, 0), (0, 0), (0, CP1 - cin), (0, LANES - C1)))
    ph = jax.nn.one_hot(jnp.arange(K1) % S1, S1, dtype=f32)            # (7,4)
    w1f = jnp.einsum('ha,wb,hwcn->hwabcn', ph, ph, w1t)                # (7,7,4,4,8,128)
    w1f = w1f.reshape(K1, K1, LANES, LANES)
    # Pre-sum the 49 tap matrices into 4 per-block matrices.  Taps that share
    # the same (kh//4, kw//4) block offset read identical space-to-depth data,
    # so sum_t (x @ W_t) == x @ (sum_t W_t) exactly (phases also occupy
    # disjoint one-hot lanes, so no weight entries collide).
    NB = -(-K1 // S1)                                                   # 2
    bo = jax.nn.one_hot(jnp.arange(K1) // S1, NB, dtype=f32)           # (7,2)
    w1b = jnp.einsum('hx,wy,hwij->xyij', bo, bo, w1f)
    w1b = w1b.reshape(NB * NB, LANES, LANES).astype(bf16)
    b1p = jnp.pad(b1.astype(f32), (0, LANES - C1)).reshape(1, LANES)

    # --- conv2..conv5 ----------------------------------------------------------
    def prep_w(w, b):
        cout, ci, kh, kw = w.shape
        wt = jnp.transpose(w.astype(f32), (2, 3, 1, 0)).reshape(kh * kw, ci, cout)
        wt = jnp.pad(wt, ((0, 0), (0, LANES - ci), (0, LANES - cout))).astype(bf16)
        bp = jnp.pad(b.astype(f32), (0, LANES - cout)).reshape(1, LANES)
        return wt, bp

    w2f, b2p = prep_w(*params[1])
    w3f, b3p = prep_w(*params[2])
    w4f, b4p = prep_w(*params[3])
    w5f, b5p = prep_w(*params[4])
    return (w1b, b1p, w2f, b2p, w3f, b3p, w4f, b4p, w5f, b5p)


# --------------------------------------------------------------- forward ---
def discriminator_forward(x, packed):
    """Fused Pallas forward pass.  x: (B, Cin, H, W) NCHW -> (B, -1, 2)."""
    f32, bf16 = jnp.float32, jnp.bfloat16
    B, Cin, H, W = x.shape
    assert B <= B8, "batch must be <= 8"
    assert Cin <= CP1, "input_nc must be <= 8"

    (C1, K1, S1, P1) = _CONV_CFG[0]
    (C2, K2, S2, P2) = _CONV_CFG[1]
    (C3, K3, S3, P3) = _CONV_CFG[2]
    (C4, K4, S4, P4) = _CONV_CFG[3]
    (C5, K5, S5, P5) = _CONV_CFG[4]
    KP, SP, PP = _POOL_K, _POOL_S, _POOL_P
    assert S1 * S1 * CP1 == LANES

    co = lambda n, k, s, p: (n + 2 * p - k) // s + 1
    H1, W1 = co(H, K1, S1, P1), co(W, K1, S1, P1)        # conv1 out
    H2, W2 = co(H1, K2, S2, P2), co(W1, K2, S2, P2)      # conv2 out
    Hp, Wp = co(H2, KP, SP, PP), co(W2, KP, SP, PP)      # pool  out
    H3, W3 = co(Hp, K3, S3, P3), co(Wp, K3, S3, P3)      # conv3 out
    H4, W4 = H3 + 2 * P4, W3 + 2 * P4                    # conv4 out (1x1, pad 1)

    # padded-activation scratch extents: (K-1) + S*OH of the consuming layer
    HA1, WA1 = (K2 - 1) + S2 * H2, (K2 - 1) + S2 * W2    # conv1 out (for conv2)
    HA2, WA2 = (KP - 1) + SP * Hp, (KP - 1) + SP * Wp    # conv2 out (for pool)
    HA3, WA3 = (K3 - 1) + S3 * H3, (K3 - 1) + S3 * W3    # pool  out (for conv3)
    HA4, WA4 = H3 + 2 * P4, W3 + 2 * P4                  # conv3 out (for conv4)
    HA5, WA5 = H4 + 2 * P5, W4 + 2 * P5                  # conv4 out (for conv5)

    # ---------------- layer-1 space-to-depth input prep (boundary only) -----
    HQ = -(-(H + 2 * P1) // S1)                          # ceil((H+2p)/4)
    WQ = -(-(W + 2 * P1) // S1)
    NB = -(-K1 // S1)                                    # 2 block offsets per axis
    assert (K1 - 1) // S1 + H1 <= HQ and (K1 - 1) // S1 + W1 <= WQ

    xt = jnp.transpose(x.astype(f32), (2, 3, 0, 1))      # (H, W, B, Cin)
    xt = jnp.pad(xt, ((P1, HQ * S1 - H - P1),
                      (P1, WQ * S1 - W - P1),
                      (0, B8 - B), (0, CP1 - Cin)))
    x_s2d = xt.reshape(HQ, S1, WQ, S1, B8, CP1)
    x_s2d = x_s2d.transpose(0, 2, 4, 1, 3, 5).reshape(HQ, WQ, B8, LANES)
    x_s2d = x_s2d.astype(bf16)       # bf16 MXU operand (weights already bf16)

    # -------------------------------------------------------------- kernel --
    def kernel(x_ref, w1_ref, b1_ref, w2_ref, b2_ref, w3_ref, b3_ref,
               w4_ref, b4_ref, w5_ref, b5_ref, o_ref, s1, s2, s3, s4, s5):

        def tap(ref, r0, c0, s, oh, ow):
            # shifted window read; stride handled by a leading-dim reshape
            # (minor (8, 128) tile untouched -> trivial relayout).
            blk = ref[r0:r0 + s * oh, c0:c0 + s * ow, :, :]
            if s == 1:
                return blk
            blk = blk.reshape(oh, s, ow, s, B8, LANES)
            return blk[:, 0, :, 0]

        def zero_ring(ref, top, h, left, w):
            # zero only the halo ring + slack; the interior is overwritten.
            HH, WW = ref.shape[0], ref.shape[1]
            if top > 0:
                ref[0:top, :, :, :] = jnp.zeros((top, WW, B8, LANES), f32)
            if HH - top - h > 0:
                ref[top + h:HH, :, :, :] = jnp.zeros((HH - top - h, WW, B8, LANES), f32)
            if left > 0:
                ref[top:top + h, 0:left, :, :] = jnp.zeros((h, left, B8, LANES), f32)
            if WW - left - w > 0:
                ref[top:top + h, left + w:WW, :, :] = jnp.zeros(
                    (h, WW - left - w, B8, LANES), f32)

        def conv(src_ref, w_ref, b_ref, K, s, oh, ow):
            m = oh * ow * B8
            acc = jnp.zeros((m, LANES), f32)
            for kh in range(K):
                for kw in range(K):
                    t = tap(src_ref, kh, kw, s, oh, ow)
                    acc = acc + jnp.dot(t.reshape(m, LANES).astype(bf16),
                                        w_ref[kh * K + kw],
                                        preferred_element_type=f32)
            return jnp.maximum(acc + b_ref[...], 0.0).reshape(oh, ow, B8, LANES)

        # halo-ring zeroing of the padded-activation scratch buffers
        zero_ring(s1, P2, H1, P2, W1)
        zero_ring(s2, PP, H2, PP, W2)
        zero_ring(s3, P3, Hp, P3, Wp)
        zero_ring(s4, P4, H3, P4, W3)
        zero_ring(s5, P5, H4, P5, W4)

        # conv1 (7x7, stride 4): 4 pre-summed block matmuls on the s2d input,
        # chunked by output row so acc + tap operands stay register-resident.
        for r in range(H1):
            acc = jnp.zeros((W1 * B8, LANES), f32)
            for bh in range(NB):
                for bw in range(NB):
                    t = x_ref[r + bh:r + bh + 1, bw:bw + W1, :, :]   # bf16, contiguous
                    acc = acc + jnp.dot(t.reshape(W1 * B8, LANES),
                                        w1_ref[bh * NB + bw],
                                        preferred_element_type=f32)
            y1r = jnp.maximum(acc + b1_ref[...], 0.0)
            s1[P2 + r:P2 + r + 1, P2:P2 + W1, :, :] = y1r.reshape(1, W1, B8, LANES)

        # conv2 (5x5, stride 2)
        s2[PP:PP + H2, PP:PP + W2, :, :] = conv(s1, w2_ref, b2_ref, K2, S2, H2, W2)

        # maxpool 3x3 / stride 2 (fused: chained VPU maxes over shifted slices)
        pm = None
        for kh in range(KP):
            for kw in range(KP):
                t = tap(s2, kh, kw, SP, Hp, Wp)
                pm = t if pm is None else jnp.maximum(pm, t)
        s3[P3:P3 + Hp, P3:P3 + Wp, :, :] = pm

        # conv3 (3x3, stride 2)
        s4[P4:P4 + H3, P4:P4 + W3, :, :] = conv(s3, w3_ref, b3_ref, K3, S3, H3, W3)

        # conv4 (1x1, pad 1): plain GEMM over the whole zero-ring-padded grid
        a4 = s4[...].reshape(HA4 * WA4 * B8, LANES).astype(bf16)
        y4 = jnp.maximum(
            jnp.dot(a4, w4_ref[0], preferred_element_type=f32) + b4_ref[...], 0.0)
        s5[P5:P5 + H4, P5:P5 + W4, :, :] = y4.reshape(HA4, WA4, B8, LANES)

        # conv5 (1x1, pad 1): GEMM -> lane-dense (., 128) output store
        a5 = s5[...].reshape(HA5 * WA5 * B8, LANES).astype(bf16)
        o_ref[...] = jnp.maximum(
            jnp.dot(a5, w5_ref[0], preferred_element_type=f32) + b5_ref[...], 0.0)

    out = pl.pallas_call(
        kernel,
        out_shape=jax.ShapeDtypeStruct((HA5 * WA5 * B8, LANES), jnp.float32),
        in_specs=[_VMEM] * 11,
        out_specs=_VMEM,
        scratch_shapes=[
            pltpu.VMEM((HA1, WA1, B8, LANES), jnp.float32),
            pltpu.VMEM((HA2, WA2, B8, LANES), jnp.float32),
            pltpu.VMEM((HA3, WA3, B8, LANES), jnp.float32),
            pltpu.VMEM((HA4, WA4, B8, LANES), jnp.float32),
            pltpu.VMEM((HA5, WA5, B8, LANES), jnp.float32),
        ],
        compiler_params=pltpu.CompilerParams(
            vmem_limit_bytes=32 * 1024 * 1024),
    )(x_s2d, *packed)

    # back to torch NCHW semantics + the final .view(B, -1, 2), once, at the
    # module boundary (tiny XLA ops).
    out = out.reshape(HA5, WA5, B8, LANES)[:, :, :B, :C5]   # (H5, W5, B, 2)
    out = jnp.transpose(out, (2, 3, 0, 1))                  # (B, 2, H5, W5)
    return out.reshape(B, -1, 2)


# -------------------------------------------------------- pure-JAX reference
def _ref_forward(x, params):
    def conv(x, w, b, stride, pad):
        y = jax.lax.conv_general_dilated(
            x, w, (stride, stride), [(pad, pad), (pad, pad)],
            dimension_numbers=("NCHW", "OIHW", "NCHW"))
        return jax.nn.relu(y + b[None, :, None, None])

    x = conv(x, *params[0], 4, 1)
    x = conv(x, *params[1], 2, 1)
    x = jax.lax.reduce_window(x, -jnp.inf, jax.lax.max,
                              (1, 1, 3, 3), (1, 1, 2, 2),
                              [(0, 0), (0, 0), (1, 1), (1, 1)])
    x = conv(x, *params[2], 2, 1)
    x = conv(x, *params[3], 1, 1)
    x = conv(x, *params[4], 1, 1)
    return x.reshape(x.shape[0], -1, 2)


if __name__ == "__main__":
    key = jax.random.PRNGKey(0)
    kx, kp = jax.random.split(key)

    B, INPUT_NC, H, W = 2, 4, 32, 32
    x = jax.random.normal(kx, (B, INPUT_NC, H, W), jnp.float32)
    params = init_params(kp, INPUT_NC)

    packed = pack_weights(params)              # one-time weight packing
    packed = jax.block_until_ready(packed)

    fwd = jax.jit(discriminator_forward)
    out = jax.block_until_ready(fwd(x, packed))

    # 32 -> 7 -> 3 -> pool 2 -> 1 -> 3 -> 5 ; NCHW (B,2,5,5).view(B,-1,2)
    assert out.shape == (B, 25, 2), out.shape

    ref = _ref_forward(x, params)
    assert jnp.allclose(out, ref, rtol=2e-2, atol=2e-2), \
        float(jnp.max(jnp.abs(out - ref)))

    print("KERNEL_OK")
</pallas_src>

<mosaic_0001>
module attributes {stable_mosaic.version = 11 : i64} {
  func.func @kernel(%arg0: memref<9x9x8x128xbf16, #tpu.memory_space<vmem>>, %arg1: memref<4x128x128xbf16, #tpu.memory_space<vmem>>, %arg2: memref<1x128xf32, #tpu.memory_space<vmem>>, %arg3: memref<25x128x128xbf16, #tpu.memory_space<vmem>>, %arg4: memref<1x128xf32, #tpu.memory_space<vmem>>, %arg5: memref<9x128x128xbf16, #tpu.memory_space<vmem>>, %arg6: memref<1x128xf32, #tpu.memory_space<vmem>>, %arg7: memref<1x128x128xbf16, #tpu.memory_space<vmem>>, %arg8: memref<1x128xf32, #tpu.memory_space<vmem>>, %arg9: memref<1x128x128xbf16, #tpu.memory_space<vmem>>, %arg10: memref<1x128xf32, #tpu.memory_space<vmem>>, %arg11: memref<200x128xf32, #tpu.memory_space<vmem>>, %arg12: memref<10x10x8x128xf32, #tpu.memory_space<vmem>>, %arg13: memref<6x6x8x128xf32, #tpu.memory_space<vmem>>, %arg14: memref<4x4x8x128xf32, #tpu.memory_space<vmem>>, %arg15: memref<3x3x8x128xf32, #tpu.memory_space<vmem>>, %arg16: memref<5x5x8x128xf32, #tpu.memory_space<vmem>>) attributes {dimension_semantics = [], scalar_prefetch = 0 : i64, scratch_operands = 5 : i64, tpu.core_type = #tpu.core_type<tc>} {
    %cst = arith.constant 0.000000e+00 : f32
    %0 = vector.broadcast %cst : f32 to vector<1x10x8x128xf32>
    %c0 = arith.constant 0 : index
    %c0_0 = arith.constant 0 : index
    %c0_1 = arith.constant 0 : index
    %c0_2 = arith.constant 0 : index
    %1 = vector.load %arg12[%c0, %c0_0, %c0_1, %c0_2] : memref<10x10x8x128xf32, #tpu.memory_space<vmem>>, vector<1x10x8x128xf32>
    tpu.vector_store %arg12[%c0, %c0_0, %c0_1, %c0_2], %0 {strides = array<i32>} : memref<10x10x8x128xf32, #tpu.memory_space<vmem>>, vector<1x10x8x128xf32>,
    %cst_3 = arith.constant 0.000000e+00 : f32
    %2 = vector.broadcast %cst_3 : f32 to vector<2x10x8x128xf32>
    %c8 = arith.constant 8 : index
    %c0_4 = arith.constant 0 : index
    %c0_5 = arith.constant 0 : index
    %c0_6 = arith.constant 0 : index
    %3 = vector.load %arg12[%c8, %c0_4, %c0_5, %c0_6] : memref<10x10x8x128xf32, #tpu.memory_space<vmem>>, vector<2x10x8x128xf32>
    tpu.vector_store %arg12[%c8, %c0_4, %c0_5, %c0_6], %2 {strides = array<i32>} : memref<10x10x8x128xf32, #tpu.memory_space<vmem>>, vector<2x10x8x128xf32>,
    %cst_7 = arith.constant 0.000000e+00 : f32
    %4 = vector.broadcast %cst_7 : f32 to vector<7x1x8x128xf32>
    %c1 = arith.constant 1 : index
    %c0_8 = arith.constant 0 : index
    %c0_9 = arith.constant 0 : index
    %c0_10 = arith.constant 0 : index
    %5 = vector.load %arg12[%c1, %c0_8, %c0_9, %c0_10] : memref<10x10x8x128xf32, #tpu.memory_space<vmem>>, vector<7x1x8x128xf32>
    tpu.vector_store %arg12[%c1, %c0_8, %c0_9, %c0_10], %4 {strides = array<i32>} : memref<10x10x8x128xf32, #tpu.memory_space<vmem>>, vector<7x1x8x128xf32>,
    %cst_11 = arith.constant 0.000000e+00 : f32
    %6 = vector.broadcast %cst_11 : f32 to vector<7x2x8x128xf32>
    %c1_12 = arith.constant 1 : index
    %c8_13 = arith.constant 8 : index
    %c0_14 = arith.constant 0 : index
    %c0_15 = arith.constant 0 : index
    %7 = vector.load %arg12[%c1_12, %c8_13, %c0_14, %c0_15] : memref<10x10x8x128xf32, #tpu.memory_space<vmem>>, vector<7x2x8x128xf32>
    tpu.vector_store %arg12[%c1_12, %c8_13, %c0_14, %c0_15], %6 {strides = array<i32>} : memref<10x10x8x128xf32, #tpu.memory_space<vmem>>, vector<7x2x8x128xf32>,
    %cst_16 = arith.constant 0.000000e+00 : f32
    %8 = vector.broadcast %cst_16 : f32 to vector<1x6x8x128xf32>
    %c0_17 = arith.constant 0 : index
    %c0_18 = arith.constant 0 : index
    %c0_19 = arith.constant 0 : index
    %c0_20 = arith.constant 0 : index
    %9 = vector.load %arg13[%c0_17, %c0_18, %c0_19, %c0_20] : memref<6x6x8x128xf32, #tpu.memory_space<vmem>>, vector<1x6x8x128xf32>
    tpu.vector_store %arg13[%c0_17, %c0_18, %c0_19, %c0_20], %8 {strides = array<i32>} : memref<6x6x8x128xf32, #tpu.memory_space<vmem>>, vector<1x6x8x128xf32>,
    %cst_21 = arith.constant 0.000000e+00 : f32
    %10 = vector.broadcast %cst_21 : f32 to vector<2x6x8x128xf32>
    %c4 = arith.constant 4 : index
    %c0_22 = arith.constant 0 : index
    %c0_23 = arith.constant 0 : index
    %c0_24 = arith.constant 0 : index
    %11 = vector.load %arg13[%c4, %c0_22, %c0_23, %c0_24] : memref<6x6x8x128xf32, #tpu.memory_space<vmem>>, vector<2x6x8x128xf32>
    tpu.vector_store %arg13[%c4, %c0_22, %c0_23, %c0_24], %10 {strides = array<i32>} : memref<6x6x8x128xf32, #tpu.memory_space<vmem>>, vector<2x6x8x128xf32>,
    %cst_25 = arith.constant 0.000000e+00 : f32
    %12 = vector.broadcast %cst_25 : f32 to vector<3x1x8x128xf32>
    %c1_26 = arith.constant 1 : index
    %c0_27 = arith.constant 0 : index
    %c0_28 = arith.constant 0 : index
    %c0_29 = arith.constant 0 : index
    %13 = vector.load %arg13[%c1_26, %c0_27, %c0_28, %c0_29] : memref<6x6x8x128xf32, #tpu.memory_space<vmem>>, vector<3x1x8x128xf32>
    tpu.vector_store %arg13[%c1_26, %c0_27, %c0_28, %c0_29], %12 {strides = array<i32>} : memref<6x6x8x128xf32, #tpu.memory_space<vmem>>, vector<3x1x8x128xf32>,
    %cst_30 = arith.constant 0.000000e+00 : f32
    %14 = vector.broadcast %cst_30 : f32 to vector<3x2x8x128xf32>
    %c1_31 = arith.constant 1 : index
    %c4_32 = arith.constant 4 : index
    %c0_33 = arith.constant 0 : index
    %c0_34 = arith.constant 0 : index
    %15 = vector.load %arg13[%c1_31, %c4_32, %c0_33, %c0_34] : memref<6x6x8x128xf32, #tpu.memory_space<vmem>>, vector<3x2x8x128xf32>
    tpu.vector_store %arg13[%c1_31, %c4_32, %c0_33, %c0_34], %14 {strides = array<i32>} : memref<6x6x8x128xf32, #tpu.memory_space<vmem>>, vector<3x2x8x128xf32>,
    %cst_35 = arith.constant 0.000000e+00 : f32
    %16 = vector.broadcast %cst_35 : f32 to vector<1x4x8x128xf32>
    %c0_36 = arith.constant 0 : index
    %c0_37 = arith.constant 0 : index
    %c0_38 = arith.constant 0 : index
    %c0_39 = arith.constant 0 : index
    %17 = vector.load %arg14[%c0_36, %c0_37, %c0_38, %c0_39] : memref<4x4x8x128xf32, #tpu.memory_space<vmem>>, vector<1x4x8x128xf32>
    tpu.vector_store %arg14[%c0_36, %c0_37, %c0_38, %c0_39], %16 {strides = array<i32>} : memref<4x4x8x128xf32, #tpu.memory_space<vmem>>, vector<1x4x8x128xf32>,
    %cst_40 = arith.constant 0.000000e+00 : f32
    %18 = vector.broadcast %cst_40 : f32 to vector<1x4x8x128xf32>
    %c3 = arith.constant 3 : index
    %c0_41 = arith.constant 0 : index
    %c0_42 = arith.constant 0 : index
    %c0_43 = arith.constant 0 : index
    %19 = vector.load %arg14[%c3, %c0_41, %c0_42, %c0_43] : memref<4x4x8x128xf32, #tpu.memory_space<vmem>>, vector<1x4x8x128xf32>
    tpu.vector_store %arg14[%c3, %c0_41, %c0_42, %c0_43], %18 {strides = array<i32>} : memref<4x4x8x128xf32, #tpu.memory_space<vmem>>, vector<1x4x8x128xf32>,
    %cst_44 = arith.constant 0.000000e+00 : f32
    %20 = vector.broadcast %cst_44 : f32 to vector<2x1x8x128xf32>
    %c1_45 = arith.constant 1 : index
    %c0_46 = arith.constant 0 : index
    %c0_47 = arith.constant 0 : index
    %c0_48 = arith.constant 0 : index
    %21 = vector.load %arg14[%c1_45, %c0_46, %c0_47, %c0_48] : memref<4x4x8x128xf32, #tpu.memory_space<vmem>>, vector<2x1x8x128xf32>
    tpu.vector_store %arg14[%c1_45, %c0_46, %c0_47, %c0_48], %20 {strides = array<i32>} : memref<4x4x8x128xf32, #tpu.memory_space<vmem>>, vector<2x1x8x128xf32>,
    %cst_49 = arith.constant 0.000000e+00 : f32
    %22 = vector.broadcast %cst_49 : f32 to vector<2x1x8x128xf32>
    %c1_50 = arith.constant 1 : index
    %c3_51 = arith.constant 3 : index
    %c0_52 = arith.constant 0 : index
    %c0_53 = arith.constant 0 : index
    %23 = vector.load %arg14[%c1_50, %c3_51, %c0_52, %c0_53] : memref<4x4x8x128xf32, #tpu.memory_space<vmem>>, vector<2x1x8x128xf32>
    tpu.vector_store %arg14[%c1_50, %c3_51, %c0_52, %c0_53], %22 {strides = array<i32>} : memref<4x4x8x128xf32, #tpu.memory_space<vmem>>, vector<2x1x8x128xf32>,
    %cst_54 = arith.constant 0.000000e+00 : f32
    %24 = vector.broadcast %cst_54 : f32 to vector<1x3x8x128xf32>
    %c0_55 = arith.constant 0 : index
    %c0_56 = arith.constant 0 : index
    %c0_57 = arith.constant 0 : index
    %c0_58 = arith.constant 0 : index
    %25 = vector.load %arg15[%c0_55, %c0_56, %c0_57, %c0_58] : memref<3x3x8x128xf32, #tpu.memory_space<vmem>>, vector<1x3x8x128xf32>
    tpu.vector_store %arg15[%c0_55, %c0_56, %c0_57, %c0_58], %24 {strides = array<i32>} : memref<3x3x8x128xf32, #tpu.memory_space<vmem>>, vector<1x3x8x128xf32>,
    %cst_59 = arith.constant 0.000000e+00 : f32
    %26 = vector.broadcast %cst_59 : f32 to vector<1x3x8x128xf32>
    %c2 = arith.constant 2 : index
    %c0_60 = arith.constant 0 : index
    %c0_61 = arith.constant 0 : index
    %c0_62 = arith.constant 0 : index
    %27 = vector.load %arg15[%c2, %c0_60, %c0_61, %c0_62] : memref<3x3x8x128xf32, #tpu.memory_space<vmem>>, vector<1x3x8x128xf32>
    tpu.vector_store %arg15[%c2, %c0_60, %c0_61, %c0_62], %26 {strides = array<i32>} : memref<3x3x8x128xf32, #tpu.memory_space<vmem>>, vector<1x3x8x128xf32>,
    %cst_63 = arith.constant 0.000000e+00 : f32
    %28 = vector.broadcast %cst_63 : f32 to vector<1x1x8x128xf32>
    %c1_64 = arith.constant 1 : index
    %c0_65 = arith.constant 0 : index
    %c0_66 = arith.constant 0 : index
    %c0_67 = arith.constant 0 : index
    %29 = vector.load %arg15[%c1_64, %c0_65, %c0_66, %c0_67] : memref<3x3x8x128xf32, #tpu.memory_space<vmem>>, vector<1x1x8x128xf32>
    tpu.vector_store %arg15[%c1_64, %c0_65, %c0_66, %c0_67], %28 {strides = array<i32>} : memref<3x3x8x128xf32, #tpu.memory_space<vmem>>, vector<1x1x8x128xf32>,
    %cst_68 = arith.constant 0.000000e+00 : f32
    %30 = vector.broadcast %cst_68 : f32 to vector<1x1x8x128xf32>
    %c1_69 = arith.constant 1 : index
    %c2_70 = arith.constant 2 : index
    %c0_71 = arith.constant 0 : index
    %c0_72 = arith.constant 0 : index
    %31 = vector.load %arg15[%c1_69, %c2_70, %c0_71, %c0_72] : memref<3x3x8x128xf32, #tpu.memory_space<vmem>>, vector<1x1x8x128xf32>
    tpu.vector_store %arg15[%c1_69, %c2_70, %c0_71, %c0_72], %30 {strides = array<i32>} : memref<3x3x8x128xf32, #tpu.memory_space<vmem>>, vector<1x1x8x128xf32>,
    %cst_73 = arith.constant 0.000000e+00 : f32
    %32 = vector.broadcast %cst_73 : f32 to vector<1x5x8x128xf32>
    %c0_74 = arith.constant 0 : index
    %c0_75 = arith.constant 0 : index
    %c0_76 = arith.constant 0 : index
    %c0_77 = arith.constant 0 : index
    %33 = vector.load %arg16[%c0_74, %c0_75, %c0_76, %c0_77] : memref<5x5x8x128xf32, #tpu.memory_space<vmem>>, vector<1x5x8x128xf32>
    tpu.vector_store %arg16[%c0_74, %c0_75, %c0_76, %c0_77], %32 {strides = array<i32>} : memref<5x5x8x128xf32, #tpu.memory_space<vmem>>, vector<1x5x8x128xf32>,
    %cst_78 = arith.constant 0.000000e+00 : f32
    %34 = vector.broadcast %cst_78 : f32 to vector<1x5x8x128xf32>
    %c4_79 = arith.constant 4 : index
    %c0_80 = arith.constant 0 : index
    %c0_81 = arith.constant 0 : index
    %c0_82 = arith.constant 0 : index
    %35 = vector.load %arg16[%c4_79, %c0_80, %c0_81, %c0_82] : memref<5x5x8x128xf32, #tpu.memory_space<vmem>>, vector<1x5x8x128xf32>
    tpu.vector_store %arg16[%c4_79, %c0_80, %c0_81, %c0_82], %34 {strides = array<i32>} : memref<5x5x8x128xf32, #tpu.memory_space<vmem>>, vector<1x5x8x128xf32>,
    %cst_83 = arith.constant 0.000000e+00 : f32
    %36 = vector.broadcast %cst_83 : f32 to vector<3x1x8x128xf32>
    %c1_84 = arith.constant 1 : index
    %c0_85 = arith.constant 0 : index
    %c0_86 = arith.constant 0 : index
    %c0_87 = arith.constant 0 : index
    %37 = vector.load %arg16[%c1_84, %c0_85, %c0_86, %c0_87] : memref<5x5x8x128xf32, #tpu.memory_space<vmem>>, vector<3x1x8x128xf32>
    tpu.vector_store %arg16[%c1_84, %c0_85, %c0_86, %c0_87], %36 {strides = array<i32>} : memref<5x5x8x128xf32, #tpu.memory_space<vmem>>, vector<3x1x8x128xf32>,
    %cst_88 = arith.constant 0.000000e+00 : f32
    %38 = vector.broadcast %cst_88 : f32 to vector<3x1x8x128xf32>
    %c1_89 = arith.constant 1 : index
    %c4_90 = arith.constant 4 : index
    %c0_91 = arith.constant 0 : index
    %c0_92 = arith.constant 0 : index
    %39 = vector.load %arg16[%c1_89, %c4_90, %c0_91, %c0_92] : memref<5x5x8x128xf32, #tpu.memory_space<vmem>>, vector<3x1x8x128xf32>
    tpu.vector_store %arg16[%c1_89, %c4_90, %c0_91, %c0_92], %38 {strides = array<i32>} : memref<5x5x8x128xf32, #tpu.memory_space<vmem>>, vector<3x1x8x128xf32>,
    %cst_93 = arith.constant 0.000000e+00 : f32
    %40 = vector.broadcast %cst_93 : f32 to vector<56x128xf32>
    %c0_94 = arith.constant 0 : index
    %c0_95 = arith.constant 0 : index
    %c0_96 = arith.constant 0 : index
    %c0_97 = arith.constant 0 : index
    %41 = vector.load %arg0[%c0_94, %c0_95, %c0_96, %c0_97] : memref<9x9x8x128xbf16, #tpu.memory_space<vmem>>, vector<1x7x8x128xbf16>
    %42 = vector.shape_cast %41 : vector<1x7x8x128xbf16> to vector<56x128xbf16>
    %c0_98 = arith.constant 0 : index
    %c0_99 = arith.constant 0 : index
    %c0_100 = arith.constant 0 : index
    %43 = vector.load %arg1[%c0_98, %c0_99, %c0_100] : memref<4x128x128xbf16, #tpu.memory_space<vmem>>, vector<1x128x128xbf16>
    %44 = vector.shape_cast %43 : vector<1x128x128xbf16> to vector<128x128xbf16>
    %cst_101 = arith.constant dense<0.000000e+00> : vector<56x128xf32>
    %45 = tpu.matmul %42, %44, %cst_101 {dimension_numbers = #tpu.dot_dimension_numbers<[1], [0], [0], [1], [0, 0, 1, 1], [], []>} : vector<56x128xbf16>, vector<128x128xbf16>, vector<56x128xf32> -> vector<56x128xf32>
    %46 = arith.addf %40, %45 : vector<56x128xf32>
    %c0_102 = arith.constant 0 : index
    %c1_103 = arith.constant 1 : index
    %c0_104 = arith.constant 0 : index
    %c0_105 = arith.constant 0 : index
    %47 = vector.load %arg0[%c0_102, %c1_103, %c0_104, %c0_105] : memref<9x9x8x128xbf16, #tpu.memory_space<vmem>>, vector<1x7x8x128xbf16>
    %48 = vector.shape_cast %47 : vector<1x7x8x128xbf16> to vector<56x128xbf16>
    %c1_106 = arith.constant 1 : index
    %c0_107 = arith.constant 0 : index
    %c0_108 = arith.constant 0 : index
    %49 = vector.load %arg1[%c1_106, %c0_107, %c0_108] : memref<4x128x128xbf16, #tpu.memory_space<vmem>>, vector<1x128x128xbf16>
    %50 = vector.shape_cast %49 : vector<1x128x128xbf16> to vector<128x128xbf16>
    %cst_109 = arith.constant dense<0.000000e+00> : vector<56x128xf32>
    %51 = tpu.matmul %48, %50, %cst_109 {dimension_numbers = #tpu.dot_dimension_numbers<[1], [0], [0], [1], [0, 0, 1, 1], [], []>} : vector<56x128xbf16>, vector<128x128xbf16>, vector<56x128xf32> -> vector<56x128xf32>
    %52 = arith.addf %46, %51 : vector<56x128xf32>
    %c1_110 = arith.constant 1 : index
    %c0_111 = arith.constant 0 : index
    %c0_112 = arith.constant 0 : index
    %c0_113 = arith.constant 0 : index
    %53 = vector.load %arg0[%c1_110, %c0_111, %c0_112, %c0_113] : memref<9x9x8x128xbf16, #tpu.memory_space<vmem>>, vector<1x7x8x128xbf16>
    %54 = vector.shape_cast %53 : vector<1x7x8x128xbf16> to vector<56x128xbf16>
    %c2_114 = arith.constant 2 : index
    %c0_115 = arith.constant 0 : index
    %c0_116 = arith.constant 0 : index
    %55 = vector.load %arg1[%c2_114, %c0_115, %c0_116] : memref<4x128x128xbf16, #tpu.memory_space<vmem>>, vector<1x128x128xbf16>
    %56 = vector.shape_cast %55 : vector<1x128x128xbf16> to vector<128x128xbf16>
    %cst_117 = arith.constant dense<0.000000e+00> : vector<56x128xf32>
    %57 = tpu.matmul %54, %56, %cst_117 {dimension_numbers = #tpu.dot_dimension_numbers<[1], [0], [0], [1], [0, 0, 1, 1], [], []>} : vector<56x128xbf16>, vector<128x128xbf16>, vector<56x128xf32> -> vector<56x128xf32>
    %58 = arith.addf %52, %57 : vector<56x128xf32>
    %c1_118 = arith.constant 1 : index
    %c1_119 = arith.constant 1 : index
    %c0_120 = arith.constant 0 : index
    %c0_121 = arith.constant 0 : index
    %59 = vector.load %arg0[%c1_118, %c1_119, %c0_120, %c0_121] : memref<9x9x8x128xbf16, #tpu.memory_space<vmem>>, vector<1x7x8x128xbf16>
    %60 = vector.shape_cast %59 : vector<1x7x8x128xbf16> to vector<56x128xbf16>
    %c3_122 = arith.constant 3 : index
    %c0_123 = arith.constant 0 : index
    %c0_124 = arith.constant 0 : index
    %61 = vector.load %arg1[%c3_122, %c0_123, %c0_124] : memref<4x128x128xbf16, #tpu.memory_space<vmem>>, vector<1x128x128xbf16>
    %62 = vector.shape_cast %61 : vector<1x128x128xbf16> to vector<128x128xbf16>
    %cst_125 = arith.constant dense<0.000000e+00> : vector<56x128xf32>
    %63 = tpu.matmul %60, %62, %cst_125 {dimension_numbers = #tpu.dot_dimension_numbers<[1], [0], [0], [1], [0, 0, 1, 1], [], []>} : vector<56x128xbf16>, vector<128x128xbf16>, vector<56x128xf32> -> vector<56x128xf32>
    %64 = arith.addf %58, %63 : vector<56x128xf32>
    %c0_126 = arith.constant 0 : index
    %c0_127 = arith.constant 0 : index
    %65 = vector.load %arg2[%c0_126, %c0_127] : memref<1x128xf32, #tpu.memory_space<vmem>>, vector<1x128xf32>
    %66 = vector.broadcast %65 : vector<1x128xf32> to vector<56x128xf32>
    %67 = arith.addf %64, %66 : vector<56x128xf32>
    %cst_128 = arith.constant 0.000000e+00 : f32
    %68 = vector.broadcast %cst_128 : f32 to vector<56x128xf32>
    %69 = arith.maximumf %67, %68 : vector<56x128xf32>
    %70 = vector.shape_cast %69 : vector<56x128xf32> to vector<1x7x8x128xf32>
    %c1_129 = arith.constant 1 : index
    %c1_130 = arith.constant 1 : index
    %c0_131 = arith.constant 0 : index
    %c0_132 = arith.constant 0 : index
    %71 = vector.load %arg12[%c1_129, %c1_130, %c0_131, %c0_132] : memref<10x10x8x128xf32, #tpu.memory_space<vmem>>, vector<1x7x8x128xf32>
    tpu.vector_store %arg12[%c1_129, %c1_130, %c0_131, %c0_132], %70 {strides = array<i32>} : memref<10x10x8x128xf32, #tpu.memory_space<vmem>>, vector<1x7x8x128xf32>,
    %cst_133 = arith.constant 0.000000e+00 : f32
    %72 = vector.broadcast %cst_133 : f32 to vector<56x128xf32>
    %c1_134 = arith.constant 1 : index
    %c0_135 = arith.constant 0 : index
    %c0_136 = arith.constant 0 : index
    %c0_137 = arith.constant 0 : index
    %73 = vector.load %arg0[%c1_134, %c0_135, %c0_136, %c0_137] : memref<9x9x8x128xbf16, #tpu.memory_space<vmem>>, vector<1x7x8x128xbf16>
    %74 = vector.shape_cast %73 : vector<1x7x8x128xbf16> to vector<56x128xbf16>
    %c0_138 = arith.constant 0 : index
    %c0_139 = arith.constant 0 : index
    %c0_140 = arith.constant 0 : index
    %75 = vector.load %arg1[%c0_138, %c0_139, %c0_140] : memref<4x128x128xbf16, #tpu.memory_space<vmem>>, vector<1x128x128xbf16>
    %76 = vector.shape_cast %75 : vector<1x128x128xbf16> to vector<128x128xbf16>
    %cst_141 = arith.constant dense<0.000000e+00> : vector<56x128xf32>
    %77 = tpu.matmul %74, %76, %cst_141 {dimension_numbers = #tpu.dot_dimension_numbers<[1], [0], [0], [1], [0, 0, 1, 1], [], []>} : vector<56x128xbf16>, vector<128x128xbf16>, vector<56x128xf32> -> vector<56x128xf32>
    %78 = arith.addf %72, %77 : vector<56x128xf32>
    %c1_142 = arith.constant 1 : index
    %c1_143 = arith.constant 1 : index
    %c0_144 = arith.constant 0 : index
    %c0_145 = arith.constant 0 : index
    %79 = vector.load %arg0[%c1_142, %c1_143, %c0_144, %c0_145] : memref<9x9x8x128xbf16, #tpu.memory_space<vmem>>, vector<1x7x8x128xbf16>
    %80 = vector.shape_cast %79 : vector<1x7x8x128xbf16> to vector<56x128xbf16>
    %c1_146 = arith.constant 1 : index
    %c0_147 = arith.constant 0 : index
    %c0_148 = arith.constant 0 : index
    %81 = vector.load %arg1[%c1_146, %c0_147, %c0_148] : memref<4x128x128xbf16, #tpu.memory_space<vmem>>, vector<1x128x128xbf16>
    %82 = vector.shape_cast %81 : vector<1x128x128xbf16> to vector<128x128xbf16>
    %cst_149 = arith.constant dense<0.000000e+00> : vector<56x128xf32>
    %83 = tpu.matmul %80, %82, %cst_149 {dimension_numbers = #tpu.dot_dimension_numbers<[1], [0], [0], [1], [0, 0, 1, 1], [], []>} : vector<56x128xbf16>, vector<128x128xbf16>, vector<56x128xf32> -> vector<56x128xf32>
    %84 = arith.addf %78, %83 : vector<56x128xf32>
    %c2_150 = arith.constant 2 : index
    %c0_151 = arith.constant 0 : index
    %c0_152 = arith.constant 0 : index
    %c0_153 = arith.constant 0 : index
    %85 = vector.load %arg0[%c2_150, %c0_151, %c0_152, %c0_153] : memref<9x9x8x128xbf16, #tpu.memory_space<vmem>>, vector<1x7x8x128xbf16>
    %86 = vector.shape_cast %85 : vector<1x7x8x128xbf16> to vector<56x128xbf16>
    %c2_154 = arith.constant 2 : index
    %c0_155 = arith.constant 0 : index
    %c0_156 = arith.constant 0 : index
    %87 = vector.load %arg1[%c2_154, %c0_155, %c0_156] : memref<4x128x128xbf16, #tpu.memory_space<vmem>>, vector<1x128x128xbf16>
    %88 = vector.shape_cast %87 : vector<1x128x128xbf16> to vector<128x128xbf16>
    %cst_157 = arith.constant dense<0.000000e+00> : vector<56x128xf32>
    %89 = tpu.matmul %86, %88, %cst_157 {dimension_numbers = #tpu.dot_dimension_numbers<[1], [0], [0], [1], [0, 0, 1, 1], [], []>} : vector<56x128xbf16>, vector<128x128xbf16>, vector<56x128xf32> -> vector<56x128xf32>
    %90 = arith.addf %84, %89 : vector<56x128xf32>
    %c2_158 = arith.constant 2 : index
    %c1_159 = arith.constant 1 : index
    %c0_160 = arith.constant 0 : index
    %c0_161 = arith.constant 0 : index
    %91 = vector.load %arg0[%c2_158, %c1_159, %c0_160, %c0_161] : memref<9x9x8x128xbf16, #tpu.memory_space<vmem>>, vector<1x7x8x128xbf16>
    %92 = vector.shape_cast %91 : vector<1x7x8x128xbf16> to vector<56x128xbf16>
    %c3_162 = arith.constant 3 : index
    %c0_163 = arith.constant 0 : index
    %c0_164 = arith.constant 0 : index
    %93 = vector.load %arg1[%c3_162, %c0_163, %c0_164] : memref<4x128x128xbf16, #tpu.memory_space<vmem>>, vector<1x128x128xbf16>
    %94 = vector.shape_cast %93 : vector<1x128x128xbf16> to vector<128x128xbf16>
    %cst_165 = arith.constant dense<0.000000e+00> : vector<56x128xf32>
    %95 = tpu.matmul %92, %94, %cst_165 {dimension_numbers = #tpu.dot_dimension_numbers<[1], [0], [0], [1], [0, 0, 1, 1], [], []>} : vector<56x128xbf16>, vector<128x128xbf16>, vector<56x128xf32> -> vector<56x128xf32>
    %96 = arith.addf %90, %95 : vector<56x128xf32>
    %c0_166 = arith.constant 0 : index
    %c0_167 = arith.constant 0 : index
    %97 = vector.load %arg2[%c0_166, %c0_167] : memref<1x128xf32, #tpu.memory_space<vmem>>, vector<1x128xf32>
    %98 = vector.broadcast %97 : vector<1x128xf32> to vector<56x128xf32>
    %99 = arith.addf %96, %98 : vector<56x128xf32>
    %cst_168 = arith.constant 0.000000e+00 : f32
    %100 = vector.broadcast %cst_168 : f32 to vector<56x128xf32>
    %101 = arith.maximumf %99, %100 : vector<56x128xf32>
    %102 = vector.shape_cast %101 : vector<56x128xf32> to vector<1x7x8x128xf32>
    %c2_169 = arith.constant 2 : index
    %c1_170 = arith.constant 1 : index
    %c0_171 = arith.constant 0 : index
    %c0_172 = arith.constant 0 : index
    %103 = vector.load %arg12[%c2_169, %c1_170, %c0_171, %c0_172] : memref<10x10x8x128xf32, #tpu.memory_space<vmem>>, vector<1x7x8x128xf32>
    tpu.vector_store %arg12[%c2_169, %c1_170, %c0_171, %c0_172], %102 {strides = array<i32>} : memref<10x10x8x128xf32, #tpu.memory_space<vmem>>, vector<1x7x8x128xf32>,
    %cst_173 = arith.constant 0.000000e+00 : f32
    %104 = vector.broadcast %cst_173 : f32 to vector<56x128xf32>
    %c2_174 = arith.constant 2 : index
    %c0_175 = arith.constant 0 : index
    %c0_176 = arith.constant 0 : index
    %c0_177 = arith.constant 0 : index
    %105 = vector.load %arg0[%c2_174, %c0_175, %c0_176, %c0_177] : memref<9x9x8x128xbf16, #tpu.memory_space<vmem>>, vector<1x7x8x128xbf16>
    %106 = vector.shape_cast %105 : vector<1x7x8x128xbf16> to vector<56x128xbf16>
    %c0_178 = arith.constant 0 : index
    %c0_179 = arith.constant 0 : index
    %c0_180 = arith.constant 0 : index
    %107 = vector.load %arg1[%c0_178, %c0_179, %c0_180] : memref<4x128x128xbf16, #tpu.memory_space<vmem>>, vector<1x128x128xbf16>
    %108 = vector.shape_cast %107 : vector<1x128x128xbf16> to vector<128x128xbf16>
    %cst_181 = arith.constant dense<0.000000e+00> : vector<56x128xf32>
    %109 = tpu.matmul %106, %108, %cst_181 {dimension_numbers = #tpu.dot_dimension_numbers<[1], [0], [0], [1], [0, 0, 1, 1], [], []>} : vector<56x128xbf16>, vector<128x128xbf16>, vector<56x128xf32> -> vector<56x128xf32>
    %110 = arith.addf %104, %109 : vector<56x128xf32>
    %c2_182 = arith.constant 2 : index
    %c1_183 = arith.constant 1 : index
    %c0_184 = arith.constant 0 : index
    %c0_185 = arith.constant 0 : index
    %111 = vector.load %arg0[%c2_182, %c1_183, %c0_184, %c0_185] : memref<9x9x8x128xbf16, #tpu.memory_space<vmem>>, vector<1x7x8x128xbf16>
    %112 = vector.shape_cast %111 : vector<1x7x8x128xbf16> to vector<56x128xbf16>
    %c1_186 = arith.constant 1 : index
    %c0_187 = arith.constant 0 : index
    %c0_188 = arith.constant 0 : index
    %113 = vector.load %arg1[%c1_186, %c0_187, %c0_188] : memref<4x128x128xbf16, #tpu.memory_space<vmem>>, vector<1x128x128xbf16>
    %114 = vector.shape_cast %113 : vector<1x128x128xbf16> to vector<128x128xbf16>
    %cst_189 = arith.constant dense<0.000000e+00> : vector<56x128xf32>
    %115 = tpu.matmul %112, %114, %cst_189 {dimension_numbers = #tpu.dot_dimension_numbers<[1], [0], [0], [1], [0, 0, 1, 1], [], []>} : vector<56x128xbf16>, vector<128x128xbf16>, vector<56x128xf32> -> vector<56x128xf32>
    %116 = arith.addf %110, %115 : vector<56x128xf32>
    %c3_190 = arith.constant 3 : index
    %c0_191 = arith.constant 0 : index
    %c0_192 = arith.constant 0 : index
    %c0_193 = arith.constant 0 : index
    %117 = vector.load %arg0[%c3_190, %c0_191, %c0_192, %c0_193] : memref<9x9x8x128xbf16, #tpu.memory_space<vmem>>, vector<1x7x8x128xbf16>
    %118 = vector.shape_cast %117 : vector<1x7x8x128xbf16> to vector<56x128xbf16>
    %c2_194 = arith.constant 2 : index
    %c0_195 = arith.constant 0 : index
    %c0_196 = arith.constant 0 : index
    %119 = vector.load %arg1[%c2_194, %c0_195, %c0_196] : memref<4x128x128xbf16, #tpu.memory_space<vmem>>, vector<1x128x128xbf16>
    %120 = vector.shape_cast %119 : vector<1x128x128xbf16> to vector<128x128xbf16>
    %cst_197 = arith.constant dense<0.000000e+00> : vector<56x128xf32>
    %121 = tpu.matmul %118, %120, %cst_197 {dimension_numbers = #tpu.dot_dimension_numbers<[1], [0], [0], [1], [0, 0, 1, 1], [], []>} : vector<56x128xbf16>, vector<128x128xbf16>, vector<56x128xf32> -> vector<56x128xf32>
    %122 = arith.addf %116, %121 : vector<56x128xf32>
    %c3_198 = arith.constant 3 : index
    %c1_199 = arith.constant 1 : index
    %c0_200 = arith.constant 0 : index
    %c0_201 = arith.constant 0 : index
    %123 = vector.load %arg0[%c3_198, %c1_199, %c0_200, %c0_201] : memref<9x9x8x128xbf16, #tpu.memory_space<vmem>>, vector<1x7x8x128xbf16>
    %124 = vector.shape_cast %123 : vector<1x7x8x128xbf16> to vector<56x128xbf16>
    %c3_202 = arith.constant 3 : index
    %c0_203 = arith.constant 0 : index
    %c0_204 = arith.constant 0 : index
    %125 = vector.load %arg1[%c3_202, %c0_203, %c0_204] : memref<4x128x128xbf16, #tpu.memory_space<vmem>>, vector<1x128x128xbf16>
    %126 = vector.shape_cast %125 : vector<1x128x128xbf16> to vector<128x128xbf16>
    %cst_205 = arith.constant dense<0.000000e+00> : vector<56x128xf32>
    %127 = tpu.matmul %124, %126, %cst_205 {dimension_numbers = #tpu.dot_dimension_numbers<[1], [0], [0], [1], [0, 0, 1, 1], [], []>} : vector<56x128xbf16>, vector<128x128xbf16>, vector<56x128xf32> -> vector<56x128xf32>
    %128 = arith.addf %122, %127 : vector<56x128xf32>
    %c0_206 = arith.constant 0 : index
    %c0_207 = arith.constant 0 : index
    %129 = vector.load %arg2[%c0_206, %c0_207] : memref<1x128xf32, #tpu.memory_space<vmem>>, vector<1x128xf32>
    %130 = vector.broadcast %129 : vector<1x128xf32> to vector<56x128xf32>
    %131 = arith.addf %128, %130 : vector<56x128xf32>
    %cst_208 = arith.constant 0.000000e+00 : f32
    %132 = vector.broadcast %cst_208 : f32 to vector<56x128xf32>
    %133 = arith.maximumf %131, %132 : vector<56x128xf32>
    %134 = vector.shape_cast %133 : vector<56x128xf32> to vector<1x7x8x128xf32>
    %c3_209 = arith.constant 3 : index
    %c1_210 = arith.constant 1 : index
    %c0_211 = arith.constant 0 : index
    %c0_212 = arith.constant 0 : index
    %135 = vector.load %arg12[%c3_209, %c1_210, %c0_211, %c0_212] : memref<10x10x8x128xf32, #tpu.memory_space<vmem>>, vector<1x7x8x128xf32>
    tpu.vector_store %arg12[%c3_209, %c1_210, %c0_211, %c0_212], %134 {strides = array<i32>} : memref<10x10x8x128xf32, #tpu.memory_space<vmem>>, vector<1x7x8x128xf32>,
    %cst_213 = arith.constant 0.000000e+00 : f32
    %136 = vector.broadcast %cst_213 : f32 to vector<56x128xf32>
    %c3_214 = arith.constant 3 : index
    %c0_215 = arith.constant 0 : index
    %c0_216 = arith.constant 0 : index
    %c0_217 = arith.constant 0 : index
    %137 = vector.load %arg0[%c3_214, %c0_215, %c0_216, %c0_217] : memref<9x9x8x128xbf16, #tpu.memory_space<vmem>>, vector<1x7x8x128xbf16>
    %138 = vector.shape_cast %137 : vector<1x7x8x128xbf16> to vector<56x128xbf16>
    %c0_218 = arith.constant 0 : index
    %c0_219 = arith.constant 0 : index
    %c0_220 = arith.constant 0 : index
    %139 = vector.load %arg1[%c0_218, %c0_219, %c0_220] : memref<4x128x128xbf16, #tpu.memory_space<vmem>>, vector<1x128x128xbf16>
    %140 = vector.shape_cast %139 : vector<1x128x128xbf16> to vector<128x128xbf16>
    %cst_221 = arith.constant dense<0.000000e+00> : vector<56x128xf32>
    %141 = tpu.matmul %138, %140, %cst_221 {dimension_numbers = #tpu.dot_dimension_numbers<[1], [0], [0], [1], [0, 0, 1, 1], [], []>} : vector<56x128xbf16>, vector<128x128xbf16>, vector<56x128xf32> -> vector<56x128xf32>
    %142 = arith.addf %136, %141 : vector<56x128xf32>
    %c3_222 = arith.constant 3 : index
    %c1_223 = arith.constant 1 : index
    %c0_224 = arith.constant 0 : index
    %c0_225 = arith.constant 0 : index
    %143 = vector.load %arg0[%c3_222, %c1_223, %c0_224, %c0_225] : memref<9x9x8x128xbf16, #tpu.memory_space<vmem>>, vector<1x7x8x128xbf16>
    %144 = vector.shape_cast %143 : vector<1x7x8x128xbf16> to vector<56x128xbf16>
    %c1_226 = arith.constant 1 : index
    %c0_227 = arith.constant 0 : index
    %c0_228 = arith.constant 0 : index
    %145 = vector.load %arg1[%c1_226, %c0_227, %c0_228] : memref<4x128x128xbf16, #tpu.memory_space<vmem>>, vector<1x128x128xbf16>
    %146 = vector.shape_cast %145 : vector<1x128x128xbf16> to vector<128x128xbf16>
    %cst_229 = arith.constant dense<0.000000e+00> : vector<56x128xf32>
    %147 = tpu.matmul %144, %146, %cst_229 {dimension_numbers = #tpu.dot_dimension_numbers<[1], [0], [0], [1], [0, 0, 1, 1], [], []>} : vector<56x128xbf16>, vector<128x128xbf16>, vector<56x128xf32> -> vector<56x128xf32>
    %148 = arith.addf %142, %147 : vector<56x128xf32>
    %c4_230 = arith.constant 4 : index
    %c0_231 = arith.constant 0 : index
    %c0_232 = arith.constant 0 : index
    %c0_233 = arith.constant 0 : index
    %149 = vector.load %arg0[%c4_230, %c0_231, %c0_232, %c0_233] : memref<9x9x8x128xbf16, #tpu.memory_space<vmem>>, vector<1x7x8x128xbf16>
    %150 = vector.shape_cast %149 : vector<1x7x8x128xbf16> to vector<56x128xbf16>
    %c2_234 = arith.constant 2 : index
    %c0_235 = arith.constant 0 : index
    %c0_236 = arith.constant 0 : index
    %151 = vector.load %arg1[%c2_234, %c0_235, %c0_236] : memref<4x128x128xbf16, #tpu.memory_space<vmem>>, vector<1x128x128xbf16>
    %152 = vector.shape_cast %151 : vector<1x128x128xbf16> to vector<128x128xbf16>
    %cst_237 = arith.constant dense<0.000000e+00> : vector<56x128xf32>
    %153 = tpu.matmul %150, %152, %cst_237 {dimension_numbers = #tpu.dot_dimension_numbers<[1], [0], [0], [1], [0, 0, 1, 1], [], []>} : vector<56x128xbf16>, vector<128x128xbf16>, vector<56x128xf32> -> vector<56x128xf32>
    %154 = arith.addf %148, %153 : vector<56x128xf32>
    %c4_238 = arith.constant 4 : index
    %c1_239 = arith.constant 1 : index
    %c0_240 = arith.constant 0 : index
    %c0_241 = arith.constant 0 : index
    %155 = vector.load %arg0[%c4_238, %c1_239, %c0_240, %c0_241] : memref<9x9x8x128xbf16, #tpu.memory_space<vmem>>, vector<1x7x8x128xbf16>
    %156 = vector.shape_cast %155 : vector<1x7x8x128xbf16> to vector<56x128xbf16>
    %c3_242 = arith.constant 3 : index
    %c0_243 = arith.constant 0 : index
    %c0_244 = arith.constant 0 : index
    %157 = vector.load %arg1[%c3_242, %c0_243, %c0_244] : memref<4x128x128xbf16, #tpu.memory_space<vmem>>, vector<1x128x128xbf16>
    %158 = vector.shape_cast %157 : vector<1x128x128xbf16> to vector<128x128xbf16>
    %cst_245 = arith.constant dense<0.000000e+00> : vector<56x128xf32>
    %159 = tpu.matmul %156, %158, %cst_245 {dimension_numbers = #tpu.dot_dimension_numbers<[1], [0], [0], [1], [0, 0, 1, 1], [], []>} : vector<56x128xbf16>, vector<128x128xbf16>, vector<56x128xf32> -> vector<56x128xf32>
    %160 = arith.addf %154, %159 : vector<56x128xf32>
    %c0_246 = arith.constant 0 : index
    %c0_247 = arith.constant 0 : index
    %161 = vector.load %arg2[%c0_246, %c0_247] : memref<1x128xf32, #tpu.memory_space<vmem>>, vector<1x128xf32>
    %162 = vector.broadcast %161 : vector<1x128xf32> to vector<56x128xf32>
    %163 = arith.addf %160, %162 : vector<56x128xf32>
    %cst_248 = arith.constant 0.000000e+00 : f32
    %164 = vector.broadcast %cst_248 : f32 to vector<56x128xf32>
    %165 = arith.maximumf %163, %164 : vector<56x128xf32>
    %166 = vector.shape_cast %165 : vector<56x128xf32> to vector<1x7x8x128xf32>
    %c4_249 = arith.constant 4 : index
    %c1_250 = arith.constant 1 : index
    %c0_251 = arith.constant 0 : index
    %c0_252 = arith.constant 0 : index
    %167 = vector.load %arg12[%c4_249, %c1_250, %c0_251, %c0_252] : memref<10x10x8x128xf32, #tpu.memory_space<vmem>>, vector<1x7x8x128xf32>
    tpu.vector_store %arg12[%c4_249, %c1_250, %c0_251, %c0_252], %166 {strides = array<i32>} : memref<10x10x8x128xf32, #tpu.memory_space<vmem>>, vector<1x7x8x128xf32>,
    %cst_253 = arith.constant 0.000000e+00 : f32
    %168 = vector.broadcast %cst_253 : f32 to vector<56x128xf32>
    %c4_254 = arith.constant 4 : index
    %c0_255 = arith.constant 0 : index
    %c0_256 = arith.constant 0 : index
    %c0_257 = arith.constant 0 : index
    %169 = vector.load %arg0[%c4_254, %c0_255, %c0_256, %c0_257] : memref<9x9x8x128xbf16, #tpu.memory_space<vmem>>, vector<1x7x8x128xbf16>
    %170 = vector.shape_cast %169 : vector<1x7x8x128xbf16> to vector<56x128xbf16>
    %c0_258 = arith.constant 0 : index
    %c0_259 = arith.constant 0 : index
    %c0_260 = arith.constant 0 : index
    %171 = vector.load %arg1[%c0_258, %c0_259, %c0_260] : memref<4x128x128xbf16, #tpu.memory_space<vmem>>, vector<1x128x128xbf16>
    %172 = vector.shape_cast %171 : vector<1x128x128xbf16> to vector<128x128xbf16>
    %cst_261 = arith.constant dense<0.000000e+00> : vector<56x128xf32>
    %173 = tpu.matmul %170, %172, %cst_261 {dimension_numbers = #tpu.dot_dimension_numbers<[1], [0], [0], [1], [0, 0, 1, 1], [], []>} : vector<56x128xbf16>, vector<128x128xbf16>, vector<56x128xf32> -> vector<56x128xf32>
    %174 = arith.addf %168, %173 : vector<56x128xf32>
    %c4_262 = arith.constant 4 : index
    %c1_263 = arith.constant 1 : index
    %c0_264 = arith.constant 0 : index
    %c0_265 = arith.constant 0 : index
    %175 = vector.load %arg0[%c4_262, %c1_263, %c0_264, %c0_265] : memref<9x9x8x128xbf16, #tpu.memory_space<vmem>>, vector<1x7x8x128xbf16>
    %176 = vector.shape_cast %175 : vector<1x7x8x128xbf16> to vector<56x128xbf16>
    %c1_266 = arith.constant 1 : index
    %c0_267 = arith.constant 0 : index
    %c0_268 = arith.constant 0 : index
    %177 = vector.load %arg1[%c1_266, %c0_267, %c0_268] : memref<4x128x128xbf16, #tpu.memory_space<vmem>>, vector<1x128x128xbf16>
    %178 = vector.shape_cast %177 : vector<1x128x128xbf16> to vector<128x128xbf16>
    %cst_269 = arith.constant dense<0.000000e+00> : vector<56x128xf32>
    %179 = tpu.matmul %176, %178, %cst_269 {dimension_numbers = #tpu.dot_dimension_numbers<[1], [0], [0], [1], [0, 0, 1, 1], [], []>} : vector<56x128xbf16>, vector<128x128xbf16>, vector<56x128xf32> -> vector<56x128xf32>
    %180 = arith.addf %174, %179 : vector<56x128xf32>
    %c5 = arith.constant 5 : index
    %c0_270 = arith.constant 0 : index
    %c0_271 = arith.constant 0 : index
    %c0_272 = arith.constant 0 : index
    %181 = vector.load %arg0[%c5, %c0_270, %c0_271, %c0_272] : memref<9x9x8x128xbf16, #tpu.memory_space<vmem>>, vector<1x7x8x128xbf16>
    %182 = vector.shape_cast %181 : vector<1x7x8x128xbf16> to vector<56x128xbf16>
    %c2_273 = arith.constant 2 : index
    %c0_274 = arith.constant 0 : index
    %c0_275 = arith.constant 0 : index
    %183 = vector.load %arg1[%c2_273, %c0_274, %c0_275] : memref<4x128x128xbf16, #tpu.memory_space<vmem>>, vector<1x128x128xbf16>
    %184 = vector.shape_cast %183 : vector<1x128x128xbf16> to vector<128x128xbf16>
    %cst_276 = arith.constant dense<0.000000e+00> : vector<56x128xf32>
    %185 = tpu.matmul %182, %184, %cst_276 {dimension_numbers = #tpu.dot_dimension_numbers<[1], [0], [0], [1], [0, 0, 1, 1], [], []>} : vector<56x128xbf16>, vector<128x128xbf16>, vector<56x128xf32> -> vector<56x128xf32>
    %186 = arith.addf %180, %185 : vector<56x128xf32>
    %c5_277 = arith.constant 5 : index
    %c1_278 = arith.constant 1 : index
    %c0_279 = arith.constant 0 : index
    %c0_280 = arith.constant 0 : index
    %187 = vector.load %arg0[%c5_277, %c1_278, %c0_279, %c0_280] : memref<9x9x8x128xbf16, #tpu.memory_space<vmem>>, vector<1x7x8x128xbf16>
    %188 = vector.shape_cast %187 : vector<1x7x8x128xbf16> to vector<56x128xbf16>
    %c3_281 = arith.constant 3 : index
    %c0_282 = arith.constant 0 : index
    %c0_283 = arith.constant 0 : index
    %189 = vector.load %arg1[%c3_281, %c0_282, %c0_283] : memref<4x128x128xbf16, #tpu.memory_space<vmem>>, vector<1x128x128xbf16>
    %190 = vector.shape_cast %189 : vector<1x128x128xbf16> to vector<128x128xbf16>
    %cst_284 = arith.constant dense<0.000000e+00> : vector<56x128xf32>
    %191 = tpu.matmul %188, %190, %cst_284 {dimension_numbers = #tpu.dot_dimension_numbers<[1], [0], [0], [1], [0, 0, 1, 1], [], []>} : vector<56x128xbf16>, vector<128x128xbf16>, vector<56x128xf32> -> vector<56x128xf32>
    %192 = arith.addf %186, %191 : vector<56x128xf32>
    %c0_285 = arith.constant 0 : index
    %c0_286 = arith.constant 0 : index
    %193 = vector.load %arg2[%c0_285, %c0_286] : memref<1x128xf32, #tpu.memory_space<vmem>>, vector<1x128xf32>
    %194 = vector.broadcast %193 : vector<1x128xf32> to vector<56x128xf32>
    %195 = arith.addf %192, %194 : vector<56x128xf32>
    %cst_287 = arith.constant 0.000000e+00 : f32
    %196 = vector.broadcast %cst_287 : f32 to vector<56x128xf32>
    %197 = arith.maximumf %195, %196 : vector<56x128xf32>
    %198 = vector.shape_cast %197 : vector<56x128xf32> to vector<1x7x8x128xf32>
    %c5_288 = arith.constant 5 : index
    %c1_289 = arith.constant 1 : index
    %c0_290 = arith.constant 0 : index
    %c0_291 = arith.constant 0 : index
    %199 = vector.load %arg12[%c5_288, %c1_289, %c0_290, %c0_291] : memref<10x10x8x128xf32, #tpu.memory_space<vmem>>, vector<1x7x8x128xf32>
    tpu.vector_store %arg12[%c5_288, %c1_289, %c0_290, %c0_291], %198 {strides = array<i32>} : memref<10x10x8x128xf32, #tpu.memory_space<vmem>>, vector<1x7x8x128xf32>,
    %cst_292 = arith.constant 0.000000e+00 : f32
    %200 = vector.broadcast %cst_292 : f32 to vector<56x128xf32>
    %c5_293 = arith.constant 5 : index
    %c0_294 = arith.constant 0 : index
    %c0_295 = arith.constant 0 : index
    %c0_296 = arith.constant 0 : index
    %201 = vector.load %arg0[%c5_293, %c0_294, %c0_295, %c0_296] : memref<9x9x8x128xbf16, #tpu.memory_space<vmem>>, vector<1x7x8x128xbf16>
    %202 = vector.shape_cast %201 : vector<1x7x8x128xbf16> to vector<56x128xbf16>
    %c0_297 = arith.constant 0 : index
    %c0_298 = arith.constant 0 : index
    %c0_299 = arith.constant 0 : index
    %203 = vector.load %arg1[%c0_297, %c0_298, %c0_299] : memref<4x128x128xbf16, #tpu.memory_space<vmem>>, vector<1x128x128xbf16>
    %204 = vector.shape_cast %203 : vector<1x128x128xbf16> to vector<128x128xbf16>
    %cst_300 = arith.constant dense<0.000000e+00> : vector<56x128xf32>
    %205 = tpu.matmul %202, %204, %cst_300 {dimension_numbers = #tpu.dot_dimension_numbers<[1], [0], [0], [1], [0, 0, 1, 1], [], []>} : vector<56x128xbf16>, vector<128x128xbf16>, vector<56x128xf32> -> vector<56x128xf32>
    %206 = arith.addf %200, %205 : vector<56x128xf32>
    %c5_301 = arith.constant 5 : index
    %c1_302 = arith.constant 1 : index
    %c0_303 = arith.constant 0 : index
    %c0_304 = arith.constant 0 : index
    %207 = vector.load %arg0[%c5_301, %c1_302, %c0_303, %c0_304] : memref<9x9x8x128xbf16, #tpu.memory_space<vmem>>, vector<1x7x8x128xbf16>
    %208 = vector.shape_cast %207 : vector<1x7x8x128xbf16> to vector<56x128xbf16>
    %c1_305 = arith.constant 1 : index
    %c0_306 = arith.constant 0 : index
    %c0_307 = arith.constant 0 : index
    %209 = vector.load %arg1[%c1_305, %c0_306, %c0_307] : memref<4x128x128xbf16, #tpu.memory_space<vmem>>, vector<1x128x128xbf16>
    %210 = vector.shape_cast %209 : vector<1x128x128xbf16> to vector<128x128xbf16>
    %cst_308 = arith.constant dense<0.000000e+00> : vector<56x128xf32>
    %211 = tpu.matmul %208, %210, %cst_308 {dimension_numbers = #tpu.dot_dimension_numbers<[1], [0], [0], [1], [0, 0, 1, 1], [], []>} : vector<56x128xbf16>, vector<128x128xbf16>, vector<56x128xf32> -> vector<56x128xf32>
    %212 = arith.addf %206, %211 : vector<56x128xf32>
    %c6 = arith.constant 6 : index
    %c0_309 = arith.constant 0 : index
    %c0_310 = arith.constant 0 : index
    %c0_311 = arith.constant 0 : index
    %213 = vector.load %arg0[%c6, %c0_309, %c0_310, %c0_311] : memref<9x9x8x128xbf16, #tpu.memory_space<vmem>>, vector<1x7x8x128xbf16>
    %214 = vector.shape_cast %213 : vector<1x7x8x128xbf16> to vector<56x128xbf16>
    %c2_312 = arith.constant 2 : index
    %c0_313 = arith.constant 0 : index
    %c0_314 = arith.constant 0 : index
    %215 = vector.load %arg1[%c2_312, %c0_313, %c0_314] : memref<4x128x128xbf16, #tpu.memory_space<vmem>>, vector<1x128x128xbf16>
    %216 = vector.shape_cast %215 : vector<1x128x128xbf16> to vector<128x128xbf16>
    %cst_315 = arith.constant dense<0.000000e+00> : vector<56x128xf32>
    %217 = tpu.matmul %214, %216, %cst_315 {dimension_numbers = #tpu.dot_dimension_numbers<[1], [0], [0], [1], [0, 0, 1, 1], [], []>} : vector<56x128xbf16>, vector<128x128xbf16>, vector<56x128xf32> -> vector<56x128xf32>
    %218 = arith.addf %212, %217 : vector<56x128xf32>
    %c6_316 = arith.constant 6 : index
    %c1_317 = arith.constant 1 : index
    %c0_318 = arith.constant 0 : index
    %c0_319 = arith.constant 0 : index
    %219 = vector.load %arg0[%c6_316, %c1_317, %c0_318, %c0_319] : memref<9x9x8x128xbf16, #tpu.memory_space<vmem>>, vector<1x7x8x128xbf16>
    %220 = vector.shape_cast %219 : vector<1x7x8x128xbf16> to vector<56x128xbf16>
    %c3_320 = arith.constant 3 : index
    %c0_321 = arith.constant 0 : index
    %c0_322 = arith.constant 0 : index
    %221 = vector.load %arg1[%c3_320, %c0_321, %c0_322] : memref<4x128x128xbf16, #tpu.memory_space<vmem>>, vector<1x128x128xbf16>
    %222 = vector.shape_cast %221 : vector<1x128x128xbf16> to vector<128x128xbf16>
    %cst_323 = arith.constant dense<0.000000e+00> : vector<56x128xf32>
    %223 = tpu.matmul %220, %222, %cst_323 {dimension_numbers = #tpu.dot_dimension_numbers<[1], [0], [0], [1], [0, 0, 1, 1], [], []>} : vector<56x128xbf16>, vector<128x128xbf16>, vector<56x128xf32> -> vector<56x128xf32>
    %224 = arith.addf %218, %223 : vector<56x128xf32>
    %c0_324 = arith.constant 0 : index
    %c0_325 = arith.constant 0 : index
    %225 = vector.load %arg2[%c0_324, %c0_325] : memref<1x128xf32, #tpu.memory_space<vmem>>, vector<1x128xf32>
    %226 = vector.broadcast %225 : vector<1x128xf32> to vector<56x128xf32>
    %227 = arith.addf %224, %226 : vector<56x128xf32>
    %cst_326 = arith.constant 0.000000e+00 : f32
    %228 = vector.broadcast %cst_326 : f32 to vector<56x128xf32>
    %229 = arith.maximumf %227, %228 : vector<56x128xf32>
    %230 = vector.shape_cast %229 : vector<56x128xf32> to vector<1x7x8x128xf32>
    %c6_327 = arith.constant 6 : index
    %c1_328 = arith.constant 1 : index
    %c0_329 = arith.constant 0 : index
    %c0_330 = arith.constant 0 : index
    %231 = vector.load %arg12[%c6_327, %c1_328, %c0_329, %c0_330] : memref<10x10x8x128xf32, #tpu.memory_space<vmem>>, vector<1x7x8x128xf32>
    tpu.vector_store %arg12[%c6_327, %c1_328, %c0_329, %c0_330], %230 {strides = array<i32>} : memref<10x10x8x128xf32, #tpu.memory_space<vmem>>, vector<1x7x8x128xf32>,
    %cst_331 = arith.constant 0.000000e+00 : f32
    %232 = vector.broadcast %cst_331 : f32 to vector<56x128xf32>
    %c6_332 = arith.constant 6 : index
    %c0_333 = arith.constant 0 : index
    %c0_334 = arith.constant 0 : index
    %c0_335 = arith.constant 0 : index
    %233 = vector.load %arg0[%c6_332, %c0_333, %c0_334, %c0_335] : memref<9x9x8x128xbf16, #tpu.memory_space<vmem>>, vector<1x7x8x128xbf16>
    %234 = vector.shape_cast %233 : vector<1x7x8x128xbf16> to vector<56x128xbf16>
    %c0_336 = arith.constant 0 : index
    %c0_337 = arith.constant 0 : index
    %c0_338 = arith.constant 0 : index
    %235 = vector.load %arg1[%c0_336, %c0_337, %c0_338] : memref<4x128x128xbf16, #tpu.memory_space<vmem>>, vector<1x128x128xbf16>
    %236 = vector.shape_cast %235 : vector<1x128x128xbf16> to vector<128x128xbf16>
    %cst_339 = arith.constant dense<0.000000e+00> : vector<56x128xf32>
    %237 = tpu.matmul %234, %236, %cst_339 {dimension_numbers = #tpu.dot_dimension_numbers<[1], [0], [0], [1], [0, 0, 1, 1], [], []>} : vector<56x128xbf16>, vector<128x128xbf16>, vector<56x128xf32> -> vector<56x128xf32>
    %238 = arith.addf %232, %237 : vector<56x128xf32>
    %c6_340 = arith.constant 6 : index
    %c1_341 = arith.constant 1 : index
    %c0_342 = arith.constant 0 : index
    %c0_343 = arith.constant 0 : index
    %239 = vector.load %arg0[%c6_340, %c1_341, %c0_342, %c0_343] : memref<9x9x8x128xbf16, #tpu.memory_space<vmem>>, vector<1x7x8x128xbf16>
    %240 = vector.shape_cast %239 : vector<1x7x8x128xbf16> to vector<56x128xbf16>
    %c1_344 = arith.constant 1 : index
    %c0_345 = arith.constant 0 : index
    %c0_346 = arith.constant 0 : index
    %241 = vector.load %arg1[%c1_344, %c0_345, %c0_346] : memref<4x128x128xbf16, #tpu.memory_space<vmem>>, vector<1x128x128xbf16>
    %242 = vector.shape_cast %241 : vector<1x128x128xbf16> to vector<128x128xbf16>
    %cst_347 = arith.constant dense<0.000000e+00> : vector<56x128xf32>
    %243 = tpu.matmul %240, %242, %cst_347 {dimension_numbers = #tpu.dot_dimension_numbers<[1], [0], [0], [1], [0, 0, 1, 1], [], []>} : vector<56x128xbf16>, vector<128x128xbf16>, vector<56x128xf32> -> vector<56x128xf32>
    %244 = arith.addf %238, %243 : vector<56x128xf32>
    %c7 = arith.constant 7 : index
    %c0_348 = arith.constant 0 : index
    %c0_349 = arith.constant 0 : index
    %c0_350 = arith.constant 0 : index
    %245 = vector.load %arg0[%c7, %c0_348, %c0_349, %c0_350] : memref<9x9x8x128xbf16, #tpu.memory_space<vmem>>, vector<1x7x8x128xbf16>
    %246 = vector.shape_cast %245 : vector<1x7x8x128xbf16> to vector<56x128xbf16>
    %c2_351 = arith.constant 2 : index
    %c0_352 = arith.constant 0 : index
    %c0_353 = arith.constant 0 : index
    %247 = vector.load %arg1[%c2_351, %c0_352, %c0_353] : memref<4x128x128xbf16, #tpu.memory_space<vmem>>, vector<1x128x128xbf16>
    %248 = vector.shape_cast %247 : vector<1x128x128xbf16> to vector<128x128xbf16>
    %cst_354 = arith.constant dense<0.000000e+00> : vector<56x128xf32>
    %249 = tpu.matmul %246, %248, %cst_354 {dimension_numbers = #tpu.dot_dimension_numbers<[1], [0], [0], [1], [0, 0, 1, 1], [], []>} : vector<56x128xbf16>, vector<128x128xbf16>, vector<56x128xf32> -> vector<56x128xf32>
    %250 = arith.addf %244, %249 : vector<56x128xf32>
    %c7_355 = arith.constant 7 : index
    %c1_356 = arith.constant 1 : index
    %c0_357 = arith.constant 0 : index
    %c0_358 = arith.constant 0 : index
    %251 = vector.load %arg0[%c7_355, %c1_356, %c0_357, %c0_358] : memref<9x9x8x128xbf16, #tpu.memory_space<vmem>>, vector<1x7x8x128xbf16>
    %252 = vector.shape_cast %251 : vector<1x7x8x128xbf16> to vector<56x128xbf16>
    %c3_359 = arith.constant 3 : index
    %c0_360 = arith.constant 0 : index
    %c0_361 = arith.constant 0 : index
    %253 = vector.load %arg1[%c3_359, %c0_360, %c0_361] : memref<4x128x128xbf16, #tpu.memory_space<vmem>>, vector<1x128x128xbf16>
    %254 = vector.shape_cast %253 : vector<1x128x128xbf16> to vector<128x128xbf16>
    %cst_362 = arith.constant dense<0.000000e+00> : vector<56x128xf32>
    %255 = tpu.matmul %252, %254, %cst_362 {dimension_numbers = #tpu.dot_dimension_numbers<[1], [0], [0], [1], [0, 0, 1, 1], [], []>} : vector<56x128xbf16>, vector<128x128xbf16>, vector<56x128xf32> -> vector<56x128xf32>
    %256 = arith.addf %250, %255 : vector<56x128xf32>
    %c0_363 = arith.constant 0 : index
    %c0_364 = arith.constant 0 : index
    %257 = vector.load %arg2[%c0_363, %c0_364] : memref<1x128xf32, #tpu.memory_space<vmem>>, vector<1x128xf32>
    %258 = vector.broadcast %257 : vector<1x128xf32> to vector<56x128xf32>
    %259 = arith.addf %256, %258 : vector<56x128xf32>
    %cst_365 = arith.constant 0.000000e+00 : f32
    %260 = vector.broadcast %cst_365 : f32 to vector<56x128xf32>
    %261 = arith.maximumf %259, %260 : vector<56x128xf32>
    %262 = vector.shape_cast %261 : vector<56x128xf32> to vector<1x7x8x128xf32>
    %c7_366 = arith.constant 7 : index
    %c1_367 = arith.constant 1 : index
    %c0_368 = arith.constant 0 : index
    %c0_369 = arith.constant 0 : index
    %263 = vector.load %arg12[%c7_366, %c1_367, %c0_368, %c0_369] : memref<10x10x8x128xf32, #tpu.memory_space<vmem>>, vector<1x7x8x128xf32>
    tpu.vector_store %arg12[%c7_366, %c1_367, %c0_368, %c0_369], %262 {strides = array<i32>} : memref<10x10x8x128xf32, #tpu.memory_space<vmem>>, vector<1x7x8x128xf32>,
    %cst_370 = arith.constant 0.000000e+00 : f32
    %264 = vector.broadcast %cst_370 : f32 to vector<72x128xf32>
    %c0_371 = arith.constant 0 : index
    %c0_372 = arith.constant 0 : index
    %c0_373 = arith.constant 0 : index
    %c0_374 = arith.constant 0 : index
    %265 = vector.load %arg12[%c0_371, %c0_372, %c0_373, %c0_374] : memref<10x10x8x128xf32, #tpu.memory_space<vmem>>, vector<6x6x8x128xf32>
    %266 = vector.shape_cast %265 : vector<6x6x8x128xf32> to vector<3x2x3x2x8x128xf32>
    %267 = vector.extract_strided_slice %266 {offsets = [0, 0, 0, 0, 0, 0], sizes = [3, 1, 3, 1, 8, 128], strides = [1, 1, 1, 1, 1, 1]} : vector<3x2x3x2x8x128xf32> to vector<3x1x3x1x8x128xf32>
    %268 = vector.shape_cast %267 : vector<3x1x3x1x8x128xf32> to vector<3x3x8x128xf32>
    %269 = vector.shape_cast %268 : vector<3x3x8x128xf32> to vector<72x128xf32>
    %270 = arith.truncf %269 : vector<72x128xf32> to vector<72x128xbf16>
    %c0_375 = arith.constant 0 : index
    %c0_376 = arith.constant 0 : index
    %c0_377 = arith.constant 0 : index
    %271 = vector.load %arg3[%c0_375, %c0_376, %c0_377] : memref<25x128x128xbf16, #tpu.memory_space<vmem>>, vector<1x128x128xbf16>
    %272 = vector.shape_cast %271 : vector<1x128x128xbf16> to vector<128x128xbf16>
    %cst_378 = arith.constant dense<0.000000e+00> : vector<72x128xf32>
    %273 = tpu.matmul %270, %272, %cst_378 {dimension_numbers = #tpu.dot_dimension_numbers<[1], [0], [0], [1], [0, 0, 1, 1], [], []>} : vector<72x128xbf16>, vector<128x128xbf16>, vector<72x128xf32> -> vector<72x128xf32>
    %274 = arith.addf %264, %273 : vector<72x128xf32>
    %c0_379 = arith.constant 0 : index
    %c1_380 = arith.constant 1 : index
    %c0_381 = arith.constant 0 : index
    %c0_382 = arith.constant 0 : index
    %275 = vector.load %arg12[%c0_379, %c1_380, %c0_381, %c0_382] : memref<10x10x8x128xf32, #tpu.memory_space<vmem>>, vector<6x6x8x128xf32>
    %276 = vector.shape_cast %275 : vector<6x6x8x128xf32> to vector<3x2x3x2x8x128xf32>
    %277 = vector.extract_strided_slice %276 {offsets = [0, 0, 0, 0, 0, 0], sizes = [3, 1, 3, 1, 8, 128], strides = [1, 1, 1, 1, 1, 1]} : vector<3x2x3x2x8x128xf32> to vector<3x1x3x1x8x128xf32>
    %278 = vector.shape_cast %277 : vector<3x1x3x1x8x128xf32> to vector<3x3x8x128xf32>
    %279 = vector.shape_cast %278 : vector<3x3x8x128xf32> to vector<72x128xf32>
    %280 = arith.truncf %279 : vector<72x128xf32> to vector<72x128xbf16>
    %c1_383 = arith.constant 1 : index
    %c0_384 = arith.constant 0 : index
    %c0_385 = arith.constant 0 : index
    %281 = vector.load %arg3[%c1_383, %c0_384, %c0_385] : memref<25x128x128xbf16, #tpu.memory_space<vmem>>, vector<1x128x128xbf16>
    %282 = vector.shape_cast %281 : vector<1x128x128xbf16> to vector<128x128xbf16>
    %cst_386 = arith.constant dense<0.000000e+00> : vector<72x128xf32>
    %283 = tpu.matmul %280, %282, %cst_386 {dimension_numbers = #tpu.dot_dimension_numbers<[1], [0], [0], [1], [0, 0, 1, 1], [], []>} : vector<72x128xbf16>, vector<128x128xbf16>, vector<72x128xf32> -> vector<72x128xf32>
    %284 = arith.addf %274, %283 : vector<72x128xf32>
    %c0_387 = arith.constant 0 : index
    %c2_388 = arith.constant 2 : index
    %c0_389 = arith.constant 0 : index
    %c0_390 = arith.constant 0 : index
    %285 = vector.load %arg12[%c0_387, %c2_388, %c0_389, %c0_390] : memref<10x10x8x128xf32, #tpu.memory_space<vmem>>, vector<6x6x8x128xf32>
    %286 = vector.shape_cast %285 : vector<6x6x8x128xf32> to vector<3x2x3x2x8x128xf32>
    %287 = vector.extract_strided_slice %286 {offsets = [0, 0, 0, 0, 0, 0], sizes = [3, 1, 3, 1, 8, 128], strides = [1, 1, 1, 1, 1, 1]} : vector<3x2x3x2x8x128xf32> to vector<3x1x3x1x8x128xf32>
    %288 = vector.shape_cast %287 : vector<3x1x3x1x8x128xf32> to vector<3x3x8x128xf32>
    %289 = vector.shape_cast %288 : vector<3x3x8x128xf32> to vector<72x128xf32>
    %290 = arith.truncf %289 : vector<72x128xf32> to vector<72x128xbf16>
    %c2_391 = arith.constant 2 : index
    %c0_392 = arith.constant 0 : index
    %c0_393 = arith.constant 0 : index
    %291 = vector.load %arg3[%c2_391, %c0_392, %c0_393] : memref<25x128x128xbf16, #tpu.memory_space<vmem>>, vector<1x128x128xbf16>
    %292 = vector.shape_cast %291 : vector<1x128x128xbf16> to vector<128x128xbf16>
    %cst_394 = arith.constant dense<0.000000e+00> : vector<72x128xf32>
    %293 = tpu.matmul %290, %292, %cst_394 {dimension_numbers = #tpu.dot_dimension_numbers<[1], [0], [0], [1], [0, 0, 1, 1], [], []>} : vector<72x128xbf16>, vector<128x128xbf16>, vector<72x128xf32> -> vector<72x128xf32>
    %294 = arith.addf %284, %293 : vector<72x128xf32>
    %c0_395 = arith.constant 0 : index
    %c3_396 = arith.constant 3 : index
    %c0_397 = arith.constant 0 : index
    %c0_398 = arith.constant 0 : index
    %295 = vector.load %arg12[%c0_395, %c3_396, %c0_397, %c0_398] : memref<10x10x8x128xf32, #tpu.memory_space<vmem>>, vector<6x6x8x128xf32>
    %296 = vector.shape_cast %295 : vector<6x6x8x128xf32> to vector<3x2x3x2x8x128xf32>
    %297 = vector.extract_strided_slice %296 {offsets = [0, 0, 0, 0, 0, 0], sizes = [3, 1, 3, 1, 8, 128], strides = [1, 1, 1, 1, 1, 1]} : vector<3x2x3x2x8x128xf32> to vector<3x1x3x1x8x128xf32>
    %298 = vector.shape_cast %297 : vector<3x1x3x1x8x128xf32> to vector<3x3x8x128xf32>
    %299 = vector.shape_cast %298 : vector<3x3x8x128xf32> to vector<72x128xf32>
    %300 = arith.truncf %299 : vector<72x128xf32> to vector<72x128xbf16>
    %c3_399 = arith.constant 3 : index
    %c0_400 = arith.constant 0 : index
    %c0_401 = arith.constant 0 : index
    %301 = vector.load %arg3[%c3_399, %c0_400, %c0_401] : memref<25x128x128xbf16, #tpu.memory_space<vmem>>, vector<1x128x128xbf16>
    %302 = vector.shape_cast %301 : vector<1x128x128xbf16> to vector<128x128xbf16>
    %cst_402 = arith.constant dense<0.000000e+00> : vector<72x128xf32>
    %303 = tpu.matmul %300, %302, %cst_402 {dimension_numbers = #tpu.dot_dimension_numbers<[1], [0], [0], [1], [0, 0, 1, 1], [], []>} : vector<72x128xbf16>, vector<128x128xbf16>, vector<72x128xf32> -> vector<72x128xf32>
    %304 = arith.addf %294, %303 : vector<72x128xf32>
    %c0_403 = arith.constant 0 : index
    %c4_404 = arith.constant 4 : index
    %c0_405 = arith.constant 0 : index
    %c0_406 = arith.constant 0 : index
    %305 = vector.load %arg12[%c0_403, %c4_404, %c0_405, %c0_406] : memref<10x10x8x128xf32, #tpu.memory_space<vmem>>, vector<6x6x8x128xf32>
    %306 = vector.shape_cast %305 : vector<6x6x8x128xf32> to vector<3x2x3x2x8x128xf32>
    %307 = vector.extract_strided_slice %306 {offsets = [0, 0, 0, 0, 0, 0], sizes = [3, 1, 3, 1, 8, 128], strides = [1, 1, 1, 1, 1, 1]} : vector<3x2x3x2x8x128xf32> to vector<3x1x3x1x8x128xf32>
    %308 = vector.shape_cast %307 : vector<3x1x3x1x8x128xf32> to vector<3x3x8x128xf32>
    %309 = vector.shape_cast %308 : vector<3x3x8x128xf32> to vector<72x128xf32>
    %310 = arith.truncf %309 : vector<72x128xf32> to vector<72x128xbf16>
    %c4_407 = arith.constant 4 : index
    %c0_408 = arith.constant 0 : index
    %c0_409 = arith.constant 0 : index
    %311 = vector.load %arg3[%c4_407, %c0_408, %c0_409] : memref<25x128x128xbf16, #tpu.memory_space<vmem>>, vector<1x128x128xbf16>
    %312 = vector.shape_cast %311 : vector<1x128x128xbf16> to vector<128x128xbf16>
    %cst_410 = arith.constant dense<0.000000e+00> : vector<72x128xf32>
    %313 = tpu.matmul %310, %312, %cst_410 {dimension_numbers = #tpu.dot_dimension_numbers<[1], [0], [0], [1], [0, 0, 1, 1], [], []>} : vector<72x128xbf16>, vector<128x128xbf16>, vector<72x128xf32> -> vector<72x128xf32>
    %314 = arith.addf %304, %313 : vector<72x128xf32>
    %c1_411 = arith.constant 1 : index
    %c0_412 = arith.constant 0 : index
    %c0_413 = arith.constant 0 : index
    %c0_414 = arith.constant 0 : index
    %315 = vector.load %arg12[%c1_411, %c0_412, %c0_413, %c0_414] : memref<10x10x8x128xf32, #tpu.memory_space<vmem>>, vector<6x6x8x128xf32>
    %316 = vector.shape_cast %315 : vector<6x6x8x128xf32> to vector<3x2x3x2x8x128xf32>
    %317 = vector.extract_strided_slice %316 {offsets = [0, 0, 0, 0, 0, 0], sizes = [3, 1, 3, 1, 8, 128], strides = [1, 1, 1, 1, 1, 1]} : vector<3x2x3x2x8x128xf32> to vector<3x1x3x1x8x128xf32>
    %318 = vector.shape_cast %317 : vector<3x1x3x1x8x128xf32> to vector<3x3x8x128xf32>
    %319 = vector.shape_cast %318 : vector<3x3x8x128xf32> to vector<72x128xf32>
    %320 = arith.truncf %319 : vector<72x128xf32> to vector<72x128xbf16>
    %c5_415 = arith.constant 5 : index
    %c0_416 = arith.constant 0 : index
    %c0_417 = arith.constant 0 : index
    %321 = vector.load %arg3[%c5_415, %c0_416, %c0_417] : memref<25x128x128xbf16, #tpu.memory_space<vmem>>, vector<1x128x128xbf16>
    %322 = vector.shape_cast %321 : vector<1x128x128xbf16> to vector<128x128xbf16>
    %cst_418 = arith.constant dense<0.000000e+00> : vector<72x128xf32>
    %323 = tpu.matmul %320, %322, %cst_418 {dimension_numbers = #tpu.dot_dimension_numbers<[1], [0], [0], [1], [0, 0, 1, 1], [], []>} : vector<72x128xbf16>, vector<128x128xbf16>, vector<72x128xf32> -> vector<72x128xf32>
    %324 = arith.addf %314, %323 : vector<72x128xf32>
    %c1_419 = arith.constant 1 : index
    %c1_420 = arith.constant 1 : index
    %c0_421 = arith.constant 0 : index
    %c0_422 = arith.constant 0 : index
    %325 = vector.load %arg12[%c1_419, %c1_420, %c0_421, %c0_422] : memref<10x10x8x128xf32, #tpu.memory_space<vmem>>, vector<6x6x8x128xf32>
    %326 = vector.shape_cast %325 : vector<6x6x8x128xf32> to vector<3x2x3x2x8x128xf32>
    %327 = vector.extract_strided_slice %326 {offsets = [0, 0, 0, 0, 0, 0], sizes = [3, 1, 3, 1, 8, 128], strides = [1, 1, 1, 1, 1, 1]} : vector<3x2x3x2x8x128xf32> to vector<3x1x3x1x8x128xf32>
    %328 = vector.shape_cast %327 : vector<3x1x3x1x8x128xf32> to vector<3x3x8x128xf32>
    %329 = vector.shape_cast %328 : vector<3x3x8x128xf32> to vector<72x128xf32>
    %330 = arith.truncf %329 : vector<72x128xf32> to vector<72x128xbf16>
    %c6_423 = arith.constant 6 : index
    %c0_424 = arith.constant 0 : index
    %c0_425 = arith.constant 0 : index
    %331 = vector.load %arg3[%c6_423, %c0_424, %c0_425] : memref<25x128x128xbf16, #tpu.memory_space<vmem>>, vector<1x128x128xbf16>
    %332 = vector.shape_cast %331 : vector<1x128x128xbf16> to vector<128x128xbf16>
    %cst_426 = arith.constant dense<0.000000e+00> : vector<72x128xf32>
    %333 = tpu.matmul %330, %332, %cst_426 {dimension_numbers = #tpu.dot_dimension_numbers<[1], [0], [0], [1], [0, 0, 1, 1], [], []>} : vector<72x128xbf16>, vector<128x128xbf16>, vector<72x128xf32> -> vector<72x128xf32>
    %334 = arith.addf %324, %333 : vector<72x128xf32>
    %c1_427 = arith.constant 1 : index
    %c2_428 = arith.constant 2 : index
    %c0_429 = arith.constant 0 : index
    %c0_430 = arith.constant 0 : index
    %335 = vector.load %arg12[%c1_427, %c2_428, %c0_429, %c0_430] : memref<10x10x8x128xf32, #tpu.memory_space<vmem>>, vector<6x6x8x128xf32>
    %336 = vector.shape_cast %335 : vector<6x6x8x128xf32> to vector<3x2x3x2x8x128xf32>
    %337 = vector.extract_strided_slice %336 {offsets = [0, 0, 0, 0, 0, 0], sizes = [3, 1, 3, 1, 8, 128], strides = [1, 1, 1, 1, 1, 1]} : vector<3x2x3x2x8x128xf32> to vector<3x1x3x1x8x128xf32>
    %338 = vector.shape_cast %337 : vector<3x1x3x1x8x128xf32> to vector<3x3x8x128xf32>
    %339 = vector.shape_cast %338 : vector<3x3x8x128xf32> to vector<72x128xf32>
    %340 = arith.truncf %339 : vector<72x128xf32> to vector<72x128xbf16>
    %c7_431 = arith.constant 7 : index
    %c0_432 = arith.constant 0 : index
    %c0_433 = arith.constant 0 : index
    %341 = vector.load %arg3[%c7_431, %c0_432, %c0_433] : memref<25x128x128xbf16, #tpu.memory_space<vmem>>, vector<1x128x128xbf16>
    %342 = vector.shape_cast %341 : vector<1x128x128xbf16> to vector<128x128xbf16>
    %cst_434 = arith.constant dense<0.000000e+00> : vector<72x128xf32>
    %343 = tpu.matmul %340, %342, %cst_434 {dimension_numbers = #tpu.dot_dimension_numbers<[1], [0], [0], [1], [0, 0, 1, 1], [], []>} : vector<72x128xbf16>, vector<128x128xbf16>, vector<72x128xf32> -> vector<72x128xf32>
    %344 = arith.addf %334, %343 : vector<72x128xf32>
    %c1_435 = arith.constant 1 : index
    %c3_436 = arith.constant 3 : index
    %c0_437 = arith.constant 0 : index
    %c0_438 = arith.constant 0 : index
    %345 = vector.load %arg12[%c1_435, %c3_436, %c0_437, %c0_438] : memref<10x10x8x128xf32, #tpu.memory_space<vmem>>, vector<6x6x8x128xf32>
    %346 = vector.shape_cast %345 : vector<6x6x8x128xf32> to vector<3x2x3x2x8x128xf32>
    %347 = vector.extract_strided_slice %346 {offsets = [0, 0, 0, 0, 0, 0], sizes = [3, 1, 3, 1, 8, 128], strides = [1, 1, 1, 1, 1, 1]} : vector<3x2x3x2x8x128xf32> to vector<3x1x3x1x8x128xf32>
    %348 = vector.shape_cast %347 : vector<3x1x3x1x8x128xf32> to vector<3x3x8x128xf32>
    %349 = vector.shape_cast %348 : vector<3x3x8x128xf32> to vector<72x128xf32>
    %350 = arith.truncf %349 : vector<72x128xf32> to vector<72x128xbf16>
    %c8_439 = arith.constant 8 : index
    %c0_440 = arith.constant 0 : index
    %c0_441 = arith.constant 0 : index
    %351 = vector.load %arg3[%c8_439, %c0_440, %c0_441] : memref<25x128x128xbf16, #tpu.memory_space<vmem>>, vector<1x128x128xbf16>
    %352 = vector.shape_cast %351 : vector<1x128x128xbf16> to vector<128x128xbf16>
    %cst_442 = arith.constant dense<0.000000e+00> : vector<72x128xf32>
    %353 = tpu.matmul %350, %352, %cst_442 {dimension_numbers = #tpu.dot_dimension_numbers<[1], [0], [0], [1], [0, 0, 1, 1], [], []>} : vector<72x128xbf16>, vector<128x128xbf16>, vector<72x128xf32> -> vector<72x128xf32>
    %354 = arith.addf %344, %353 : vector<72x128xf32>
    %c1_443 = arith.constant 1 : index
    %c4_444 = arith.constant 4 : index
    %c0_445 = arith.constant 0 : index
    %c0_446 = arith.constant 0 : index
    %355 = vector.load %arg12[%c1_443, %c4_444, %c0_445, %c0_446] : memref<10x10x8x128xf32, #tpu.memory_space<vmem>>, vector<6x6x8x128xf32>
    %356 = vector.shape_cast %355 : vector<6x6x8x128xf32> to vector<3x2x3x2x8x128xf32>
    %357 = vector.extract_strided_slice %356 {offsets = [0, 0, 0, 0, 0, 0], sizes = [3, 1, 3, 1, 8, 128], strides = [1, 1, 1, 1, 1, 1]} : vector<3x2x3x2x8x128xf32> to vector<3x1x3x1x8x128xf32>
    %358 = vector.shape_cast %357 : vector<3x1x3x1x8x128xf32> to vector<3x3x8x128xf32>
    %359 = vector.shape_cast %358 : vector<3x3x8x128xf32> to vector<72x128xf32>
    %360 = arith.truncf %359 : vector<72x128xf32> to vector<72x128xbf16>
    %c9 = arith.constant 9 : index
    %c0_447 = arith.constant 0 : index
    %c0_448 = arith.constant 0 : index
    %361 = vector.load %arg3[%c9, %c0_447, %c0_448] : memref<25x128x128xbf16, #tpu.memory_space<vmem>>, vector<1x128x128xbf16>
    %362 = vector.shape_cast %361 : vector<1x128x128xbf16> to vector<128x128xbf16>
    %cst_449 = arith.constant dense<0.000000e+00> : vector<72x128xf32>
    %363 = tpu.matmul %360, %362, %cst_449 {dimension_numbers = #tpu.dot_dimension_numbers<[1], [0], [0], [1], [0, 0, 1, 1], [], []>} : vector<72x128xbf16>, vector<128x128xbf16>, vector<72x128xf32> -> vector<72x128xf32>
    %364 = arith.addf %354, %363 : vector<72x128xf32>
    %c2_450 = arith.constant 2 : index
    %c0_451 = arith.constant 0 : index
    %c0_452 = arith.constant 0 : index
    %c0_453 = arith.constant 0 : index
    %365 = vector.load %arg12[%c2_450, %c0_451, %c0_452, %c0_453] : memref<10x10x8x128xf32, #tpu.memory_space<vmem>>, vector<6x6x8x128xf32>
    %366 = vector.shape_cast %365 : vector<6x6x8x128xf32> to vector<3x2x3x2x8x128xf32>
    %367 = vector.extract_strided_slice %366 {offsets = [0, 0, 0, 0, 0, 0], sizes = [3, 1, 3, 1, 8, 128], strides = [1, 1, 1, 1, 1, 1]} : vector<3x2x3x2x8x128xf32> to vector<3x1x3x1x8x128xf32>
    %368 = vector.shape_cast %367 : vector<3x1x3x1x8x128xf32> to vector<3x3x8x128xf32>
    %369 = vector.shape_cast %368 : vector<3x3x8x128xf32> to vector<72x128xf32>
    %370 = arith.truncf %369 : vector<72x128xf32> to vector<72x128xbf16>
    %c10 = arith.constant 10 : index
    %c0_454 = arith.constant 0 : index
    %c0_455 = arith.constant 0 : index
    %371 = vector.load %arg3[%c10, %c0_454, %c0_455] : memref<25x128x128xbf16, #tpu.memory_space<vmem>>, vector<1x128x128xbf16>
    %372 = vector.shape_cast %371 : vector<1x128x128xbf16> to vector<128x128xbf16>
    %cst_456 = arith.constant dense<0.000000e+00> : vector<72x128xf32>
    %373 = tpu.matmul %370, %372, %cst_456 {dimension_numbers = #tpu.dot_dimension_numbers<[1], [0], [0], [1], [0, 0, 1, 1], [], []>} : vector<72x128xbf16>, vector<128x128xbf16>, vector<72x128xf32> -> vector<72x128xf32>
    %374 = arith.addf %364, %373 : vector<72x128xf32>
    %c2_457 = arith.constant 2 : index
    %c1_458 = arith.constant 1 : index
    %c0_459 = arith.constant 0 : index
    %c0_460 = arith.constant 0 : index
    %375 = vector.load %arg12[%c2_457, %c1_458, %c0_459, %c0_460] : memref<10x10x8x128xf32, #tpu.memory_space<vmem>>, vector<6x6x8x128xf32>
    %376 = vector.shape_cast %375 : vector<6x6x8x128xf32> to vector<3x2x3x2x8x128xf32>
    %377 = vector.extract_strided_slice %376 {offsets = [0, 0, 0, 0, 0, 0], sizes = [3, 1, 3, 1, 8, 128], strides = [1, 1, 1, 1, 1, 1]} : vector<3x2x3x2x8x128xf32> to vector<3x1x3x1x8x128xf32>
    %378 = vector.shape_cast %377 : vector<3x1x3x1x8x128xf32> to vector<3x3x8x128xf32>
    %379 = vector.shape_cast %378 : vector<3x3x8x128xf32> to vector<72x128xf32>
    %380 = arith.truncf %379 : vector<72x128xf32> to vector<72x128xbf16>
    %c11 = arith.constant 11 : index
    %c0_461 = arith.constant 0 : index
    %c0_462 = arith.constant 0 : index
    %381 = vector.load %arg3[%c11, %c0_461, %c0_462] : memref<25x128x128xbf16, #tpu.memory_space<vmem>>, vector<1x128x128xbf16>
    %382 = vector.shape_cast %381 : vector<1x128x128xbf16> to vector<128x128xbf16>
    %cst_463 = arith.constant dense<0.000000e+00> : vector<72x128xf32>
    %383 = tpu.matmul %380, %382, %cst_463 {dimension_numbers = #tpu.dot_dimension_numbers<[1], [0], [0], [1], [0, 0, 1, 1], [], []>} : vector<72x128xbf16>, vector<128x128xbf16>, vector<72x128xf32> -> vector<72x128xf32>
    %384 = arith.addf %374, %383 : vector<72x128xf32>
    %c2_464 = arith.constant 2 : index
    %c2_465 = arith.constant 2 : index
    %c0_466 = arith.constant 0 : index
    %c0_467 = arith.constant 0 : index
    %385 = vector.load %arg12[%c2_464, %c2_465, %c0_466, %c0_467] : memref<10x10x8x128xf32, #tpu.memory_space<vmem>>, vector<6x6x8x128xf32>
    %386 = vector.shape_cast %385 : vector<6x6x8x128xf32> to vector<3x2x3x2x8x128xf32>
    %387 = vector.extract_strided_slice %386 {offsets = [0, 0, 0, 0, 0, 0], sizes = [3, 1, 3, 1, 8, 128], strides = [1, 1, 1, 1, 1, 1]} : vector<3x2x3x2x8x128xf32> to vector<3x1x3x1x8x128xf32>
    %388 = vector.shape_cast %387 : vector<3x1x3x1x8x128xf32> to vector<3x3x8x128xf32>
    %389 = vector.shape_cast %388 : vector<3x3x8x128xf32> to vector<72x128xf32>
    %390 = arith.truncf %389 : vector<72x128xf32> to vector<72x128xbf16>
    %c12 = arith.constant 12 : index
    %c0_468 = arith.constant 0 : index
    %c0_469 = arith.constant 0 : index
    %391 = vector.load %arg3[%c12, %c0_468, %c0_469] : memref<25x128x128xbf16, #tpu.memory_space<vmem>>, vector<1x128x128xbf16>
    %392 = vector.shape_cast %391 : vector<1x128x128xbf16> to vector<128x128xbf16>
    %cst_470 = arith.constant dense<0.000000e+00> : vector<72x128xf32>
    %393 = tpu.matmul %390, %392, %cst_470 {dimension_numbers = #tpu.dot_dimension_numbers<[1], [0], [0], [1], [0, 0, 1, 1], [], []>} : vector<72x128xbf16>, vector<128x128xbf16>, vector<72x128xf32> -> vector<72x128xf32>
    %394 = arith.addf %384, %393 : vector<72x128xf32>
    %c2_471 = arith.constant 2 : index
    %c3_472 = arith.constant 3 : index
    %c0_473 = arith.constant 0 : index
    %c0_474 = arith.constant 0 : index
    %395 = vector.load %arg12[%c2_471, %c3_472, %c0_473, %c0_474] : memref<10x10x8x128xf32, #tpu.memory_space<vmem>>, vector<6x6x8x128xf32>
    %396 = vector.shape_cast %395 : vector<6x6x8x128xf32> to vector<3x2x3x2x8x128xf32>
    %397 = vector.extract_strided_slice %396 {offsets = [0, 0, 0, 0, 0, 0], sizes = [3, 1, 3, 1, 8, 128], strides = [1, 1, 1, 1, 1, 1]} : vector<3x2x3x2x8x128xf32> to vector<3x1x3x1x8x128xf32>
    %398 = vector.shape_cast %397 : vector<3x1x3x1x8x128xf32> to vector<3x3x8x128xf32>
    %399 = vector.shape_cast %398 : vector<3x3x8x128xf32> to vector<72x128xf32>
    %400 = arith.truncf %399 : vector<72x128xf32> to vector<72x128xbf16>
    %c13 = arith.constant 13 : index
    %c0_475 = arith.constant 0 : index
    %c0_476 = arith.constant 0 : index
    %401 = vector.load %arg3[%c13, %c0_475, %c0_476] : memref<25x128x128xbf16, #tpu.memory_space<vmem>>, vector<1x128x128xbf16>
    %402 = vector.shape_cast %401 : vector<1x128x128xbf16> to vector<128x128xbf16>
    %cst_477 = arith.constant dense<0.000000e+00> : vector<72x128xf32>
    %403 = tpu.matmul %400, %402, %cst_477 {dimension_numbers = #tpu.dot_dimension_numbers<[1], [0], [0], [1], [0, 0, 1, 1], [], []>} : vector<72x128xbf16>, vector<128x128xbf16>, vector<72x128xf32> -> vector<72x128xf32>
    %404 = arith.addf %394, %403 : vector<72x128xf32>
    %c2_478 = arith.constant 2 : index
    %c4_479 = arith.constant 4 : index
    %c0_480 = arith.constant 0 : index
    %c0_481 = arith.constant 0 : index
    %405 = vector.load %arg12[%c2_478, %c4_479, %c0_480, %c0_481] : memref<10x10x8x128xf32, #tpu.memory_space<vmem>>, vector<6x6x8x128xf32>
    %406 = vector.shape_cast %405 : vector<6x6x8x128xf32> to vector<3x2x3x2x8x128xf32>
    %407 = vector.extract_strided_slice %406 {offsets = [0, 0, 0, 0, 0, 0], sizes = [3, 1, 3, 1, 8, 128], strides = [1, 1, 1, 1, 1, 1]} : vector<3x2x3x2x8x128xf32> to vector<3x1x3x1x8x128xf32>
    %408 = vector.shape_cast %407 : vector<3x1x3x1x8x128xf32> to vector<3x3x8x128xf32>
    %409 = vector.shape_cast %408 : vector<3x3x8x128xf32> to vector<72x128xf32>
    %410 = arith.truncf %409 : vector<72x128xf32> to vector<72x128xbf16>
    %c14 = arith.constant 14 : index
    %c0_482 = arith.constant 0 : index
    %c0_483 = arith.constant 0 : index
    %411 = vector.load %arg3[%c14, %c0_482, %c0_483] : memref<25x128x128xbf16, #tpu.memory_space<vmem>>, vector<1x128x128xbf16>
    %412 = vector.shape_cast %411 : vector<1x128x128xbf16> to vector<128x128xbf16>
    %cst_484 = arith.constant dense<0.000000e+00> : vector<72x128xf32>
    %413 = tpu.matmul %410, %412, %cst_484 {dimension_numbers = #tpu.dot_dimension_numbers<[1], [0], [0], [1], [0, 0, 1, 1], [], []>} : vector<72x128xbf16>, vector<128x128xbf16>, vector<72x128xf32> -> vector<72x128xf32>
    %414 = arith.addf %404, %413 : vector<72x128xf32>
    %c3_485 = arith.constant 3 : index
    %c0_486 = arith.constant 0 : index
    %c0_487 = arith.constant 0 : index
    %c0_488 = arith.constant 0 : index
    %415 = vector.load %arg12[%c3_485, %c0_486, %c0_487, %c0_488] : memref<10x10x8x128xf32, #tpu.memory_space<vmem>>, vector<6x6x8x128xf32>
    %416 = vector.shape_cast %415 : vector<6x6x8x128xf32> to vector<3x2x3x2x8x128xf32>
    %417 = vector.extract_strided_slice %416 {offsets = [0, 0, 0, 0, 0, 0], sizes = [3, 1, 3, 1, 8, 128], strides = [1, 1, 1, 1, 1, 1]} : vector<3x2x3x2x8x128xf32> to vector<3x1x3x1x8x128xf32>
    %418 = vector.shape_cast %417 : vector<3x1x3x1x8x128xf32> to vector<3x3x8x128xf32>
    %419 = vector.shape_cast %418 : vector<3x3x8x128xf32> to vector<72x128xf32>
    %420 = arith.truncf %419 : vector<72x128xf32> to vector<72x128xbf16>
    %c15 = arith.constant 15 : index
    %c0_489 = arith.constant 0 : index
    %c0_490 = arith.constant 0 : index
    %421 = vector.load %arg3[%c15, %c0_489, %c0_490] : memref<25x128x128xbf16, #tpu.memory_space<vmem>>, vector<1x128x128xbf16>
    %422 = vector.shape_cast %421 : vector<1x128x128xbf16> to vector<128x128xbf16>
    %cst_491 = arith.constant dense<0.000000e+00> : vector<72x128xf32>
    %423 = tpu.matmul %420, %422, %cst_491 {dimension_numbers = #tpu.dot_dimension_numbers<[1], [0], [0], [1], [0, 0, 1, 1], [], []>} : vector<72x128xbf16>, vector<128x128xbf16>, vector<72x128xf32> -> vector<72x128xf32>
    %424 = arith.addf %414, %423 : vector<72x128xf32>
    %c3_492 = arith.constant 3 : index
    %c1_493 = arith.constant 1 : index
    %c0_494 = arith.constant 0 : index
    %c0_495 = arith.constant 0 : index
    %425 = vector.load %arg12[%c3_492, %c1_493, %c0_494, %c0_495] : memref<10x10x8x128xf32, #tpu.memory_space<vmem>>, vector<6x6x8x128xf32>
    %426 = vector.shape_cast %425 : vector<6x6x8x128xf32> to vector<3x2x3x2x8x128xf32>
    %427 = vector.extract_strided_slice %426 {offsets = [0, 0, 0, 0, 0, 0], sizes = [3, 1, 3, 1, 8, 128], strides = [1, 1, 1, 1, 1, 1]} : vector<3x2x3x2x8x128xf32> to vector<3x1x3x1x8x128xf32>
    %428 = vector.shape_cast %427 : vector<3x1x3x1x8x128xf32> to vector<3x3x8x128xf32>
    %429 = vector.shape_cast %428 : vector<3x3x8x128xf32> to vector<72x128xf32>
    %430 = arith.truncf %429 : vector<72x128xf32> to vector<72x128xbf16>
    %c16 = arith.constant 16 : index
    %c0_496 = arith.constant 0 : index
    %c0_497 = arith.constant 0 : index
    %431 = vector.load %arg3[%c16, %c0_496, %c0_497] : memref<25x128x128xbf16, #tpu.memory_space<vmem>>, vector<1x128x128xbf16>
    %432 = vector.shape_cast %431 : vector<1x128x128xbf16> to vector<128x128xbf16>
    %cst_498 = arith.constant dense<0.000000e+00> : vector<72x128xf32>
    %433 = tpu.matmul %430, %432, %cst_498 {dimension_numbers = #tpu.dot_dimension_numbers<[1], [0], [0], [1], [0, 0, 1, 1], [], []>} : vector<72x128xbf16>, vector<128x128xbf16>, vector<72x128xf32> -> vector<72x128xf32>
    %434 = arith.addf %424, %433 : vector<72x128xf32>
    %c3_499 = arith.constant 3 : index
    %c2_500 = arith.constant 2 : index
    %c0_501 = arith.constant 0 : index
    %c0_502 = arith.constant 0 : index
    %435 = vector.load %arg12[%c3_499, %c2_500, %c0_501, %c0_502] : memref<10x10x8x128xf32, #tpu.memory_space<vmem>>, vector<6x6x8x128xf32>
    %436 = vector.shape_cast %435 : vector<6x6x8x128xf32> to vector<3x2x3x2x8x128xf32>
    %437 = vector.extract_strided_slice %436 {offsets = [0, 0, 0, 0, 0, 0], sizes = [3, 1, 3, 1, 8, 128], strides = [1, 1, 1, 1, 1, 1]} : vector<3x2x3x2x8x128xf32> to vector<3x1x3x1x8x128xf32>
    %438 = vector.shape_cast %437 : vector<3x1x3x1x8x128xf32> to vector<3x3x8x128xf32>
    %439 = vector.shape_cast %438 : vector<3x3x8x128xf32> to vector<72x128xf32>
    %440 = arith.truncf %439 : vector<72x128xf32> to vector<72x128xbf16>
    %c17 = arith.constant 17 : index
    %c0_503 = arith.constant 0 : index
    %c0_504 = arith.constant 0 : index
    %441 = vector.load %arg3[%c17, %c0_503, %c0_504] : memref<25x128x128xbf16, #tpu.memory_space<vmem>>, vector<1x128x128xbf16>
    %442 = vector.shape_cast %441 : vector<1x128x128xbf16> to vector<128x128xbf16>
    %cst_505 = arith.constant dense<0.000000e+00> : vector<72x128xf32>
    %443 = tpu.matmul %440, %442, %cst_505 {dimension_numbers = #tpu.dot_dimension_numbers<[1], [0], [0], [1], [0, 0, 1, 1], [], []>} : vector<72x128xbf16>, vector<128x128xbf16>, vector<72x128xf32> -> vector<72x128xf32>
    %444 = arith.addf %434, %443 : vector<72x128xf32>
    %c3_506 = arith.constant 3 : index
    %c3_507 = arith.constant 3 : index
    %c0_508 = arith.constant 0 : index
    %c0_509 = arith.constant 0 : index
    %445 = vector.load %arg12[%c3_506, %c3_507, %c0_508, %c0_509] : memref<10x10x8x128xf32, #tpu.memory_space<vmem>>, vector<6x6x8x128xf32>
    %446 = vector.shape_cast %445 : vector<6x6x8x128xf32> to vector<3x2x3x2x8x128xf32>
    %447 = vector.extract_strided_slice %446 {offsets = [0, 0, 0, 0, 0, 0], sizes = [3, 1, 3, 1, 8, 128], strides = [1, 1, 1, 1, 1, 1]} : vector<3x2x3x2x8x128xf32> to vector<3x1x3x1x8x128xf32>
    %448 = vector.shape_cast %447 : vector<3x1x3x1x8x128xf32> to vector<3x3x8x128xf32>
    %449 = vector.shape_cast %448 : vector<3x3x8x128xf32> to vector<72x128xf32>
    %450 = arith.truncf %449 : vector<72x128xf32> to vector<72x128xbf16>
    %c18 = arith.constant 18 : index
    %c0_510 = arith.constant 0 : index
    %c0_511 = arith.constant 0 : index
    %451 = vector.load %arg3[%c18, %c0_510, %c0_511] : memref<25x128x128xbf16, #tpu.memory_space<vmem>>, vector<1x128x128xbf16>
    %452 = vector.shape_cast %451 : vector<1x128x128xbf16> to vector<128x128xbf16>
    %cst_512 = arith.constant dense<0.000000e+00> : vector<72x128xf32>
    %453 = tpu.matmul %450, %452, %cst_512 {dimension_numbers = #tpu.dot_dimension_numbers<[1], [0], [0], [1], [0, 0, 1, 1], [], []>} : vector<72x128xbf16>, vector<128x128xbf16>, vector<72x128xf32> -> vector<72x128xf32>
    %454 = arith.addf %444, %453 : vector<72x128xf32>
    %c3_513 = arith.constant 3 : index
    %c4_514 = arith.constant 4 : index
    %c0_515 = arith.constant 0 : index
    %c0_516 = arith.constant 0 : index
    %455 = vector.load %arg12[%c3_513, %c4_514, %c0_515, %c0_516] : memref<10x10x8x128xf32, #tpu.memory_space<vmem>>, vector<6x6x8x128xf32>
    %456 = vector.shape_cast %455 : vector<6x6x8x128xf32> to vector<3x2x3x2x8x128xf32>
    %457 = vector.extract_strided_slice %456 {offsets = [0, 0, 0, 0, 0, 0], sizes = [3, 1, 3, 1, 8, 128], strides = [1, 1, 1, 1, 1, 1]} : vector<3x2x3x2x8x128xf32> to vector<3x1x3x1x8x128xf32>
    %458 = vector.shape_cast %457 : vector<3x1x3x1x8x128xf32> to vector<3x3x8x128xf32>
    %459 = vector.shape_cast %458 : vector<3x3x8x128xf32> to vector<72x128xf32>
    %460 = arith.truncf %459 : vector<72x128xf32> to vector<72x128xbf16>
    %c19 = arith.constant 19 : index
    %c0_517 = arith.constant 0 : index
    %c0_518 = arith.constant 0 : index
    %461 = vector.load %arg3[%c19, %c0_517, %c0_518] : memref<25x128x128xbf16, #tpu.memory_space<vmem>>, vector<1x128x128xbf16>
    %462 = vector.shape_cast %461 : vector<1x128x128xbf16> to vector<128x128xbf16>
    %cst_519 = arith.constant dense<0.000000e+00> : vector<72x128xf32>
    %463 = tpu.matmul %460, %462, %cst_519 {dimension_numbers = #tpu.dot_dimension_numbers<[1], [0], [0], [1], [0, 0, 1, 1], [], []>} : vector<72x128xbf16>, vector<128x128xbf16>, vector<72x128xf32> -> vector<72x128xf32>
    %464 = arith.addf %454, %463 : vector<72x128xf32>
    %c4_520 = arith.constant 4 : index
    %c0_521 = arith.constant 0 : index
    %c0_522 = arith.constant 0 : index
    %c0_523 = arith.constant 0 : index
    %465 = vector.load %arg12[%c4_520, %c0_521, %c0_522, %c0_523] : memref<10x10x8x128xf32, #tpu.memory_space<vmem>>, vector<6x6x8x128xf32>
    %466 = vector.shape_cast %465 : vector<6x6x8x128xf32> to vector<3x2x3x2x8x128xf32>
    %467 = vector.extract_strided_slice %466 {offsets = [0, 0, 0, 0, 0, 0], sizes = [3, 1, 3, 1, 8, 128], strides = [1, 1, 1, 1, 1, 1]} : vector<3x2x3x2x8x128xf32> to vector<3x1x3x1x8x128xf32>
    %468 = vector.shape_cast %467 : vector<3x1x3x1x8x128xf32> to vector<3x3x8x128xf32>
    %469 = vector.shape_cast %468 : vector<3x3x8x128xf32> to vector<72x128xf32>
    %470 = arith.truncf %469 : vector<72x128xf32> to vector<72x128xbf16>
    %c20 = arith.constant 20 : index
    %c0_524 = arith.constant 0 : index
    %c0_525 = arith.constant 0 : index
    %471 = vector.load %arg3[%c20, %c0_524, %c0_525] : memref<25x128x128xbf16, #tpu.memory_space<vmem>>, vector<1x128x128xbf16>
    %472 = vector.shape_cast %471 : vector<1x128x128xbf16> to vector<128x128xbf16>
    %cst_526 = arith.constant dense<0.000000e+00> : vector<72x128xf32>
    %473 = tpu.matmul %470, %472, %cst_526 {dimension_numbers = #tpu.dot_dimension_numbers<[1], [0], [0], [1], [0, 0, 1, 1], [], []>} : vector<72x128xbf16>, vector<128x128xbf16>, vector<72x128xf32> -> vector<72x128xf32>
    %474 = arith.addf %464, %473 : vector<72x128xf32>
    %c4_527 = arith.constant 4 : index
    %c1_528 = arith.constant 1 : index
    %c0_529 = arith.constant 0 : index
    %c0_530 = arith.constant 0 : index
    %475 = vector.load %arg12[%c4_527, %c1_528, %c0_529, %c0_530] : memref<10x10x8x128xf32, #tpu.memory_space<vmem>>, vector<6x6x8x128xf32>
    %476 = vector.shape_cast %475 : vector<6x6x8x128xf32> to vector<3x2x3x2x8x128xf32>
    %477 = vector.extract_strided_slice %476 {offsets = [0, 0, 0, 0, 0, 0], sizes = [3, 1, 3, 1, 8, 128], strides = [1, 1, 1, 1, 1, 1]} : vector<3x2x3x2x8x128xf32> to vector<3x1x3x1x8x128xf32>
    %478 = vector.shape_cast %477 : vector<3x1x3x1x8x128xf32> to vector<3x3x8x128xf32>
    %479 = vector.shape_cast %478 : vector<3x3x8x128xf32> to vector<72x128xf32>
    %480 = arith.truncf %479 : vector<72x128xf32> to vector<72x128xbf16>
    %c21 = arith.constant 21 : index
    %c0_531 = arith.constant 0 : index
    %c0_532 = arith.constant 0 : index
    %481 = vector.load %arg3[%c21, %c0_531, %c0_532] : memref<25x128x128xbf16, #tpu.memory_space<vmem>>, vector<1x128x128xbf16>
    %482 = vector.shape_cast %481 : vector<1x128x128xbf16> to vector<128x128xbf16>
    %cst_533 = arith.constant dense<0.000000e+00> : vector<72x128xf32>
    %483 = tpu.matmul %480, %482, %cst_533 {dimension_numbers = #tpu.dot_dimension_numbers<[1], [0], [0], [1], [0, 0, 1, 1], [], []>} : vector<72x128xbf16>, vector<128x128xbf16>, vector<72x128xf32> -> vector<72x128xf32>
    %484 = arith.addf %474, %483 : vector<72x128xf32>
    %c4_534 = arith.constant 4 : index
    %c2_535 = arith.constant 2 : index
    %c0_536 = arith.constant 0 : index
    %c0_537 = arith.constant 0 : index
    %485 = vector.load %arg12[%c4_534, %c2_535, %c0_536, %c0_537] : memref<10x10x8x128xf32, #tpu.memory_space<vmem>>, vector<6x6x8x128xf32>
    %486 = vector.shape_cast %485 : vector<6x6x8x128xf32> to vector<3x2x3x2x8x128xf32>
    %487 = vector.extract_strided_slice %486 {offsets = [0, 0, 0, 0, 0, 0], sizes = [3, 1, 3, 1, 8, 128], strides = [1, 1, 1, 1, 1, 1]} : vector<3x2x3x2x8x128xf32> to vector<3x1x3x1x8x128xf32>
    %488 = vector.shape_cast %487 : vector<3x1x3x1x8x128xf32> to vector<3x3x8x128xf32>
    %489 = vector.shape_cast %488 : vector<3x3x8x128xf32> to vector<72x128xf32>
    %490 = arith.truncf %489 : vector<72x128xf32> to vector<72x128xbf16>
    %c22 = arith.constant 22 : index
    %c0_538 = arith.constant 0 : index
    %c0_539 = arith.constant 0 : index
    %491 = vector.load %arg3[%c22, %c0_538, %c0_539] : memref<25x128x128xbf16, #tpu.memory_space<vmem>>, vector<1x128x128xbf16>
    %492 = vector.shape_cast %491 : vector<1x128x128xbf16> to vector<128x128xbf16>
    %cst_540 = arith.constant dense<0.000000e+00> : vector<72x128xf32>
    %493 = tpu.matmul %490, %492, %cst_540 {dimension_numbers = #tpu.dot_dimension_numbers<[1], [0], [0], [1], [0, 0, 1, 1], [], []>} : vector<72x128xbf16>, vector<128x128xbf16>, vector<72x128xf32> -> vector<72x128xf32>
    %494 = arith.addf %484, %493 : vector<72x128xf32>
    %c4_541 = arith.constant 4 : index
    %c3_542 = arith.constant 3 : index
    %c0_543 = arith.constant 0 : index
    %c0_544 = arith.constant 0 : index
    %495 = vector.load %arg12[%c4_541, %c3_542, %c0_543, %c0_544] : memref<10x10x8x128xf32, #tpu.memory_space<vmem>>, vector<6x6x8x128xf32>
    %496 = vector.shape_cast %495 : vector<6x6x8x128xf32> to vector<3x2x3x2x8x128xf32>
    %497 = vector.extract_strided_slice %496 {offsets = [0, 0, 0, 0, 0, 0], sizes = [3, 1, 3, 1, 8, 128], strides = [1, 1, 1, 1, 1, 1]} : vector<3x2x3x2x8x128xf32> to vector<3x1x3x1x8x128xf32>
    %498 = vector.shape_cast %497 : vector<3x1x3x1x8x128xf32> to vector<3x3x8x128xf32>
    %499 = vector.shape_cast %498 : vector<3x3x8x128xf32> to vector<72x128xf32>
    %500 = arith.truncf %499 : vector<72x128xf32> to vector<72x128xbf16>
    %c23 = arith.constant 23 : index
    %c0_545 = arith.constant 0 : index
    %c0_546 = arith.constant 0 : index
    %501 = vector.load %arg3[%c23, %c0_545, %c0_546] : memref<25x128x128xbf16, #tpu.memory_space<vmem>>, vector<1x128x128xbf16>
    %502 = vector.shape_cast %501 : vector<1x128x128xbf16> to vector<128x128xbf16>
    %cst_547 = arith.constant dense<0.000000e+00> : vector<72x128xf32>
    %503 = tpu.matmul %500, %502, %cst_547 {dimension_numbers = #tpu.dot_dimension_numbers<[1], [0], [0], [1], [0, 0, 1, 1], [], []>} : vector<72x128xbf16>, vector<128x128xbf16>, vector<72x128xf32> -> vector<72x128xf32>
    %504 = arith.addf %494, %503 : vector<72x128xf32>
    %c4_548 = arith.constant 4 : index
    %c4_549 = arith.constant 4 : index
    %c0_550 = arith.constant 0 : index
    %c0_551 = arith.constant 0 : index
    %505 = vector.load %arg12[%c4_548, %c4_549, %c0_550, %c0_551] : memref<10x10x8x128xf32, #tpu.memory_space<vmem>>, vector<6x6x8x128xf32>
    %506 = vector.shape_cast %505 : vector<6x6x8x128xf32> to vector<3x2x3x2x8x128xf32>
    %507 = vector.extract_strided_slice %506 {offsets = [0, 0, 0, 0, 0, 0], sizes = [3, 1, 3, 1, 8, 128], strides = [1, 1, 1, 1, 1, 1]} : vector<3x2x3x2x8x128xf32> to vector<3x1x3x1x8x128xf32>
    %508 = vector.shape_cast %507 : vector<3x1x3x1x8x128xf32> to vector<3x3x8x128xf32>
    %509 = vector.shape_cast %508 : vector<3x3x8x128xf32> to vector<72x128xf32>
    %510 = arith.truncf %509 : vector<72x128xf32> to vector<72x128xbf16>
    %c24 = arith.constant 24 : index
    %c0_552 = arith.constant 0 : index
    %c0_553 = arith.constant 0 : index
    %511 = vector.load %arg3[%c24, %c0_552, %c0_553] : memref<25x128x128xbf16, #tpu.memory_space<vmem>>, vector<1x128x128xbf16>
    %512 = vector.shape_cast %511 : vector<1x128x128xbf16> to vector<128x128xbf16>
    %cst_554 = arith.constant dense<0.000000e+00> : vector<72x128xf32>
    %513 = tpu.matmul %510, %512, %cst_554 {dimension_numbers = #tpu.dot_dimension_numbers<[1], [0], [0], [1], [0, 0, 1, 1], [], []>} : vector<72x128xbf16>, vector<128x128xbf16>, vector<72x128xf32> -> vector<72x128xf32>
    %514 = arith.addf %504, %513 : vector<72x128xf32>
    %c0_555 = arith.constant 0 : index
    %c0_556 = arith.constant 0 : index
    %515 = vector.load %arg4[%c0_555, %c0_556] : memref<1x128xf32, #tpu.memory_space<vmem>>, vector<1x128xf32>
    %516 = vector.broadcast %515 : vector<1x128xf32> to vector<72x128xf32>
    %517 = arith.addf %514, %516 : vector<72x128xf32>
    %cst_557 = arith.constant 0.000000e+00 : f32
    %518 = vector.broadcast %cst_557 : f32 to vector<72x128xf32>
    %519 = arith.maximumf %517, %518 : vector<72x128xf32>
    %520 = vector.shape_cast %519 : vector<72x128xf32> to vector<3x3x8x128xf32>
    %c1_558 = arith.constant 1 : index
    %c1_559 = arith.constant 1 : index
    %c0_560 = arith.constant 0 : index
    %c0_561 = arith.constant 0 : index
    %521 = vector.load %arg13[%c1_558, %c1_559, %c0_560, %c0_561] : memref<6x6x8x128xf32, #tpu.memory_space<vmem>>, vector<3x3x8x128xf32>
    tpu.vector_store %arg13[%c1_558, %c1_559, %c0_560, %c0_561], %520 {strides = array<i32>} : memref<6x6x8x128xf32, #tpu.memory_space<vmem>>, vector<3x3x8x128xf32>,
    %c0_562 = arith.constant 0 : index
    %c0_563 = arith.constant 0 : index
    %c0_564 = arith.constant 0 : index
    %c0_565 = arith.constant 0 : index
    %522 = vector.load %arg13[%c0_562, %c0_563, %c0_564, %c0_565] : memref<6x6x8x128xf32, #tpu.memory_space<vmem>>, vector<4x4x8x128xf32>
    %523 = vector.shape_cast %522 : vector<4x4x8x128xf32> to vector<2x2x2x2x8x128xf32>
    %524 = vector.extract_strided_slice %523 {offsets = [0, 0, 0, 0, 0, 0], sizes = [2, 1, 2, 1, 8, 128], strides = [1, 1, 1, 1, 1, 1]} : vector<2x2x2x2x8x128xf32> to vector<2x1x2x1x8x128xf32>
    %525 = vector.shape_cast %524 : vector<2x1x2x1x8x128xf32> to vector<2x2x8x128xf32>
    %c0_566 = arith.constant 0 : index
    %c1_567 = arith.constant 1 : index
    %c0_568 = arith.constant 0 : index
    %c0_569 = arith.constant 0 : index
    %526 = vector.load %arg13[%c0_566, %c1_567, %c0_568, %c0_569] : memref<6x6x8x128xf32, #tpu.memory_space<vmem>>, vector<4x4x8x128xf32>
    %527 = vector.shape_cast %526 : vector<4x4x8x128xf32> to vector<2x2x2x2x8x128xf32>
    %528 = vector.extract_strided_slice %527 {offsets = [0, 0, 0, 0, 0, 0], sizes = [2, 1, 2, 1, 8, 128], strides = [1, 1, 1, 1, 1, 1]} : vector<2x2x2x2x8x128xf32> to vector<2x1x2x1x8x128xf32>
    %529 = vector.shape_cast %528 : vector<2x1x2x1x8x128xf32> to vector<2x2x8x128xf32>
    %530 = arith.maximumf %525, %529 : vector<2x2x8x128xf32>
    %c0_570 = arith.constant 0 : index
    %c2_571 = arith.constant 2 : index
    %c0_572 = arith.constant 0 : index
    %c0_573 = arith.constant 0 : index
    %531 = vector.load %arg13[%c0_570, %c2_571, %c0_572, %c0_573] : memref<6x6x8x128xf32, #tpu.memory_space<vmem>>, vector<4x4x8x128xf32>
    %532 = vector.shape_cast %531 : vector<4x4x8x128xf32> to vector<2x2x2x2x8x128xf32>
    %533 = vector.extract_strided_slice %532 {offsets = [0, 0, 0, 0, 0, 0], sizes = [2, 1, 2, 1, 8, 128], strides = [1, 1, 1, 1, 1, 1]} : vector<2x2x2x2x8x128xf32> to vector<2x1x2x1x8x128xf32>
    %534 = vector.shape_cast %533 : vector<2x1x2x1x8x128xf32> to vector<2x2x8x128xf32>
    %535 = arith.maximumf %530, %534 : vector<2x2x8x128xf32>
    %c1_574 = arith.constant 1 : index
    %c0_575 = arith.constant 0 : index
    %c0_576 = arith.constant 0 : index
    %c0_577 = arith.constant 0 : index
    %536 = vector.load %arg13[%c1_574, %c0_575, %c0_576, %c0_577] : memref<6x6x8x128xf32, #tpu.memory_space<vmem>>, vector<4x4x8x128xf32>
    %537 = vector.shape_cast %536 : vector<4x4x8x128xf32> to vector<2x2x2x2x8x128xf32>
    %538 = vector.extract_strided_slice %537 {offsets = [0, 0, 0, 0, 0, 0], sizes = [2, 1, 2, 1, 8, 128], strides = [1, 1, 1, 1, 1, 1]} : vector<2x2x2x2x8x128xf32> to vector<2x1x2x1x8x128xf32>
    %539 = vector.shape_cast %538 : vector<2x1x2x1x8x128xf32> to vector<2x2x8x128xf32>
    %540 = arith.maximumf %535, %539 : vector<2x2x8x128xf32>
    %c1_578 = arith.constant 1 : index
    %c1_579 = arith.constant 1 : index
    %c0_580 = arith.constant 0 : index
    %c0_581 = arith.constant 0 : index
    %541 = vector.load %arg13[%c1_578, %c1_579, %c0_580, %c0_581] : memref<6x6x8x128xf32, #tpu.memory_space<vmem>>, vector<4x4x8x128xf32>
    %542 = vector.shape_cast %541 : vector<4x4x8x128xf32> to vector<2x2x2x2x8x128xf32>
    %543 = vector.extract_strided_slice %542 {offsets = [0, 0, 0, 0, 0, 0], sizes = [2, 1, 2, 1, 8, 128], strides = [1, 1, 1, 1, 1, 1]} : vector<2x2x2x2x8x128xf32> to vector<2x1x2x1x8x128xf32>
    %544 = vector.shape_cast %543 : vector<2x1x2x1x8x128xf32> to vector<2x2x8x128xf32>
    %545 = arith.maximumf %540, %544 : vector<2x2x8x128xf32>
    %c1_582 = arith.constant 1 : index
    %c2_583 = arith.constant 2 : index
    %c0_584 = arith.constant 0 : index
    %c0_585 = arith.constant 0 : index
    %546 = vector.load %arg13[%c1_582, %c2_583, %c0_584, %c0_585] : memref<6x6x8x128xf32, #tpu.memory_space<vmem>>, vector<4x4x8x128xf32>
    %547 = vector.shape_cast %546 : vector<4x4x8x128xf32> to vector<2x2x2x2x8x128xf32>
    %548 = vector.extract_strided_slice %547 {offsets = [0, 0, 0, 0, 0, 0], sizes = [2, 1, 2, 1, 8, 128], strides = [1, 1, 1, 1, 1, 1]} : vector<2x2x2x2x8x128xf32> to vector<2x1x2x1x8x128xf32>
    %549 = vector.shape_cast %548 : vector<2x1x2x1x8x128xf32> to vector<2x2x8x128xf32>
    %550 = arith.maximumf %545, %549 : vector<2x2x8x128xf32>
    %c2_586 = arith.constant 2 : index
    %c0_587 = arith.constant 0 : index
    %c0_588 = arith.constant 0 : index
    %c0_589 = arith.constant 0 : index
    %551 = vector.load %arg13[%c2_586, %c0_587, %c0_588, %c0_589] : memref<6x6x8x128xf32, #tpu.memory_space<vmem>>, vector<4x4x8x128xf32>
    %552 = vector.shape_cast %551 : vector<4x4x8x128xf32> to vector<2x2x2x2x8x128xf32>
    %553 = vector.extract_strided_slice %552 {offsets = [0, 0, 0, 0, 0, 0], sizes = [2, 1, 2, 1, 8, 128], strides = [1, 1, 1, 1, 1, 1]} : vector<2x2x2x2x8x128xf32> to vector<2x1x2x1x8x128xf32>
    %554 = vector.shape_cast %553 : vector<2x1x2x1x8x128xf32> to vector<2x2x8x128xf32>
    %555 = arith.maximumf %550, %554 : vector<2x2x8x128xf32>
    %c2_590 = arith.constant 2 : index
    %c1_591 = arith.constant 1 : index
    %c0_592 = arith.constant 0 : index
    %c0_593 = arith.constant 0 : index
    %556 = vector.load %arg13[%c2_590, %c1_591, %c0_592, %c0_593] : memref<6x6x8x128xf32, #tpu.memory_space<vmem>>, vector<4x4x8x128xf32>
    %557 = vector.shape_cast %556 : vector<4x4x8x128xf32> to vector<2x2x2x2x8x128xf32>
    %558 = vector.extract_strided_slice %557 {offsets = [0, 0, 0, 0, 0, 0], sizes = [2, 1, 2, 1, 8, 128], strides = [1, 1, 1, 1, 1, 1]} : vector<2x2x2x2x8x128xf32> to vector<2x1x2x1x8x128xf32>
    %559 = vector.shape_cast %558 : vector<2x1x2x1x8x128xf32> to vector<2x2x8x128xf32>
    %560 = arith.maximumf %555, %559 : vector<2x2x8x128xf32>
    %c2_594 = arith.constant 2 : index
    %c2_595 = arith.constant 2 : index
    %c0_596 = arith.constant 0 : index
    %c0_597 = arith.constant 0 : index
    %561 = vector.load %arg13[%c2_594, %c2_595, %c0_596, %c0_597] : memref<6x6x8x128xf32, #tpu.memory_space<vmem>>, vector<4x4x8x128xf32>
    %562 = vector.shape_cast %561 : vector<4x4x8x128xf32> to vector<2x2x2x2x8x128xf32>
    %563 = vector.extract_strided_slice %562 {offsets = [0, 0, 0, 0, 0, 0], sizes = [2, 1, 2, 1, 8, 128], strides = [1, 1, 1, 1, 1, 1]} : vector<2x2x2x2x8x128xf32> to vector<2x1x2x1x8x128xf32>
    %564 = vector.shape_cast %563 : vector<2x1x2x1x8x128xf32> to vector<2x2x8x128xf32>
    %565 = arith.maximumf %560, %564 : vector<2x2x8x128xf32>
    %c1_598 = arith.constant 1 : index
    %c1_599 = arith.constant 1 : index
    %c0_600 = arith.constant 0 : index
    %c0_601 = arith.constant 0 : index
    %566 = vector.load %arg14[%c1_598, %c1_599, %c0_600, %c0_601] : memref<4x4x8x128xf32, #tpu.memory_space<vmem>>, vector<2x2x8x128xf32>
    tpu.vector_store %arg14[%c1_598, %c1_599, %c0_600, %c0_601], %565 {strides = array<i32>} : memref<4x4x8x128xf32, #tpu.memory_space<vmem>>, vector<2x2x8x128xf32>,
    %cst_602 = arith.constant 0.000000e+00 : f32
    %567 = vector.broadcast %cst_602 : f32 to vector<8x128xf32>
    %c0_603 = arith.constant 0 : index
    %c0_604 = arith.constant 0 : index
    %c0_605 = arith.constant 0 : index
    %c0_606 = arith.constant 0 : index
    %568 = vector.load %arg14[%c0_603, %c0_604, %c0_605, %c0_606] : memref<4x4x8x128xf32, #tpu.memory_space<vmem>>, vector<2x2x8x128xf32>
    %569 = vector.shape_cast %568 : vector<2x2x8x128xf32> to vector<1x2x1x2x8x128xf32>
    %570 = vector.extract_strided_slice %569 {offsets = [0, 0, 0, 0, 0, 0], sizes = [1, 1, 1, 1, 8, 128], strides = [1, 1, 1, 1, 1, 1]} : vector<1x2x1x2x8x128xf32> to vector<1x1x1x1x8x128xf32>
    %571 = vector.shape_cast %570 : vector<1x1x1x1x8x128xf32> to vector<1x1x8x128xf32>
    %572 = vector.shape_cast %571 : vector<1x1x8x128xf32> to vector<8x128xf32>
    %573 = arith.truncf %572 : vector<8x128xf32> to vector<8x128xbf16>
    %c0_607 = arith.constant 0 : index
    %c0_608 = arith.constant 0 : index
    %c0_609 = arith.constant 0 : index
    %574 = vector.load %arg5[%c0_607, %c0_608, %c0_609] : memref<9x128x128xbf16, #tpu.memory_space<vmem>>, vector<1x128x128xbf16>
    %575 = vector.shape_cast %574 : vector<1x128x128xbf16> to vector<128x128xbf16>
    %cst_610 = arith.constant dense<0.000000e+00> : vector<8x128xf32>
    %576 = tpu.matmul %573, %575, %cst_610 {dimension_numbers = #tpu.dot_dimension_numbers<[1], [0], [0], [1], [0, 0, 1, 1], [], []>} : vector<8x128xbf16>, vector<128x128xbf16>, vector<8x128xf32> -> vector<8x128xf32>
    %577 = arith.addf %567, %576 : vector<8x128xf32>
    %c0_611 = arith.constant 0 : index
    %c1_612 = arith.constant 1 : index
    %c0_613 = arith.constant 0 : index
    %c0_614 = arith.constant 0 : index
    %578 = vector.load %arg14[%c0_611, %c1_612, %c0_613, %c0_614] : memref<4x4x8x128xf32, #tpu.memory_space<vmem>>, vector<2x2x8x128xf32>
    %579 = vector.shape_cast %578 : vector<2x2x8x128xf32> to vector<1x2x1x2x8x128xf32>
    %580 = vector.extract_strided_slice %579 {offsets = [0, 0, 0, 0, 0, 0], sizes = [1, 1, 1, 1, 8, 128], strides = [1, 1, 1, 1, 1, 1]} : vector<1x2x1x2x8x128xf32> to vector<1x1x1x1x8x128xf32>
    %581 = vector.shape_cast %580 : vector<1x1x1x1x8x128xf32> to vector<1x1x8x128xf32>
    %582 = vector.shape_cast %581 : vector<1x1x8x128xf32> to vector<8x128xf32>
    %583 = arith.truncf %582 : vector<8x128xf32> to vector<8x128xbf16>
    %c1_615 = arith.constant 1 : index
    %c0_616 = arith.constant 0 : index
    %c0_617 = arith.constant 0 : index
    %584 = vector.load %arg5[%c1_615, %c0_616, %c0_617] : memref<9x128x128xbf16, #tpu.memory_space<vmem>>, vector<1x128x128xbf16>
    %585 = vector.shape_cast %584 : vector<1x128x128xbf16> to vector<128x128xbf16>
    %cst_618 = arith.constant dense<0.000000e+00> : vector<8x128xf32>
    %586 = tpu.matmul %583, %585, %cst_618 {dimension_numbers = #tpu.dot_dimension_numbers<[1], [0], [0], [1], [0, 0, 1, 1], [], []>} : vector<8x128xbf16>, vector<128x128xbf16>, vector<8x128xf32> -> vector<8x128xf32>
    %587 = arith.addf %577, %586 : vector<8x128xf32>
    %c0_619 = arith.constant 0 : index
    %c2_620 = arith.constant 2 : index
    %c0_621 = arith.constant 0 : index
    %c0_622 = arith.constant 0 : index
    %588 = vector.load %arg14[%c0_619, %c2_620, %c0_621, %c0_622] : memref<4x4x8x128xf32, #tpu.memory_space<vmem>>, vector<2x2x8x128xf32>
    %589 = vector.shape_cast %588 : vector<2x2x8x128xf32> to vector<1x2x1x2x8x128xf32>
    %590 = vector.extract_strided_slice %589 {offsets = [0, 0, 0, 0, 0, 0], sizes = [1, 1, 1, 1, 8, 128], strides = [1, 1, 1, 1, 1, 1]} : vector<1x2x1x2x8x128xf32> to vector<1x1x1x1x8x128xf32>
    %591 = vector.shape_cast %590 : vector<1x1x1x1x8x128xf32> to vector<1x1x8x128xf32>
    %592 = vector.shape_cast %591 : vector<1x1x8x128xf32> to vector<8x128xf32>
    %593 = arith.truncf %592 : vector<8x128xf32> to vector<8x128xbf16>
    %c2_623 = arith.constant 2 : index
    %c0_624 = arith.constant 0 : index
    %c0_625 = arith.constant 0 : index
    %594 = vector.load %arg5[%c2_623, %c0_624, %c0_625] : memref<9x128x128xbf16, #tpu.memory_space<vmem>>, vector<1x128x128xbf16>
    %595 = vector.shape_cast %594 : vector<1x128x128xbf16> to vector<128x128xbf16>
    %cst_626 = arith.constant dense<0.000000e+00> : vector<8x128xf32>
    %596 = tpu.matmul %593, %595, %cst_626 {dimension_numbers = #tpu.dot_dimension_numbers<[1], [0], [0], [1], [0, 0, 1, 1], [], []>} : vector<8x128xbf16>, vector<128x128xbf16>, vector<8x128xf32> -> vector<8x128xf32>
    %597 = arith.addf %587, %596 : vector<8x128xf32>
    %c1_627 = arith.constant 1 : index
    %c0_628 = arith.constant 0 : index
    %c0_629 = arith.constant 0 : index
    %c0_630 = arith.constant 0 : index
    %598 = vector.load %arg14[%c1_627, %c0_628, %c0_629, %c0_630] : memref<4x4x8x128xf32, #tpu.memory_space<vmem>>, vector<2x2x8x128xf32>
    %599 = vector.shape_cast %598 : vector<2x2x8x128xf32> to vector<1x2x1x2x8x128xf32>
    %600 = vector.extract_strided_slice %599 {offsets = [0, 0, 0, 0, 0, 0], sizes = [1, 1, 1, 1, 8, 128], strides = [1, 1, 1, 1, 1, 1]} : vector<1x2x1x2x8x128xf32> to vector<1x1x1x1x8x128xf32>
    %601 = vector.shape_cast %600 : vector<1x1x1x1x8x128xf32> to vector<1x1x8x128xf32>
    %602 = vector.shape_cast %601 : vector<1x1x8x128xf32> to vector<8x128xf32>
    %603 = arith.truncf %602 : vector<8x128xf32> to vector<8x128xbf16>
    %c3_631 = arith.constant 3 : index
    %c0_632 = arith.constant 0 : index
    %c0_633 = arith.constant 0 : index
    %604 = vector.load %arg5[%c3_631, %c0_632, %c0_633] : memref<9x128x128xbf16, #tpu.memory_space<vmem>>, vector<1x128x128xbf16>
    %605 = vector.shape_cast %604 : vector<1x128x128xbf16> to vector<128x128xbf16>
    %cst_634 = arith.constant dense<0.000000e+00> : vector<8x128xf32>
    %606 = tpu.matmul %603, %605, %cst_634 {dimension_numbers = #tpu.dot_dimension_numbers<[1], [0], [0], [1], [0, 0, 1, 1], [], []>} : vector<8x128xbf16>, vector<128x128xbf16>, vector<8x128xf32> -> vector<8x128xf32>
    %607 = arith.addf %597, %606 : vector<8x128xf32>
    %c1_635 = arith.constant 1 : index
    %c1_636 = arith.constant 1 : index
    %c0_637 = arith.constant 0 : index
    %c0_638 = arith.constant 0 : index
    %608 = vector.load %arg14[%c1_635, %c1_636, %c0_637, %c0_638] : memref<4x4x8x128xf32, #tpu.memory_space<vmem>>, vector<2x2x8x128xf32>
    %609 = vector.shape_cast %608 : vector<2x2x8x128xf32> to vector<1x2x1x2x8x128xf32>
    %610 = vector.extract_strided_slice %609 {offsets = [0, 0, 0, 0, 0, 0], sizes = [1, 1, 1, 1, 8, 128], strides = [1, 1, 1, 1, 1, 1]} : vector<1x2x1x2x8x128xf32> to vector<1x1x1x1x8x128xf32>
    %611 = vector.shape_cast %610 : vector<1x1x1x1x8x128xf32> to vector<1x1x8x128xf32>
    %612 = vector.shape_cast %611 : vector<1x1x8x128xf32> to vector<8x128xf32>
    %613 = arith.truncf %612 : vector<8x128xf32> to vector<8x128xbf16>
    %c4_639 = arith.constant 4 : index
    %c0_640 = arith.constant 0 : index
    %c0_641 = arith.constant 0 : index
    %614 = vector.load %arg5[%c4_639, %c0_640, %c0_641] : memref<9x128x128xbf16, #tpu.memory_space<vmem>>, vector<1x128x128xbf16>
    %615 = vector.shape_cast %614 : vector<1x128x128xbf16> to vector<128x128xbf16>
    %cst_642 = arith.constant dense<0.000000e+00> : vector<8x128xf32>
    %616 = tpu.matmul %613, %615, %cst_642 {dimension_numbers = #tpu.dot_dimension_numbers<[1], [0], [0], [1], [0, 0, 1, 1], [], []>} : vector<8x128xbf16>, vector<128x128xbf16>, vector<8x128xf32> -> vector<8x128xf32>
    %617 = arith.addf %607, %616 : vector<8x128xf32>
    %c1_643 = arith.constant 1 : index
    %c2_644 = arith.constant 2 : index
    %c0_645 = arith.constant 0 : index
    %c0_646 = arith.constant 0 : index
    %618 = vector.load %arg14[%c1_643, %c2_644, %c0_645, %c0_646] : memref<4x4x8x128xf32, #tpu.memory_space<vmem>>, vector<2x2x8x128xf32>
    %619 = vector.shape_cast %618 : vector<2x2x8x128xf32> to vector<1x2x1x2x8x128xf32>
    %620 = vector.extract_strided_slice %619 {offsets = [0, 0, 0, 0, 0, 0], sizes = [1, 1, 1, 1, 8, 128], strides = [1, 1, 1, 1, 1, 1]} : vector<1x2x1x2x8x128xf32> to vector<1x1x1x1x8x128xf32>
    %621 = vector.shape_cast %620 : vector<1x1x1x1x8x128xf32> to vector<1x1x8x128xf32>
    %622 = vector.shape_cast %621 : vector<1x1x8x128xf32> to vector<8x128xf32>
    %623 = arith.truncf %622 : vector<8x128xf32> to vector<8x128xbf16>
    %c5_647 = arith.constant 5 : index
    %c0_648 = arith.constant 0 : index
    %c0_649 = arith.constant 0 : index
    %624 = vector.load %arg5[%c5_647, %c0_648, %c0_649] : memref<9x128x128xbf16, #tpu.memory_space<vmem>>, vector<1x128x128xbf16>
    %625 = vector.shape_cast %624 : vector<1x128x128xbf16> to vector<128x128xbf16>
    %cst_650 = arith.constant dense<0.000000e+00> : vector<8x128xf32>
    %626 = tpu.matmul %623, %625, %cst_650 {dimension_numbers = #tpu.dot_dimension_numbers<[1], [0], [0], [1], [0, 0, 1, 1], [], []>} : vector<8x128xbf16>, vector<128x128xbf16>, vector<8x128xf32> -> vector<8x128xf32>
    %627 = arith.addf %617, %626 : vector<8x128xf32>
    %c2_651 = arith.constant 2 : index
    %c0_652 = arith.constant 0 : index
    %c0_653 = arith.constant 0 : index
    %c0_654 = arith.constant 0 : index
    %628 = vector.load %arg14[%c2_651, %c0_652, %c0_653, %c0_654] : memref<4x4x8x128xf32, #tpu.memory_space<vmem>>, vector<2x2x8x128xf32>
    %629 = vector.shape_cast %628 : vector<2x2x8x128xf32> to vector<1x2x1x2x8x128xf32>
    %630 = vector.extract_strided_slice %629 {offsets = [0, 0, 0, 0, 0, 0], sizes = [1, 1, 1, 1, 8, 128], strides = [1, 1, 1, 1, 1, 1]} : vector<1x2x1x2x8x128xf32> to vector<1x1x1x1x8x128xf32>
    %631 = vector.shape_cast %630 : vector<1x1x1x1x8x128xf32> to vector<1x1x8x128xf32>
    %632 = vector.shape_cast %631 : vector<1x1x8x128xf32> to vector<8x128xf32>
    %633 = arith.truncf %632 : vector<8x128xf32> to vector<8x128xbf16>
    %c6_655 = arith.constant 6 : index
    %c0_656 = arith.constant 0 : index
    %c0_657 = arith.constant 0 : index
    %634 = vector.load %arg5[%c6_655, %c0_656, %c0_657] : memref<9x128x128xbf16, #tpu.memory_space<vmem>>, vector<1x128x128xbf16>
    %635 = vector.shape_cast %634 : vector<1x128x128xbf16> to vector<128x128xbf16>
    %cst_658 = arith.constant dense<0.000000e+00> : vector<8x128xf32>
    %636 = tpu.matmul %633, %635, %cst_658 {dimension_numbers = #tpu.dot_dimension_numbers<[1], [0], [0], [1], [0, 0, 1, 1], [], []>} : vector<8x128xbf16>, vector<128x128xbf16>, vector<8x128xf32> -> vector<8x128xf32>
    %637 = arith.addf %627, %636 : vector<8x128xf32>
    %c2_659 = arith.constant 2 : index
    %c1_660 = arith.constant 1 : index
    %c0_661 = arith.constant 0 : index
    %c0_662 = arith.constant 0 : index
    %638 = vector.load %arg14[%c2_659, %c1_660, %c0_661, %c0_662] : memref<4x4x8x128xf32, #tpu.memory_space<vmem>>, vector<2x2x8x128xf32>
    %639 = vector.shape_cast %638 : vector<2x2x8x128xf32> to vector<1x2x1x2x8x128xf32>
    %640 = vector.extract_strided_slice %639 {offsets = [0, 0, 0, 0, 0, 0], sizes = [1, 1, 1, 1, 8, 128], strides = [1, 1, 1, 1, 1, 1]} : vector<1x2x1x2x8x128xf32> to vector<1x1x1x1x8x128xf32>
    %641 = vector.shape_cast %640 : vector<1x1x1x1x8x128xf32> to vector<1x1x8x128xf32>
    %642 = vector.shape_cast %641 : vector<1x1x8x128xf32> to vector<8x128xf32>
    %643 = arith.truncf %642 : vector<8x128xf32> to vector<8x128xbf16>
    %c7_663 = arith.constant 7 : index
    %c0_664 = arith.constant 0 : index
    %c0_665 = arith.constant 0 : index
    %644 = vector.load %arg5[%c7_663, %c0_664, %c0_665] : memref<9x128x128xbf16, #tpu.memory_space<vmem>>, vector<1x128x128xbf16>
    %645 = vector.shape_cast %644 : vector<1x128x128xbf16> to vector<128x128xbf16>
    %cst_666 = arith.constant dense<0.000000e+00> : vector<8x128xf32>
    %646 = tpu.matmul %643, %645, %cst_666 {dimension_numbers = #tpu.dot_dimension_numbers<[1], [0], [0], [1], [0, 0, 1, 1], [], []>} : vector<8x128xbf16>, vector<128x128xbf16>, vector<8x128xf32> -> vector<8x128xf32>
    %647 = arith.addf %637, %646 : vector<8x128xf32>
    %c2_667 = arith.constant 2 : index
    %c2_668 = arith.constant 2 : index
    %c0_669 = arith.constant 0 : index
    %c0_670 = arith.constant 0 : index
    %648 = vector.load %arg14[%c2_667, %c2_668, %c0_669, %c0_670] : memref<4x4x8x128xf32, #tpu.memory_space<vmem>>, vector<2x2x8x128xf32>
    %649 = vector.shape_cast %648 : vector<2x2x8x128xf32> to vector<1x2x1x2x8x128xf32>
    %650 = vector.extract_strided_slice %649 {offsets = [0, 0, 0, 0, 0, 0], sizes = [1, 1, 1, 1, 8, 128], strides = [1, 1, 1, 1, 1, 1]} : vector<1x2x1x2x8x128xf32> to vector<1x1x1x1x8x128xf32>
    %651 = vector.shape_cast %650 : vector<1x1x1x1x8x128xf32> to vector<1x1x8x128xf32>
    %652 = vector.shape_cast %651 : vector<1x1x8x128xf32> to vector<8x128xf32>
    %653 = arith.truncf %652 : vector<8x128xf32> to vector<8x128xbf16>
    %c8_671 = arith.constant 8 : index
    %c0_672 = arith.constant 0 : index
    %c0_673 = arith.constant 0 : index
    %654 = vector.load %arg5[%c8_671, %c0_672, %c0_673] : memref<9x128x128xbf16, #tpu.memory_space<vmem>>, vector<1x128x128xbf16>
    %655 = vector.shape_cast %654 : vector<1x128x128xbf16> to vector<128x128xbf16>
    %cst_674 = arith.constant dense<0.000000e+00> : vector<8x128xf32>
    %656 = tpu.matmul %653, %655, %cst_674 {dimension_numbers = #tpu.dot_dimension_numbers<[1], [0], [0], [1], [0, 0, 1, 1], [], []>} : vector<8x128xbf16>, vector<128x128xbf16>, vector<8x128xf32> -> vector<8x128xf32>
    %657 = arith.addf %647, %656 : vector<8x128xf32>
    %c0_675 = arith.constant 0 : index
    %c0_676 = arith.constant 0 : index
    %658 = vector.load %arg6[%c0_675, %c0_676] : memref<1x128xf32, #tpu.memory_space<vmem>>, vector<1x128xf32>
    %659 = vector.broadcast %658 : vector<1x128xf32> to vector<8x128xf32>
    %660 = arith.addf %657, %659 : vector<8x128xf32>
    %cst_677 = arith.constant 0.000000e+00 : f32
    %661 = vector.broadcast %cst_677 : f32 to vector<8x128xf32>
    %662 = arith.maximumf %660, %661 : vector<8x128xf32>
    %663 = vector.shape_cast %662 : vector<8x128xf32> to vector<1x1x8x128xf32>
    %c1_678 = arith.constant 1 : index
    %c1_679 = arith.constant 1 : index
    %c0_680 = arith.constant 0 : index
    %c0_681 = arith.constant 0 : index
    %664 = vector.load %arg15[%c1_678, %c1_679, %c0_680, %c0_681] : memref<3x3x8x128xf32, #tpu.memory_space<vmem>>, vector<1x1x8x128xf32>
    tpu.vector_store %arg15[%c1_678, %c1_679, %c0_680, %c0_681], %663 {strides = array<i32>} : memref<3x3x8x128xf32, #tpu.memory_space<vmem>>, vector<1x1x8x128xf32>,
    %c0_682 = arith.constant 0 : index
    %c0_683 = arith.constant 0 : index
    %c0_684 = arith.constant 0 : index
    %c0_685 = arith.constant 0 : index
    %665 = vector.load %arg15[%c0_682, %c0_683, %c0_684, %c0_685] : memref<3x3x8x128xf32, #tpu.memory_space<vmem>>, vector<3x3x8x128xf32>
    %666 = vector.shape_cast %665 : vector<3x3x8x128xf32> to vector<72x128xf32>
    %667 = arith.truncf %666 : vector<72x128xf32> to vector<72x128xbf16>
    %c0_686 = arith.constant 0 : index
    %c0_687 = arith.constant 0 : index
    %c0_688 = arith.constant 0 : index
    %668 = vector.load %arg7[%c0_686, %c0_687, %c0_688] : memref<1x128x128xbf16, #tpu.memory_space<vmem>>, vector<1x128x128xbf16>
    %669 = vector.shape_cast %668 : vector<1x128x128xbf16> to vector<128x128xbf16>
    %cst_689 = arith.constant dense<0.000000e+00> : vector<72x128xf32>
    %670 = tpu.matmul %667, %669, %cst_689 {dimension_numbers = #tpu.dot_dimension_numbers<[1], [0], [0], [1], [0, 0, 1, 1], [], []>} : vector<72x128xbf16>, vector<128x128xbf16>, vector<72x128xf32> -> vector<72x128xf32>
    %c0_690 = arith.constant 0 : index
    %c0_691 = arith.constant 0 : index
    %671 = vector.load %arg8[%c0_690, %c0_691] : memref<1x128xf32, #tpu.memory_space<vmem>>, vector<1x128xf32>
    %672 = vector.broadcast %671 : vector<1x128xf32> to vector<72x128xf32>
    %673 = arith.addf %670, %672 : vector<72x128xf32>
    %cst_692 = arith.constant 0.000000e+00 : f32
    %674 = vector.broadcast %cst_692 : f32 to vector<72x128xf32>
    %675 = arith.maximumf %673, %674 : vector<72x128xf32>
    %676 = vector.shape_cast %675 : vector<72x128xf32> to vector<3x3x8x128xf32>
    %c1_693 = arith.constant 1 : index
    %c1_694 = arith.constant 1 : index
    %c0_695 = arith.constant 0 : index
    %c0_696 = arith.constant 0 : index
    %677 = vector.load %arg16[%c1_693, %c1_694, %c0_695, %c0_696] : memref<5x5x8x128xf32, #tpu.memory_space<vmem>>, vector<3x3x8x128xf32>
    tpu.vector_store %arg16[%c1_693, %c1_694, %c0_695, %c0_696], %676 {strides = array<i32>} : memref<5x5x8x128xf32, #tpu.memory_space<vmem>>, vector<3x3x8x128xf32>,
    %c0_697 = arith.constant 0 : index
    %c0_698 = arith.constant 0 : index
    %c0_699 = arith.constant 0 : index
    %c0_700 = arith.constant 0 : index
    %678 = vector.load %arg16[%c0_697, %c0_698, %c0_699, %c0_700] : memref<5x5x8x128xf32, #tpu.memory_space<vmem>>, vector<5x5x8x128xf32>
    %679 = vector.shape_cast %678 : vector<5x5x8x128xf32> to vector<200x128xf32>
    %680 = arith.truncf %679 : vector<200x128xf32> to vector<200x128xbf16>
    %c0_701 = arith.constant 0 : index
    %c0_702 = arith.constant 0 : index
    %c0_703 = arith.constant 0 : index
    %681 = vector.load %arg9[%c0_701, %c0_702, %c0_703] : memref<1x128x128xbf16, #tpu.memory_space<vmem>>, vector<1x128x128xbf16>
    %682 = vector.shape_cast %681 : vector<1x128x128xbf16> to vector<128x128xbf16>
    %cst_704 = arith.constant dense<0.000000e+00> : vector<200x128xf32>
    %683 = tpu.matmul %680, %682, %cst_704 {dimension_numbers = #tpu.dot_dimension_numbers<[1], [0], [0], [1], [0, 0, 1, 1], [], []>} : vector<200x128xbf16>, vector<128x128xbf16>, vector<200x128xf32> -> vector<200x128xf32>
    %c0_705 = arith.constant 0 : index
    %c0_706 = arith.constant 0 : index
    %684 = vector.load %arg10[%c0_705, %c0_706] : memref<1x128xf32, #tpu.memory_space<vmem>>, vector<1x128xf32>
    %685 = vector.broadcast %684 : vector<1x128xf32> to vector<200x128xf32>
    %686 = arith.addf %683, %685 : vector<200x128xf32>
    %cst_707 = arith.constant 0.000000e+00 : f32
    %687 = vector.broadcast %cst_707 : f32 to vector<200x128xf32>
    %688 = arith.maximumf %686, %687 : vector<200x128xf32>
    %c0_708 = arith.constant 0 : index
    %c0_709 = arith.constant 0 : index
    %689 = vector.load %arg11[%c0_708, %c0_709] : memref<200x128xf32, #tpu.memory_space<vmem>>, vector<200x128xf32>
    tpu.vector_store %arg11[%c0_708, %c0_709], %688 {strides = array<i32>} : memref<200x128xf32, #tpu.memory_space<vmem>>, vector<200x128xf32>,
    return
  }
}

</mosaic_0001>

<llo_original>
// kernel: discriminator_forward.1
$region0: #{discriminator_forward.1}
  #allocation0 [shape = 'u32[]', space=smem, size = 0x4, offset = 0x4, fixed_abs, tag = 'smem constant byte address 0x4 - core index']
  #allocation1 [shape = 'u32[144,128]{1,0:T(1,128)}', space=vmem, size = 0x12000, scoped, tag = 'internal scratch']
  #allocation2 [shape = 'f32[10,10,8,128]{3,2,1,0:T(8,128)}', space=vmem, size = 0x64000, scoped, tag = 'scratch operand']
  #allocation3 [shape = 'f32[6,6,8,128]{3,2,1,0:T(8,128)}', space=vmem, size = 0x24000, scoped, tag = 'scratch operand']
  #allocation4 [shape = 'f32[4,4,8,128]{3,2,1,0:T(8,128)}', space=vmem, size = 0x10000, scoped, tag = 'scratch operand']
  #allocation5 [shape = 'f32[3,3,8,128]{3,2,1,0:T(8,128)}', space=vmem, size = 0x9000, scoped, tag = 'scratch operand']
  #allocation6 [shape = 'f32[5,5,8,128]{3,2,1,0:T(8,128)}', space=vmem, size = 0x19000, scoped, tag = 'scratch operand']
  %s0 = inlined_call_operand.vmem [shape: bf16[9,9,8,128], index: 0, kind: input, shape index: {}]
  %s1 = inlined_call_operand.vmem [shape: bf16[4,128,128], index: 1, kind: input, shape index: {}]
  %s2 = inlined_call_operand.vmem [shape: f32[1,128], index: 2, kind: input, shape index: {}]
  %s3 = inlined_call_operand.vmem [shape: bf16[25,128,128], index: 3, kind: input, shape index: {}]
  %s4 = inlined_call_operand.vmem [shape: f32[1,128], index: 4, kind: input, shape index: {}]
  %s5 = inlined_call_operand.vmem [shape: bf16[9,128,128], index: 5, kind: input, shape index: {}]
  %s6 = inlined_call_operand.vmem [shape: f32[1,128], index: 6, kind: input, shape index: {}]
  %s7 = inlined_call_operand.vmem [shape: bf16[1,128,128], index: 7, kind: input, shape index: {}]
  %s8 = inlined_call_operand.vmem [shape: f32[1,128], index: 8, kind: input, shape index: {}]
  %s9 = inlined_call_operand.vmem [shape: bf16[1,128,128], index: 9, kind: input, shape index: {}]
  %s10 = inlined_call_operand.vmem [shape: f32[1,128], index: 10, kind: input, shape index: {}]
  %s11 = inlined_call_operand.vmem [shape: f32[200,128], index: 11, kind: output, shape index: {}]
  %s12 = sld [smem:[#allocation0]]
  $region54: #{discriminator_forward.1} parent=0
    _
  %s14 = ssub.s32 1, %s12
  %s15 = scalar_select 0, %s14, %s12
  // Predicated region
  $region2: #{discriminator_forward.1} parent=0 // pred_check
    _
  $region3: #{discriminator_forward.1} parent=0 // pred_check_branch
    %17 = sbr.rel (0) target = $region5
  $region4: #{discriminator_forward.1} parent=0 // pred_region
    _
  $region5: #{discriminator_forward.1} parent=0 // pred_fallthru
    _
  // Predicated region
  $region6: #{discriminator_forward.1} parent=0 // pred_check
    _
  $region7: #{discriminator_forward.1} parent=0 // pred_check_branch
    %19 = sbr.rel (0) target = $region9
  $region8: #{discriminator_forward.1} parent=0 // pred_region
    _
  $region9: #{discriminator_forward.1} parent=0 // pred_fallthru
    _
  // Predicated region
  $region10: #{discriminator_forward.1} parent=0 // pred_check
    _
  $region11: #{discriminator_forward.1} parent=0 // pred_check_branch
    %21 = sbr.rel (0) target = $region13
  $region12: #{discriminator_forward.1} parent=0 // pred_region
    _
  $region13: #{discriminator_forward.1} parent=0 // pred_fallthru
    _
  // Predicated region
  $region14: #{discriminator_forward.1} parent=0 // pred_check
    _
  $region15: #{discriminator_forward.1} parent=0 // pred_check_branch
    %23 = sbr.rel (0) target = $region17
  $region16: #{discriminator_forward.1} parent=0 // pred_region
    _
  $region17: #{discriminator_forward.1} parent=0 // pred_fallthru
    _
  // Predicated region
  $region18: #{discriminator_forward.1} parent=0 // pred_check
    _
  $region19: #{discriminator_forward.1} parent=0 // pred_check_branch
    %25 = sbr.rel (0) target = $region21
  $region20: #{discriminator_forward.1} parent=0 // pred_region
    _
  $region21: #{discriminator_forward.1} parent=0 // pred_fallthru
    _
  // Predicated region
  $region22: #{discriminator_forward.1} parent=0 // pred_check
    _
  $region23: #{discriminator_forward.1} parent=0 // pred_check_branch
    %27 = sbr.rel (0) target = $region25
  $region24: #{discriminator_forward.1} parent=0 // pred_region
    _
  $region25: #{discriminator_forward.1} parent=0 // pred_fallthru
    _
  // Predicated region
  $region26: #{discriminator_forward.1} parent=0 // pred_check
    _
  $region27: #{discriminator_forward.1} parent=0 // pred_check_branch
    %29 = sbr.rel (0) target = $region29
  $region28: #{discriminator_forward.1} parent=0 // pred_region
    _
  $region29: #{discriminator_forward.1} parent=0 // pred_fallthru
    _
  // Predicated region
  $region30: #{discriminator_forward.1} parent=0 // pred_check
    _
  $region31: #{discriminator_forward.1} parent=0 // pred_check_branch
    %31 = sbr.rel (0) target = $region33
  $region32: #{discriminator_forward.1} parent=0 // pred_region
    _
  $region33: #{discriminator_forward.1} parent=0 // pred_fallthru
    _
  // Predicated region
  $region34: #{discriminator_forward.1} parent=0 // pred_check
    _
  $region35: #{discriminator_forward.1} parent=0 // pred_check_branch
    %33 = sbr.rel (0) target = $region37
  $region36: #{discriminator_forward.1} parent=0 // pred_region
    _
  $region37: #{discriminator_forward.1} parent=0 // pred_fallthru
    _
  // Predicated region
  $region38: #{discriminator_forward.1} parent=0 // pred_check
    _
  $region39: #{discriminator_forward.1} parent=0 // pred_check_branch
    %35 = sbr.rel (0) target = $region41
  $region40: #{discriminator_forward.1} parent=0 // pred_region
    _
  $region41: #{discriminator_forward.1} parent=0 // pred_fallthru
    _
  // Predicated region
  $region42: #{discriminator_forward.1} parent=0 // pred_check
    _
  $region43: #{discriminator_forward.1} parent=0 // pred_check_branch
    %37 = sbr.rel (0) target = $region45
  $region44: #{discriminator_forward.1} parent=0 // pred_region
    _
  $region45: #{discriminator_forward.1} parent=0 // pred_fallthru
    _
  %39 = vst [vmem:[#allocation2] sm:$0xff] 0.0
  %40 = vst [vmem:[#allocation2 + $0x8] sm:$0xff] 0.0
  %41 = vst [vmem:[#allocation2 + $0x10] sm:$0xff] 0.0
  %42 = vst [vmem:[#allocation2 + $0x18] sm:$0xff] 0.0
  %43 = vst [vmem:[#allocation2 + $0x20] sm:$0xff] 0.0
  %44 = vst [vmem:[#allocation2 + $0x28] sm:$0xff] 0.0
  %45 = vst [vmem:[#allocation2 + $0x30] sm:$0xff] 0.0
  %46 = vst [vmem:[#allocation2 + $0x38] sm:$0xff] 0.0
  %47 = vst [vmem:[#allocation2 + $0x40] sm:$0xff] 0.0
  %48 = vst [vmem:[#allocation2 + $0x48] sm:$0xff] 0.0
  %s49 = scalar_lea.vmem [#allocation2], 640
  %50 = vst [vmem:[%s49] sm:$0xff] 0.0
  %51 = vst [vmem:[%s49 + $0x8] sm:$0xff] 0.0
  %52 = vst [vmem:[%s49 + $0x10] sm:$0xff] 0.0
  %53 = vst [vmem:[%s49 + $0x18] sm:$0xff] 0.0
  %54 = vst [vmem:[%s49 + $0x20] sm:$0xff] 0.0
  %55 = vst [vmem:[%s49 + $0x28] sm:$0xff] 0.0
  %56 = vst [vmem:[%s49 + $0x30] sm:$0xff] 0.0
  %57 = vst [vmem:[%s49 + $0x38] sm:$0xff] 0.0
  %58 = vst [vmem:[%s49 + $0x40] sm:$0xff] 0.0
  %59 = vst [vmem:[%s49 + $0x48] sm:$0xff] 0.0
  %60 = vst [vmem:[%s49 + $0x50] sm:$0xff] 0.0
  %61 = vst [vmem:[%s49 + $0x58] sm:$0xff] 0.0
  %62 = vst [vmem:[%s49 + $0x60] sm:$0xff] 0.0
  %63 = vst [vmem:[%s49 + $0x68] sm:$0xff] 0.0
  %64 = vst [vmem:[%s49 + $0x70] sm:$0xff] 0.0
  %65 = vst [vmem:[%s49 + $0x78] sm:$0xff] 0.0
  %66 = vst [vmem:[%s49 + $0x80] sm:$0xff] 0.0
  %67 = vst [vmem:[%s49 + $0x88] sm:$0xff] 0.0
  %68 = vst [vmem:[%s49 + $0x90] sm:$0xff] 0.0
  %69 = vst [vmem:[%s49 + $0x98] sm:$0xff] 0.0
  %s70 = scalar_lea.vmem [#allocation2], 80
  %71 = vst [vmem:[%s70] sm:$0xff] 0.0
  %72 = vst [vmem:[%s70 + $0x50] sm:$0xff] 0.0
  %73 = vst [vmem:[%s70 + $0xa0] sm:$0xff] 0.0
  %74 = vst [vmem:[%s70 + $0xf0] sm:$0xff] 0.0
  %75 = vst [vmem:[%s70 + $0x140] sm:$0xff] 0.0
  %76 = vst [vmem:[%s70 + $0x190] sm:$0xff] 0.0
  %77 = vst [vmem:[%s70 + $0x1e0] sm:$0xff] 0.0
  %s78 = scalar_lea.vmem [#allocation2], 144
  %79 = vst [vmem:[%s78] sm:$0xff] 0.0
  %80 = vst [vmem:[%s78 + $0x8] sm:$0xff] 0.0
  %81 = vst [vmem:[%s78 + $0x50] sm:$0xff] 0.0
  %82 = vst [vmem:[%s78 + $0x58] sm:$0xff] 0.0
  %83 = vst [vmem:[%s78 + $0xa0] sm:$0xff] 0.0
  %84 = vst [vmem:[%s78 + $0xa8] sm:$0xff] 0.0
  %85 = vst [vmem:[%s78 + $0xf0] sm:$0xff] 0.0
  %86 = vst [vmem:[%s78 + $0xf8] sm:$0xff] 0.0
  %87 = vst [vmem:[%s78 + $0x140] sm:$0xff] 0.0
  %88 = vst [vmem:[%s78 + $0x148] sm:$0xff] 0.0
  %89 = vst [vmem:[%s78 + $0x190] sm:$0xff] 0.0
  %90 = vst [vmem:[%s78 + $0x198] sm:$0xff] 0.0
  %91 = vst [vmem:[%s78 + $0x1e0] sm:$0xff] 0.0
  %92 = vst [vmem:[%s78 + $0x1e8] sm:$0xff] 0.0
  %93 = vst [vmem:[#allocation3] sm:$0xff] 0.0
  %94 = vst [vmem:[#allocation3 + $0x8] sm:$0xff] 0.0
  %95 = vst [vmem:[#allocation3 + $0x10] sm:$0xff] 0.0
  %96 = vst [vmem:[#allocation3 + $0x18] sm:$0xff] 0.0
  %97 = vst [vmem:[#allocation3 + $0x20] sm:$0xff] 0.0
  %98 = vst [vmem:[#allocation3 + $0x28] sm:$0xff] 0.0
  %s99 = scalar_lea.vmem [#allocation3], 192
  %100 = vst [vmem:[%s99] sm:$0xff] 0.0
  %101 = vst [vmem:[%s99 + $0x8] sm:$0xff] 0.0
  %102 = vst [vmem:[%s99 + $0x10] sm:$0xff] 0.0
  %103 = vst [vmem:[%s99 + $0x18] sm:$0xff] 0.0
  %104 = vst [vmem:[%s99 + $0x20] sm:$0xff] 0.0
  %105 = vst [vmem:[%s99 + $0x28] sm:$0xff] 0.0
  %106 = vst [vmem:[%s99 + $0x30] sm:$0xff] 0.0
  %107 = vst [vmem:[%s99 + $0x38] sm:$0xff] 0.0
  %108 = vst [vmem:[%s99 + $0x40] sm:$0xff] 0.0
  %109 = vst [vmem:[%s99 + $0x48] sm:$0xff] 0.0
  %110 = vst [vmem:[%s99 + $0x50] sm:$0xff] 0.0
  %111 = vst [vmem:[%s99 + $0x58] sm:$0xff] 0.0
  %s112 = scalar_lea.vmem [#allocation3], 48
  %113 = vst [vmem:[%s112] sm:$0xff] 0.0
  %114 = vst [vmem:[%s112 + $0x30] sm:$0xff] 0.0
  %115 = vst [vmem:[%s112 + $0x60] sm:$0xff] 0.0
  %s116 = scalar_lea.vmem [#allocation3], 80
  %117 = vst [vmem:[%s116] sm:$0xff] 0.0
  %118 = vst [vmem:[%s116 + $0x8] sm:$0xff] 0.0
  %119 = vst [vmem:[%s116 + $0x30] sm:$0xff] 0.0
  %120 = vst [vmem:[%s116 + $0x38] sm:$0xff] 0.0
  %121 = vst [vmem:[%s116 + $0x60] sm:$0xff] 0.0
  %122 = vst [vmem:[%s116 + $0x68] sm:$0xff] 0.0
  %123 = vst [vmem:[#allocation4] sm:$0xff] 0.0
  %124 = vst [vmem:[#allocation4 + $0x8] sm:$0xff] 0.0
  %125 = vst [vmem:[#allocation4 + $0x10] sm:$0xff] 0.0
  %126 = vst [vmem:[#allocation4 + $0x18] sm:$0xff] 0.0
  %s127 = scalar_lea.vmem [#allocation4], 96
  %128 = vst [vmem:[%s127] sm:$0xff] 0.0
  %129 = vst [vmem:[%s127 + $0x8] sm:$0xff] 0.0
  %130 = vst [vmem:[%s127 + $0x10] sm:$0xff] 0.0
  %131 = vst [vmem:[%s127 + $0x18] sm:$0xff] 0.0
  %s132 = scalar_lea.vmem [#allocation4], 32
  %133 = vst [vmem:[%s132] sm:$0xff] 0.0
  %134 = vst [vmem:[%s132 + $0x20] sm:$0xff] 0.0
  %s135 = scalar_lea.vmem [#allocation4], 56
  %136 = vst [vmem:[%s135] sm:$0xff] 0.0
  %137 = vst [vmem:[%s135 + $0x20] sm:$0xff] 0.0
  %138 = vst [vmem:[#allocation5] sm:$0xff] 0.0
  %139 = vst [vmem:[#allocation5 + $0x8] sm:$0xff] 0.0
  %140 = vst [vmem:[#allocation5 + $0x10] sm:$0xff] 0.0
  %s141 = scalar_lea.vmem [#allocation5], 48
  %142 = vst [vmem:[%s141] sm:$0xff] 0.0
  %143 = vst [vmem:[%s141 + $0x8] sm:$0xff] 0.0
  %144 = vst [vmem:[%s141 + $0x10] sm:$0xff] 0.0
  %s145 = scalar_lea.vmem [#allocation5], 24
  %146 = vst [vmem:[%s145] sm:$0xff] 0.0
  %s147 = scalar_lea.vmem [#allocation5], 40
  %148 = vst [vmem:[%s147] sm:$0xff] 0.0
  %149 = vst [vmem:[#allocation6] sm:$0xff] 0.0
  %150 = vst [vmem:[#allocation6 + $0x8] sm:$0xff] 0.0
  %151 = vst [vmem:[#allocation6 + $0x10] sm:$0xff] 0.0
  %152 = vst [vmem:[#allocation6 + $0x18] sm:$0xff] 0.0
  %153 = vst [vmem:[#allocation6 + $0x20] sm:$0xff] 0.0
  %s154 = scalar_lea.vmem [#allocation6], 160
  %155 = vst [vmem:[%s154] sm:$0xff] 0.0
  %156 = vst [vmem:[%s154 + $0x8] sm:$0xff] 0.0
  %157 = vst [vmem:[%s154 + $0x10] sm:$0xff] 0.0
  %158 = vst [vmem:[%s154 + $0x18] sm:$0xff] 0.0
  %159 = vst [vmem:[%s154 + $0x20] sm:$0xff] 0.0
  %s160 = scalar_lea.vmem [#allocation6], 40
  %161 = vst [vmem:[%s160] sm:$0xff] 0.0
  %162 = vst [vmem:[%s160 + $0x28] sm:$0xff] 0.0
  %163 = vst [vmem:[%s160 + $0x50] sm:$0xff] 0.0
  %s164 = scalar_lea.vmem [#allocation6], 72
  %165 = vst [vmem:[%s164] sm:$0xff] 0.0
  %166 = vst [vmem:[%s164 + $0x28] sm:$0xff] 0.0
  %167 = vst [vmem:[%s164 + $0x50] sm:$0xff] 0.0
  %v168 = vld [vmem:[%s0] sm:$0xf]
  %v169 = vld [vmem:[%s0 + $0x4] sm:$0xf]
  %v170 = vld [vmem:[%s0 + $0x8] sm:$0xf]
  %v171 = vld [vmem:[%s0 + $0xc] sm:$0xf]
  %v172 = vld [vmem:[%s0 + $0x10] sm:$0xf]
  %v173 = vld [vmem:[%s0 + $0x14] sm:$0xf]
  %v174 = vld [vmem:[%s0 + $0x18] sm:$0xf]
  %v175 = vld [vmem:[%s1] sm:$0xf]
  %v176 = vld [vmem:[%s1 + $0x4] sm:$0xf]
  %v177 = vld [vmem:[%s1 + $0x8] sm:$0xf]
  %v178 = vld [vmem:[%s1 + $0xc] sm:$0xf]
  %v179 = vld [vmem:[%s1 + $0x10] sm:$0xf]
  %v180 = vld [vmem:[%s1 + $0x14] sm:$0xf]
  %v181 = vld [vmem:[%s1 + $0x18] sm:$0xf]
  %v182 = vld [vmem:[%s1 + $0x1c] sm:$0xf]
  %v183 = vld [vmem:[%s1 + $0x20] sm:$0xf]
  %v184 = vld [vmem:[%s1 + $0x24] sm:$0xf]
  %v185 = vld [vmem:[%s1 + $0x28] sm:$0xf]
  %v186 = vld [vmem:[%s1 + $0x2c] sm:$0xf]
  %v187 = vld [vmem:[%s1 + $0x30] sm:$0xf]
  %v188 = vld [vmem:[%s1 + $0x34] sm:$0xf]
  %v189 = vld [vmem:[%s1 + $0x38] sm:$0xf]
  %v190 = vld [vmem:[%s1 + $0x3c] sm:$0xf]
  %s191 = scalar_lea.vmem %s0, 4
  %v192 = vld [vmem:[%s191] sm:$0xf]
  %v193 = vld [vmem:[%s191 + $0x4] sm:$0xf]
  %v194 = vld [vmem:[%s191 + $0x8] sm:$0xf]
  %v195 = vld [vmem:[%s191 + $0xc] sm:$0xf]
  %v196 = vld [vmem:[%s191 + $0x10] sm:$0xf]
  %v197 = vld [vmem:[%s191 + $0x14] sm:$0xf]
  %v198 = vld [vmem:[%s191 + $0x18] sm:$0xf]
  %s199 = scalar_lea.vmem %s1, 64
  %v200 = vld [vmem:[%s199] sm:$0xf]
  %v201 = vld [vmem:[%s199 + $0x4] sm:$0xf]
  %v202 = vld [vmem:[%s199 + $0x8] sm:$0xf]
  %v203 = vld [vmem:[%s199 + $0xc] sm:$0xf]
  %v204 = vld [vmem:[%s199 + $0x10] sm:$0xf]
  %v205 = vld [vmem:[%s199 + $0x14] sm:$0xf]
  %v206 = vld [vmem:[%s199 + $0x18] sm:$0xf]
  %v207 = vld [vmem:[%s199 + $0x1c] sm:$0xf]
  %v208 = vld [vmem:[%s199 + $0x20] sm:$0xf]
  %v209 = vld [vmem:[%s199 + $0x24] sm:$0xf]
  %v210 = vld [vmem:[%s199 + $0x28] sm:$0xf]
  %v211 = vld [vmem:[%s199 + $0x2c] sm:$0xf]
  %v212 = vld [vmem:[%s199 + $0x30] sm:$0xf]
  %v213 = vld [vmem:[%s199 + $0x34] sm:$0xf]
  %v214 = vld [vmem:[%s199 + $0x38] sm:$0xf]
  %v215 = vld [vmem:[%s199 + $0x3c] sm:$0xf]
  %v223 = vunpack.c.l.b16 %v192
  %v224 = vunpack.c.l.b16 %v193
  %v225 = vunpack.c.l.b16 %v194
  %v226 = vunpack.c.l.b16 %v195
  %v227 = vunpack.c.l.b16 %v196
  %v228 = vunpack.c.l.b16 %v197
  %v229 = vunpack.c.l.b16 %v198
  %v230 = vpack.c.b16 %v224, %v223
  %v231 = vpack.c.b16 %v226, %v225
  %v232 = vpack.c.b16 %v228, %v227
  %v233 = vpack.c.b16 %v229, %v229
  %v254 = vunpack.c.l.b16 %v200
  %v255 = vunpack.c.l.b16 %v201
  %v256 = vunpack.c.l.b16 %v202
  %v257 = vunpack.c.l.b16 %v203
  %v258 = vunpack.c.l.b16 %v204
  %v259 = vunpack.c.l.b16 %v205
  %v260 = vunpack.c.l.b16 %v206
  %v261 = vunpack.c.l.b16 %v207
  %v262 = vunpack.c.l.b16 %v208
  %v263 = vunpack.c.l.b16 %v209
  %v264 = vunpack.c.l.b16 %v210
  %v265 = vunpack.c.l.b16 %v211
  %v266 = vunpack.c.l.b16 %v212
  %v267 = vunpack.c.l.b16 %v213
  %v268 = vunpack.c.l.b16 %v214
  %v269 = vunpack.c.l.b16 %v215
  %v270 = vpack.c.b16 %v255, %v254
  %v271 = vpack.c.b16 %v257, %v256
  %v272 = vpack.c.b16 %v259, %v258
  %v273 = vpack.c.b16 %v261, %v260
  %v274 = vpack.c.b16 %v263, %v262
  %v275 = vpack.c.b16 %v265, %v264
  %v276 = vpack.c.b16 %v267, %v266
  %v277 = vpack.c.b16 %v269, %v268
  %286 = vmatprep.subr.bf16.mxu0 0
  %287 = vmatpush1.bf16.msra.mxu0 %v270
  %288 = vmatprep.subr.bf16.mxu0 0
  %289 = vmatpush1.bf16.msra.mxu0 %v271
  %290 = vmatprep.subr.bf16.mxu0 0
  %291 = vmatpush1.bf16.msra.mxu0 %v272
  %292 = vmatprep.subr.bf16.mxu0 0
  %293 = vmatpush1.bf16.msra.mxu0 %v273
  %294 = vmatprep.subr.bf16.mxu0 0
  %295 = vmatpush1.bf16.msra.mxu0 %v274
  %296 = vmatprep.subr.bf16.mxu0 0
  %297 = vmatpush1.bf16.msra.mxu0 %v275
  %298 = vmatprep.subr.bf16.mxu0 0
  %299 = vmatpush1.bf16.msra.mxu0 %v276
  %300 = vmatprep.subr.bf16.mxu0 0
  %301 = vmatpush1.bf16.msra.mxu0 %v277
  %302 = vmatprep.subr.bf16.mxu0 0
  %303 = vmatpush1.bf16.msra.mxu0 0
  %304 = vmatprep.subr.bf16.mxu0 0
  %305 = vmatpush1.bf16.msra.mxu0 0
  %306 = vmatprep.subr.bf16.mxu0 0
  %307 = vmatpush1.bf16.msra.mxu0 0
  %308 = vmatprep.subr.bf16.mxu0 0
  %309 = vmatpush1.bf16.msra.mxu0 0
  %310 = vmatprep.subr.bf16.mxu0 0
  %311 = vmatpush1.bf16.msra.mxu0 0
  %312 = vmatprep.subr.bf16.mxu0 0
  %313 = vmatpush1.bf16.msra.mxu0 0
  %314 = vmatprep.subr.bf16.mxu0 0
  %315 = vmatpush1.bf16.msra.mxu0 0
  %316 = vmatprep.subr.bf16.mxu0 0
  %317 = vmatpush1.bf16.msra.mxu0 0
  %318 = vmatprep.mubr.bf16.mxu0 0
  %319 = vmatmul.mubr.bf16.gmra.mrb[0].mxu0 %v230
  %v320 = vpop.f32.mrb[0].mxu0
  %v321 = vadd.f32 0.0, %v320
  %v322 = vpop.f32.mrb[0].mxu0
  %v323 = vpop.f32.mrb[0].mxu0
  %v324 = vadd.f32 0.0, %v323
  %v325 = vpop.f32.mrb[0].mxu0
  %326 = vmatprep.mubr.bf16.mxu0 0
  %327 = vmatmul.mubr.bf16.gmra.mrb[0].mxu0 %v231
  %v328 = vpop.f32.mrb[0].mxu0
  %v329 = vadd.f32 0.0, %v328
  %v330 = vpop.f32.mrb[0].mxu0
  %v331 = vpop.f32.mrb[0].mxu0
  %v332 = vadd.f32 0.0, %v331
  %v333 = vpop.f32.mrb[0].mxu0
  %334 = vmatprep.mubr.bf16.mxu0 0
  %335 = vmatmul.mubr.bf16.gmra.mrb[0].mxu0 %v232
  %v336 = vpop.f32.mrb[0].mxu0
  %v337 = vadd.f32 0.0, %v336
  %v338 = vpop.f32.mrb[0].mxu0
  %v339 = vpop.f32.mrb[0].mxu0
  %v340 = vadd.f32 0.0, %v339
  %v341 = vpop.f32.mrb[0].mxu0
  %342 = vmatprep.mubr.bf16.mxu0 0
  %343 = vmatmul.mubr.bf16.gmra.mrb[0].mxu0 %v233
  %v344 = vpop.f32.mrb[0].mxu0
  %v345 = vadd.f32 0.0, %v344
  %v346 = vpop.f32.mrb[0].mxu0
  %v347 = vpop.f32.mrb[0].mxu0
  %v348 = vpop.f32.mrb[0].mxu0
  %349 = vdwg.mxu0
  %v357 = vunpack.c.l.b16 %v168
  %v358 = vunpack.c.l.b16 %v169
  %v359 = vunpack.c.l.b16 %v170
  %v360 = vunpack.c.l.b16 %v171
  %v361 = vunpack.c.l.b16 %v172
  %v362 = vunpack.c.l.b16 %v173
  %v363 = vunpack.c.l.b16 %v174
  %v364 = vpack.c.b16 %v358, %v357
  %v365 = vpack.c.b16 %v360, %v359
  %v366 = vpack.c.b16 %v362, %v361
  %v367 = vpack.c.b16 %v363, %v363
  %v388 = vunpack.c.l.b16 %v175
  %v389 = vunpack.c.l.b16 %v176
  %v390 = vunpack.c.l.b16 %v177
  %v391 = vunpack.c.l.b16 %v178
  %v392 = vunpack.c.l.b16 %v179
  %v393 = vunpack.c.l.b16 %v180
  %v394 = vunpack.c.l.b16 %v181
  %v395 = vunpack.c.l.b16 %v182
  %v396 = vunpack.c.l.b16 %v183
  %v397 = vunpack.c.l.b16 %v184
  %v398 = vunpack.c.l.b16 %v185
  %v399 = vunpack.c.l.b16 %v186
  %v400 = vunpack.c.l.b16 %v187
  %v401 = vunpack.c.l.b16 %v188
  %v402 = vunpack.c.l.b16 %v189
  %v403 = vunpack.c.l.b16 %v190
  %v404 = vpack.c.b16 %v389, %v388
  %v405 = vpack.c.b16 %v391, %v390
  %v406 = vpack.c.b16 %v393, %v392
  %v407 = vpack.c.b16 %v395, %v394
  %v408 = vpack.c.b16 %v397, %v396
  %v409 = vpack.c.b16 %v399, %v398
  %v410 = vpack.c.b16 %v401, %v400
  %v411 = vpack.c.b16 %v403, %v402
  %420 = vmatprep.subr.bf16.mxu0 0
  %421 = vmatpush1.bf16.msra.mxu0 %v404
  %422 = vmatprep.subr.bf16.mxu0 0
  %423 = vmatpush1.bf16.msra.mxu0 %v405
  %424 = vmatprep.subr.bf16.mxu0 0
  %425 = vmatpush1.bf16.msra.mxu0 %v406
  %426 = vmatprep.subr.bf16.mxu0 0
  %427 = vmatpush1.bf16.msra.mxu0 %v407
  %428 = vmatprep.subr.bf16.mxu0 0
  %429 = vmatpush1.bf16.msra.mxu0 %v408
  %430 = vmatprep.subr.bf16.mxu0 0
  %431 = vmatpush1.bf16.msra.mxu0 %v409
  %432 = vmatprep.subr.bf16.mxu0 0
  %433 = vmatpush1.bf16.msra.mxu0 %v410
  %434 = vmatprep.subr.bf16.mxu0 0
  %435 = vmatpush1.bf16.msra.mxu0 %v411
  %436 = vmatprep.subr.bf16.mxu0 0
  %437 = vmatpush1.bf16.msra.mxu0 0
  %438 = vmatprep.subr.bf16.mxu0 0
  %439 = vmatpush1.bf16.msra.mxu0 0
  %440 = vmatprep.subr.bf16.mxu0 0
  %441 = vmatpush1.bf16.msra.mxu0 0
  %442 = vmatprep.subr.bf16.mxu0 0
  %443 = vmatpush1.bf16.msra.mxu0 0
  %444 = vmatprep.subr.bf16.mxu0 0
  %445 = vmatpush1.bf16.msra.mxu0 0
  %446 = vmatprep.subr.bf16.mxu0 0
  %447 = vmatpush1.bf16.msra.mxu0 0
  %448 = vmatprep.subr.bf16.mxu0 0
  %449 = vmatpush1.bf16.msra.mxu0 0
  %450 = vmatprep.subr.bf16.mxu0 0
  %451 = vmatpush1.bf16.msra.mxu0 0
  %452 = vmatprep.mubr.bf16.mxu0 0
  %453 = vmatmul.mubr.bf16.gmra.mrb[0].mxu0 %v364
  %v454 = vpop.f32.mrb[0].mxu0
  %v455 = vadd.f32 %v321, %v454
  %v456 = vpop.f32.mrb[0].mxu0
  %v457 = vpop.f32.mrb[0].mxu0
  %v458 = vadd.f32 %v324, %v457
  %v459 = vpop.f32.mrb[0].mxu0
  %460 = vmatprep.mubr.bf16.mxu0 0
  %461 = vmatmul.mubr.bf16.gmra.mrb[0].mxu0 %v365
  %v462 = vpop.f32.mrb[0].mxu0
  %v463 = vadd.f32 %v329, %v462
  %v464 = vpop.f32.mrb[0].mxu0
  %v465 = vpop.f32.mrb[0].mxu0
  %v466 = vadd.f32 %v332, %v465
  %v467 = vpop.f32.mrb[0].mxu0
  %468 = vmatprep.mubr.bf16.mxu0 0
  %469 = vmatmul.mubr.bf16.gmra.mrb[0].mxu0 %v366
  %v470 = vpop.f32.mrb[0].mxu0
  %v471 = vadd.f32 %v337, %v470
  %v472 = vpop.f32.mrb[0].mxu0
  %v473 = vpop.f32.mrb[0].mxu0
  %v474 = vadd.f32 %v340, %v473
  %v475 = vpop.f32.mrb[0].mxu0
  %476 = vmatprep.mubr.bf16.mxu0 0
  %477 = vmatmul.mubr.bf16.gmra.mrb[0].mxu0 %v367
  %v478 = vpop.f32.mrb[0].mxu0
  %v479 = vadd.f32 %v345, %v478
  %v480 = vpop.f32.mrb[0].mxu0
  %v481 = vpop.f32.mrb[0].mxu0
  %v482 = vpop.f32.mrb[0].mxu0
  %483 = vdwg.mxu0
  %s484 = scalar_lea.vmem %s0, 36
  %v485 = vld [vmem:[%s484] sm:$0xf]
  %v486 = vld [vmem:[%s484 + $0x4] sm:$0xf]
  %v487 = vld [vmem:[%s484 + $0x8] sm:$0xf]
  %v488 = vld [vmem:[%s484 + $0xc] sm:$0xf]
  %v489 = vld [vmem:[%s484 + $0x10] sm:$0xf]
  %v490 = vld [vmem:[%s484 + $0x14] sm:$0xf]
  %v491 = vld [vmem:[%s484 + $0x18] sm:$0xf]
  %s492 = scalar_lea.vmem %s1, 128
  %v493 = vld [vmem:[%s492] sm:$0xf]
  %v494 = vld [vmem:[%s492 + $0x4] sm:$0xf]
  %v495 = vld [vmem:[%s492 + $0x8] sm:$0xf]
  %v496 = vld [vmem:[%s492 + $0xc] sm:$0xf]
  %v497 = vld [vmem:[%s492 + $0x10] sm:$0xf]
  %v498 = vld [vmem:[%s492 + $0x14] sm:$0xf]
  %v499 = vld [vmem:[%s492 + $0x18] sm:$0xf]
  %v500 = vld [vmem:[%s492 + $0x1c] sm:$0xf]
  %v501 = vld [vmem:[%s492 + $0x20] sm:$0xf]
  %v502 = vld [vmem:[%s492 + $0x24] sm:$0xf]
  %v503 = vld [vmem:[%s492 + $0x28] sm:$0xf]
  %v504 = vld [vmem:[%s492 + $0x2c] sm:$0xf]
  %v505 = vld [vmem:[%s492 + $0x30] sm:$0xf]
  %v506 = vld [vmem:[%s492 + $0x34] sm:$0xf]
  %v507 = vld [vmem:[%s492 + $0x38] sm:$0xf]
  %v508 = vld [vmem:[%s492 + $0x3c] sm:$0xf]
  %v516 = vunpack.c.l.b16 %v485
  %v517 = vunpack.c.l.b16 %v486
  %v518 = vunpack.c.l.b16 %v487
  %v519 = vunpack.c.l.b16 %v488
  %v520 = vunpack.c.l.b16 %v489
  %v521 = vunpack.c.l.b16 %v490
  %v522 = vunpack.c.l.b16 %v491
  %v523 = vpack.c.b16 %v517, %v516
  %v524 = vpack.c.b16 %v519, %v518
  %v525 = vpack.c.b16 %v521, %v520
  %v526 = vpack.c.b16 %v522, %v522
  %v547 = vunpack.c.l.b16 %v493
  %v548 = vunpack.c.l.b16 %v494
  %v549 = vunpack.c.l.b16 %v495
  %v550 = vunpack.c.l.b16 %v496
  %v551 = vunpack.c.l.b16 %v497
  %v552 = vunpack.c.l.b16 %v498
  %v553 = vunpack.c.l.b16 %v499
  %v554 = vunpack.c.l.b16 %v500
  %v555 = vunpack.c.l.b16 %v501
  %v556 = vunpack.c.l.b16 %v502
  %v557 = vunpack.c.l.b16 %v503
  %v558 = vunpack.c.l.b16 %v504
  %v559 = vunpack.c.l.b16 %v505
  %v560 = vunpack.c.l.b16 %v506
  %v561 = vunpack.c.l.b16 %v507
  %v562 = vunpack.c.l.b16 %v508
  %v563 = vpack.c.b16 %v548, %v547
  %v564 = vpack.c.b16 %v550, %v549
  %v565 = vpack.c.b16 %v552, %v551
  %v566 = vpack.c.b16 %v554, %v553
  %v567 = vpack.c.b16 %v556, %v555
  %v568 = vpack.c.b16 %v558, %v557
  %v569 = vpack.c.b16 %v560, %v559
  %v570 = vpack.c.b16 %v562, %v561
  %579 = vmatprep.subr.bf16.mxu0 0
  %580 = vmatpush1.bf16.msra.mxu0 %v563
  %581 = vmatprep.subr.bf16.mxu0 0
  %582 = vmatpush1.bf16.msra.mxu0 %v564
  %583 = vmatprep.subr.bf16.mxu0 0
  %584 = vmatpush1.bf16.msra.mxu0 %v565
  %585 = vmatprep.subr.bf16.mxu0 0
  %586 = vmatpush1.bf16.msra.mxu0 %v566
  %587 = vmatprep.subr.bf16.mxu0 0
  %588 = vmatpush1.bf16.msra.mxu0 %v567
  %589 = vmatprep.subr.bf16.mxu0 0
  %590 = vmatpush1.bf16.msra.mxu0 %v568
  %591 = vmatprep.subr.bf16.mxu0 0
  %592 = vmatpush1.bf16.msra.mxu0 %v569
  %593 = vmatprep.subr.bf16.mxu0 0
  %594 = vmatpush1.bf16.msra.mxu0 %v570
  %595 = vmatprep.subr.bf16.mxu0 0
  %596 = vmatpush1.bf16.msra.mxu0 0
  %597 = vmatprep.subr.bf16.mxu0 0
  %598 = vmatpush1.bf16.msra.mxu0 0
  %599 = vmatprep.subr.bf16.mxu0 0
  %600 = vmatpush1.bf16.msra.mxu0 0
  %601 = vmatprep.subr.bf16.mxu0 0
  %602 = vmatpush1.bf16.msra.mxu0 0
  %603 = vmatprep.subr.bf16.mxu0 0
  %604 = vmatpush1.bf16.msra.mxu0 0
  %605 = vmatprep.subr.bf16.mxu0 0
  %606 = vmatpush1.bf16.msra.mxu0 0
  %607 = vmatprep.subr.bf16.mxu0 0
  %608 = vmatpush1.bf16.msra.mxu0 0
  %609 = vmatprep.subr.bf16.mxu0 0
  %610 = vmatpush1.bf16.msra.mxu0 0
  %611 = vmatprep.mubr.bf16.mxu0 0
  %612 = vmatmul.mubr.bf16.gmra.mrb[0].mxu0 %v523
  %v613 = vpop.f32.mrb[0].mxu0
  %v614 = vadd.f32 0.0, %v613
  %v615 = vpop.f32.mrb[0].mxu0
  %v616 = vpop.f32.mrb[0].mxu0
  %v617 = vadd.f32 0.0, %v616
  %v618 = vpop.f32.mrb[0].mxu0
  %619 = vmatprep.mubr.bf16.mxu0 0
  %620 = vmatmul.mubr.bf16.gmra.mrb[0].mxu0 %v524
  %v621 = vpop.f32.mrb[0].mxu0
  %v622 = vadd.f32 0.0, %v621
  %v623 = vpop.f32.mrb[0].mxu0
  %v624 = vpop.f32.mrb[0].mxu0
  %v625 = vadd.f32 0.0, %v624
  %v626 = vpop.f32.mrb[0].mxu0
  %627 = vmatprep.mubr.bf16.mxu0 0
  %628 = vmatmul.mubr.bf16.gmra.mrb[0].mxu0 %v525
  %v629 = vpop.f32.mrb[0].mxu0
  %v630 = vadd.f32 0.0, %v629
  %v631 = vpop.f32.mrb[0].mxu0
  %v632 = vpop.f32.mrb[0].mxu0
  %v633 = vadd.f32 0.0, %v632
  %v634 = vpop.f32.mrb[0].mxu0
  %635 = vmatprep.mubr.bf16.mxu0 0
  %636 = vmatmul.mubr.bf16.gmra.mrb[0].mxu0 %v526
  %v637 = vpop.f32.mrb[0].mxu0
  %v638 = vadd.f32 0.0, %v637
  %v639 = vpop.f32.mrb[0].mxu0
  %v640 = vpop.f32.mrb[0].mxu0
  %v641 = vpop.f32.mrb[0].mxu0
  %642 = vdwg.mxu0
  %v643 = vadd.f32 %v455, %v614
  %v644 = vadd.f32 %v458, %v617
  %v645 = vadd.f32 %v463, %v622
  %v646 = vadd.f32 %v466, %v625
  %v647 = vadd.f32 %v471, %v630
  %v648 = vadd.f32 %v474, %v633
  %v649 = vadd.f32 %v479, %v638
  %s650 = scalar_lea.vmem %s0, 40
  %v651 = vld [vmem:[%s650] sm:$0xf]
  %v652 = vld [vmem:[%s650 + $0x4] sm:$0xf]
  %v653 = vld [vmem:[%s650 + $0x8] sm:$0xf]
  %v654 = vld [vmem:[%s650 + $0xc] sm:$0xf]
  %v655 = vld [vmem:[%s650 + $0x10] sm:$0xf]
  %v656 = vld [vmem:[%s650 + $0x14] sm:$0xf]
  %v657 = vld [vmem:[%s650 + $0x18] sm:$0xf]
  %s658 = scalar_lea.vmem %s1, 192
  %v659 = vld [vmem:[%s658] sm:$0xf]
  %v660 = vld [vmem:[%s658 + $0x4] sm:$0xf]
  %v661 = vld [vmem:[%s658 + $0x8] sm:$0xf]
  %v662 = vld [vmem:[%s658 + $0xc] sm:$0xf]
  %v663 = vld [vmem:[%s658 + $0x10] sm:$0xf]
  %v664 = vld [vmem:[%s658 + $0x14] sm:$0xf]
  %v665 = vld [vmem:[%s658 + $0x18] sm:$0xf]
  %v666 = vld [vmem:[%s658 + $0x1c] sm:$0xf]
  %v667 = vld [vmem:[%s658 + $0x20] sm:$0xf]
  %v668 = vld [vmem:[%s658 + $0x24] sm:$0xf]
  %v669 = vld [vmem:[%s658 + $0x28] sm:$0xf]
  %v670 = vld [vmem:[%s658 + $0x2c] sm:$0xf]
  %v671 = vld [vmem:[%s658 + $0x30] sm:$0xf]
  %v672 = vld [vmem:[%s658 + $0x34] sm:$0xf]
  %v673 = vld [vmem:[%s658 + $0x38] sm:$0xf]
  %v674 = vld [vmem:[%s658 + $0x3c] sm:$0xf]
  %v682 = vunpack.c.l.b16 %v651
  %v683 = vunpack.c.l.b16 %v652
  %v684 = vunpack.c.l.b16 %v653
  %v685 = vunpack.c.l.b16 %v654
  %v686 = vunpack.c.l.b16 %v655
  %v687 = vunpack.c.l.b16 %v656
  %v688 = vunpack.c.l.b16 %v657
  %v689 = vpack.c.b16 %v683, %v682
  %v690 = vpack.c.b16 %v685, %v684
  %v691 = vpack.c.b16 %v687, %v686
  %v692 = vpack.c.b16 %v688, %v688
  %v713 = vunpack.c.l.b16 %v659
  %v714 = vunpack.c.l.b16 %v660
  %v715 = vunpack.c.l.b16 %v661
  %v716 = vunpack.c.l.b16 %v662
  %v717 = vunpack.c.l.b16 %v663
  %v718 = vunpack.c.l.b16 %v664
  %v719 = vunpack.c.l.b16 %v665
  %v720 = vunpack.c.l.b16 %v666
  %v721 = vunpack.c.l.b16 %v667
  %v722 = vunpack.c.l.b16 %v668
  %v723 = vunpack.c.l.b16 %v669
  %v724 = vunpack.c.l.b16 %v670
  %v725 = vunpack.c.l.b16 %v671
  %v726 = vunpack.c.l.b16 %v672
  %v727 = vunpack.c.l.b16 %v673
  %v728 = vunpack.c.l.b16 %v674
  %v729 = vpack.c.b16 %v714, %v713
  %v730 = vpack.c.b16 %v716, %v715
  %v731 = vpack.c.b16 %v718, %v717
  %v732 = vpack.c.b16 %v720, %v719
  %v733 = vpack.c.b16 %v722, %v721
  %v734 = vpack.c.b16 %v724, %v723
  %v735 = vpack.c.b16 %v726, %v725
  %v736 = vpack.c.b16 %v728, %v727
  %745 = vmatprep.subr.bf16.mxu0 0
  %746 = vmatpush1.bf16.msra.mxu0 %v729
  %747 = vmatprep.subr.bf16.mxu0 0
  %748 = vmatpush1.bf16.msra.mxu0 %v730
  %749 = vmatprep.subr.bf16.mxu0 0
  %750 = vmatpush1.bf16.msra.mxu0 %v731
  %751 = vmatprep.subr.bf16.mxu0 0
  %752 = vmatpush1.bf16.msra.mxu0 %v732
  %753 = vmatprep.subr.bf16.mxu0 0
  %754 = vmatpush1.bf16.msra.mxu0 %v733
  %755 = vmatprep.subr.bf16.mxu0 0
  %756 = vmatpush1.bf16.msra.mxu0 %v734
  %757 = vmatprep.subr.bf16.mxu0 0
  %758 = vmatpush1.bf16.msra.mxu0 %v735
  %759 = vmatprep.subr.bf16.mxu0 0
  %760 = vmatpush1.bf16.msra.mxu0 %v736
  %761 = vmatprep.subr.bf16.mxu0 0
  %762 = vmatpush1.bf16.msra.mxu0 0
  %763 = vmatprep.subr.bf16.mxu0 0
  %764 = vmatpush1.bf16.msra.mxu0 0
  %765 = vmatprep.subr.bf16.mxu0 0
  %766 = vmatpush1.bf16.msra.mxu0 0
  %767 = vmatprep.subr.bf16.mxu0 0
  %768 = vmatpush1.bf16.msra.mxu0 0
  %769 = vmatprep.subr.bf16.mxu0 0
  %770 = vmatpush1.bf16.msra.mxu0 0
  %771 = vmatprep.subr.bf16.mxu0 0
  %772 = vmatpush1.bf16.msra.mxu0 0
  %773 = vmatprep.subr.bf16.mxu0 0
  %774 = vmatpush1.bf16.msra.mxu0 0
  %775 = vmatprep.subr.bf16.mxu0 0
  %776 = vmatpush1.bf16.msra.mxu0 0
  %777 = vmatprep.mubr.bf16.mxu0 0
  %778 = vmatmul.mubr.bf16.gmra.mrb[0].mxu0 %v689
  %v779 = vpop.f32.mrb[0].mxu0
  %v780 = vadd.f32 0.0, %v779
  %v781 = vpop.f32.mrb[0].mxu0
  %v782 = vpop.f32.mrb[0].mxu0
  %v783 = vadd.f32 0.0, %v782
  %v784 = vpop.f32.mrb[0].mxu0
  %785 = vmatprep.mubr.bf16.mxu0 0
  %786 = vmatmul.mubr.bf16.gmra.mrb[0].mxu0 %v690
  %v787 = vpop.f32.mrb[0].mxu0
  %v788 = vadd.f32 0.0, %v787
  %v789 = vpop.f32.mrb[0].mxu0
  %v790 = vpop.f32.mrb[0].mxu0
  %v791 = vadd.f32 0.0, %v790
  %v792 = vpop.f32.mrb[0].mxu0
  %793 = vmatprep.mubr.bf16.mxu0 0
  %794 = vmatmul.mubr.bf16.gmra.mrb[0].mxu0 %v691
  %v795 = vpop.f32.mrb[0].mxu0
  %v796 = vadd.f32 0.0, %v795
  %v797 = vpop.f32.mrb[0].mxu0
  %v798 = vpop.f32.mrb[0].mxu0
  %v799 = vadd.f32 0.0, %v798
  %v800 = vpop.f32.mrb[0].mxu0
  %801 = vmatprep.mubr.bf16.mxu0 0
  %802 = vmatmul.mubr.bf16.gmra.mrb[0].mxu0 %v692
  %v803 = vpop.f32.mrb[0].mxu0
  %v804 = vadd.f32 0.0, %v803
  %v805 = vpop.f32.mrb[0].mxu0
  %v806 = vpop.f32.mrb[0].mxu0
  %v807 = vpop.f32.mrb[0].mxu0
  %808 = vdwg.mxu0
  %v809 = vadd.f32 %v643, %v780
  %v810 = vadd.f32 %v644, %v783
  %v811 = vadd.f32 %v645, %v788
  %v812 = vadd.f32 %v646, %v791
  %v813 = vadd.f32 %v647, %v796
  %v814 = vadd.f32 %v648, %v799
  %v815 = vadd.f32 %v649, %v804
  %v816 = vld [vmem:[%s2] sm:$0x1]
  %v818 = vlaneseq
  %v819 = vshrl.u32 %v818, 7
  %v820 = vsub.s32 0, %v819
  %v821 = vrot.slane %v816, %v820
  %v823 = vadd.f32 %v809, %v821
  %v824 = vadd.f32 %v810, %v821
  %v825 = vadd.f32 %v811, %v821
  %v826 = vadd.f32 %v812, %v821
  %v827 = vadd.f32 %v813, %v821
  %v828 = vadd.f32 %v814, %v821
  %v829 = vadd.f32 %v815, %v821
  %v830 = vmax.f32 %v823, 0.0
  %v831 = vmax.f32 %v824, 0.0
  %v832 = vmax.f32 %v825, 0.0
  %v833 = vmax.f32 %v826, 0.0
  %v834 = vmax.f32 %v827, 0.0
  %v835 = vmax.f32 %v828, 0.0
  %v836 = vmax.f32 %v829, 0.0
  %s837 = scalar_lea.vmem [#allocation2], 88
  %838 = vst [vmem:[%s837] sm:$0xff] %v830
  %839 = vst [vmem:[%s837 + $0x8] sm:$0xff] %v831
  %840 = vst [vmem:[%s837 + $0x10] sm:$0xff] %v832
  %841 = vst [vmem:[%s837 + $0x18] sm:$0xff] %v833
  %842 = vst [vmem:[%s837 + $0x20] sm:$0xff] %v834
  %843 = vst [vmem:[%s837 + $0x28] sm:$0xff] %v835
  %844 = vst [vmem:[%s837 + $0x30] sm:$0xff] %v836
  %v845 = vld [vmem:[%s484] sm:$0xf]
  %v846 = vld [vmem:[%s484 + $0x4] sm:$0xf]
  %v847 = vld [vmem:[%s484 + $0x8] sm:$0xf]
  %v848 = vld [vmem:[%s484 + $0xc] sm:$0xf]
  %v849 = vld [vmem:[%s484 + $0x10] sm:$0xf]
  %v850 = vld [vmem:[%s484 + $0x14] sm:$0xf]
  %v851 = vld [vmem:[%s484 + $0x18] sm:$0xf]
  %v852 = vld [vmem:[%s1] sm:$0xf]
  %v853 = vld [vmem:[%s1 + $0x4] sm:$0xf]
  %v854 = vld [vmem:[%s1 + $0x8] sm:$0xf]
  %v855 = vld [vmem:[%s1 + $0xc] sm:$0xf]
  %v856 = vld [vmem:[%s1 + $0x10] sm:$0xf]
  %v857 = vld [vmem:[%s1 + $0x14] sm:$0xf]
  %v858 = vld [vmem:[%s1 + $0x18] sm:$0xf]
  %v859 = vld [vmem:[%s1 + $0x1c] sm:$0xf]
  %v860 = vld [vmem:[%s1 + $0x20] sm:$0xf]
  %v861 = vld [vmem:[%s1 + $0x24] sm:$0xf]
  %v862 = vld [vmem:[%s1 + $0x28] sm:$0xf]
  %v863 = vld [vmem:[%s1 + $0x2c] sm:$0xf]
  %v864 = vld [vmem:[%s1 + $0x30] sm:$0xf]
  %v865 = vld [vmem:[%s1 + $0x34] sm:$0xf]
  %v866 = vld [vmem:[%s1 + $0x38] sm:$0xf]
  %v867 = vld [vmem:[%s1 + $0x3c] sm:$0xf]
  %v868 = vld [vmem:[%s650] sm:$0xf]
  %v869 = vld [vmem:[%s650 + $0x4] sm:$0xf]
  %v870 = vld [vmem:[%s650 + $0x8] sm:$0xf]
  %v871 = vld [vmem:[%s650 + $0xc] sm:$0xf]
  %v872 = vld [vmem:[%s650 + $0x10] sm:$0xf]
  %v873 = vld [vmem:[%s650 + $0x14] sm:$0xf]
  %v874 = vld [vmem:[%s650 + $0x18] sm:$0xf]
  %v875 = vld [vmem:[%s199] sm:$0xf]
  %v876 = vld [vmem:[%s199 + $0x4] sm:$0xf]
  %v877 = vld [vmem:[%s199 + $0x8] sm:$0xf]
  %v878 = vld [vmem:[%s199 + $0xc] sm:$0xf]
  %v879 = vld [vmem:[%s199 + $0x10] sm:$0xf]
  %v880 = vld [vmem:[%s199 + $0x14] sm:$0xf]
  %v881 = vld [vmem:[%s199 + $0x18] sm:$0xf]
  %v882 = vld [vmem:[%s199 + $0x1c] sm:$0xf]
  %v883 = vld [vmem:[%s199 + $0x20] sm:$0xf]
  %v884 = vld [vmem:[%s199 + $0x24] sm:$0xf]
  %v885 = vld [vmem:[%s199 + $0x28] sm:$0xf]
  %v886 = vld [vmem:[%s199 + $0x2c] sm:$0xf]
  %v887 = vld [vmem:[%s199 + $0x30] sm:$0xf]
  %v888 = vld [vmem:[%s199 + $0x34] sm:$0xf]
  %v889 = vld [vmem:[%s199 + $0x38] sm:$0xf]
  %v890 = vld [vmem:[%s199 + $0x3c] sm:$0xf]
  %v898 = vunpack.c.l.b16 %v868
  %v899 = vunpack.c.l.b16 %v869
  %v900 = vunpack.c.l.b16 %v870
  %v901 = vunpack.c.l.b16 %v871
  %v902 = vunpack.c.l.b16 %v872
  %v903 = vunpack.c.l.b16 %v873
  %v904 = vunpack.c.l.b16 %v874
  %v905 = vpack.c.b16 %v899, %v898
  %v906 = vpack.c.b16 %v901, %v900
  %v907 = vpack.c.b16 %v903, %v902
  %v908 = vpack.c.b16 %v904, %v904
  %v929 = vunpack.c.l.b16 %v875
  %v930 = vunpack.c.l.b16 %v876
  %v931 = vunpack.c.l.b16 %v877
  %v932 = vunpack.c.l.b16 %v878
  %v933 = vunpack.c.l.b16 %v879
  %v934 = vunpack.c.l.b16 %v880
  %v935 = vunpack.c.l.b16 %v881
  %v936 = vunpack.c.l.b16 %v882
  %v937 = vunpack.c.l.b16 %v883
  %v938 = vunpack.c.l.b16 %v884
  %v939 = vunpack.c.l.b16 %v885
  %v940 = vunpack.c.l.b16 %v886
  %v941 = vunpack.c.l.b16 %v887
  %v942 = vunpack.c.l.b16 %v888
  %v943 = vunpack.c.l.b16 %v889
  %v944 = vunpack.c.l.b16 %v890
  %v945 = vpack.c.b16 %v930, %v929
  %v946 = vpack.c.b16 %v932, %v931
  %v947 = vpack.c.b16 %v934, %v933
  %v948 = vpack.c.b16 %v936, %v935
  %v949 = vpack.c.b16 %v938, %v937
  %v950 = vpack.c.b16 %v940, %v939
  %v951 = vpack.c.b16 %v942, %v941
  %v952 = vpack.c.b16 %v944, %v943
  %961 = vmatprep.subr.bf16.mxu0 0
  %962 = vmatpush1.bf16.msra.mxu0 %v945
  %963 = vmatprep.subr.bf16.mxu0 0
  %964 = vmatpush1.bf16.msra.mxu0 %v946
  %965 = vmatprep.subr.bf16.mxu0 0
  %966 = vmatpush1.bf16.msra.mxu0 %v947
  %967 = vmatprep.subr.bf16.mxu0 0
  %968 = vmatpush1.bf16.msra.mxu0 %v948
  %969 = vmatprep.subr.bf16.mxu0 0
  %970 = vmatpush1.bf16.msra.mxu0 %v949
  %971 = vmatprep.subr.bf16.mxu0 0
  %972 = vmatpush1.bf16.msra.mxu0 %v950
  %973 = vmatprep.subr.bf16.mxu0 0
  %974 = vmatpush1.bf16.msra.mxu0 %v951
  %975 = vmatprep.subr.bf16.mxu0 0
  %976 = vmatpush1.bf16.msra.mxu0 %v952
  %977 = vmatprep.subr.bf16.mxu0 0
  %978 = vmatpush1.bf16.msra.mxu0 0
  %979 = vmatprep.subr.bf16.mxu0 0
  %980 = vmatpush1.bf16.msra.mxu0 0
  %981 = vmatprep.subr.bf16.mxu0 0
  %982 = vmatpush1.bf16.msra.mxu0 0
  %983 = vmatprep.subr.bf16.mxu0 0
  %984 = vmatpush1.bf16.msra.mxu0 0
  %985 = vmatprep.subr.bf16.mxu0 0
  %986 = vmatpush1.bf16.msra.mxu0 0
  %987 = vmatprep.subr.bf16.mxu0 0
  %988 = vmatpush1.bf16.msra.mxu0 0
  %989 = vmatprep.subr.bf16.mxu0 0
  %990 = vmatpush1.bf16.msra.mxu0 0
  %991 = vmatprep.subr.bf16.mxu0 0
  %992 = vmatpush1.bf16.msra.mxu0 0
  %993 = vmatprep.mubr.bf16.mxu0 0
  %994 = vmatmul.mubr.bf16.gmra.mrb[0].mxu0 %v905
  %v995 = vpop.f32.mrb[0].mxu0
  %v996 = vadd.f32 0.0, %v995
  %v997 = vpop.f32.mrb[0].mxu0
  %v998 = vpop.f32.mrb[0].mxu0
  %v999 = vadd.f32 0.0, %v998
  %v1000 = vpop.f32.mrb[0].mxu0
  %1001 = vmatprep.mubr.bf16.mxu0 0
  %1002 = vmatmul.mubr.bf16.gmra.mrb[0].mxu0 %v906
  %v1003 = vpop.f32.mrb[0].mxu0
  %v1004 = vadd.f32 0.0, %v1003
  %v1005 = vpop.f32.mrb[0].mxu0
  %v1006 = vpop.f32.mrb[0].mxu0
  %v1007 = vadd.f32 0.0, %v1006
  %v1008 = vpop.f32.mrb[0].mxu0
  %1009 = vmatprep.mubr.bf16.mxu0 0
  %1010 = vmatmul.mubr.bf16.gmra.mrb[0].mxu0 %v907
  %v1011 = vpop.f32.mrb[0].mxu0
  %v1012 = vadd.f32 0.0, %v1011
  %v1013 = vpop.f32.mrb[0].mxu0
  %v1014 = vpop.f32.mrb[0].mxu0
  %v1015 = vadd.f32 0.0, %v1014
  %v1016 = vpop.f32.mrb[0].mxu0
  %1017 = vmatprep.mubr.bf16.mxu0 0
  %1018 = vmatmul.mubr.bf16.gmra.mrb[0].mxu0 %v908
  %v1019 = vpop.f32.mrb[0].mxu0
  %v1020 = vadd.f32 0.0, %v1019
  %v1021 = vpop.f32.mrb[0].mxu0
  %v1022 = vpop.f32.mrb[0].mxu0
  %v1023 = vpop.f32.mrb[0].mxu0
  %1024 = vdwg.mxu0
  %v1032 = vunpack.c.l.b16 %v845
  %v1033 = vunpack.c.l.b16 %v846
  %v1034 = vunpack.c.l.b16 %v847
  %v1035 = vunpack.c.l.b16 %v848
  %v1036 = vunpack.c.l.b16 %v849
  %v1037 = vunpack.c.l.b16 %v850
  %v1038 = vunpack.c.l.b16 %v851
  %v1039 = vpack.c.b16 %v1033, %v1032
  %v1040 = vpack.c.b16 %v1035, %v1034
  %v1041 = vpack.c.b16 %v1037, %v1036
  %v1042 = vpack.c.b16 %v1038, %v1038
  %v1063 = vunpack.c.l.b16 %v852
  %v1064 = vunpack.c.l.b16 %v853
  %v1065 = vunpack.c.l.b16 %v854
  %v1066 = vunpack.c.l.b16 %v855
  %v1067 = vunpack.c.l.b16 %v856
  %v1068 = vunpack.c.l.b16 %v857
  %v1069 = vunpack.c.l.b16 %v858
  %v1070 = vunpack.c.l.b16 %v859
  %v1071 = vunpack.c.l.b16 %v860
  %v1072 = vunpack.c.l.b16 %v861
  %v1073 = vunpack.c.l.b16 %v862
  %v1074 = vunpack.c.l.b16 %v863
  %v1075 = vunpack.c.l.b16 %v864
  %v1076 = vunpack.c.l.b16 %v865
  %v1077 = vunpack.c.l.b16 %v866
  %v1078 = vunpack.c.l.b16 %v867
  %v1079 = vpack.c.b16 %v1064, %v1063
  %v1080 = vpack.c.b16 %v1066, %v1065
  %v1081 = vpack.c.b16 %v1068, %v1067
  %v1082 = vpack.c.b16 %v1070, %v1069
  %v1083 = vpack.c.b16 %v1072, %v1071
  %v1084 = vpack.c.b16 %v1074, %v1073
  %v1085 = vpack.c.b16 %v1076, %v1075
  %v1086 = vpack.c.b16 %v1078, %v1077
  %1095 = vmatprep.subr.bf16.mxu0 0
  %1096 = vmatpush1.bf16.msra.mxu0 %v1079
  %1097 = vmatprep.subr.bf16.mxu0 0
  %1098 = vmatpush1.bf16.msra.mxu0 %v1080
  %1099 = vmatprep.subr.bf16.mxu0 0
  %1100 = vmatpush1.bf16.msra.mxu0 %v1081
  %1101 = vmatprep.subr.bf16.mxu0 0
  %1102 = vmatpush1.bf16.msra.mxu0 %v1082
  %1103 = vmatprep.subr.bf16.mxu0 0
  %1104 = vmatpush1.bf16.msra.mxu0 %v1083
  %1105 = vmatprep.subr.bf16.mxu0 0
  %1106 = vmatpush1.bf16.msra.mxu0 %v1084
  %1107 = vmatprep.subr.bf16.mxu0 0
  %1108 = vmatpush1.bf16.msra.mxu0 %v1085
  %1109 = vmatprep.subr.bf16.mxu0 0
  %1110 = vmatpush1.bf16.msra.mxu0 %v1086
  %1111 = vmatprep.subr.bf16.mxu0 0
  %1112 = vmatpush1.bf16.msra.mxu0 0
  %1113 = vmatprep.subr.bf16.mxu0 0
  %1114 = vmatpush1.bf16.msra.mxu0 0
  %1115 = vmatprep.subr.bf16.mxu0 0
  %1116 = vmatpush1.bf16.msra.mxu0 0
  %1117 = vmatprep.subr.bf16.mxu0 0
  %1118 = vmatpush1.bf16.msra.mxu0 0
  %1119 = vmatprep.subr.bf16.mxu0 0
  %1120 = vmatpush1.bf16.msra.mxu0 0
  %1121 = vmatprep.subr.bf16.mxu0 0
  %1122 = vmatpush1.bf16.msra.mxu0 0
  %1123 = vmatprep.subr.bf16.mxu0 0
  %1124 = vmatpush1.bf16.msra.mxu0 0
  %1125 = vmatprep.subr.bf16.mxu0 0
  %1126 = vmatpush1.bf16.msra.mxu0 0
  %1127 = vmatprep.mubr.bf16.mxu0 0
  %1128 = vmatmul.mubr.bf16.gmra.mrb[0].mxu0 %v1039
  %v1129 = vpop.f32.mrb[0].mxu0
  %v1130 = vadd.f32 %v996, %v1129
  %v1131 = vpop.f32.mrb[0].mxu0
  %v1132 = vpop.f32.mrb[0].mxu0
  %v1133 = vadd.f32 %v999, %v1132
  %v1134 = vpop.f32.mrb[0].mxu0
  %1135 = vmatprep.mubr.bf16.mxu0 0
  %1136 = vmatmul.mubr.bf16.gmra.mrb[0].mxu0 %v1040
  %v1137 = vpop.f32.mrb[0].mxu0
  %v1138 = vadd.f32 %v1004, %v1137
  %v1139 = vpop.f32.mrb[0].mxu0
  %v1140 = vpop.f32.mrb[0].mxu0
  %v1141 = vadd.f32 %v1007, %v1140
  %v1142 = vpop.f32.mrb[0].mxu0
  %1143 = vmatprep.mubr.bf16.mxu0 0
  %1144 = vmatmul.mubr.bf16.gmra.mrb[0].mxu0 %v1041
  %v1145 = vpop.f32.mrb[0].mxu0
  %v1146 = vadd.f32 %v1012, %v1145
  %v1147 = vpop.f32.mrb[0].mxu0
  %v1148 = vpop.f32.mrb[0].mxu0
  %v1149 = vadd.f32 %v1015, %v1148
  %v1150 = vpop.f32.mrb[0].mxu0
  %1151 = vmatprep.mubr.bf16.mxu0 0
  %1152 = vmatmul.mubr.bf16.gmra.mrb[0].mxu0 %v1042
  %v1153 = vpop.f32.mrb[0].mxu0
  %v1154 = vadd.f32 %v1020, %v1153
  %v1155 = vpop.f32.mrb[0].mxu0
  %v1156 = vpop.f32.mrb[0].mxu0
  %v1157 = vpop.f32.mrb[0].mxu0
  %1158 = vdwg.mxu0
  %s1159 = scalar_lea.vmem %s0, 72
  %v1160 = vld [vmem:[%s1159] sm:$0xf]
  %v1161 = vld [vmem:[%s1159 + $0x4] sm:$0xf]
  %v1162 = vld [vmem:[%s1159 + $0x8] sm:$0xf]
  %v1163 = vld [vmem:[%s1159 + $0xc] sm:$0xf]
  %v1164 = vld [vmem:[%s1159 + $0x10] sm:$0xf]
  %v1165 = vld [vmem:[%s1159 + $0x14] sm:$0xf]
  %v1166 = vld [vmem:[%s1159 + $0x18] sm:$0xf]
  %v1167 = vld [vmem:[%s492] sm:$0xf]
  %v1168 = vld [vmem:[%s492 + $0x4] sm:$0xf]
  %v1169 = vld [vmem:[%s492 + $0x8] sm:$0xf]
  %v1170 = vld [vmem:[%s492 + $0xc] sm:$0xf]
  %v1171 = vld [vmem:[%s492 + $0x10] sm:$0xf]
  %v1172 = vld [vmem:[%s492 + $0x14] sm:$0xf]
  %v1173 = vld [vmem:[%s492 + $0x18] sm:$0xf]
  %v1174 = vld [vmem:[%s492 + $0x1c] sm:$0xf]
  %v1175 = vld [vmem:[%s492 + $0x20] sm:$0xf]
  %v1176 = vld [vmem:[%s492 + $0x24] sm:$0xf]
  %v1177 = vld [vmem:[%s492 + $0x28] sm:$0xf]
  %v1178 = vld [vmem:[%s492 + $0x2c] sm:$0xf]
  %v1179 = vld [vmem:[%s492 + $0x30] sm:$0xf]
  %v1180 = vld [vmem:[%s492 + $0x34] sm:$0xf]
  %v1181 = vld [vmem:[%s492 + $0x38] sm:$0xf]
  %v1182 = vld [vmem:[%s492 + $0x3c] sm:$0xf]
  %v1190 = vunpack.c.l.b16 %v1160
  %v1191 = vunpack.c.l.b16 %v1161
  %v1192 = vunpack.c.l.b16 %v1162
  %v1193 = vunpack.c.l.b16 %v1163
  %v1194 = vunpack.c.l.b16 %v1164
  %v1195 = vunpack.c.l.b16 %v1165
  %v1196 = vunpack.c.l.b16 %v1166
  %v1197 = vpack.c.b16 %v1191, %v1190
  %v1198 = vpack.c.b16 %v1193, %v1192
  %v1199 = vpack.c.b16 %v1195, %v1194
  %v1200 = vpack.c.b16 %v1196, %v1196
  %v1221 = vunpack.c.l.b16 %v1167
  %v1222 = vunpack.c.l.b16 %v1168
  %v1223 = vunpack.c.l.b16 %v1169
  %v1224 = vunpack.c.l.b16 %v1170
  %v1225 = vunpack.c.l.b16 %v1171
  %v1226 = vunpack.c.l.b16 %v1172
  %v1227 = vunpack.c.l.b16 %v1173
  %v1228 = vunpack.c.l.b16 %v1174
  %v1229 = vunpack.c.l.b16 %v1175
  %v1230 = vunpack.c.l.b16 %v1176
  %v1231 = vunpack.c.l.b16 %v1177
  %v1232 = vunpack.c.l.b16 %v1178
  %v1233 = vunpack.c.l.b16 %v1179
  %v1234 = vunpack.c.l.b16 %v1180
  %v1235 = vunpack.c.l.b16 %v1181
  %v1236 = vunpack.c.l.b16 %v1182
  %v1237 = vpack.c.b16 %v1222, %v1221
  %v1238 = vpack.c.b16 %v1224, %v1223
  %v1239 = vpack.c.b16 %v1226, %v1225
  %v1240 = vpack.c.b16 %v1228, %v1227
  %v1241 = vpack.c.b16 %v1230, %v1229
  %v1242 = vpack.c.b16 %v1232, %v1231
  %v1243 = vpack.c.b16 %v1234, %v1233
  %v1244 = vpack.c.b16 %v1236, %v1235
  %1253 = vmatprep.subr.bf16.mxu0 0
  %1254 = vmatpush1.bf16.msra.mxu0 %v1237
  %1255 = vmatprep.subr.bf16.mxu0 0
  %1256 = vmatpush1.bf16.msra.mxu0 %v1238
  %1257 = vmatprep.subr.bf16.mxu0 0
  %1258 = vmatpush1.bf16.msra.mxu0 %v1239
  %1259 = vmatprep.subr.bf16.mxu0 0
  %1260 = vmatpush1.bf16.msra.mxu0 %v1240
  %1261 = vmatprep.subr.bf16.mxu0 0
  %1262 = vmatpush1.bf16.msra.mxu0 %v1241
  %1263 = vmatprep.subr.bf16.mxu0 0
  %1264 = vmatpush1.bf16.msra.mxu0 %v1242
  %1265 = vmatprep.subr.bf16.mxu0 0
  %1266 = vmatpush1.bf16.msra.mxu0 %v1243
  %1267 = vmatprep.subr.bf16.mxu0 0
  %1268 = vmatpush1.bf16.msra.mxu0 %v1244
  %1269 = vmatprep.subr.bf16.mxu0 0
  %1270 = vmatpush1.bf16.msra.mxu0 0
  %1271 = vmatprep.subr.bf16.mxu0 0
  %1272 = vmatpush1.bf16.msra.mxu0 0
  %1273 = vmatprep.subr.bf16.mxu0 0
  %1274 = vmatpush1.bf16.msra.mxu0 0
  %1275 = vmatprep.subr.bf16.mxu0 0
  %1276 = vmatpush1.bf16.msra.mxu0 0
  %1277 = vmatprep.subr.bf16.mxu0 0
  %1278 = vmatpush1.bf16.msra.mxu0 0
  %1279 = vmatprep.subr.bf16.mxu0 0
  %1280 = vmatpush1.bf16.msra.mxu0 0
  %1281 = vmatprep.subr.bf16.mxu0 0
  %1282 = vmatpush1.bf16.msra.mxu0 0
  %1283 = vmatprep.subr.bf16.mxu0 0
  %1284 = vmatpush1.bf16.msra.mxu0 0
  %1285 = vmatprep.mubr.bf16.mxu0 0
  %1286 = vmatmul.mubr.bf16.gmra.mrb[0].mxu0 %v1197
  %v1287 = vpop.f32.mrb[0].mxu0
  %v1288 = vadd.f32 0.0, %v1287
  %v1289 = vpop.f32.mrb[0].mxu0
  %v1290 = vpop.f32.mrb[0].mxu0
  %v1291 = vadd.f32 0.0, %v1290
  %v1292 = vpop.f32.mrb[0].mxu0
  %1293 = vmatprep.mubr.bf16.mxu0 0
  %1294 = vmatmul.mubr.bf16.gmra.mrb[0].mxu0 %v1198
  %v1295 = vpop.f32.mrb[0].mxu0
  %v1296 = vadd.f32 0.0, %v1295
  %v1297 = vpop.f32.mrb[0].mxu0
  %v1298 = vpop.f32.mrb[0].mxu0
  %v1299 = vadd.f32 0.0, %v1298
  %v1300 = vpop.f32.mrb[0].mxu0
  %1301 = vmatprep.mubr.bf16.mxu0 0
  %1302 = vmatmul.mubr.bf16.gmra.mrb[0].mxu0 %v1199
  %v1303 = vpop.f32.mrb[0].mxu0
  %v1304 = vadd.f32 0.0, %v1303
  %v1305 = vpop.f32.mrb[0].mxu0
  %v1306 = vpop.f32.mrb[0].mxu0
  %v1307 = vadd.f32 0.0, %v1306
  %v1308 = vpop.f32.mrb[0].mxu0
  %1309 = vmatprep.mubr.bf16.mxu0 0
  %1310 = vmatmul.mubr.bf16.gmra.mrb[0].mxu0 %v1200
  %v1311 = vpop.f32.mrb[0].mxu0
  %v1312 = vadd.f32 0.0, %v1311
  %v1313 = vpop.f32.mrb[0].mxu0
  %v1314 = vpop.f32.mrb[0].mxu0
  %v1315 = vpop.f32.mrb[0].mxu0
  %1316 = vdwg.mxu0
  %v1317 = vadd.f32 %v1130, %v1288
  %v1318 = vadd.f32 %v1133, %v1291
  %v1319 = vadd.f32 %v1138, %v1296
  %v1320 = vadd.f32 %v1141, %v1299
  %v1321 = vadd.f32 %v1146, %v1304
  %v1322 = vadd.f32 %v1149, %v1307
  %v1323 = vadd.f32 %v1154, %v1312
  %s1324 = scalar_lea.vmem %s0, 76
  %v1325 = vld [vmem:[%s1324] sm:$0xf]
  %v1326 = vld [vmem:[%s1324 + $0x4] sm:$0xf]
  %v1327 = vld [vmem:[%s1324 + $0x8] sm:$0xf]
  %v1328 = vld [vmem:[%s1324 + $0xc] sm:$0xf]
  %v1329 = vld [vmem:[%s1324 + $0x10] sm:$0xf]
  %v1330 = vld [vmem:[%s1324 + $0x14] sm:$0xf]
  %v1331 = vld [vmem:[%s1324 + $0x18] sm:$0xf]
  %v1332 = vld [vmem:[%s658] sm:$0xf]
  %v1333 = vld [vmem:[%s658 + $0x4] sm:$0xf]
  %v1334 = vld [vmem:[%s658 + $0x8] sm:$0xf]
  %v1335 = vld [vmem:[%s658 + $0xc] sm:$0xf]
  %v1336 = vld [vmem:[%s658 + $0x10] sm:$0xf]
  %v1337 = vld [vmem:[%s658 + $0x14] sm:$0xf]
  %v1338 = vld [vmem:[%s658 + $0x18] sm:$0xf]
  %v1339 = vld [vmem:[%s658 + $0x1c] sm:$0xf]
  %v1340 = vld [vmem:[%s658 + $0x20] sm:$0xf]
  %v1341 = vld [vmem:[%s658 + $0x24] sm:$0xf]
  %v1342 = vld [vmem:[%s658 + $0x28] sm:$0xf]
  %v1343 = vld [vmem:[%s658 + $0x2c] sm:$0xf]
  %v1344 = vld [vmem:[%s658 + $0x30] sm:$0xf]
  %v1345 = vld [vmem:[%s658 + $0x34] sm:$0xf]
  %v1346 = vld [vmem:[%s658 + $0x38] sm:$0xf]
  %v1347 = vld [vmem:[%s658 + $0x3c] sm:$0xf]
  %v1355 = vunpack.c.l.b16 %v1325
  %v1356 = vunpack.c.l.b16 %v1326
  %v1357 = vunpack.c.l.b16 %v1327
  %v1358 = vunpack.c.l.b16 %v1328
  %v1359 = vunpack.c.l.b16 %v1329
  %v1360 = vunpack.c.l.b16 %v1330
  %v1361 = vunpack.c.l.b16 %v1331
  %v1362 = vpack.c.b16 %v1356, %v1355
  %v1363 = vpack.c.b16 %v1358, %v1357
  %v1364 = vpack.c.b16 %v1360, %v1359
  %v1365 = vpack.c.b16 %v1361, %v1361
  %v1386 = vunpack.c.l.b16 %v1332
  %v1387 = vunpack.c.l.b16 %v1333
  %v1388 = vunpack.c.l.b16 %v1334
  %v1389 = vunpack.c.l.b16 %v1335
  %v1390 = vunpack.c.l.b16 %v1336
  %v1391 = vunpack.c.l.b16 %v1337
  %v1392 = vunpack.c.l.b16 %v1338
  %v1393 = vunpack.c.l.b16 %v1339
  %v1394 = vunpack.c.l.b16 %v1340
  %v1395 = vunpack.c.l.b16 %v1341
  %v1396 = vunpack.c.l.b16 %v1342
  %v1397 = vunpack.c.l.b16 %v1343
  %v1398 = vunpack.c.l.b16 %v1344
  %v1399 = vunpack.c.l.b16 %v1345
  %v1400 = vunpack.c.l.b16 %v1346
  %v1401 = vunpack.c.l.b16 %v1347
  %v1402 = vpack.c.b16 %v1387, %v1386
  %v1403 = vpack.c.b16 %v1389, %v1388
  %v1404 = vpack.c.b16 %v1391, %v1390
  %v1405 = vpack.c.b16 %v1393, %v1392
  %v1406 = vpack.c.b16 %v1395, %v1394
  %v1407 = vpack.c.b16 %v1397, %v1396
  %v1408 = vpack.c.b16 %v1399, %v1398
  %v1409 = vpack.c.b16 %v1401, %v1400
  %1418 = vmatprep.subr.bf16.mxu0 0
  %1419 = vmatpush1.bf16.msra.mxu0 %v1402
  %1420 = vmatprep.subr.bf16.mxu0 0
  %1421 = vmatpush1.bf16.msra.mxu0 %v1403
  %1422 = vmatprep.subr.bf16.mxu0 0
  %1423 = vmatpush1.bf16.msra.mxu0 %v1404
  %1424 = vmatprep.subr.bf16.mxu0 0
  %1425 = vmatpush1.bf16.msra.mxu0 %v1405
  %1426 = vmatprep.subr.bf16.mxu0 0
  %1427 = vmatpush1.bf16.msra.mxu0 %v1406
  %1428 = vmatprep.subr.bf16.mxu0 0
  %1429 = vmatpush1.bf16.msra.mxu0 %v1407
  %1430 = vmatprep.subr.bf16.mxu0 0
  %1431 = vmatpush1.bf16.msra.mxu0 %v1408
  %1432 = vmatprep.subr.bf16.mxu0 0
  %1433 = vmatpush1.bf16.msra.mxu0 %v1409
  %1434 = vmatprep.subr.bf16.mxu0 0
  %1435 = vmatpush1.bf16.msra.mxu0 0
  %1436 = vmatprep.subr.bf16.mxu0 0
  %1437 = vmatpush1.bf16.msra.mxu0 0
  %1438 = vmatprep.subr.bf16.mxu0 0
  %1439 = vmatpush1.bf16.msra.mxu0 0
  %1440 = vmatprep.subr.bf16.mxu0 0
  %1441 = vmatpush1.bf16.msra.mxu0 0
  %1442 = vmatprep.subr.bf16.mxu0 0
  %1443 = vmatpush1.bf16.msra.mxu0 0
  %1444 = vmatprep.subr.bf16.mxu0 0
  %1445 = vmatpush1.bf16.msra.mxu0 0
  %1446 = vmatprep.subr.bf16.mxu0 0
  %1447 = vmatpush1.bf16.msra.mxu0 0
  %1448 = vmatprep.subr.bf16.mxu0 0
  %1449 = vmatpush1.bf16.msra.mxu0 0
  %1450 = vmatprep.mubr.bf16.mxu0 0
  %1451 = vmatmul.mubr.bf16.gmra.mrb[0].mxu0 %v1362
  %v1452 = vpop.f32.mrb[0].mxu0
  %v1453 = vadd.f32 0.0, %v1452
  %v1454 = vpop.f32.mrb[0].mxu0
  %v1455 = vpop.f32.mrb[0].mxu0
  %v1456 = vadd.f32 0.0, %v1455
  %v1457 = vpop.f32.mrb[0].mxu0
  %1458 = vmatprep.mubr.bf16.mxu0 0
  %1459 = vmatmul.mubr.bf16.gmra.mrb[0].mxu0 %v1363
  %v1460 = vpop.f32.mrb[0].mxu0
  %v1461 = vadd.f32 0.0, %v1460
  %v1462 = vpop.f32.mrb[0].mxu0
  %v1463 = vpop.f32.mrb[0].mxu0
  %v1464 = vadd.f32 0.0, %v1463
  %v1465 = vpop.f32.mrb[0].mxu0
  %1466 = vmatprep.mubr.bf16.mxu0 0
  %1467 = vmatmul.mubr.bf16.gmra.mrb[0].mxu0 %v1364
  %v1468 = vpop.f32.mrb[0].mxu0
  %v1469 = vadd.f32 0.0, %v1468
  %v1470 = vpop.f32.mrb[0].mxu0
  %v1471 = vpop.f32.mrb[0].mxu0
  %v1472 = vadd.f32 0.0, %v1471
  %v1473 = vpop.f32.mrb[0].mxu0
  %1474 = vmatprep.mubr.bf16.mxu0 0
  %1475 = vmatmul.mubr.bf16.gmra.mrb[0].mxu0 %v1365
  %v1476 = vpop.f32.mrb[0].mxu0
  %v1477 = vadd.f32 0.0, %v1476
  %v1478 = vpop.f32.mrb[0].mxu0
  %v1479 = vpop.f32.mrb[0].mxu0
  %v1480 = vpop.f32.mrb[0].mxu0
  %1481 = vdwg.mxu0
  %v1482 = vadd.f32 %v1317, %v1453
  %v1483 = vadd.f32 %v1318, %v1456
  %v1484 = vadd.f32 %v1319, %v1461
  %v1485 = vadd.f32 %v1320, %v1464
  %v1486 = vadd.f32 %v1321, %v1469
  %v1487 = vadd.f32 %v1322, %v1472
  %v1488 = vadd.f32 %v1323, %v1477
  %v1489 = vld [vmem:[%s2] sm:$0x1]
  %v1491 = vlaneseq
  %v1492 = vshrl.u32 %v1491, 7
  %v1493 = vsub.s32 0, %v1492
  %v1494 = vrot.slane %v1489, %v1493
  %v1496 = vadd.f32 %v1482, %v1494
  %v1497 = vadd.f32 %v1483, %v1494
  %v1498 = vadd.f32 %v1484, %v1494
  %v1499 = vadd.f32 %v1485, %v1494
  %v1500 = vadd.f32 %v1486, %v1494
  %v1501 = vadd.f32 %v1487, %v1494
  %v1502 = vadd.f32 %v1488, %v1494
  %v1503 = vmax.f32 %v1496, 0.0
  %v1504 = vmax.f32 %v1497, 0.0
  %v1505 = vmax.f32 %v1498, 0.0
  %v1506 = vmax.f32 %v1499, 0.0
  %v1507 = vmax.f32 %v1500, 0.0
  %v1508 = vmax.f32 %v1501, 0.0
  %v1509 = vmax.f32 %v1502, 0.0
  %s1510 = scalar_lea.vmem [#allocation2], 168
  %1511 = vst [vmem:[%s1510] sm:$0xff] %v1503
  %1512 = vst [vmem:[%s1510 + $0x8] sm:$0xff] %v1504
  %1513 = vst [vmem:[%s1510 + $0x10] sm:$0xff] %v1505
  %1514 = vst [vmem:[%s1510 + $0x18] sm:$0xff] %v1506
  %1515 = vst [vmem:[%s1510 + $0x20] sm:$0xff] %v1507
  %1516 = vst [vmem:[%s1510 + $0x28] sm:$0xff] %v1508
  %1517 = vst [vmem:[%s1510 + $0x30] sm:$0xff] %v1509
  %v1518 = vld [vmem:[%s1159] sm:$0xf]
  %v1519 = vld [vmem:[%s1159 + $0x4] sm:$0xf]
  %v1520 = vld [vmem:[%s1159 + $0x8] sm:$0xf]
  %v1521 = vld [vmem:[%s1159 + $0xc] sm:$0xf]
  %v1522 = vld [vmem:[%s1159 + $0x10] sm:$0xf]
  %v1523 = vld [vmem:[%s1159 + $0x14] sm:$0xf]
  %v1524 = vld [vmem:[%s1159 + $0x18] sm:$0xf]
  %v1525 = vld [vmem:[%s1] sm:$0xf]
  %v1526 = vld [vmem:[%s1 + $0x4] sm:$0xf]
  %v1527 = vld [vmem:[%s1 + $0x8] sm:$0xf]
  %v1528 = vld [vmem:[%s1 + $0xc] sm:$0xf]
  %v1529 = vld [vmem:[%s1 + $0x10] sm:$0xf]
  %v1530 = vld [vmem:[%s1 + $0x14] sm:$0xf]
  %v1531 = vld [vmem:[%s1 + $0x18] sm:$0xf]
  %v1532 = vld [vmem:[%s1 + $0x1c] sm:$0xf]
  %v1533 = vld [vmem:[%s1 + $0x20] sm:$0xf]
  %v1534 = vld [vmem:[%s1 + $0x24] sm:$0xf]
  %v1535 = vld [vmem:[%s1 + $0x28] sm:$0xf]
  %v1536 = vld [vmem:[%s1 + $0x2c] sm:$0xf]
  %v1537 = vld [vmem:[%s1 + $0x30] sm:$0xf]
  %v1538 = vld [vmem:[%s1 + $0x34] sm:$0xf]
  %v1539 = vld [vmem:[%s1 + $0x38] sm:$0xf]
  %v1540 = vld [vmem:[%s1 + $0x3c] sm:$0xf]
  %v1541 = vld [vmem:[%s1324] sm:$0xf]
  %v1542 = vld [vmem:[%s1324 + $0x4] sm:$0xf]
  %v1543 = vld [vmem:[%s1324 + $0x8] sm:$0xf]
  %v1544 = vld [vmem:[%s1324 + $0xc] sm:$0xf]
  %v1545 = vld [vmem:[%s1324 + $0x10] sm:$0xf]
  %v1546 = vld [vmem:[%s1324 + $0x14] sm:$0xf]
  %v1547 = vld [vmem:[%s1324 + $0x18] sm:$0xf]
  %v1548 = vld [vmem:[%s199] sm:$0xf]
  %v1549 = vld [vmem:[%s199 + $0x4] sm:$0xf]
  %v1550 = vld [vmem:[%s199 + $0x8] sm:$0xf]
  %v1551 = vld [vmem:[%s199 + $0xc] sm:$0xf]
  %v1552 = vld [vmem:[%s199 + $0x10] sm:$0xf]
  %v1553 = vld [vmem:[%s199 + $0x14] sm:$0xf]
  %v1554 = vld [vmem:[%s199 + $0x18] sm:$0xf]
  %v1555 = vld [vmem:[%s199 + $0x1c] sm:$0xf]
  %v1556 = vld [vmem:[%s199 + $0x20] sm:$0xf]
  %v1557 = vld [vmem:[%s199 + $0x24] sm:$0xf]
  %v1558 = vld [vmem:[%s199 + $0x28] sm:$0xf]
  %v1559 = vld [vmem:[%s199 + $0x2c] sm:$0xf]
  %v1560 = vld [vmem:[%s199 + $0x30] sm:$0xf]
  %v1561 = vld [vmem:[%s199 + $0x34] sm:$0xf]
  %v1562 = vld [vmem:[%s199 + $0x38] sm:$0xf]
  %v1563 = vld [vmem:[%s199 + $0x3c] sm:$0xf]
  %v1571 = vunpack.c.l.b16 %v1541
  %v1572 = vunpack.c.l.b16 %v1542
  %v1573 = vunpack.c.l.b16 %v1543
  %v1574 = vunpack.c.l.b16 %v1544
  %v1575 = vunpack.c.l.b16 %v1545
  %v1576 = vunpack.c.l.b16 %v1546
  %v1577 = vunpack.c.l.b16 %v1547
  %v1578 = vpack.c.b16 %v1572, %v1571
  %v1579 = vpack.c.b16 %v1574, %v1573
  %v1580 = vpack.c.b16 %v1576, %v1575
  %v1581 = vpack.c.b16 %v1577, %v1577
  %v1602 = vunpack.c.l.b16 %v1548
  %v1603 = vunpack.c.l.b16 %v1549
  %v1604 = vunpack.c.l.b16 %v1550
  %v1605 = vunpack.c.l.b16 %v1551
  %v1606 = vunpack.c.l.b16 %v1552
  %v1607 = vunpack.c.l.b16 %v1553
  %v1608 = vunpack.c.l.b16 %v1554
  %v1609 = vunpack.c.l.b16 %v1555
  %v1610 = vunpack.c.l.b16 %v1556
  %v1611 = vunpack.c.l.b16 %v1557
  %v1612 = vunpack.c.l.b16 %v1558
  %v1613 = vunpack.c.l.b16 %v1559
  %v1614 = vunpack.c.l.b16 %v1560
  %v1615 = vunpack.c.l.b16 %v1561
  %v1616 = vunpack.c.l.b16 %v1562
  %v1617 = vunpack.c.l.b16 %v1563
  %v1618 = vpack.c.b16 %v1603, %v1602
  %v1619 = vpack.c.b16 %v1605, %v1604
  %v1620 = vpack.c.b16 %v1607, %v1606
  %v1621 = vpack.c.b16 %v1609, %v1608
  %v1622 = vpack.c.b16 %v1611, %v1610
  %v1623 = vpack.c.b16 %v1613, %v1612
  %v1624 = vpack.c.b16 %v1615, %v1614
  %v1625 = vpack.c.b16 %v1617, %v1616
  %1634 = vmatprep.subr.bf16.mxu0 0
  %1635 = vmatpush1.bf16.msra.mxu0 %v1618
  %1636 = vmatprep.subr.bf16.mxu0 0
  %1637 = vmatpush1.bf16.msra.mxu0 %v1619
  %1638 = vmatprep.subr.bf16.mxu0 0
  %1639 = vmatpush1.bf16.msra.mxu0 %v1620
  %1640 = vmatprep.subr.bf16.mxu0 0
  %1641 = vmatpush1.bf16.msra.mxu0 %v1621
  %1642 = vmatprep.subr.bf16.mxu0 0
  %1643 = vmatpush1.bf16.msra.mxu0 %v1622
  %1644 = vmatprep.subr.bf16.mxu0 0
  %1645 = vmatpush1.bf16.msra.mxu0 %v1623
  %1646 = vmatprep.subr.bf16.mxu0 0
  %1647 = vmatpush1.bf16.msra.mxu0 %v1624
  %1648 = vmatprep.subr.bf16.mxu0 0
  %1649 = vmatpush1.bf16.msra.mxu0 %v1625
  %1650 = vmatprep.subr.bf16.mxu0 0
  %1651 = vmatpush1.bf16.msra.mxu0 0
  %1652 = vmatprep.subr.bf16.mxu0 0
  %1653 = vmatpush1.bf16.msra.mxu0 0
  %1654 = vmatprep.subr.bf16.mxu0 0
  %1655 = vmatpush1.bf16.msra.mxu0 0
  %1656 = vmatprep.subr.bf16.mxu0 0
  %1657 = vmatpush1.bf16.msra.mxu0 0
  %1658 = vmatprep.subr.bf16.mxu0 0
  %1659 = vmatpush1.bf16.msra.mxu0 0
  %1660 = vmatprep.subr.bf16.mxu0 0
  %1661 = vmatpush1.bf16.msra.mxu0 0
  %1662 = vmatprep.subr.bf16.mxu0 0
  %1663 = vmatpush1.bf16.msra.mxu0 0
  %1664 = vmatprep.subr.bf16.mxu0 0
  %1665 = vmatpush1.bf16.msra.mxu0 0
  %1666 = vmatprep.mubr.bf16.mxu0 0
  %1667 = vmatmul.mubr.bf16.gmra.mrb[0].mxu0 %v1578
  %v1668 = vpop.f32.mrb[0].mxu0
  %v1669 = vadd.f32 0.0, %v1668
  %v1670 = vpop.f32.mrb[0].mxu0
  %v1671 = vpop.f32.mrb[0].mxu0
  %v1672 = vadd.f32 0.0, %v1671
  %v1673 = vpop.f32.mrb[0].mxu0
  %1674 = vmatprep.mubr.bf16.mxu0 0
  %1675 = vmatmul.mubr.bf16.gmra.mrb[0].mxu0 %v1579
  %v1676 = vpop.f32.mrb[0].mxu0
  %v1677 = vadd.f32 0.0, %v1676
  %v1678 = vpop.f32.mrb[0].mxu0
  %v1679 = vpop.f32.mrb[0].mxu0
  %v1680 = vadd.f32 0.0, %v1679
  %v1681 = vpop.f32.mrb[0].mxu0
  %1682 = vmatprep.mubr.bf16.mxu0 0
  %1683 = vmatmul.mubr.bf16.gmra.mrb[0].mxu0 %v1580
  %v1684 = vpop.f32.mrb[0].mxu0
  %v1685 = vadd.f32 0.0, %v1684
  %v1686 = vpop.f32.mrb[0].mxu0
  %v1687 = vpop.f32.mrb[0].mxu0
  %v1688 = vadd.f32 0.0, %v1687
  %v1689 = vpop.f32.mrb[0].mxu0
  %1690 = vmatprep.mubr.bf16.mxu0 0
  %1691 = vmatmul.mubr.bf16.gmra.mrb[0].mxu0 %v1581
  %v1692 = vpop.f32.mrb[0].mxu0
  %v1693 = vadd.f32 0.0, %v1692
  %v1694 = vpop.f32.mrb[0].mxu0
  %v1695 = vpop.f32.mrb[0].mxu0
  %v1696 = vpop.f32.mrb[0].mxu0
  %1697 = vdwg.mxu0
  %v1705 = vunpack.c.l.b16 %v1518
  %v1706 = vunpack.c.l.b16 %v1519
  %v1707 = vunpack.c.l.b16 %v1520
  %v1708 = vunpack.c.l.b16 %v1521
  %v1709 = vunpack.c.l.b16 %v1522
  %v1710 = vunpack.c.l.b16 %v1523
  %v1711 = vunpack.c.l.b16 %v1524
  %v1712 = vpack.c.b16 %v1706, %v1705
  %v1713 = vpack.c.b16 %v1708, %v1707
  %v1714 = vpack.c.b16 %v1710, %v1709
  %v1715 = vpack.c.b16 %v1711, %v1711
  %v1736 = vunpack.c.l.b16 %v1525
  %v1737 = vunpack.c.l.b16 %v1526
  %v1738 = vunpack.c.l.b16 %v1527
  %v1739 = vunpack.c.l.b16 %v1528
  %v1740 = vunpack.c.l.b16 %v1529
  %v1741 = vunpack.c.l.b16 %v1530
  %v1742 = vunpack.c.l.b16 %v1531
  %v1743 = vunpack.c.l.b16 %v1532
  %v1744 = vunpack.c.l.b16 %v1533
  %v1745 = vunpack.c.l.b16 %v1534
  %v1746 = vunpack.c.l.b16 %v1535
  %v1747 = vunpack.c.l.b16 %v1536
  %v1748 = vunpack.c.l.b16 %v1537
  %v1749 = vunpack.c.l.b16 %v1538
  %v1750 = vunpack.c.l.b16 %v1539
  %v1751 = vunpack.c.l.b16 %v1540
  %v1752 = vpack.c.b16 %v1737, %v1736
  %v1753 = vpack.c.b16 %v1739, %v1738
  %v1754 = vpack.c.b16 %v1741, %v1740
  %v1755 = vpack.c.b16 %v1743, %v1742
  %v1756 = vpack.c.b16 %v1745, %v1744
  %v1757 = vpack.c.b16 %v1747, %v1746
  %v1758 = vpack.c.b16 %v1749, %v1748
  %v1759 = vpack.c.b16 %v1751, %v1750
  %1768 = vmatprep.subr.bf16.mxu0 0
  %1769 = vmatpush1.bf16.msra.mxu0 %v1752
  %1770 = vmatprep.subr.bf16.mxu0 0
  %1771 = vmatpush1.bf16.msra.mxu0 %v1753
  %1772 = vmatprep.subr.bf16.mxu0 0
  %1773 = vmatpush1.bf16.msra.mxu0 %v1754
  %1774 = vmatprep.subr.bf16.mxu0 0
  %1775 = vmatpush1.bf16.msra.mxu0 %v1755
  %1776 = vmatprep.subr.bf16.mxu0 0
  %1777 = vmatpush1.bf16.msra.mxu0 %v1756
  %1778 = vmatprep.subr.bf16.mxu0 0
  %1779 = vmatpush1.bf16.msra.mxu0 %v1757
  %1780 = vmatprep.subr.bf16.mxu0 0
  %1781 = vmatpush1.bf16.msra.mxu0 %v1758
  %1782 = vmatprep.subr.bf16.mxu0 0
  %1783 = vmatpush1.bf16.msra.mxu0 %v1759
  %1784 = vmatprep.subr.bf16.mxu0 0
  %1785 = vmatpush1.bf16.msra.mxu0 0
  %1786 = vmatprep.subr.bf16.mxu0 0
  %1787 = vmatpush1.bf16.msra.mxu0 0
  %1788 = vmatprep.subr.bf16.mxu0 0
  %1789 = vmatpush1.bf16.msra.mxu0 0
  %1790 = vmatprep.subr.bf16.mxu0 0
  %1791 = vmatpush1.bf16.msra.mxu0 0
  %1792 = vmatprep.subr.bf16.mxu0 0
  %1793 = vmatpush1.bf16.msra.mxu0 0
  %1794 = vmatprep.subr.bf16.mxu0 0
  %1795 = vmatpush1.bf16.msra.mxu0 0
  %1796 = vmatprep.subr.bf16.mxu0 0
  %1797 = vmatpush1.bf16.msra.mxu0 0
  %1798 = vmatprep.subr.bf16.mxu0 0
  %1799 = vmatpush1.bf16.msra.mxu0 0
  %1800 = vmatprep.mubr.bf16.mxu0 0
  %1801 = vmatmul.mubr.bf16.gmra.mrb[0].mxu0 %v1712
  %v1802 = vpop.f32.mrb[0].mxu0
  %v1803 = vadd.f32 %v1669, %v1802
  %v1804 = vpop.f32.mrb[0].mxu0
  %v1805 = vpop.f32.mrb[0].mxu0
  %v1806 = vadd.f32 %v1672, %v1805
  %v1807 = vpop.f32.mrb[0].mxu0
  %1808 = vmatprep.mubr.bf16.mxu0 0
  %1809 = vmatmul.mubr.bf16.gmra.mrb[0].mxu0 %v1713
  %v1810 = vpop.f32.mrb[0].mxu0
  %v1811 = vadd.f32 %v1677, %v1810
  %v1812 = vpop.f32.mrb[0].mxu0
  %v1813 = vpop.f32.mrb[0].mxu0
  %v1814 = vadd.f32 %v1680, %v1813
  %v1815 = vpop.f32.mrb[0].mxu0
  %1816 = vmatprep.mubr.bf16.mxu0 0
  %1817 = vmatmul.mubr.bf16.gmra.mrb[0].mxu0 %v1714
  %v1818 = vpop.f32.mrb[0].mxu0
  %v1819 = vadd.f32 %v1685, %v1818
  %v1820 = vpop.f32.mrb[0].mxu0
  %v1821 = vpop.f32.mrb[0].mxu0
  %v1822 = vadd.f32 %v1688, %v1821
  %v1823 = vpop.f32.mrb[0].mxu0
  %1824 = vmatprep.mubr.bf16.mxu0 0
  %1825 = vmatmul.mubr.bf16.gmra.mrb[0].mxu0 %v1715
  %v1826 = vpop.f32.mrb[0].mxu0
  %v1827 = vadd.f32 %v1693, %v1826
  %v1828 = vpop.f32.mrb[0].mxu0
  %v1829 = vpop.f32.mrb[0].mxu0
  %v1830 = vpop.f32.mrb[0].mxu0
  %1831 = vdwg.mxu0
  %s1832 = scalar_lea.vmem %s0, 108
  %v1833 = vld [vmem:[%s1832] sm:$0xf]
  %v1834 = vld [vmem:[%s1832 + $0x4] sm:$0xf]
  %v1835 = vld [vmem:[%s1832 + $0x8] sm:$0xf]
  %v1836 = vld [vmem:[%s1832 + $0xc] sm:$0xf]
  %v1837 = vld [vmem:[%s1832 + $0x10] sm:$0xf]
  %v1838 = vld [vmem:[%s1832 + $0x14] sm:$0xf]
  %v1839 = vld [vmem:[%s1832 + $0x18] sm:$0xf]
  %v1840 = vld [vmem:[%s492] sm:$0xf]
  %v1841 = vld [vmem:[%s492 + $0x4] sm:$0xf]
  %v1842 = vld [vmem:[%s492 + $0x8] sm:$0xf]
  %v1843 = vld [vmem:[%s492 + $0xc] sm:$0xf]
  %v1844 = vld [vmem:[%s492 + $0x10] sm:$0xf]
  %v1845 = vld [vmem:[%s492 + $0x14] sm:$0xf]
  %v1846 = vld [vmem:[%s492 + $0x18] sm:$0xf]
  %v1847 = vld [vmem:[%s492 + $0x1c] sm:$0xf]
  %v1848 = vld [vmem:[%s492 + $0x20] sm:$0xf]
  %v1849 = vld [vmem:[%s492 + $0x24] sm:$0xf]
  %v1850 = vld [vmem:[%s492 + $0x28] sm:$0xf]
  %v1851 = vld [vmem:[%s492 + $0x2c] sm:$0xf]
  %v1852 = vld [vmem:[%s492 + $0x30] sm:$0xf]
  %v1853 = vld [vmem:[%s492 + $0x34] sm:$0xf]
  %v1854 = vld [vmem:[%s492 + $0x38] sm:$0xf]
  %v1855 = vld [vmem:[%s492 + $0x3c] sm:$0xf]
  %v1863 = vunpack.c.l.b16 %v1833
  %v1864 = vunpack.c.l.b16 %v1834
  %v1865 = vunpack.c.l.b16 %v1835
  %v1866 = vunpack.c.l.b16 %v1836
  %v1867 = vunpack.c.l.b16 %v1837
  %v1868 = vunpack.c.l.b16 %v1838
  %v1869 = vunpack.c.l.b16 %v1839
  %v1870 = vpack.c.b16 %v1864, %v1863
  %v1871 = vpack.c.b16 %v1866, %v1865
  %v1872 = vpack.c.b16 %v1868, %v1867
  %v1873 = vpack.c.b16 %v1869, %v1869
  %v1894 = vunpack.c.l.b16 %v1840
  %v1895 = vunpack.c.l.b16 %v1841
  %v1896 = vunpack.c.l.b16 %v1842
  %v1897 = vunpack.c.l.b16 %v1843
  %v1898 = vunpack.c.l.b16 %v1844
  %v1899 = vunpack.c.l.b16 %v1845
  %v1900 = vunpack.c.l.b16 %v1846
  %v1901 = vunpack.c.l.b16 %v1847
  %v1902 = vunpack.c.l.b16 %v1848
  %v1903 = vunpack.c.l.b16 %v1849
  %v1904 = vunpack.c.l.b16 %v1850
  %v1905 = vunpack.c.l.b16 %v1851
  %v1906 = vunpack.c.l.b16 %v1852
  %v1907 = vunpack.c.l.b16 %v1853
  %v1908 = vunpack.c.l.b16 %v1854
  %v1909 = vunpack.c.l.b16 %v1855
  %v1910 = vpack.c.b16 %v1895, %v1894
  %v1911 = vpack.c.b16 %v1897, %v1896
  %v1912 = vpack.c.b16 %v1899, %v1898
  %v1913 = vpack.c.b16 %v1901, %v1900
  %v1914 = vpack.c.b16 %v1903, %v1902
  %v1915 = vpack.c.b16 %v1905, %v1904
  %v1916 = vpack.c.b16 %v1907, %v1906
  %v1917 = vpack.c.b16 %v1909, %v1908
  %1926 = vmatprep.subr.bf16.mxu0 0
  %1927 = vmatpush1.bf16.msra.mxu0 %v1910
  %1928 = vmatprep.subr.bf16.mxu0 0
  %1929 = vmatpush1.bf16.msra.mxu0 %v1911
  %1930 = vmatprep.subr.bf16.mxu0 0
  %1931 = vmatpush1.bf16.msra.mxu0 %v1912
  %1932 = vmatprep.subr.bf16.mxu0 0
  %1933 = vmatpush1.bf16.msra.mxu0 %v1913
  %1934 = vmatprep.subr.bf16.mxu0 0
  %1935 = vmatpush1.bf16.msra.mxu0 %v1914
  %1936 = vmatprep.subr.bf16.mxu0 0
  %1937 = vmatpush1.bf16.msra.mxu0 %v1915
  %1938 = vmatprep.subr.bf16.mxu0 0
  %1939 = vmatpush1.bf16.msra.mxu0 %v1916
  %1940 = vmatprep.subr.bf16.mxu0 0
  %1941 = vmatpush1.bf16.msra.mxu0 %v1917
  %1942 = vmatprep.subr.bf16.mxu0 0
  %1943 = vmatpush1.bf16.msra.mxu0 0
  %1944 = vmatprep.subr.bf16.mxu0 0
  %1945 = vmatpush1.bf16.msra.mxu0 0
  %1946 = vmatprep.subr.bf16.mxu0 0
  %1947 = vmatpush1.bf16.msra.mxu0 0
  %1948 = vmatprep.subr.bf16.mxu0 0
  %1949 = vmatpush1.bf16.msra.mxu0 0
  %1950 = vmatprep.subr.bf16.mxu0 0
  %1951 = vmatpush1.bf16.msra.mxu0 0
  %1952 = vmatprep.subr.bf16.mxu0 0
  %1953 = vmatpush1.bf16.msra.mxu0 0
  %1954 = vmatprep.subr.bf16.mxu0 0
  %1955 = vmatpush1.bf16.msra.mxu0 0
  %1956 = vmatprep.subr.bf16.mxu0 0
  %1957 = vmatpush1.bf16.msra.mxu0 0
  %1958 = vmatprep.mubr.bf16.mxu0 0
  %1959 = vmatmul.mubr.bf16.gmra.mrb[0].mxu0 %v1870
  %v1960 = vpop.f32.mrb[0].mxu0
  %v1961 = vadd.f32 0.0, %v1960
  %v1962 = vpop.f32.mrb[0].mxu0
  %v1963 = vpop.f32.mrb[0].mxu0
  %v1964 = vadd.f32 0.0, %v1963
  %v1965 = vpop.f32.mrb[0].mxu0
  %1966 = vmatprep.mubr.bf16.mxu0 0
  %1967 = vmatmul.mubr.bf16.gmra.mrb[0].mxu0 %v1871
  %v1968 = vpop.f32.mrb[0].mxu0
  %v1969 = vadd.f32 0.0, %v1968
  %v1970 = vpop.f32.mrb[0].mxu0
  %v1971 = vpop.f32.mrb[0].mxu0
  %v1972 = vadd.f32 0.0, %v1971
  %v1973 = vpop.f32.mrb[0].mxu0
  %1974 = vmatprep.mubr.bf16.mxu0 0
  %1975 = vmatmul.mubr.bf16.gmra.mrb[0].mxu0 %v1872
  %v1976 = vpop.f32.mrb[0].mxu0
  %v1977 = vadd.f32 0.0, %v1976
  %v1978 = vpop.f32.mrb[0].mxu0
  %v1979 = vpop.f32.mrb[0].mxu0
  %v1980 = vadd.f32 0.0, %v1979
  %v1981 = vpop.f32.mrb[0].mxu0
  %1982 = vmatprep.mubr.bf16.mxu0 0
  %1983 = vmatmul.mubr.bf16.gmra.mrb[0].mxu0 %v1873
  %v1984 = vpop.f32.mrb[0].mxu0
  %v1985 = vadd.f32 0.0, %v1984
  %v1986 = vpop.f32.mrb[0].mxu0
  %v1987 = vpop.f32.mrb[0].mxu0
  %v1988 = vpop.f32.mrb[0].mxu0
  %1989 = vdwg.mxu0
  %v1990 = vadd.f32 %v1803, %v1961
  %v1991 = vadd.f32 %v1806, %v1964
  %v1992 = vadd.f32 %v1811, %v1969
  %v1993 = vadd.f32 %v1814, %v1972
  %v1994 = vadd.f32 %v1819, %v1977
  %v1995 = vadd.f32 %v1822, %v1980
  %v1996 = vadd.f32 %v1827, %v1985
  %s1997 = scalar_lea.vmem %s0, 112
  %v1998 = vld [vmem:[%s1997] sm:$0xf]
  %v1999 = vld [vmem:[%s1997 + $0x4] sm:$0xf]
  %v2000 = vld [vmem:[%s1997 + $0x8] sm:$0xf]
  %v2001 = vld [vmem:[%s1997 + $0xc] sm:$0xf]
  %v2002 = vld [vmem:[%s1997 + $0x10] sm:$0xf]
  %v2003 = vld [vmem:[%s1997 + $0x14] sm:$0xf]
  %v2004 = vld [vmem:[%s1997 + $0x18] sm:$0xf]
  %v2005 = vld [vmem:[%s658] sm:$0xf]
  %v2006 = vld [vmem:[%s658 + $0x4] sm:$0xf]
  %v2007 = vld [vmem:[%s658 + $0x8] sm:$0xf]
  %v2008 = vld [vmem:[%s658 + $0xc] sm:$0xf]
  %v2009 = vld [vmem:[%s658 + $0x10] sm:$0xf]
  %v2010 = vld [vmem:[%s658 + $0x14] sm:$0xf]
  %v2011 = vld [vmem:[%s658 + $0x18] sm:$0xf]
  %v2012 = vld [vmem:[%s658 + $0x1c] sm:$0xf]
  %v2013 = vld [vmem:[%s658 + $0x20] sm:$0xf]
  %v2014 = vld [vmem:[%s658 + $0x24] sm:$0xf]
  %v2015 = vld [vmem:[%s658 + $0x28] sm:$0xf]
  %v2016 = vld [vmem:[%s658 + $0x2c] sm:$0xf]
  %v2017 = vld [vmem:[%s658 + $0x30] sm:$0xf]
  %v2018 = vld [vmem:[%s658 + $0x34] sm:$0xf]
  %v2019 = vld [vmem:[%s658 + $0x38] sm:$0xf]
  %v2020 = vld [vmem:[%s658 + $0x3c] sm:$0xf]
  %v2028 = vunpack.c.l.b16 %v1998
  %v2029 = vunpack.c.l.b16 %v1999
  %v2030 = vunpack.c.l.b16 %v2000
  %v2031 = vunpack.c.l.b16 %v2001
  %v2032 = vunpack.c.l.b16 %v2002
  %v2033 = vunpack.c.l.b16 %v2003
  %v2034 = vunpack.c.l.b16 %v2004
  %v2035 = vpack.c.b16 %v2029, %v2028
  %v2036 = vpack.c.b16 %v2031, %v2030
  %v2037 = vpack.c.b16 %v2033, %v2032
  %v2038 = vpack.c.b16 %v2034, %v2034
  %v2059 = vunpack.c.l.b16 %v2005
  %v2060 = vunpack.c.l.b16 %v2006
  %v2061 = vunpack.c.l.b16 %v2007
  %v2062 = vunpack.c.l.b16 %v2008
  %v2063 = vunpack.c.l.b16 %v2009
  %v2064 = vunpack.c.l.b16 %v2010
  %v2065 = vunpack.c.l.b16 %v2011
  %v2066 = vunpack.c.l.b16 %v2012
  %v2067 = vunpack.c.l.b16 %v2013
  %v2068 = vunpack.c.l.b16 %v2014
  %v2069 = vunpack.c.l.b16 %v2015
  %v2070 = vunpack.c.l.b16 %v2016
  %v2071 = vunpack.c.l.b16 %v2017
  %v2072 = vunpack.c.l.b16 %v2018
  %v2073 = vunpack.c.l.b16 %v2019
  %v2074 = vunpack.c.l.b16 %v2020
  %v2075 = vpack.c.b16 %v2060, %v2059
  %v2076 = vpack.c.b16 %v2062, %v2061
  %v2077 = vpack.c.b16 %v2064, %v2063
  %v2078 = vpack.c.b16 %v2066, %v2065
  %v2079 = vpack.c.b16 %v2068, %v2067
  %v2080 = vpack.c.b16 %v2070, %v2069
  %v2081 = vpack.c.b16 %v2072, %v2071
  %v2082 = vpack.c.b16 %v2074, %v2073
  %2091 = vmatprep.subr.bf16.mxu0 0
  %2092 = vmatpush1.bf16.msra.mxu0 %v2075
  %2093 = vmatprep.subr.bf16.mxu0 0
  %2094 = vmatpush1.bf16.msra.mxu0 %v2076
  %2095 = vmatprep.subr.bf16.mxu0 0
  %2096 = vmatpush1.bf16.msra.mxu0 %v2077
  %2097 = vmatprep.subr.bf16.mxu0 0
  %2098 = vmatpush1.bf16.msra.mxu0 %v2078
  %2099 = vmatprep.subr.bf16.mxu0 0
  %2100 = vmatpush1.bf16.msra.mxu0 %v2079
  %2101 = vmatprep.subr.bf16.mxu0 0
  %2102 = vmatpush1.bf16.msra.mxu0 %v2080
  %2103 = vmatprep.subr.bf16.mxu0 0
  %2104 = vmatpush1.bf16.msra.mxu0 %v2081
  %2105 = vmatprep.subr.bf16.mxu0 0
  %2106 = vmatpush1.bf16.msra.mxu0 %v2082
  %2107 = vmatprep.subr.bf16.mxu0 0
  %2108 = vmatpush1.bf16.msra.mxu0 0
  %2109 = vmatprep.subr.bf16.mxu0 0
  %2110 = vmatpush1.bf16.msra.mxu0 0
  %2111 = vmatprep.subr.bf16.mxu0 0
  %2112 = vmatpush1.bf16.msra.mxu0 0
  %2113 = vmatprep.subr.bf16.mxu0 0
  %2114 = vmatpush1.bf16.msra.mxu0 0
  %2115 = vmatprep.subr.bf16.mxu0 0
  %2116 = vmatpush1.bf16.msra.mxu0 0
  %2117 = vmatprep.subr.bf16.mxu0 0
  %2118 = vmatpush1.bf16.msra.mxu0 0
  %2119 = vmatprep.subr.bf16.mxu0 0
  %2120 = vmatpush1.bf16.msra.mxu0 0
  %2121 = vmatprep.subr.bf16.mxu0 0
  %2122 = vmatpush1.bf16.msra.mxu0 0
  %2123 = vmatprep.mubr.bf16.mxu0 0
  %2124 = vmatmul.mubr.bf16.gmra.mrb[0].mxu0 %v2035
  %v2125 = vpop.f32.mrb[0].mxu0
  %v2126 = vadd.f32 0.0, %v2125
  %v2127 = vpop.f32.mrb[0].mxu0
  %v2128 = vpop.f32.mrb[0].mxu0
  %v2129 = vadd.f32 0.0, %v2128
  %v2130 = vpop.f32.mrb[0].mxu0
  %2131 = vmatprep.mubr.bf16.mxu0 0
  %2132 = vmatmul.mubr.bf16.gmra.mrb[0].mxu0 %v2036
  %v2133 = vpop.f32.mrb[0].mxu0
  %v2134 = vadd.f32 0.0, %v2133
  %v2135 = vpop.f32.mrb[0].mxu0
  %v2136 = vpop.f32.mrb[0].mxu0
  %v2137 = vadd.f32 0.0, %v2136
  %v2138 = vpop.f32.mrb[0].mxu0
  %2139 = vmatprep.mubr.bf16.mxu0 0
  %2140 = vmatmul.mubr.bf16.gmra.mrb[0].mxu0 %v2037
  %v2141 = vpop.f32.mrb[0].mxu0
  %v2142 = vadd.f32 0.0, %v2141
  %v2143 = vpop.f32.mrb[0].mxu0
  %v2144 = vpop.f32.mrb[0].mxu0
  %v2145 = vadd.f32 0.0, %v2144
  %v2146 = vpop.f32.mrb[0].mxu0
  %2147 = vmatprep.mubr.bf16.mxu0 0
  %2148 = vmatmul.mubr.bf16.gmra.mrb[0].mxu0 %v2038
  %v2149 = vpop.f32.mrb[0].mxu0
  %v2150 = vadd.f32 0.0, %v2149
  %v2151 = vpop.f32.mrb[0].mxu0
  %v2152 = vpop.f32.mrb[0].mxu0
  %v2153 = vpop.f32.mrb[0].mxu0
  %2154 = vdwg.mxu0
  %v2155 = vadd.f32 %v1990, %v2126
  %v2156 = vadd.f32 %v1991, %v2129
  %v2157 = vadd.f32 %v1992, %v2134
  %v2158 = vadd.f32 %v1993, %v2137
  %v2159 = vadd.f32 %v1994, %v2142
  %v2160 = vadd.f32 %v1995, %v2145
  %v2161 = vadd.f32 %v1996, %v2150
  %v2162 = vld [vmem:[%s2] sm:$0x1]
  %v2164 = vlaneseq
  %v2165 = vshrl.u32 %v2164, 7
  %v2166 = vsub.s32 0, %v2165
  %v2167 = vrot.slane %v2162, %v2166
  %v2169 = vadd.f32 %v2155, %v2167
  %v2170 = vadd.f32 %v2156, %v2167
  %v2171 = vadd.f32 %v2157, %v2167
  %v2172 = vadd.f32 %v2158, %v2167
  %v2173 = vadd.f32 %v2159, %v2167
  %v2174 = vadd.f32 %v2160, %v2167
  %v2175 = vadd.f32 %v2161, %v2167
  %v2176 = vmax.f32 %v2169, 0.0
  %v2177 = vmax.f32 %v2170, 0.0
  %v2178 = vmax.f32 %v2171, 0.0
  %v2179 = vmax.f32 %v2172, 0.0
  %v2180 = vmax.f32 %v2173, 0.0
  %v2181 = vmax.f32 %v2174, 0.0
  %v2182 = vmax.f32 %v2175, 0.0
  %s2183 = scalar_lea.vmem [#allocation2], 248
  %2184 = vst [vmem:[%s2183] sm:$0xff] %v2176
  %2185 = vst [vmem:[%s2183 + $0x8] sm:$0xff] %v2177
  %2186 = vst [vmem:[%s2183 + $0x10] sm:$0xff] %v2178
  %2187 = vst [vmem:[%s2183 + $0x18] sm:$0xff] %v2179
  %2188 = vst [vmem:[%s2183 + $0x20] sm:$0xff] %v2180
  %2189 = vst [vmem:[%s2183 + $0x28] sm:$0xff] %v2181
  %2190 = vst [vmem:[%s2183 + $0x30] sm:$0xff] %v2182
  %v2191 = vld [vmem:[%s1832] sm:$0xf]
  %v2192 = vld [vmem:[%s1832 + $0x4] sm:$0xf]
  %v2193 = vld [vmem:[%s1832 + $0x8] sm:$0xf]
  %v2194 = vld [vmem:[%s1832 + $0xc] sm:$0xf]
  %v2195 = vld [vmem:[%s1832 + $0x10] sm:$0xf]
  %v2196 = vld [vmem:[%s1832 + $0x14] sm:$0xf]
  %v2197 = vld [vmem:[%s1832 + $0x18] sm:$0xf]
  %v2198 = vld [vmem:[%s1] sm:$0xf]
  %v2199 = vld [vmem:[%s1 + $0x4] sm:$0xf]
  %v2200 = vld [vmem:[%s1 + $0x8] sm:$0xf]
  %v2201 = vld [vmem:[%s1 + $0xc] sm:$0xf]
  %v2202 = vld [vmem:[%s1 + $0x10] sm:$0xf]
  %v2203 = vld [vmem:[%s1 + $0x14] sm:$0xf]
  %v2204 = vld [vmem:[%s1 + $0x18] sm:$0xf]
  %v2205 = vld [vmem:[%s1 + $0x1c] sm:$0xf]
  %v2206 = vld [vmem:[%s1 + $0x20] sm:$0xf]
  %v2207 = vld [vmem:[%s1 + $0x24] sm:$0xf]
  %v2208 = vld [vmem:[%s1 + $0x28] sm:$0xf]
  %v2209 = vld [vmem:[%s1 + $0x2c] sm:$0xf]
  %v2210 = vld [vmem:[%s1 + $0x30] sm:$0xf]
  %v2211 = vld [vmem:[%s1 + $0x34] sm:$0xf]
  %v2212 = vld [vmem:[%s1 + $0x38] sm:$0xf]
  %v2213 = vld [vmem:[%s1 + $0x3c] sm:$0xf]
  %v2214 = vld [vmem:[%s1997] sm:$0xf]
  %v2215 = vld [vmem:[%s1997 + $0x4] sm:$0xf]
  %v2216 = vld [vmem:[%s1997 + $0x8] sm:$0xf]
  %v2217 = vld [vmem:[%s1997 + $0xc] sm:$0xf]
  %v2218 = vld [vmem:[%s1997 + $0x10] sm:$0xf]
  %v2219 = vld [vmem:[%s1997 + $0x14] sm:$0xf]
  %v2220 = vld [vmem:[%s1997 + $0x18] sm:$0xf]
  %v2221 = vld [vmem:[%s199] sm:$0xf]
  %v2222 = vld [vmem:[%s199 + $0x4] sm:$0xf]
  %v2223 = vld [vmem:[%s199 + $0x8] sm:$0xf]
  %v2224 = vld [vmem:[%s199 + $0xc] sm:$0xf]
  %v2225 = vld [vmem:[%s199 + $0x10] sm:$0xf]
  %v2226 = vld [vmem:[%s199 + $0x14] sm:$0xf]
  %v2227 = vld [vmem:[%s199 + $0x18] sm:$0xf]
  %v2228 = vld [vmem:[%s199 + $0x1c] sm:$0xf]
  %v2229 = vld [vmem:[%s199 + $0x20] sm:$0xf]
  %v2230 = vld [vmem:[%s199 + $0x24] sm:$0xf]
  %v2231 = vld [vmem:[%s199 + $0x28] sm:$0xf]
  %v2232 = vld [vmem:[%s199 + $0x2c] sm:$0xf]
  %v2233 = vld [vmem:[%s199 + $0x30] sm:$0xf]
  %v2234 = vld [vmem:[%s199 + $0x34] sm:$0xf]
  %v2235 = vld [vmem:[%s199 + $0x38] sm:$0xf]
  %v2236 = vld [vmem:[%s199 + $0x3c] sm:$0xf]
  %v2244 = vunpack.c.l.b16 %v2214
  %v2245 = vunpack.c.l.b16 %v2215
  %v2246 = vunpack.c.l.b16 %v2216
  %v2247 = vunpack.c.l.b16 %v2217
  %v2248 = vunpack.c.l.b16 %v2218
  %v2249 = vunpack.c.l.b16 %v2219
  %v2250 = vunpack.c.l.b16 %v2220
  %v2251 = vpack.c.b16 %v2245, %v2244
  %v2252 = vpack.c.b16 %v2247, %v2246
  %v2253 = vpack.c.b16 %v2249, %v2248
  %v2254 = vpack.c.b16 %v2250, %v2250
  %v2275 = vunpack.c.l.b16 %v2221
  %v2276 = vunpack.c.l.b16 %v2222
  %v2277 = vunpack.c.l.b16 %v2223
  %v2278 = vunpack.c.l.b16 %v2224
  %v2279 = vunpack.c.l.b16 %v2225
  %v2280 = vunpack.c.l.b16 %v2226
  %v2281 = vunpack.c.l.b16 %v2227
  %v2282 = vunpack.c.l.b16 %v2228
  %v2283 = vunpack.c.l.b16 %v2229
  %v2284 = vunpack.c.l.b16 %v2230
  %v2285 = vunpack.c.l.b16 %v2231
  %v2286 = vunpack.c.l.b16 %v2232
  %v2287 = vunpack.c.l.b16 %v2233
  %v2288 = vunpack.c.l.b16 %v2234
  %v2289 = vunpack.c.l.b16 %v2235
  %v2290 = vunpack.c.l.b16 %v2236
  %v2291 = vpack.c.b16 %v2276, %v2275
  %v2292 = vpack.c.b16 %v2278, %v2277
  %v2293 = vpack.c.b16 %v2280, %v2279
  %v2294 = vpack.c.b16 %v2282, %v2281
  %v2295 = vpack.c.b16 %v2284, %v2283
  %v2296 = vpack.c.b16 %v2286, %v2285
  %v2297 = vpack.c.b16 %v2288, %v2287
  %v2298 = vpack.c.b16 %v2290, %v2289
  %2307 = vmatprep.subr.bf16.mxu0 0
  %2308 = vmatpush1.bf16.msra.mxu0 %v2291
  %2309 = vmatprep.subr.bf16.mxu0 0
  %2310 = vmatpush1.bf16.msra.mxu0 %v2292
  %2311 = vmatprep.subr.bf16.mxu0 0
  %2312 = vmatpush1.bf16.msra.mxu0 %v2293
  %2313 = vmatprep.subr.bf16.mxu0 0
  %2314 = vmatpush1.bf16.msra.mxu0 %v2294
  %2315 = vmatprep.subr.bf16.mxu0 0
  %2316 = vmatpush1.bf16.msra.mxu0 %v2295
  %2317 = vmatprep.subr.bf16.mxu0 0
  %2318 = vmatpush1.bf16.msra.mxu0 %v2296
  %2319 = vmatprep.subr.bf16.mxu0 0
  %2320 = vmatpush1.bf16.msra.mxu0 %v2297
  %2321 = vmatprep.subr.bf16.mxu0 0
  %2322 = vmatpush1.bf16.msra.mxu0 %v2298
  %2323 = vmatprep.subr.bf16.mxu0 0
  %2324 = vmatpush1.bf16.msra.mxu0 0
  %2325 = vmatprep.subr.bf16.mxu0 0
  %2326 = vmatpush1.bf16.msra.mxu0 0
  %2327 = vmatprep.subr.bf16.mxu0 0
  %2328 = vmatpush1.bf16.msra.mxu0 0
  %2329 = vmatprep.subr.bf16.mxu0 0
  %2330 = vmatpush1.bf16.msra.mxu0 0
  %2331 = vmatprep.subr.bf16.mxu0 0
  %2332 = vmatpush1.bf16.msra.mxu0 0
  %2333 = vmatprep.subr.bf16.mxu0 0
  %2334 = vmatpush1.bf16.msra.mxu0 0
  %2335 = vmatprep.subr.bf16.mxu0 0
  %2336 = vmatpush1.bf16.msra.mxu0 0
  %2337 = vmatprep.subr.bf16.mxu0 0
  %2338 = vmatpush1.bf16.msra.mxu0 0
  %2339 = vmatprep.mubr.bf16.mxu0 0
  %2340 = vmatmul.mubr.bf16.gmra.mrb[0].mxu0 %v2251
  %v2341 = vpop.f32.mrb[0].mxu0
  %v2342 = vadd.f32 0.0, %v2341
  %v2343 = vpop.f32.mrb[0].mxu0
  %v2344 = vpop.f32.mrb[0].mxu0
  %v2345 = vadd.f32 0.0, %v2344
  %v2346 = vpop.f32.mrb[0].mxu0
  %2347 = vmatprep.mubr.bf16.mxu0 0
  %2348 = vmatmul.mubr.bf16.gmra.mrb[0].mxu0 %v2252
  %v2349 = vpop.f32.mrb[0].mxu0
  %v2350 = vadd.f32 0.0, %v2349
  %v2351 = vpop.f32.mrb[0].mxu0
  %v2352 = vpop.f32.mrb[0].mxu0
  %v2353 = vadd.f32 0.0, %v2352
  %v2354 = vpop.f32.mrb[0].mxu0
  %2355 = vmatprep.mubr.bf16.mxu0 0
  %2356 = vmatmul.mubr.bf16.gmra.mrb[0].mxu0 %v2253
  %v2357 = vpop.f32.mrb[0].mxu0
  %v2358 = vadd.f32 0.0, %v2357
  %v2359 = vpop.f32.mrb[0].mxu0
  %v2360 = vpop.f32.mrb[0].mxu0
  %v2361 = vadd.f32 0.0, %v2360
  %v2362 = vpop.f32.mrb[0].mxu0
  %2363 = vmatprep.mubr.bf16.mxu0 0
  %2364 = vmatmul.mubr.bf16.gmra.mrb[0].mxu0 %v2254
  %v2365 = vpop.f32.mrb[0].mxu0
  %v2366 = vadd.f32 0.0, %v2365
  %v2367 = vpop.f32.mrb[0].mxu0
  %v2368 = vpop.f32.mrb[0].mxu0
  %v2369 = vpop.f32.mrb[0].mxu0
  %2370 = vdwg.mxu0
  %v2378 = vunpack.c.l.b16 %v2191
  %v2379 = vunpack.c.l.b16 %v2192
  %v2380 = vunpack.c.l.b16 %v2193
  %v2381 = vunpack.c.l.b16 %v2194
  %v2382 = vunpack.c.l.b16 %v2195
  %v2383 = vunpack.c.l.b16 %v2196
  %v2384 = vunpack.c.l.b16 %v2197
  %v2385 = vpack.c.b16 %v2379, %v2378
  %v2386 = vpack.c.b16 %v2381, %v2380
  %v2387 = vpack.c.b16 %v2383, %v2382
  %v2388 = vpack.c.b16 %v2384, %v2384
  %v2409 = vunpack.c.l.b16 %v2198
  %v2410 = vunpack.c.l.b16 %v2199
  %v2411 = vunpack.c.l.b16 %v2200
  %v2412 = vunpack.c.l.b16 %v2201
  %v2413 = vunpack.c.l.b16 %v2202
  %v2414 = vunpack.c.l.b16 %v2203
  %v2415 = vunpack.c.l.b16 %v2204
  %v2416 = vunpack.c.l.b16 %v2205
  %v2417 = vunpack.c.l.b16 %v2206
  %v2418 = vunpack.c.l.b16 %v2207
  %v2419 = vunpack.c.l.b16 %v2208
  %v2420 = vunpack.c.l.b16 %v2209
  %v2421 = vunpack.c.l.b16 %v2210
  %v2422 = vunpack.c.l.b16 %v2211
  %v2423 = vunpack.c.l.b16 %v2212
  %v2424 = vunpack.c.l.b16 %v2213
  %v2425 = vpack.c.b16 %v2410, %v2409
  %v2426 = vpack.c.b16 %v2412, %v2411
  %v2427 = vpack.c.b16 %v2414, %v2413
  %v2428 = vpack.c.b16 %v2416, %v2415
  %v2429 = vpack.c.b16 %v2418, %v2417
  %v2430 = vpack.c.b16 %v2420, %v2419
  %v2431 = vpack.c.b16 %v2422, %v2421
  %v2432 = vpack.c.b16 %v2424, %v2423
  %2441 = vmatprep.subr.bf16.mxu0 0
  %2442 = vmatpush1.bf16.msra.mxu0 %v2425
  %2443 = vmatprep.subr.bf16.mxu0 0
  %2444 = vmatpush1.bf16.msra.mxu0 %v2426
  %2445 = vmatprep.subr.bf16.mxu0 0
  %2446 = vmatpush1.bf16.msra.mxu0 %v2427
  %2447 = vmatprep.subr.bf16.mxu0 0
  %2448 = vmatpush1.bf16.msra.mxu0 %v2428
  %2449 = vmatprep.subr.bf16.mxu0 0
  %2450 = vmatpush1.bf16.msra.mxu0 %v2429
  %2451 = vmatprep.subr.bf16.mxu0 0
  %2452 = vmatpush1.bf16.msra.mxu0 %v2430
  %2453 = vmatprep.subr.bf16.mxu0 0
  %2454 = vmatpush1.bf16.msra.mxu0 %v2431
  %2455 = vmatprep.subr.bf16.mxu0 0
  %2456 = vmatpush1.bf16.msra.mxu0 %v2432
  %2457 = vmatprep.subr.bf16.mxu0 0
  %2458 = vmatpush1.bf16.msra.mxu0 0
  %2459 = vmatprep.subr.bf16.mxu0 0
  %2460 = vmatpush1.bf16.msra.mxu0 0
  %2461 = vmatprep.subr.bf16.mxu0 0
  %2462 = vmatpush1.bf16.msra.mxu0 0
  %2463 = vmatprep.subr.bf16.mxu0 0
  %2464 = vmatpush1.bf16.msra.mxu0 0
  %2465 = vmatprep.subr.bf16.mxu0 0
  %2466 = vmatpush1.bf16.msra.mxu0 0
  %2467 = vmatprep.subr.bf16.mxu0 0
  %2468 = vmatpush1.bf16.msra.mxu0 0
  %2469 = vmatprep.subr.bf16.mxu0 0
  %2470 = vmatpush1.bf16.msra.mxu0 0
  %2471 = vmatprep.subr.bf16.mxu0 0
  %2472 = vmatpush1.bf16.msra.mxu0 0
  %2473 = vmatprep.mubr.bf16.mxu0 0
  %2474 = vmatmul.mubr.bf16.gmra.mrb[0].mxu0 %v2385
  %v2475 = vpop.f32.mrb[0].mxu0
  %v2476 = vadd.f32 %v2342, %v2475
  %v2477 = vpop.f32.mrb[0].mxu0
  %v2478 = vpop.f32.mrb[0].mxu0
  %v2479 = vadd.f32 %v2345, %v2478
  %v2480 = vpop.f32.mrb[0].mxu0
  %2481 = vmatprep.mubr.bf16.mxu0 0
  %2482 = vmatmul.mubr.bf16.gmra.mrb[0].mxu0 %v2386
  %v2483 = vpop.f32.mrb[0].mxu0
  %v2484 = vadd.f32 %v2350, %v2483
  %v2485 = vpop.f32.mrb[0].mxu0
  %v2486 = vpop.f32.mrb[0].mxu0
  %v2487 = vadd.f32 %v2353, %v2486
  %v2488 = vpop.f32.mrb[0].mxu0
  %2489 = vmatprep.mubr.bf16.mxu0 0
  %2490 = vmatmul.mubr.bf16.gmra.mrb[0].mxu0 %v2387
  %v2491 = vpop.f32.mrb[0].mxu0
  %v2492 = vadd.f32 %v2358, %v2491
  %v2493 = vpop.f32.mrb[0].mxu0
  %v2494 = vpop.f32.mrb[0].mxu0
  %v2495 = vadd.f32 %v2361, %v2494
  %v2496 = vpop.f32.mrb[0].mxu0
  %2497 = vmatprep.mubr.bf16.mxu0 0
  %2498 = vmatmul.mubr.bf16.gmra.mrb[0].mxu0 %v2388
  %v2499 = vpop.f32.mrb[0].mxu0
  %v2500 = vadd.f32 %v2366, %v2499
  %v2501 = vpop.f32.mrb[0].mxu0
  %v2502 = vpop.f32.mrb[0].mxu0
  %v2503 = vpop.f32.mrb[0].mxu0
  %2504 = vdwg.mxu0
  %s2505 = scalar_lea.vmem %s0, 144
  %v2506 = vld [vmem:[%s2505] sm:$0xf]
  %v2507 = vld [vmem:[%s2505 + $0x4] sm:$0xf]
  %v2508 = vld [vmem:[%s2505 + $0x8] sm:$0xf]
  %v2509 = vld [vmem:[%s2505 + $0xc] sm:$0xf]
  %v2510 = vld [vmem:[%s2505 + $0x10] sm:$0xf]
  %v2511 = vld [vmem:[%s2505 + $0x14] sm:$0xf]
  %v2512 = vld [vmem:[%s2505 + $0x18] sm:$0xf]
  %v2513 = vld [vmem:[%s492] sm:$0xf]
  %v2514 = vld [vmem:[%s492 + $0x4] sm:$0xf]
  %v2515 = vld [vmem:[%s492 + $0x8] sm:$0xf]
  %v2516 = vld [vmem:[%s492 + $0xc] sm:$0xf]
  %v2517 = vld [vmem:[%s492 + $0x10] sm:$0xf]
  %v2518 = vld [vmem:[%s492 + $0x14] sm:$0xf]
  %v2519 = vld [vmem:[%s492 + $0x18] sm:$0xf]
  %v2520 = vld [vmem:[%s492 + $0x1c] sm:$0xf]
  %v2521 = vld [vmem:[%s492 + $0x20] sm:$0xf]
  %v2522 = vld [vmem:[%s492 + $0x24] sm:$0xf]
  %v2523 = vld [vmem:[%s492 + $0x28] sm:$0xf]
  %v2524 = vld [vmem:[%s492 + $0x2c] sm:$0xf]
  %v2525 = vld [vmem:[%s492 + $0x30] sm:$0xf]
  %v2526 = vld [vmem:[%s492 + $0x34] sm:$0xf]
  %v2527 = vld [vmem:[%s492 + $0x38] sm:$0xf]
  %v2528 = vld [vmem:[%s492 + $0x3c] sm:$0xf]
  %v2536 = vunpack.c.l.b16 %v2506
  %v2537 = vunpack.c.l.b16 %v2507
  %v2538 = vunpack.c.l.b16 %v2508
  %v2539 = vunpack.c.l.b16 %v2509
  %v2540 = vunpack.c.l.b16 %v2510
  %v2541 = vunpack.c.l.b16 %v2511
  %v2542 = vunpack.c.l.b16 %v2512
  %v2543 = vpack.c.b16 %v2537, %v2536
  %v2544 = vpack.c.b16 %v2539, %v2538
  %v2545 = vpack.c.b16 %v2541, %v2540
  %v2546 = vpack.c.b16 %v2542, %v2542
  %v2567 = vunpack.c.l.b16 %v2513
  %v2568 = vunpack.c.l.b16 %v2514
  %v2569 = vunpack.c.l.b16 %v2515
  %v2570 = vunpack.c.l.b16 %v2516
  %v2571 = vunpack.c.l.b16 %v2517
  %v2572 = vunpack.c.l.b16 %v2518
  %v2573 = vunpack.c.l.b16 %v2519
  %v2574 = vunpack.c.l.b16 %v2520
  %v2575 = vunpack.c.l.b16 %v2521
  %v2576 = vunpack.c.l.b16 %v2522
  %v2577 = vunpack.c.l.b16 %v2523
  %v2578 = vunpack.c.l.b16 %v2524
  %v2579 = vunpack.c.l.b16 %v2525
  %v2580 = vunpack.c.l.b16 %v2526
  %v2581 = vunpack.c.l.b16 %v2527
  %v2582 = vunpack.c.l.b16 %v2528
  %v2583 = vpack.c.b16 %v2568, %v2567
  %v2584 = vpack.c.b16 %v2570, %v2569
  %v2585 = vpack.c.b16 %v2572, %v2571
  %v2586 = vpack.c.b16 %v2574, %v2573
  %v2587 = vpack.c.b16 %v2576, %v2575
  %v2588 = vpack.c.b16 %v2578, %v2577
  %v2589 = vpack.c.b16 %v2580, %v2579
  %v2590 = vpack.c.b16 %v2582, %v2581
  %2599 = vmatprep.subr.bf16.mxu0 0
  %2600 = vmatpush1.bf16.msra.mxu0 %v2583
  %2601 = vmatprep.subr.bf16.mxu0 0
  %2602 = vmatpush1.bf16.msra.mxu0 %v2584
  %2603 = vmatprep.subr.bf16.mxu0 0
  %2604 = vmatpush1.bf16.msra.mxu0 %v2585
  %2605 = vmatprep.subr.bf16.mxu0 0
  %2606 = vmatpush1.bf16.msra.mxu0 %v2586
  %2607 = vmatprep.subr.bf16.mxu0 0
  %2608 = vmatpush1.bf16.msra.mxu0 %v2587
  %2609 = vmatprep.subr.bf16.mxu0 0
  %2610 = vmatpush1.bf16.msra.mxu0 %v2588
  %2611 = vmatprep.subr.bf16.mxu0 0
  %2612 = vmatpush1.bf16.msra.mxu0 %v2589
  %2613 = vmatprep.subr.bf16.mxu0 0
  %2614 = vmatpush1.bf16.msra.mxu0 %v2590
  %2615 = vmatprep.subr.bf16.mxu0 0
  %2616 = vmatpush1.bf16.msra.mxu0 0
  %2617 = vmatprep.subr.bf16.mxu0 0
  %2618 = vmatpush1.bf16.msra.mxu0 0
  %2619 = vmatprep.subr.bf16.mxu0 0
  %2620 = vmatpush1.bf16.msra.mxu0 0
  %2621 = vmatprep.subr.bf16.mxu0 0
  %2622 = vmatpush1.bf16.msra.mxu0 0
  %2623 = vmatprep.subr.bf16.mxu0 0
  %2624 = vmatpush1.bf16.msra.mxu0 0
  %2625 = vmatprep.subr.bf16.mxu0 0
  %2626 = vmatpush1.bf16.msra.mxu0 0
  %2627 = vmatprep.subr.bf16.mxu0 0
  %2628 = vmatpush1.bf16.msra.mxu0 0
  %2629 = vmatprep.subr.bf16.mxu0 0
  %2630 = vmatpush1.bf16.msra.mxu0 0
  %2631 = vmatprep.mubr.bf16.mxu0 0
  %2632 = vmatmul.mubr.bf16.gmra.mrb[0].mxu0 %v2543
  %v2633 = vpop.f32.mrb[0].mxu0
  %v2634 = vadd.f32 0.0, %v2633
  %v2635 = vpop.f32.mrb[0].mxu0
  %v2636 = vpop.f32.mrb[0].mxu0
  %v2637 = vadd.f32 0.0, %v2636
  %v2638 = vpop.f32.mrb[0].mxu0
  %2639 = vmatprep.mubr.bf16.mxu0 0
  %2640 = vmatmul.mubr.bf16.gmra.mrb[0].mxu0 %v2544
  %v2641 = vpop.f32.mrb[0].mxu0
  %v2642 = vadd.f32 0.0, %v2641
  %v2643 = vpop.f32.mrb[0].mxu0
  %v2644 = vpop.f32.mrb[0].mxu0
  %v2645 = vadd.f32 0.0, %v2644
  %v2646 = vpop.f32.mrb[0].mxu0
  %2647 = vmatprep.mubr.bf16.mxu0 0
  %2648 = vmatmul.mubr.bf16.gmra.mrb[0].mxu0 %v2545
  %v2649 = vpop.f32.mrb[0].mxu0
  %v2650 = vadd.f32 0.0, %v2649
  %v2651 = vpop.f32.mrb[0].mxu0
  %v2652 = vpop.f32.mrb[0].mxu0
  %v2653 = vadd.f32 0.0, %v2652
  %v2654 = vpop.f32.mrb[0].mxu0
  %2655 = vmatprep.mubr.bf16.mxu0 0
  %2656 = vmatmul.mubr.bf16.gmra.mrb[0].mxu0 %v2546
  %v2657 = vpop.f32.mrb[0].mxu0
  %v2658 = vadd.f32 0.0, %v2657
  %v2659 = vpop.f32.mrb[0].mxu0
  %v2660 = vpop.f32.mrb[0].mxu0
  %v2661 = vpop.f32.mrb[0].mxu0
  %2662 = vdwg.mxu0
  %v2663 = vadd.f32 %v2476, %v2634
  %v2664 = vadd.f32 %v2479, %v2637
  %v2665 = vadd.f32 %v2484, %v2642
  %v2666 = vadd.f32 %v2487, %v2645
  %v2667 = vadd.f32 %v2492, %v2650
  %v2668 = vadd.f32 %v2495, %v2653
  %v2669 = vadd.f32 %v2500, %v2658
  %s2670 = scalar_lea.vmem %s0, 148
  %v2671 = vld [vmem:[%s2670] sm:$0xf]
  %v2672 = vld [vmem:[%s2670 + $0x4] sm:$0xf]
  %v2673 = vld [vmem:[%s2670 + $0x8] sm:$0xf]
  %v2674 = vld [vmem:[%s2670 + $0xc] sm:$0xf]
  %v2675 = vld [vmem:[%s2670 + $0x10] sm:$0xf]
  %v2676 = vld [vmem:[%s2670 + $0x14] sm:$0xf]
  %v2677 = vld [vmem:[%s2670 + $0x18] sm:$0xf]
  %v2678 = vld [vmem:[%s658] sm:$0xf]
  %v2679 = vld [vmem:[%s658 + $0x4] sm:$0xf]
  %v2680 = vld [vmem:[%s658 + $0x8] sm:$0xf]
  %v2681 = vld [vmem:[%s658 + $0xc] sm:$0xf]
  %v2682 = vld [vmem:[%s658 + $0x10] sm:$0xf]
  %v2683 = vld [vmem:[%s658 + $0x14] sm:$0xf]
  %v2684 = vld [vmem:[%s658 + $0x18] sm:$0xf]
  %v2685 = vld [vmem:[%s658 + $0x1c] sm:$0xf]
  %v2686 = vld [vmem:[%s658 + $0x20] sm:$0xf]
  %v2687 = vld [vmem:[%s658 + $0x24] sm:$0xf]
  %v2688 = vld [vmem:[%s658 + $0x28] sm:$0xf]
  %v2689 = vld [vmem:[%s658 + $0x2c] sm:$0xf]
  %v2690 = vld [vmem:[%s658 + $0x30] sm:$0xf]
  %v2691 = vld [vmem:[%s658 + $0x34] sm:$0xf]
  %v2692 = vld [vmem:[%s658 + $0x38] sm:$0xf]
  %v2693 = vld [vmem:[%s658 + $0x3c] sm:$0xf]
  %v2701 = vunpack.c.l.b16 %v2671
  %v2702 = vunpack.c.l.b16 %v2672
  %v2703 = vunpack.c.l.b16 %v2673
  %v2704 = vunpack.c.l.b16 %v2674
  %v2705 = vunpack.c.l.b16 %v2675
  %v2706 = vunpack.c.l.b16 %v2676
  %v2707 = vunpack.c.l.b16 %v2677
  %v2708 = vpack.c.b16 %v2702, %v2701
  %v2709 = vpack.c.b16 %v2704, %v2703
  %v2710 = vpack.c.b16 %v2706, %v2705
  %v2711 = vpack.c.b16 %v2707, %v2707
  %v2732 = vunpack.c.l.b16 %v2678
  %v2733 = vunpack.c.l.b16 %v2679
  %v2734 = vunpack.c.l.b16 %v2680
  %v2735 = vunpack.c.l.b16 %v2681
  %v2736 = vunpack.c.l.b16 %v2682
  %v2737 = vunpack.c.l.b16 %v2683
  %v2738 = vunpack.c.l.b16 %v2684
  %v2739 = vunpack.c.l.b16 %v2685
  %v2740 = vunpack.c.l.b16 %v2686
  %v2741 = vunpack.c.l.b16 %v2687
  %v2742 = vunpack.c.l.b16 %v2688
  %v2743 = vunpack.c.l.b16 %v2689
  %v2744 = vunpack.c.l.b16 %v2690
  %v2745 = vunpack.c.l.b16 %v2691
  %v2746 = vunpack.c.l.b16 %v2692
  %v2747 = vunpack.c.l.b16 %v2693
  %v2748 = vpack.c.b16 %v2733, %v2732
  %v2749 = vpack.c.b16 %v2735, %v2734
  %v2750 = vpack.c.b16 %v2737, %v2736
  %v2751 = vpack.c.b16 %v2739, %v2738
  %v2752 = vpack.c.b16 %v2741, %v2740
  %v2753 = vpack.c.b16 %v2743, %v2742
  %v2754 = vpack.c.b16 %v2745, %v2744
  %v2755 = vpack.c.b16 %v2747, %v2746
  %2764 = vmatprep.subr.bf16.mxu0 0
  %2765 = vmatpush1.bf16.msra.mxu0 %v2748
  %2766 = vmatprep.subr.bf16.mxu0 0
  %2767 = vmatpush1.bf16.msra.mxu0 %v2749
  %2768 = vmatprep.subr.bf16.mxu0 0
  %2769 = vmatpush1.bf16.msra.mxu0 %v2750
  %2770 = vmatprep.subr.bf16.mxu0 0
  %2771 = vmatpush1.bf16.msra.mxu0 %v2751
  %2772 = vmatprep.subr.bf16.mxu0 0
  %2773 = vmatpush1.bf16.msra.mxu0 %v2752
  %2774 = vmatprep.subr.bf16.mxu0 0
  %2775 = vmatpush1.bf16.msra.mxu0 %v2753
  %2776 = vmatprep.subr.bf16.mxu0 0
  %2777 = vmatpush1.bf16.msra.mxu0 %v2754
  %2778 = vmatprep.subr.bf16.mxu0 0
  %2779 = vmatpush1.bf16.msra.mxu0 %v2755
  %2780 = vmatprep.subr.bf16.mxu0 0
  %2781 = vmatpush1.bf16.msra.mxu0 0
  %2782 = vmatprep.subr.bf16.mxu0 0
  %2783 = vmatpush1.bf16.msra.mxu0 0
  %2784 = vmatprep.subr.bf16.mxu0 0
  %2785 = vmatpush1.bf16.msra.mxu0 0
  %2786 = vmatprep.subr.bf16.mxu0 0
  %2787 = vmatpush1.bf16.msra.mxu0 0
  %2788 = vmatprep.subr.bf16.mxu0 0
  %2789 = vmatpush1.bf16.msra.mxu0 0
  %2790 = vmatprep.subr.bf16.mxu0 0
  %2791 = vmatpush1.bf16.msra.mxu0 0
  %2792 = vmatprep.subr.bf16.mxu0 0
  %2793 = vmatpush1.bf16.msra.mxu0 0
  %2794 = vmatprep.subr.bf16.mxu0 0
  %2795 = vmatpush1.bf16.msra.mxu0 0
  %2796 = vmatprep.mubr.bf16.mxu0 0
  %2797 = vmatmul.mubr.bf16.gmra.mrb[0].mxu0 %v2708
  %v2798 = vpop.f32.mrb[0].mxu0
  %v2799 = vadd.f32 0.0, %v2798
  %v2800 = vpop.f32.mrb[0].mxu0
  %v2801 = vpop.f32.mrb[0].mxu0
  %v2802 = vadd.f32 0.0, %v2801
  %v2803 = vpop.f32.mrb[0].mxu0
  %2804 = vmatprep.mubr.bf16.mxu0 0
  %2805 = vmatmul.mubr.bf16.gmra.mrb[0].mxu0 %v2709
  %v2806 = vpop.f32.mrb[0].mxu0
  %v2807 = vadd.f32 0.0, %v2806
  %v2808 = vpop.f32.mrb[0].mxu0
  %v2809 = vpop.f32.mrb[0].mxu0
  %v2810 = vadd.f32 0.0, %v2809
  %v2811 = vpop.f32.mrb[0].mxu0
  %2812 = vmatprep.mubr.bf16.mxu0 0
  %2813 = vmatmul.mubr.bf16.gmra.mrb[0].mxu0 %v2710
  %v2814 = vpop.f32.mrb[0].mxu0
  %v2815 = vadd.f32 0.0, %v2814
  %v2816 = vpop.f32.mrb[0].mxu0
  %v2817 = vpop.f32.mrb[0].mxu0
  %v2818 = vadd.f32 0.0, %v2817
  %v2819 = vpop.f32.mrb[0].mxu0
  %2820 = vmatprep.mubr.bf16.mxu0 0
  %2821 = vmatmul.mubr.bf16.gmra.mrb[0].mxu0 %v2711
  %v2822 = vpop.f32.mrb[0].mxu0
  %v2823 = vadd.f32 0.0, %v2822
  %v2824 = vpop.f32.mrb[0].mxu0
  %v2825 = vpop.f32.mrb[0].mxu0
  %v2826 = vpop.f32.mrb[0].mxu0
  %2827 = vdwg.mxu0
  %v2828 = vadd.f32 %v2663, %v2799
  %v2829 = vadd.f32 %v2664, %v2802
  %v2830 = vadd.f32 %v2665, %v2807
  %v2831 = vadd.f32 %v2666, %v2810
  %v2832 = vadd.f32 %v2667, %v2815
  %v2833 = vadd.f32 %v2668, %v2818
  %v2834 = vadd.f32 %v2669, %v2823
  %v2835 = vld [vmem:[%s2] sm:$0x1]
  %v2837 = vlaneseq
  %v2838 = vshrl.u32 %v2837, 7
  %v2839 = vsub.s32 0, %v2838
  %v2840 = vrot.slane %v2835, %v2839
  %v2842 = vadd.f32 %v2828, %v2840
  %v2843 = vadd.f32 %v2829, %v2840
  %v2844 = vadd.f32 %v2830, %v2840
  %v2845 = vadd.f32 %v2831, %v2840
  %v2846 = vadd.f32 %v2832, %v2840
  %v2847 = vadd.f32 %v2833, %v2840
  %v2848 = vadd.f32 %v2834, %v2840
  %v2849 = vmax.f32 %v2842, 0.0
  %v2850 = vmax.f32 %v2843, 0.0
  %v2851 = vmax.f32 %v2844, 0.0
  %v2852 = vmax.f32 %v2845, 0.0
  %v2853 = vmax.f32 %v2846, 0.0
  %v2854 = vmax.f32 %v2847, 0.0
  %v2855 = vmax.f32 %v2848, 0.0
  %s2856 = scalar_lea.vmem [#allocation2], 328
  %2857 = vst [vmem:[%s2856] sm:$0xff] %v2849
  %2858 = vst [vmem:[%s2856 + $0x8] sm:$0xff] %v2850
  %2859 = vst [vmem:[%s2856 + $0x10] sm:$0xff] %v2851
  %2860 = vst [vmem:[%s2856 + $0x18] sm:$0xff] %v2852
  %2861 = vst [vmem:[%s2856 + $0x20] sm:$0xff] %v2853
  %2862 = vst [vmem:[%s2856 + $0x28] sm:$0xff] %v2854
  %2863 = vst [vmem:[%s2856 + $0x30] sm:$0xff] %v2855
  %v2864 = vld [vmem:[%s2505] sm:$0xf]
  %v2865 = vld [vmem:[%s2505 + $0x4] sm:$0xf]
  %v2866 = vld [vmem:[%s2505 + $0x8] sm:$0xf]
  %v2867 = vld [vmem:[%s2505 + $0xc] sm:$0xf]
  %v2868 = vld [vmem:[%s2505 + $0x10] sm:$0xf]
  %v2869 = vld [vmem:[%s2505 + $0x14] sm:$0xf]
  %v2870 = vld [vmem:[%s2505 + $0x18] sm:$0xf]
  %v2871 = vld [vmem:[%s1] sm:$0xf]
  %v2872 = vld [vmem:[%s1 + $0x4] sm:$0xf]
  %v2873 = vld [vmem:[%s1 + $0x8] sm:$0xf]
  %v2874 = vld [vmem:[%s1 + $0xc] sm:$0xf]
  %v2875 = vld [vmem:[%s1 + $0x10] sm:$0xf]
  %v2876 = vld [vmem:[%s1 + $0x14] sm:$0xf]
  %v2877 = vld [vmem:[%s1 + $0x18] sm:$0xf]
  %v2878 = vld [vmem:[%s1 + $0x1c] sm:$0xf]
  %v2879 = vld [vmem:[%s1 + $0x20] sm:$0xf]
  %v2880 = vld [vmem:[%s1 + $0x24] sm:$0xf]
  %v2881 = vld [vmem:[%s1 + $0x28] sm:$0xf]
  %v2882 = vld [vmem:[%s1 + $0x2c] sm:$0xf]
  %v2883 = vld [vmem:[%s1 + $0x30] sm:$0xf]
  %v2884 = vld [vmem:[%s1 + $0x34] sm:$0xf]
  %v2885 = vld [vmem:[%s1 + $0x38] sm:$0xf]
  %v2886 = vld [vmem:[%s1 + $0x3c] sm:$0xf]
  %v2887 = vld [vmem:[%s2670] sm:$0xf]
  %v2888 = vld [vmem:[%s2670 + $0x4] sm:$0xf]
  %v2889 = vld [vmem:[%s2670 + $0x8] sm:$0xf]
  %v2890 = vld [vmem:[%s2670 + $0xc] sm:$0xf]
  %v2891 = vld [vmem:[%s2670 + $0x10] sm:$0xf]
  %v2892 = vld [vmem:[%s2670 + $0x14] sm:$0xf]
  %v2893 = vld [vmem:[%s2670 + $0x18] sm:$0xf]
  %v2894 = vld [vmem:[%s199] sm:$0xf]
  %v2895 = vld [vmem:[%s199 + $0x4] sm:$0xf]
  %v2896 = vld [vmem:[%s199 + $0x8] sm:$0xf]
  %v2897 = vld [vmem:[%s199 + $0xc] sm:$0xf]
  %v2898 = vld [vmem:[%s199 + $0x10] sm:$0xf]
  %v2899 = vld [vmem:[%s199 + $0x14] sm:$0xf]
  %v2900 = vld [vmem:[%s199 + $0x18] sm:$0xf]
  %v2901 = vld [vmem:[%s199 + $0x1c] sm:$0xf]
  %v2902 = vld [vmem:[%s199 + $0x20] sm:$0xf]
  %v2903 = vld [vmem:[%s199 + $0x24] sm:$0xf]
  %v2904 = vld [vmem:[%s199 + $0x28] sm:$0xf]
  %v2905 = vld [vmem:[%s199 + $0x2c] sm:$0xf]
  %v2906 = vld [vmem:[%s199 + $0x30] sm:$0xf]
  %v2907 = vld [vmem:[%s199 + $0x34] sm:$0xf]
  %v2908 = vld [vmem:[%s199 + $0x38] sm:$0xf]
  %v2909 = vld [vmem:[%s199 + $0x3c] sm:$0xf]
  %v2917 = vunpack.c.l.b16 %v2887
  %v2918 = vunpack.c.l.b16 %v2888
  %v2919 = vunpack.c.l.b16 %v2889
  %v2920 = vunpack.c.l.b16 %v2890
  %v2921 = vunpack.c.l.b16 %v2891
  %v2922 = vunpack.c.l.b16 %v2892
  %v2923 = vunpack.c.l.b16 %v2893
  %v2924 = vpack.c.b16 %v2918, %v2917
  %v2925 = vpack.c.b16 %v2920, %v2919
  %v2926 = vpack.c.b16 %v2922, %v2921
  %v2927 = vpack.c.b16 %v2923, %v2923
  %v2948 = vunpack.c.l.b16 %v2894
  %v2949 = vunpack.c.l.b16 %v2895
  %v2950 = vunpack.c.l.b16 %v2896
  %v2951 = vunpack.c.l.b16 %v2897
  %v2952 = vunpack.c.l.b16 %v2898
  %v2953 = vunpack.c.l.b16 %v2899
  %v2954 = vunpack.c.l.b16 %v2900
  %v2955 = vunpack.c.l.b16 %v2901
  %v2956 = vunpack.c.l.b16 %v2902
  %v2957 = vunpack.c.l.b16 %v2903
  %v2958 = vunpack.c.l.b16 %v2904
  %v2959 = vunpack.c.l.b16 %v2905
  %v2960 = vunpack.c.l.b16 %v2906
  %v2961 = vunpack.c.l.b16 %v2907
  %v2962 = vunpack.c.l.b16 %v2908
  %v2963 = vunpack.c.l.b16 %v2909
  %v2964 = vpack.c.b16 %v2949, %v2948
  %v2965 = vpack.c.b16 %v2951, %v2950
  %v2966 = vpack.c.b16 %v2953, %v2952
  %v2967 = vpack.c.b16 %v2955, %v2954
  %v2968 = vpack.c.b16 %v2957, %v2956
  %v2969 = vpack.c.b16 %v2959, %v2958
  %v2970 = vpack.c.b16 %v2961, %v2960
  %v2971 = vpack.c.b16 %v2963, %v2962
  %2980 = vmatprep.subr.bf16.mxu0 0
  %2981 = vmatpush1.bf16.msra.mxu0 %v2964
  %2982 = vmatprep.subr.bf16.mxu0 0
  %2983 = vmatpush1.bf16.msra.mxu0 %v2965
  %2984 = vmatprep.subr.bf16.mxu0 0
  %2985 = vmatpush1.bf16.msra.mxu0 %v2966
  %2986 = vmatprep.subr.bf16.mxu0 0
  %2987 = vmatpush1.bf16.msra.mxu0 %v2967
  %2988 = vmatprep.subr.bf16.mxu0 0
  %2989 = vmatpush1.bf16.msra.mxu0 %v2968
  %2990 = vmatprep.subr.bf16.mxu0 0
  %2991 = vmatpush1.bf16.msra.mxu0 %v2969
  %2992 = vmatprep.subr.bf16.mxu0 0
  %2993 = vmatpush1.bf16.msra.mxu0 %v2970
  %2994 = vmatprep.subr.bf16.mxu0 0
  %2995 = vmatpush1.bf16.msra.mxu0 %v2971
  %2996 = vmatprep.subr.bf16.mxu0 0
  %2997 = vmatpush1.bf16.msra.mxu0 0
  %2998 = vmatprep.subr.bf16.mxu0 0
  %2999 = vmatpush1.bf16.msra.mxu0 0
  %3000 = vmatprep.subr.bf16.mxu0 0
  %3001 = vmatpush1.bf16.msra.mxu0 0
  %3002 = vmatprep.subr.bf16.mxu0 0
  %3003 = vmatpush1.bf16.msra.mxu0 0
  %3004 = vmatprep.subr.bf16.mxu0 0
  %3005 = vmatpush1.bf16.msra.mxu0 0
  %3006 = vmatprep.subr.bf16.mxu0 0
  %3007 = vmatpush1.bf16.msra.mxu0 0
  %3008 = vmatprep.subr.bf16.mxu0 0
  %3009 = vmatpush1.bf16.msra.mxu0 0
  %3010 = vmatprep.subr.bf16.mxu0 0
  %3011 = vmatpush1.bf16.msra.mxu0 0
  %3012 = vmatprep.mubr.bf16.mxu0 0
  %3013 = vmatmul.mubr.bf16.gmra.mrb[0].mxu0 %v2924
  %v3014 = vpop.f32.mrb[0].mxu0
  %v3015 = vadd.f32 0.0, %v3014
  %v3016 = vpop.f32.mrb[0].mxu0
  %v3017 = vpop.f32.mrb[0].mxu0
  %v3018 = vadd.f32 0.0, %v3017
  %v3019 = vpop.f32.mrb[0].mxu0
  %3020 = vmatprep.mubr.bf16.mxu0 0
  %3021 = vmatmul.mubr.bf16.gmra.mrb[0].mxu0 %v2925
  %v3022 = vpop.f32.mrb[0].mxu0
  %v3023 = vadd.f32 0.0, %v3022
  %v3024 = vpop.f32.mrb[0].mxu0
  %v3025 = vpop.f32.mrb[0].mxu0
  %v3026 = vadd.f32 0.0, %v3025
  %v3027 = vpop.f32.mrb[0].mxu0
  %3028 = vmatprep.mubr.bf16.mxu0 0
  %3029 = vmatmul.mubr.bf16.gmra.mrb[0].mxu0 %v2926
  %v3030 = vpop.f32.mrb[0].mxu0
  %v3031 = vadd.f32 0.0, %v3030
  %v3032 = vpop.f32.mrb[0].mxu0
  %v3033 = vpop.f32.mrb[0].mxu0
  %v3034 = vadd.f32 0.0, %v3033
  %v3035 = vpop.f32.mrb[0].mxu0
  %3036 = vmatprep.mubr.bf16.mxu0 0
  %3037 = vmatmul.mubr.bf16.gmra.mrb[0].mxu0 %v2927
  %v3038 = vpop.f32.mrb[0].mxu0
  %v3039 = vadd.f32 0.0, %v3038
  %v3040 = vpop.f32.mrb[0].mxu0
  %v3041 = vpop.f32.mrb[0].mxu0
  %v3042 = vpop.f32.mrb[0].mxu0
  %3043 = vdwg.mxu0
  %v3051 = vunpack.c.l.b16 %v2864
  %v3052 = vunpack.c.l.b16 %v2865
  %v3053 = vunpack.c.l.b16 %v2866
  %v3054 = vunpack.c.l.b16 %v2867
  %v3055 = vunpack.c.l.b16 %v2868
  %v3056 = vunpack.c.l.b16 %v2869
  %v3057 = vunpack.c.l.b16 %v2870
  %v3058 = vpack.c.b16 %v3052, %v3051
  %v3059 = vpack.c.b16 %v3054, %v3053
  %v3060 = vpack.c.b16 %v3056, %v3055
  %v3061 = vpack.c.b16 %v3057, %v3057
  %v3082 = vunpack.c.l.b16 %v2871
  %v3083 = vunpack.c.l.b16 %v2872
  %v3084 = vunpack.c.l.b16 %v2873
  %v3085 = vunpack.c.l.b16 %v2874
  %v3086 = vunpack.c.l.b16 %v2875
  %v3087 = vunpack.c.l.b16 %v2876
  %v3088 = vunpack.c.l.b16 %v2877
  %v3089 = vunpack.c.l.b16 %v2878
  %v3090 = vunpack.c.l.b16 %v2879
  %v3091 = vunpack.c.l.b16 %v2880
  %v3092 = vunpack.c.l.b16 %v2881
  %v3093 = vunpack.c.l.b16 %v2882
  %v3094 = vunpack.c.l.b16 %v2883
  %v3095 = vunpack.c.l.b16 %v2884
  %v3096 = vunpack.c.l.b16 %v2885
  %v3097 = vunpack.c.l.b16 %v2886
  %v3098 = vpack.c.b16 %v3083, %v3082
  %v3099 = vpack.c.b16 %v3085, %v3084
  %v3100 = vpack.c.b16 %v3087, %v3086
  %v3101 = vpack.c.b16 %v3089, %v3088
  %v3102 = vpack.c.b16 %v3091, %v3090
  %v3103 = vpack.c.b16 %v3093, %v3092
  %v3104 = vpack.c.b16 %v3095, %v3094
  %v3105 = vpack.c.b16 %v3097, %v3096
  %3114 = vmatprep.subr.bf16.mxu0 0
  %3115 = vmatpush1.bf16.msra.mxu0 %v3098
  %3116 = vmatprep.subr.bf16.mxu0 0
  %3117 = vmatpush1.bf16.msra.mxu0 %v3099
  %3118 = vmatprep.subr.bf16.mxu0 0
  %3119 = vmatpush1.bf16.msra.mxu0 %v3100
  %3120 = vmatprep.subr.bf16.mxu0 0
  %3121 = vmatpush1.bf16.msra.mxu0 %v3101
  %3122 = vmatprep.subr.bf16.mxu0 0
  %3123 = vmatpush1.bf16.msra.mxu0 %v3102
  %3124 = vmatprep.subr.bf16.mxu0 0
  %3125 = vmatpush1.bf16.msra.mxu0 %v3103
  %3126 = vmatprep.subr.bf16.mxu0 0
  %3127 = vmatpush1.bf16.msra.mxu0 %v3104
  %3128 = vmatprep.subr.bf16.mxu0 0
  %3129 = vmatpush1.bf16.msra.mxu0 %v3105
  %3130 = vmatprep.subr.bf16.mxu0 0
  %3131 = vmatpush1.bf16.msra.mxu0 0
  %3132 = vmatprep.subr.bf16.mxu0 0
  %3133 = vmatpush1.bf16.msra.mxu0 0
  %3134 = vmatprep.subr.bf16.mxu0 0
  %3135 = vmatpush1.bf16.msra.mxu0 0
  %3136 = vmatprep.subr.bf16.mxu0 0
  %3137 = vmatpush1.bf16.msra.mxu0 0
  %3138 = vmatprep.subr.bf16.mxu0 0
  %3139 = vmatpush1.bf16.msra.mxu0 0
  %3140 = vmatprep.subr.bf16.mxu0 0
  %3141 = vmatpush1.bf16.msra.mxu0 0
  %3142 = vmatprep.subr.bf16.mxu0 0
  %3143 = vmatpush1.bf16.msra.mxu0 0
  %3144 = vmatprep.subr.bf16.mxu0 0
  %3145 = vmatpush1.bf16.msra.mxu0 0
  %3146 = vmatprep.mubr.bf16.mxu0 0
  %3147 = vmatmul.mubr.bf16.gmra.mrb[0].mxu0 %v3058
  %v3148 = vpop.f32.mrb[0].mxu0
  %v3149 = vadd.f32 %v3015, %v3148
  %v3150 = vpop.f32.mrb[0].mxu0
  %v3151 = vpop.f32.mrb[0].mxu0
  %v3152 = vadd.f32 %v3018, %v3151
  %v3153 = vpop.f32.mrb[0].mxu0
  %3154 = vmatprep.mubr.bf16.mxu0 0
  %3155 = vmatmul.mubr.bf16.gmra.mrb[0].mxu0 %v3059
  %v3156 = vpop.f32.mrb[0].mxu0
  %v3157 = vadd.f32 %v3023, %v3156
  %v3158 = vpop.f32.mrb[0].mxu0
  %v3159 = vpop.f32.mrb[0].mxu0
  %v3160 = vadd.f32 %v3026, %v3159
  %v3161 = vpop.f32.mrb[0].mxu0
  %3162 = vmatprep.mubr.bf16.mxu0 0
  %3163 = vmatmul.mubr.bf16.gmra.mrb[0].mxu0 %v3060
  %v3164 = vpop.f32.mrb[0].mxu0
  %v3165 = vadd.f32 %v3031, %v3164
  %v3166 = vpop.f32.mrb[0].mxu0
  %v3167 = vpop.f32.mrb[0].mxu0
  %v3168 = vadd.f32 %v3034, %v3167
  %v3169 = vpop.f32.mrb[0].mxu0
  %3170 = vmatprep.mubr.bf16.mxu0 0
  %3171 = vmatmul.mubr.bf16.gmra.mrb[0].mxu0 %v3061
  %v3172 = vpop.f32.mrb[0].mxu0
  %v3173 = vadd.f32 %v3039, %v3172
  %v3174 = vpop.f32.mrb[0].mxu0
  %v3175 = vpop.f32.mrb[0].mxu0
  %v3176 = vpop.f32.mrb[0].mxu0
  %3177 = vdwg.mxu0
  %s3178 = scalar_lea.vmem %s0, 180
  %v3179 = vld [vmem:[%s3178] sm:$0xf]
  %v3180 = vld [vmem:[%s3178 + $0x4] sm:$0xf]
  %v3181 = vld [vmem:[%s3178 + $0x8] sm:$0xf]
  %v3182 = vld [vmem:[%s3178 + $0xc] sm:$0xf]
  %v3183 = vld [vmem:[%s3178 + $0x10] sm:$0xf]
  %v3184 = vld [vmem:[%s3178 + $0x14] sm:$0xf]
  %v3185 = vld [vmem:[%s3178 + $0x18] sm:$0xf]
  %v3186 = vld [vmem:[%s492] sm:$0xf]
  %v3187 = vld [vmem:[%s492 + $0x4] sm:$0xf]
  %v3188 = vld [vmem:[%s492 + $0x8] sm:$0xf]
  %v3189 = vld [vmem:[%s492 + $0xc] sm:$0xf]
  %v3190 = vld [vmem:[%s492 + $0x10] sm:$0xf]
  %v3191 = vld [vmem:[%s492 + $0x14] sm:$0xf]
  %v3192 = vld [vmem:[%s492 + $0x18] sm:$0xf]
  %v3193 = vld [vmem:[%s492 + $0x1c] sm:$0xf]
  %v3194 = vld [vmem:[%s492 + $0x20] sm:$0xf]
  %v3195 = vld [vmem:[%s492 + $0x24] sm:$0xf]
  %v3196 = vld [vmem:[%s492 + $0x28] sm:$0xf]
  %v3197 = vld [vmem:[%s492 + $0x2c] sm:$0xf]
  %v3198 = vld [vmem:[%s492 + $0x30] sm:$0xf]
  %v3199 = vld [vmem:[%s492 + $0x34] sm:$0xf]
  %v3200 = vld [vmem:[%s492 + $0x38] sm:$0xf]
  %v3201 = vld [vmem:[%s492 + $0x3c] sm:$0xf]
  %v3209 = vunpack.c.l.b16 %v3179
  %v3210 = vunpack.c.l.b16 %v3180
  %v3211 = vunpack.c.l.b16 %v3181
  %v3212 = vunpack.c.l.b16 %v3182
  %v3213 = vunpack.c.l.b16 %v3183
  %v3214 = vunpack.c.l.b16 %v3184
  %v3215 = vunpack.c.l.b16 %v3185
  %v3216 = vpack.c.b16 %v3210, %v3209
  %v3217 = vpack.c.b16 %v3212, %v3211
  %v3218 = vpack.c.b16 %v3214, %v3213
  %v3219 = vpack.c.b16 %v3215, %v3215
  %v3240 = vunpack.c.l.b16 %v3186
  %v3241 = vunpack.c.l.b16 %v3187
  %v3242 = vunpack.c.l.b16 %v3188
  %v3243 = vunpack.c.l.b16 %v3189
  %v3244 = vunpack.c.l.b16 %v3190
  %v3245 = vunpack.c.l.b16 %v3191
  %v3246 = vunpack.c.l.b16 %v3192
  %v3247 = vunpack.c.l.b16 %v3193
  %v3248 = vunpack.c.l.b16 %v3194
  %v3249 = vunpack.c.l.b16 %v3195
  %v3250 = vunpack.c.l.b16 %v3196
  %v3251 = vunpack.c.l.b16 %v3197
  %v3252 = vunpack.c.l.b16 %v3198
  %v3253 = vunpack.c.l.b16 %v3199
  %v3254 = vunpack.c.l.b16 %v3200
  %v3255 = vunpack.c.l.b16 %v3201
  %v3256 = vpack.c.b16 %v3241, %v3240
  %v3257 = vpack.c.b16 %v3243, %v3242
  %v3258 = vpack.c.b16 %v3245, %v3244
  %v3259 = vpack.c.b16 %v3247, %v3246
  %v3260 = vpack.c.b16 %v3249, %v3248
  %v3261 = vpack.c.b16 %v3251, %v3250
  %v3262 = vpack.c.b16 %v3253, %v3252
  %v3263 = vpack.c.b16 %v3255, %v3254
  %3272 = vmatprep.subr.bf16.mxu0 0
  %3273 = vmatpush1.bf16.msra.mxu0 %v3256
  %3274 = vmatprep.subr.bf16.mxu0 0
  %3275 = vmatpush1.bf16.msra.mxu0 %v3257
  %3276 = vmatprep.subr.bf16.mxu0 0
  %3277 = vmatpush1.bf16.msra.mxu0 %v3258
  %3278 = vmatprep.subr.bf16.mxu0 0
  %3279 = vmatpush1.bf16.msra.mxu0 %v3259
  %3280 = vmatprep.subr.bf16.mxu0 0
  %3281 = vmatpush1.bf16.msra.mxu0 %v3260
  %3282 = vmatprep.subr.bf16.mxu0 0
  %3283 = vmatpush1.bf16.msra.mxu0 %v3261
  %3284 = vmatprep.subr.bf16.mxu0 0
  %3285 = vmatpush1.bf16.msra.mxu0 %v3262
  %3286 = vmatprep.subr.bf16.mxu0 0
  %3287 = vmatpush1.bf16.msra.mxu0 %v3263
  %3288 = vmatprep.subr.bf16.mxu0 0
  %3289 = vmatpush1.bf16.msra.mxu0 0
  %3290 = vmatprep.subr.bf16.mxu0 0
  %3291 = vmatpush1.bf16.msra.mxu0 0
  %3292 = vmatprep.subr.bf16.mxu0 0
  %3293 = vmatpush1.bf16.msra.mxu0 0
  %3294 = vmatprep.subr.bf16.mxu0 0
  %3295 = vmatpush1.bf16.msra.mxu0 0
  %3296 = vmatprep.subr.bf16.mxu0 0
  %3297 = vmatpush1.bf16.msra.mxu0 0
  %3298 = vmatprep.subr.bf16.mxu0 0
  %3299 = vmatpush1.bf16.msra.mxu0 0
  %3300 = vmatprep.subr.bf16.mxu0 0
  %3301 = vmatpush1.bf16.msra.mxu0 0
  %3302 = vmatprep.subr.bf16.mxu0 0
  %3303 = vmatpush1.bf16.msra.mxu0 0
  %3304 = vmatprep.mubr.bf16.mxu0 0
  %3305 = vmatmul.mubr.bf16.gmra.mrb[0].mxu0 %v3216
  %v3306 = vpop.f32.mrb[0].mxu0
  %v3307 = vadd.f32 0.0, %v3306
  %v3308 = vpop.f32.mrb[0].mxu0
  %v3309 = vpop.f32.mrb[0].mxu0
  %v3310 = vadd.f32 0.0, %v3309
  %v3311 = vpop.f32.mrb[0].mxu0
  %3312 = vmatprep.mubr.bf16.mxu0 0
  %3313 = vmatmul.mubr.bf16.gmra.mrb[0].mxu0 %v3217
  %v3314 = vpop.f32.mrb[0].mxu0
  %v3315 = vadd.f32 0.0, %v3314
  %v3316 = vpop.f32.mrb[0].mxu0
  %v3317 = vpop.f32.mrb[0].mxu0
  %v3318 = vadd.f32 0.0, %v3317
  %v3319 = vpop.f32.mrb[0].mxu0
  %3320 = vmatprep.mubr.bf16.mxu0 0
  %3321 = vmatmul.mubr.bf16.gmra.mrb[0].mxu0 %v3218
  %v3322 = vpop.f32.mrb[0].mxu0
  %v3323 = vadd.f32 0.0, %v3322
  %v3324 = vpop.f32.mrb[0].mxu0
  %v3325 = vpop.f32.mrb[0].mxu0
  %v3326 = vadd.f32 0.0, %v3325
  %v3327 = vpop.f32.mrb[0].mxu0
  %3328 = vmatprep.mubr.bf16.mxu0 0
  %3329 = vmatmul.mubr.bf16.gmra.mrb[0].mxu0 %v3219
  %v3330 = vpop.f32.mrb[0].mxu0
  %v3331 = vadd.f32 0.0, %v3330
  %v3332 = vpop.f32.mrb[0].mxu0
  %v3333 = vpop.f32.mrb[0].mxu0
  %v3334 = vpop.f32.mrb[0].mxu0
  %3335 = vdwg.mxu0
  %v3336 = vadd.f32 %v3149, %v3307
  %v3337 = vadd.f32 %v3152, %v3310
  %v3338 = vadd.f32 %v3157, %v3315
  %v3339 = vadd.f32 %v3160, %v3318
  %v3340 = vadd.f32 %v3165, %v3323
  %v3341 = vadd.f32 %v3168, %v3326
  %v3342 = vadd.f32 %v3173, %v3331
  %s3343 = scalar_lea.vmem %s0, 184
  %v3344 = vld [vmem:[%s3343] sm:$0xf]
  %v3345 = vld [vmem:[%s3343 + $0x4] sm:$0xf]
  %v3346 = vld [vmem:[%s3343 + $0x8] sm:$0xf]
  %v3347 = vld [vmem:[%s3343 + $0xc] sm:$0xf]
  %v3348 = vld [vmem:[%s3343 + $0x10] sm:$0xf]
  %v3349 = vld [vmem:[%s3343 + $0x14] sm:$0xf]
  %v3350 = vld [vmem:[%s3343 + $0x18] sm:$0xf]
  %v3351 = vld [vmem:[%s658] sm:$0xf]
  %v3352 = vld [vmem:[%s658 + $0x4] sm:$0xf]
  %v3353 = vld [vmem:[%s658 + $0x8] sm:$0xf]
  %v3354 = vld [vmem:[%s658 + $0xc] sm:$0xf]
  %v3355 = vld [vmem:[%s658 + $0x10] sm:$0xf]
  %v3356 = vld [vmem:[%s658 + $0x14] sm:$0xf]
  %v3357 = vld [vmem:[%s658 + $0x18] sm:$0xf]
  %v3358 = vld [vmem:[%s658 + $0x1c] sm:$0xf]
  %v3359 = vld [vmem:[%s658 + $0x20] sm:$0xf]
  %v3360 = vld [vmem:[%s658 + $0x24] sm:$0xf]
  %v3361 = vld [vmem:[%s658 + $0x28] sm:$0xf]
  %v3362 = vld [vmem:[%s658 + $0x2c] sm:$0xf]
  %v3363 = vld [vmem:[%s658 + $0x30] sm:$0xf]
  %v3364 = vld [vmem:[%s658 + $0x34] sm:$0xf]
  %v3365 = vld [vmem:[%s658 + $0x38] sm:$0xf]
  %v3366 = vld [vmem:[%s658 + $0x3c] sm:$0xf]
  %v3374 = vunpack.c.l.b16 %v3344
  %v3375 = vunpack.c.l.b16 %v3345
  %v3376 = vunpack.c.l.b16 %v3346
  %v3377 = vunpack.c.l.b16 %v3347
  %v3378 = vunpack.c.l.b16 %v3348
  %v3379 = vunpack.c.l.b16 %v3349
  %v3380 = vunpack.c.l.b16 %v3350
  %v3381 = vpack.c.b16 %v3375, %v3374
  %v3382 = vpack.c.b16 %v3377, %v3376
  %v3383 = vpack.c.b16 %v3379, %v3378
  %v3384 = vpack.c.b16 %v3380, %v3380
  %v3405 = vunpack.c.l.b16 %v3351
  %v3406 = vunpack.c.l.b16 %v3352
  %v3407 = vunpack.c.l.b16 %v3353
  %v3408 = vunpack.c.l.b16 %v3354
  %v3409 = vunpack.c.l.b16 %v3355
  %v3410 = vunpack.c.l.b16 %v3356
  %v3411 = vunpack.c.l.b16 %v3357
  %v3412 = vunpack.c.l.b16 %v3358
  %v3413 = vunpack.c.l.b16 %v3359
  %v3414 = vunpack.c.l.b16 %v3360
  %v3415 = vunpack.c.l.b16 %v3361
  %v3416 = vunpack.c.l.b16 %v3362
  %v3417 = vunpack.c.l.b16 %v3363
  %v3418 = vunpack.c.l.b16 %v3364
  %v3419 = vunpack.c.l.b16 %v3365
  %v3420 = vunpack.c.l.b16 %v3366
  %v3421 = vpack.c.b16 %v3406, %v3405
  %v3422 = vpack.c.b16 %v3408, %v3407
  %v3423 = vpack.c.b16 %v3410, %v3409
  %v3424 = vpack.c.b16 %v3412, %v3411
  %v3425 = vpack.c.b16 %v3414, %v3413
  %v3426 = vpack.c.b16 %v3416, %v3415
  %v3427 = vpack.c.b16 %v3418, %v3417
  %v3428 = vpack.c.b16 %v3420, %v3419
  %3437 = vmatprep.subr.bf16.mxu0 0
  %3438 = vmatpush1.bf16.msra.mxu0 %v3421
  %3439 = vmatprep.subr.bf16.mxu0 0
  %3440 = vmatpush1.bf16.msra.mxu0 %v3422
  %3441 = vmatprep.subr.bf16.mxu0 0
  %3442 = vmatpush1.bf16.msra.mxu0 %v3423
  %3443 = vmatprep.subr.bf16.mxu0 0
  %3444 = vmatpush1.bf16.msra.mxu0 %v3424
  %3445 = vmatprep.subr.bf16.mxu0 0
  %3446 = vmatpush1.bf16.msra.mxu0 %v3425
  %3447 = vmatprep.subr.bf16.mxu0 0
  %3448 = vmatpush1.bf16.msra.mxu0 %v3426
  %3449 = vmatprep.subr.bf16.mxu0 0
  %3450 = vmatpush1.bf16.msra.mxu0 %v3427
  %3451 = vmatprep.subr.bf16.mxu0 0
  %3452 = vmatpush1.bf16.msra.mxu0 %v3428
  %3453 = vmatprep.subr.bf16.mxu0 0
  %3454 = vmatpush1.bf16.msra.mxu0 0
  %3455 = vmatprep.subr.bf16.mxu0 0
  %3456 = vmatpush1.bf16.msra.mxu0 0
  %3457 = vmatprep.subr.bf16.mxu0 0
  %3458 = vmatpush1.bf16.msra.mxu0 0
  %3459 = vmatprep.subr.bf16.mxu0 0
  %3460 = vmatpush1.bf16.msra.mxu0 0
  %3461 = vmatprep.subr.bf16.mxu0 0
  %3462 = vmatpush1.bf16.msra.mxu0 0
  %3463 = vmatprep.subr.bf16.mxu0 0
  %3464 = vmatpush1.bf16.msra.mxu0 0
  %3465 = vmatprep.subr.bf16.mxu0 0
  %3466 = vmatpush1.bf16.msra.mxu0 0
  %3467 = vmatprep.subr.bf16.mxu0 0
  %3468 = vmatpush1.bf16.msra.mxu0 0
  %3469 = vmatprep.mubr.bf16.mxu0 0
  %3470 = vmatmul.mubr.bf16.gmra.mrb[0].mxu0 %v3381
  %v3471 = vpop.f32.mrb[0].mxu0
  %v3472 = vadd.f32 0.0, %v3471
  %v3473 = vpop.f32.mrb[0].mxu0
  %v3474 = vpop.f32.mrb[0].mxu0
  %v3475 = vadd.f32 0.0, %v3474
  %v3476 = vpop.f32.mrb[0].mxu0
  %3477 = vmatprep.mubr.bf16.mxu0 0
  %3478 = vmatmul.mubr.bf16.gmra.mrb[0].mxu0 %v3382
  %v3479 = vpop.f32.mrb[0].mxu0
  %v3480 = vadd.f32 0.0, %v3479
  %v3481 = vpop.f32.mrb[0].mxu0
  %v3482 = vpop.f32.mrb[0].mxu0
  %v3483 = vadd.f32 0.0, %v3482
  %v3484 = vpop.f32.mrb[0].mxu0
  %3485 = vmatprep.mubr.bf16.mxu0 0
  %3486 = vmatmul.mubr.bf16.gmra.mrb[0].mxu0 %v3383
  %v3487 = vpop.f32.mrb[0].mxu0
  %v3488 = vadd.f32 0.0, %v3487
  %v3489 = vpop.f32.mrb[0].mxu0
  %v3490 = vpop.f32.mrb[0].mxu0
  %v3491 = vadd.f32 0.0, %v3490
  %v3492 = vpop.f32.mrb[0].mxu0
  %3493 = vmatprep.mubr.bf16.mxu0 0
  %3494 = vmatmul.mubr.bf16.gmra.mrb[0].mxu0 %v3384
  %v3495 = vpop.f32.mrb[0].mxu0
  %v3496 = vadd.f32 0.0, %v3495
  %v3497 = vpop.f32.mrb[0].mxu0
  %v3498 = vpop.f32.mrb[0].mxu0
  %v3499 = vpop.f32.mrb[0].mxu0
  %3500 = vdwg.mxu0
  %v3501 = vadd.f32 %v3336, %v3472
  %v3502 = vadd.f32 %v3337, %v3475
  %v3503 = vadd.f32 %v3338, %v3480
  %v3504 = vadd.f32 %v3339, %v3483
  %v3505 = vadd.f32 %v3340, %v3488
  %v3506 = vadd.f32 %v3341, %v3491
  %v3507 = vadd.f32 %v3342, %v3496
  %v3508 = vld [vmem:[%s2] sm:$0x1]
  %v3510 = vlaneseq
  %v3511 = vshrl.u32 %v3510, 7
  %v3512 = vsub.s32 0, %v3511
  %v3513 = vrot.slane %v3508, %v3512
  %v3515 = vadd.f32 %v3501, %v3513
  %v3516 = vadd.f32 %v3502, %v3513
  %v3517 = vadd.f32 %v3503, %v3513
  %v3518 = vadd.f32 %v3504, %v3513
  %v3519 = vadd.f32 %v3505, %v3513
  %v3520 = vadd.f32 %v3506, %v3513
  %v3521 = vadd.f32 %v3507, %v3513
  %v3522 = vmax.f32 %v3515, 0.0
  %v3523 = vmax.f32 %v3516, 0.0
  %v3524 = vmax.f32 %v3517, 0.0
  %v3525 = vmax.f32 %v3518, 0.0
  %v3526 = vmax.f32 %v3519, 0.0
  %v3527 = vmax.f32 %v3520, 0.0
  %v3528 = vmax.f32 %v3521, 0.0
  %s3529 = scalar_lea.vmem [#allocation2], 408
  %3530 = vst [vmem:[%s3529] sm:$0xff] %v3522
  %3531 = vst [vmem:[%s3529 + $0x8] sm:$0xff] %v3523
  %3532 = vst [vmem:[%s3529 + $0x10] sm:$0xff] %v3524
  %3533 = vst [vmem:[%s3529 + $0x18] sm:$0xff] %v3525
  %3534 = vst [vmem:[%s3529 + $0x20] sm:$0xff] %v3526
  %3535 = vst [vmem:[%s3529 + $0x28] sm:$0xff] %v3527
  %3536 = vst [vmem:[%s3529 + $0x30] sm:$0xff] %v3528
  %v3537 = vld [vmem:[%s3178] sm:$0xf]
  %v3538 = vld [vmem:[%s3178 + $0x4] sm:$0xf]
  %v3539 = vld [vmem:[%s3178 + $0x8] sm:$0xf]
  %v3540 = vld [vmem:[%s3178 + $0xc] sm:$0xf]
  %v3541 = vld [vmem:[%s3178 + $0x10] sm:$0xf]
  %v3542 = vld [vmem:[%s3178 + $0x14] sm:$0xf]
  %v3543 = vld [vmem:[%s3178 + $0x18] sm:$0xf]
  %v3544 = vld [vmem:[%s1] sm:$0xf]
  %v3545 = vld [vmem:[%s1 + $0x4] sm:$0xf]
  %v3546 = vld [vmem:[%s1 + $0x8] sm:$0xf]
  %v3547 = vld [vmem:[%s1 + $0xc] sm:$0xf]
  %v3548 = vld [vmem:[%s1 + $0x10] sm:$0xf]
  %v3549 = vld [vmem:[%s1 + $0x14] sm:$0xf]
  %v3550 = vld [vmem:[%s1 + $0x18] sm:$0xf]
  %v3551 = vld [vmem:[%s1 + $0x1c] sm:$0xf]
  %v3552 = vld [vmem:[%s1 + $0x20] sm:$0xf]
  %v3553 = vld [vmem:[%s1 + $0x24] sm:$0xf]
  %v3554 = vld [vmem:[%s1 + $0x28] sm:$0xf]
  %v3555 = vld [vmem:[%s1 + $0x2c] sm:$0xf]
  %v3556 = vld [vmem:[%s1 + $0x30] sm:$0xf]
  %v3557 = vld [vmem:[%s1 + $0x34] sm:$0xf]
  %v3558 = vld [vmem:[%s1 + $0x38] sm:$0xf]
  %v3559 = vld [vmem:[%s1 + $0x3c] sm:$0xf]
  %v3560 = vld [vmem:[%s3343] sm:$0xf]
  %v3561 = vld [vmem:[%s3343 + $0x4] sm:$0xf]
  %v3562 = vld [vmem:[%s3343 + $0x8] sm:$0xf]
  %v3563 = vld [vmem:[%s3343 + $0xc] sm:$0xf]
  %v3564 = vld [vmem:[%s3343 + $0x10] sm:$0xf]
  %v3565 = vld [vmem:[%s3343 + $0x14] sm:$0xf]
  %v3566 = vld [vmem:[%s3343 + $0x18] sm:$0xf]
  %v3567 = vld [vmem:[%s199] sm:$0xf]
  %v3568 = vld [vmem:[%s199 + $0x4] sm:$0xf]
  %v3569 = vld [vmem:[%s199 + $0x8] sm:$0xf]
  %v3570 = vld [vmem:[%s199 + $0xc] sm:$0xf]
  %v3571 = vld [vmem:[%s199 + $0x10] sm:$0xf]
  %v3572 = vld [vmem:[%s199 + $0x14] sm:$0xf]
  %v3573 = vld [vmem:[%s199 + $0x18] sm:$0xf]
  %v3574 = vld [vmem:[%s199 + $0x1c] sm:$0xf]
  %v3575 = vld [vmem:[%s199 + $0x20] sm:$0xf]
  %v3576 = vld [vmem:[%s199 + $0x24] sm:$0xf]
  %v3577 = vld [vmem:[%s199 + $0x28] sm:$0xf]
  %v3578 = vld [vmem:[%s199 + $0x2c] sm:$0xf]
  %v3579 = vld [vmem:[%s199 + $0x30] sm:$0xf]
  %v3580 = vld [vmem:[%s199 + $0x34] sm:$0xf]
  %v3581 = vld [vmem:[%s199 + $0x38] sm:$0xf]
  %v3582 = vld [vmem:[%s199 + $0x3c] sm:$0xf]
  %v3590 = vunpack.c.l.b16 %v3560
  %v3591 = vunpack.c.l.b16 %v3561
  %v3592 = vunpack.c.l.b16 %v3562
  %v3593 = vunpack.c.l.b16 %v3563
  %v3594 = vunpack.c.l.b16 %v3564
  %v3595 = vunpack.c.l.b16 %v3565
  %v3596 = vunpack.c.l.b16 %v3566
  %v3597 = vpack.c.b16 %v3591, %v3590
  %v3598 = vpack.c.b16 %v3593, %v3592
  %v3599 = vpack.c.b16 %v3595, %v3594
  %v3600 = vpack.c.b16 %v3596, %v3596
  %v3621 = vunpack.c.l.b16 %v3567
  %v3622 = vunpack.c.l.b16 %v3568
  %v3623 = vunpack.c.l.b16 %v3569
  %v3624 = vunpack.c.l.b16 %v3570
  %v3625 = vunpack.c.l.b16 %v3571
  %v3626 = vunpack.c.l.b16 %v3572
  %v3627 = vunpack.c.l.b16 %v3573
  %v3628 = vunpack.c.l.b16 %v3574
  %v3629 = vunpack.c.l.b16 %v3575
  %v3630 = vunpack.c.l.b16 %v3576
  %v3631 = vunpack.c.l.b16 %v3577
  %v3632 = vunpack.c.l.b16 %v3578
  %v3633 = vunpack.c.l.b16 %v3579
  %v3634 = vunpack.c.l.b16 %v3580
  %v3635 = vunpack.c.l.b16 %v3581
  %v3636 = vunpack.c.l.b16 %v3582
  %v3637 = vpack.c.b16 %v3622, %v3621
  %v3638 = vpack.c.b16 %v3624, %v3623
  %v3639 = vpack.c.b16 %v3626, %v3625
  %v3640 = vpack.c.b16 %v3628, %v3627
  %v3641 = vpack.c.b16 %v3630, %v3629
  %v3642 = vpack.c.b16 %v3632, %v3631
  %v3643 = vpack.c.b16 %v3634, %v3633
  %v3644 = vpack.c.b16 %v3636, %v3635
  %3653 = vmatprep.subr.bf16.mxu0 0
  %3654 = vmatpush1.bf16.msra.mxu0 %v3637
  %3655 = vmatprep.subr.bf16.mxu0 0
  %3656 = vmatpush1.bf16.msra.mxu0 %v3638
  %3657 = vmatprep.subr.bf16.mxu0 0
  %3658 = vmatpush1.bf16.msra.mxu0 %v3639
  %3659 = vmatprep.subr.bf16.mxu0 0
  %3660 = vmatpush1.bf16.msra.mxu0 %v3640
  %3661 = vmatprep.subr.bf16.mxu0 0
  %3662 = vmatpush1.bf16.msra.mxu0 %v3641
  %3663 = vmatprep.subr.bf16.mxu0 0
  %3664 = vmatpush1.bf16.msra.mxu0 %v3642
  %3665 = vmatprep.subr.bf16.mxu0 0
  %3666 = vmatpush1.bf16.msra.mxu0 %v3643
  %3667 = vmatprep.subr.bf16.mxu0 0
  %3668 = vmatpush1.bf16.msra.mxu0 %v3644
  %3669 = vmatprep.subr.bf16.mxu0 0
  %3670 = vmatpush1.bf16.msra.mxu0 0
  %3671 = vmatprep.subr.bf16.mxu0 0
  %3672 = vmatpush1.bf16.msra.mxu0 0
  %3673 = vmatprep.subr.bf16.mxu0 0
  %3674 = vmatpush1.bf16.msra.mxu0 0
  %3675 = vmatprep.subr.bf16.mxu0 0
  %3676 = vmatpush1.bf16.msra.mxu0 0
  %3677 = vmatprep.subr.bf16.mxu0 0
  %3678 = vmatpush1.bf16.msra.mxu0 0
  %3679 = vmatprep.subr.bf16.mxu0 0
  %3680 = vmatpush1.bf16.msra.mxu0 0
  %3681 = vmatprep.subr.bf16.mxu0 0
  %3682 = vmatpush1.bf16.msra.mxu0 0
  %3683 = vmatprep.subr.bf16.mxu0 0
  %3684 = vmatpush1.bf16.msra.mxu0 0
  %3685 = vmatprep.mubr.bf16.mxu0 0
  %3686 = vmatmul.mubr.bf16.gmra.mrb[0].mxu0 %v3597
  %v3687 = vpop.f32.mrb[0].mxu0
  %v3688 = vadd.f32 0.0, %v3687
  %v3689 = vpop.f32.mrb[0].mxu0
  %v3690 = vpop.f32.mrb[0].mxu0
  %v3691 = vadd.f32 0.0, %v3690
  %v3692 = vpop.f32.mrb[0].mxu0
  %3693 = vmatprep.mubr.bf16.mxu0 0
  %3694 = vmatmul.mubr.bf16.gmra.mrb[0].mxu0 %v3598
  %v3695 = vpop.f32.mrb[0].mxu0
  %v3696 = vadd.f32 0.0, %v3695
  %v3697 = vpop.f32.mrb[0].mxu0
  %v3698 = vpop.f32.mrb[0].mxu0
  %v3699 = vadd.f32 0.0, %v3698
  %v3700 = vpop.f32.mrb[0].mxu0
  %3701 = vmatprep.mubr.bf16.mxu0 0
  %3702 = vmatmul.mubr.bf16.gmra.mrb[0].mxu0 %v3599
  %v3703 = vpop.f32.mrb[0].mxu0
  %v3704 = vadd.f32 0.0, %v3703
  %v3705 = vpop.f32.mrb[0].mxu0
  %v3706 = vpop.f32.mrb[0].mxu0
  %v3707 = vadd.f32 0.0, %v3706
  %v3708 = vpop.f32.mrb[0].mxu0
  %3709 = vmatprep.mubr.bf16.mxu0 0
  %3710 = vmatmul.mubr.bf16.gmra.mrb[0].mxu0 %v3600
  %v3711 = vpop.f32.mrb[0].mxu0
  %v3712 = vadd.f32 0.0, %v3711
  %v3713 = vpop.f32.mrb[0].mxu0
  %v3714 = vpop.f32.mrb[0].mxu0
  %v3715 = vpop.f32.mrb[0].mxu0
  %3716 = vdwg.mxu0
  %v3724 = vunpack.c.l.b16 %v3537
  %v3725 = vunpack.c.l.b16 %v3538
  %v3726 = vunpack.c.l.b16 %v3539
  %v3727 = vunpack.c.l.b16 %v3540
  %v3728 = vunpack.c.l.b16 %v3541
  %v3729 = vunpack.c.l.b16 %v3542
  %v3730 = vunpack.c.l.b16 %v3543
  %v3731 = vpack.c.b16 %v3725, %v3724
  %v3732 = vpack.c.b16 %v3727, %v3726
  %v3733 = vpack.c.b16 %v3729, %v3728
  %v3734 = vpack.c.b16 %v3730, %v3730
  %v3755 = vunpack.c.l.b16 %v3544
  %v3756 = vunpack.c.l.b16 %v3545
  %v3757 = vunpack.c.l.b16 %v3546
  %v3758 = vunpack.c.l.b16 %v3547
  %v3759 = vunpack.c.l.b16 %v3548
  %v3760 = vunpack.c.l.b16 %v3549
  %v3761 = vunpack.c.l.b16 %v3550
  %v3762 = vunpack.c.l.b16 %v3551
  %v3763 = vunpack.c.l.b16 %v3552
  %v3764 = vunpack.c.l.b16 %v3553
  %v3765 = vunpack.c.l.b16 %v3554
  %v3766 = vunpack.c.l.b16 %v3555
  %v3767 = vunpack.c.l.b16 %v3556
  %v3768 = vunpack.c.l.b16 %v3557
  %v3769 = vunpack.c.l.b16 %v3558
  %v3770 = vunpack.c.l.b16 %v3559
  %v3771 = vpack.c.b16 %v3756, %v3755
  %v3772 = vpack.c.b16 %v3758, %v3757
  %v3773 = vpack.c.b16 %v3760, %v3759
  %v3774 = vpack.c.b16 %v3762, %v3761
  %v3775 = vpack.c.b16 %v3764, %v3763
  %v3776 = vpack.c.b16 %v3766, %v3765
  %v3777 = vpack.c.b16 %v3768, %v3767
  %v3778 = vpack.c.b16 %v3770, %v3769
  %3787 = vmatprep.subr.bf16.mxu0 0
  %3788 = vmatpush1.bf16.msra.mxu0 %v3771
  %3789 = vmatprep.subr.bf16.mxu0 0
  %3790 = vmatpush1.bf16.msra.mxu0 %v3772
  %3791 = vmatprep.subr.bf16.mxu0 0
  %3792 = vmatpush1.bf16.msra.mxu0 %v3773
  %3793 = vmatprep.subr.bf16.mxu0 0
  %3794 = vmatpush1.bf16.msra.mxu0 %v3774
  %3795 = vmatprep.subr.bf16.mxu0 0
  %3796 = vmatpush1.bf16.msra.mxu0 %v3775
  %3797 = vmatprep.subr.bf16.mxu0 0
  %3798 = vmatpush1.bf16.msra.mxu0 %v3776
  %3799 = vmatprep.subr.bf16.mxu0 0
  %3800 = vmatpush1.bf16.msra.mxu0 %v3777
  %3801 = vmatprep.subr.bf16.mxu0 0
  %3802 = vmatpush1.bf16.msra.mxu0 %v3778
  %3803 = vmatprep.subr.bf16.mxu0 0
  %3804 = vmatpush1.bf16.msra.mxu0 0
  %3805 = vmatprep.subr.bf16.mxu0 0
  %3806 = vmatpush1.bf16.msra.mxu0 0
  %3807 = vmatprep.subr.bf16.mxu0 0
  %3808 = vmatpush1.bf16.msra.mxu0 0
  %3809 = vmatprep.subr.bf16.mxu0 0
  %3810 = vmatpush1.bf16.msra.mxu0 0
  %3811 = vmatprep.subr.bf16.mxu0 0
  %3812 = vmatpush1.bf16.msra.mxu0 0
  %3813 = vmatprep.subr.bf16.mxu0 0
  %3814 = vmatpush1.bf16.msra.mxu0 0
  %3815 = vmatprep.subr.bf16.mxu0 0
  %3816 = vmatpush1.bf16.msra.mxu0 0
  %3817 = vmatprep.subr.bf16.mxu0 0
  %3818 = vmatpush1.bf16.msra.mxu0 0
  %3819 = vmatprep.mubr.bf16.mxu0 0
  %3820 = vmatmul.mubr.bf16.gmra.mrb[0].mxu0 %v3731
  %v3821 = vpop.f32.mrb[0].mxu0
  %v3822 = vadd.f32 %v3688, %v3821
  %v3823 = vpop.f32.mrb[0].mxu0
  %v3824 = vpop.f32.mrb[0].mxu0
  %v3825 = vadd.f32 %v3691, %v3824
  %v3826 = vpop.f32.mrb[0].mxu0
  %3827 = vmatprep.mubr.bf16.mxu0 0
  %3828 = vmatmul.mubr.bf16.gmra.mrb[0].mxu0 %v3732
  %v3829 = vpop.f32.mrb[0].mxu0
  %v3830 = vadd.f32 %v3696, %v3829
  %v3831 = vpop.f32.mrb[0].mxu0
  %v3832 = vpop.f32.mrb[0].mxu0
  %v3833 = vadd.f32 %v3699, %v3832
  %v3834 = vpop.f32.mrb[0].mxu0
  %3835 = vmatprep.mubr.bf16.mxu0 0
  %3836 = vmatmul.mubr.bf16.gmra.mrb[0].mxu0 %v3733
  %v3837 = vpop.f32.mrb[0].mxu0
  %v3838 = vadd.f32 %v3704, %v3837
  %v3839 = vpop.f32.mrb[0].mxu0
  %v3840 = vpop.f32.mrb[0].mxu0
  %v3841 = vadd.f32 %v3707, %v3840
  %v3842 = vpop.f32.mrb[0].mxu0
  %3843 = vmatprep.mubr.bf16.mxu0 0
  %3844 = vmatmul.mubr.bf16.gmra.mrb[0].mxu0 %v3734
  %v3845 = vpop.f32.mrb[0].mxu0
  %v3846 = vadd.f32 %v3712, %v3845
  %v3847 = vpop.f32.mrb[0].mxu0
  %v3848 = vpop.f32.mrb[0].mxu0
  %v3849 = vpop.f32.mrb[0].mxu0
  %3850 = vdwg.mxu0
  %s3851 = scalar_lea.vmem %s0, 216
  %v3852 = vld [vmem:[%s3851] sm:$0xf]
  %v3853 = vld [vmem:[%s3851 + $0x4] sm:$0xf]
  %v3854 = vld [vmem:[%s3851 + $0x8] sm:$0xf]
  %v3855 = vld [vmem:[%s3851 + $0xc] sm:$0xf]
  %v3856 = vld [vmem:[%s3851 + $0x10] sm:$0xf]
  %v3857 = vld [vmem:[%s3851 + $0x14] sm:$0xf]
  %v3858 = vld [vmem:[%s3851 + $0x18] sm:$0xf]
  %v3859 = vld [vmem:[%s492] sm:$0xf]
  %v3860 = vld [vmem:[%s492 + $0x4] sm:$0xf]
  %v3861 = vld [vmem:[%s492 + $0x8] sm:$0xf]
  %v3862 = vld [vmem:[%s492 + $0xc] sm:$0xf]
  %v3863 = vld [vmem:[%s492 + $0x10] sm:$0xf]
  %v3864 = vld [vmem:[%s492 + $0x14] sm:$0xf]
  %v3865 = vld [vmem:[%s492 + $0x18] sm:$0xf]
  %v3866 = vld [vmem:[%s492 + $0x1c] sm:$0xf]
  %v3867 = vld [vmem:[%s492 + $0x20] sm:$0xf]
  %v3868 = vld [vmem:[%s492 + $0x24] sm:$0xf]
  %v3869 = vld [vmem:[%s492 + $0x28] sm:$0xf]
  %v3870 = vld [vmem:[%s492 + $0x2c] sm:$0xf]
  %v3871 = vld [vmem:[%s492 + $0x30] sm:$0xf]
  %v3872 = vld [vmem:[%s492 + $0x34] sm:$0xf]
  %v3873 = vld [vmem:[%s492 + $0x38] sm:$0xf]
  %v3874 = vld [vmem:[%s492 + $0x3c] sm:$0xf]
  %v3882 = vunpack.c.l.b16 %v3852
  %v3883 = vunpack.c.l.b16 %v3853
  %v3884 = vunpack.c.l.b16 %v3854
  %v3885 = vunpack.c.l.b16 %v3855
  %v3886 = vunpack.c.l.b16 %v3856
  %v3887 = vunpack.c.l.b16 %v3857
  %v3888 = vunpack.c.l.b16 %v3858
  %v3889 = vpack.c.b16 %v3883, %v3882
  %v3890 = vpack.c.b16 %v3885, %v3884
  %v3891 = vpack.c.b16 %v3887, %v3886
  %v3892 = vpack.c.b16 %v3888, %v3888
  %v3913 = vunpack.c.l.b16 %v3859
  %v3914 = vunpack.c.l.b16 %v3860
  %v3915 = vunpack.c.l.b16 %v3861
  %v3916 = vunpack.c.l.b16 %v3862
  %v3917 = vunpack.c.l.b16 %v3863
  %v3918 = vunpack.c.l.b16 %v3864
  %v3919 = vunpack.c.l.b16 %v3865
  %v3920 = vunpack.c.l.b16 %v3866
  %v3921 = vunpack.c.l.b16 %v3867
  %v3922 = vunpack.c.l.b16 %v3868
  %v3923 = vunpack.c.l.b16 %v3869
  %v3924 = vunpack.c.l.b16 %v3870
  %v3925 = vunpack.c.l.b16 %v3871
  %v3926 = vunpack.c.l.b16 %v3872
  %v3927 = vunpack.c.l.b16 %v3873
  %v3928 = vunpack.c.l.b16 %v3874
  %v3929 = vpack.c.b16 %v3914, %v3913
  %v3930 = vpack.c.b16 %v3916, %v3915
  %v3931 = vpack.c.b16 %v3918, %v3917
  %v3932 = vpack.c.b16 %v3920, %v3919
  %v3933 = vpack.c.b16 %v3922, %v3921
  %v3934 = vpack.c.b16 %v3924, %v3923
  %v3935 = vpack.c.b16 %v3926, %v3925
  %v3936 = vpack.c.b16 %v3928, %v3927
  %3945 = vmatprep.subr.bf16.mxu0 0
  %3946 = vmatpush1.bf16.msra.mxu0 %v3929
  %3947 = vmatprep.subr.bf16.mxu0 0
  %3948 = vmatpush1.bf16.msra.mxu0 %v3930
  %3949 = vmatprep.subr.bf16.mxu0 0
  %3950 = vmatpush1.bf16.msra.mxu0 %v3931
  %3951 = vmatprep.subr.bf16.mxu0 0
  %3952 = vmatpush1.bf16.msra.mxu0 %v3932
  %3953 = vmatprep.subr.bf16.mxu0 0
  %3954 = vmatpush1.bf16.msra.mxu0 %v3933
  %3955 = vmatprep.subr.bf16.mxu0 0
  %3956 = vmatpush1.bf16.msra.mxu0 %v3934
  %3957 = vmatprep.subr.bf16.mxu0 0
  %3958 = vmatpush1.bf16.msra.mxu0 %v3935
  %3959 = vmatprep.subr.bf16.mxu0 0
  %3960 = vmatpush1.bf16.msra.mxu0 %v3936
  %3961 = vmatprep.subr.bf16.mxu0 0
  %3962 = vmatpush1.bf16.msra.mxu0 0
  %3963 = vmatprep.subr.bf16.mxu0 0
  %3964 = vmatpush1.bf16.msra.mxu0 0
  %3965 = vmatprep.subr.bf16.mxu0 0
  %3966 = vmatpush1.bf16.msra.mxu0 0
  %3967 = vmatprep.subr.bf16.mxu0 0
  %3968 = vmatpush1.bf16.msra.mxu0 0
  %3969 = vmatprep.subr.bf16.mxu0 0
  %3970 = vmatpush1.bf16.msra.mxu0 0
  %3971 = vmatprep.subr.bf16.mxu0 0
  %3972 = vmatpush1.bf16.msra.mxu0 0
  %3973 = vmatprep.subr.bf16.mxu0 0
  %3974 = vmatpush1.bf16.msra.mxu0 0
  %3975 = vmatprep.subr.bf16.mxu0 0
  %3976 = vmatpush1.bf16.msra.mxu0 0
  %3977 = vmatprep.mubr.bf16.mxu0 0
  %3978 = vmatmul.mubr.bf16.gmra.mrb[0].mxu0 %v3889
  %v3979 = vpop.f32.mrb[0].mxu0
  %v3980 = vadd.f32 0.0, %v3979
  %v3981 = vpop.f32.mrb[0].mxu0
  %v3982 = vpop.f32.mrb[0].mxu0
  %v3983 = vadd.f32 0.0, %v3982
  %v3984 = vpop.f32.mrb[0].mxu0
  %3985 = vmatprep.mubr.bf16.mxu0 0
  %3986 = vmatmul.mubr.bf16.gmra.mrb[0].mxu0 %v3890
  %v3987 = vpop.f32.mrb[0].mxu0
  %v3988 = vadd.f32 0.0, %v3987
  %v3989 = vpop.f32.mrb[0].mxu0
  %v3990 = vpop.f32.mrb[0].mxu0
  %v3991 = vadd.f32 0.0, %v3990
  %v3992 = vpop.f32.mrb[0].mxu0
  %3993 = vmatprep.mubr.bf16.mxu0 0
  %3994 = vmatmul.mubr.bf16.gmra.mrb[0].mxu0 %v3891
  %v3995 = vpop.f32.mrb[0].mxu0
  %v3996 = vadd.f32 0.0, %v3995
  %v3997 = vpop.f32.mrb[0].mxu0
  %v3998 = vpop.f32.mrb[0].mxu0
  %v3999 = vadd.f32 0.0, %v3998
  %v4000 = vpop.f32.mrb[0].mxu0
  %4001 = vmatprep.mubr.bf16.mxu0 0
  %4002 = vmatmul.mubr.bf16.gmra.mrb[0].mxu0 %v3892
  %v4003 = vpop.f32.mrb[0].mxu0
  %v4004 = vadd.f32 0.0, %v4003
  %v4005 = vpop.f32.mrb[0].mxu0
  %v4006 = vpop.f32.mrb[0].mxu0
  %v4007 = vpop.f32.mrb[0].mxu0
  %4008 = vdwg.mxu0
  %v4009 = vadd.f32 %v3822, %v3980
  %v4010 = vadd.f32 %v3825, %v3983
  %v4011 = vadd.f32 %v3830, %v3988
  %v4012 = vadd.f32 %v3833, %v3991
  %v4013 = vadd.f32 %v3838, %v3996
  %v4014 = vadd.f32 %v3841, %v3999
  %v4015 = vadd.f32 %v3846, %v4004
  %s4016 = scalar_lea.vmem %s0, 220
  %v4017 = vld [vmem:[%s4016] sm:$0xf]
  %v4018 = vld [vmem:[%s4016 + $0x4] sm:$0xf]
  %v4019 = vld [vmem:[%s4016 + $0x8] sm:$0xf]
  %v4020 = vld [vmem:[%s4016 + $0xc] sm:$0xf]
  %v4021 = vld [vmem:[%s4016 + $0x10] sm:$0xf]
  %v4022 = vld [vmem:[%s4016 + $0x14] sm:$0xf]
  %v4023 = vld [vmem:[%s4016 + $0x18] sm:$0xf]
  %v4024 = vld [vmem:[%s658] sm:$0xf]
  %v4025 = vld [vmem:[%s658 + $0x4] sm:$0xf]
  %v4026 = vld [vmem:[%s658 + $0x8] sm:$0xf]
  %v4027 = vld [vmem:[%s658 + $0xc] sm:$0xf]
  %v4028 = vld [vmem:[%s658 + $0x10] sm:$0xf]
  %v4029 = vld [vmem:[%s658 + $0x14] sm:$0xf]
  %v4030 = vld [vmem:[%s658 + $0x18] sm:$0xf]
  %v4031 = vld [vmem:[%s658 + $0x1c] sm:$0xf]
  %v4032 = vld [vmem:[%s658 + $0x20] sm:$0xf]
  %v4033 = vld [vmem:[%s658 + $0x24] sm:$0xf]
  %v4034 = vld [vmem:[%s658 + $0x28] sm:$0xf]
  %v4035 = vld [vmem:[%s658 + $0x2c] sm:$0xf]
  %v4036 = vld [vmem:[%s658 + $0x30] sm:$0xf]
  %v4037 = vld [vmem:[%s658 + $0x34] sm:$0xf]
  %v4038 = vld [vmem:[%s658 + $0x38] sm:$0xf]
  %v4039 = vld [vmem:[%s658 + $0x3c] sm:$0xf]
  %v4047 = vunpack.c.l.b16 %v4017
  %v4048 = vunpack.c.l.b16 %v4018
  %v4049 = vunpack.c.l.b16 %v4019
  %v4050 = vunpack.c.l.b16 %v4020
  %v4051 = vunpack.c.l.b16 %v4021
  %v4052 = vunpack.c.l.b16 %v4022
  %v4053 = vunpack.c.l.b16 %v4023
  %v4054 = vpack.c.b16 %v4048, %v4047
  %v4055 = vpack.c.b16 %v4050, %v4049
  %v4056 = vpack.c.b16 %v4052, %v4051
  %v4057 = vpack.c.b16 %v4053, %v4053
  %v4078 = vunpack.c.l.b16 %v4024
  %v4079 = vunpack.c.l.b16 %v4025
  %v4080 = vunpack.c.l.b16 %v4026
  %v4081 = vunpack.c.l.b16 %v4027
  %v4082 = vunpack.c.l.b16 %v4028
  %v4083 = vunpack.c.l.b16 %v4029
  %v4084 = vunpack.c.l.b16 %v4030
  %v4085 = vunpack.c.l.b16 %v4031
  %v4086 = vunpack.c.l.b16 %v4032
  %v4087 = vunpack.c.l.b16 %v4033
  %v4088 = vunpack.c.l.b16 %v4034
  %v4089 = vunpack.c.l.b16 %v4035
  %v4090 = vunpack.c.l.b16 %v4036
  %v4091 = vunpack.c.l.b16 %v4037
  %v4092 = vunpack.c.l.b16 %v4038
  %v4093 = vunpack.c.l.b16 %v4039
  %v4094 = vpack.c.b16 %v4079, %v4078
  %v4095 = vpack.c.b16 %v4081, %v4080
  %v4096 = vpack.c.b16 %v4083, %v4082
  %v4097 = vpack.c.b16 %v4085, %v4084
  %v4098 = vpack.c.b16 %v4087, %v4086
  %v4099 = vpack.c.b16 %v4089, %v4088
  %v4100 = vpack.c.b16 %v4091, %v4090
  %v4101 = vpack.c.b16 %v4093, %v4092
  %4110 = vmatprep.subr.bf16.mxu0 0
  %4111 = vmatpush1.bf16.msra.mxu0 %v4094
  %4112 = vmatprep.subr.bf16.mxu0 0
  %4113 = vmatpush1.bf16.msra.mxu0 %v4095
  %4114 = vmatprep.subr.bf16.mxu0 0
  %4115 = vmatpush1.bf16.msra.mxu0 %v4096
  %4116 = vmatprep.subr.bf16.mxu0 0
  %4117 = vmatpush1.bf16.msra.mxu0 %v4097
  %4118 = vmatprep.subr.bf16.mxu0 0
  %4119 = vmatpush1.bf16.msra.mxu0 %v4098
  %4120 = vmatprep.subr.bf16.mxu0 0
  %4121 = vmatpush1.bf16.msra.mxu0 %v4099
  %4122 = vmatprep.subr.bf16.mxu0 0
  %4123 = vmatpush1.bf16.msra.mxu0 %v4100
  %4124 = vmatprep.subr.bf16.mxu0 0
  %4125 = vmatpush1.bf16.msra.mxu0 %v4101
  %4126 = vmatprep.subr.bf16.mxu0 0
  %4127 = vmatpush1.bf16.msra.mxu0 0
  %4128 = vmatprep.subr.bf16.mxu0 0
  %4129 = vmatpush1.bf16.msra.mxu0 0
  %4130 = vmatprep.subr.bf16.mxu0 0
  %4131 = vmatpush1.bf16.msra.mxu0 0
  %4132 = vmatprep.subr.bf16.mxu0 0
  %4133 = vmatpush1.bf16.msra.mxu0 0
  %4134 = vmatprep.subr.bf16.mxu0 0
  %4135 = vmatpush1.bf16.msra.mxu0 0
  %4136 = vmatprep.subr.bf16.mxu0 0
  %4137 = vmatpush1.bf16.msra.mxu0 0
  %4138 = vmatprep.subr.bf16.mxu0 0
  %4139 = vmatpush1.bf16.msra.mxu0 0
  %4140 = vmatprep.subr.bf16.mxu0 0
  %4141 = vmatpush1.bf16.msra.mxu0 0
  %4142 = vmatprep.mubr.bf16.mxu0 0
  %4143 = vmatmul.mubr.bf16.gmra.mrb[0].mxu0 %v4054
  %v4144 = vpop.f32.mrb[0].mxu0
  %v4145 = vadd.f32 0.0, %v4144
  %v4146 = vpop.f32.mrb[0].mxu0
  %v4147 = vpop.f32.mrb[0].mxu0
  %v4148 = vadd.f32 0.0, %v4147
  %v4149 = vpop.f32.mrb[0].mxu0
  %4150 = vmatprep.mubr.bf16.mxu0 0
  %4151 = vmatmul.mubr.bf16.gmra.mrb[0].mxu0 %v4055
  %v4152 = vpop.f32.mrb[0].mxu0
  %v4153 = vadd.f32 0.0, %v4152
  %v4154 = vpop.f32.mrb[0].mxu0
  %v4155 = vpop.f32.mrb[0].mxu0
  %v4156 = vadd.f32 0.0, %v4155
  %v4157 = vpop.f32.mrb[0].mxu0
  %4158 = vmatprep.mubr.bf16.mxu0 0
  %4159 = vmatmul.mubr.bf16.gmra.mrb[0].mxu0 %v4056
  %v4160 = vpop.f32.mrb[0].mxu0
  %v4161 = vadd.f32 0.0, %v4160
  %v4162 = vpop.f32.mrb[0].mxu0
  %v4163 = vpop.f32.mrb[0].mxu0
  %v4164 = vadd.f32 0.0, %v4163
  %v4165 = vpop.f32.mrb[0].mxu0
  %4166 = vmatprep.mubr.bf16.mxu0 0
  %4167 = vmatmul.mubr.bf16.gmra.mrb[0].mxu0 %v4057
  %v4168 = vpop.f32.mrb[0].mxu0
  %v4169 = vadd.f32 0.0, %v4168
  %v4170 = vpop.f32.mrb[0].mxu0
  %v4171 = vpop.f32.mrb[0].mxu0
  %v4172 = vpop.f32.mrb[0].mxu0
  %4173 = vdwg.mxu0
  %v4174 = vadd.f32 %v4009, %v4145
  %v4175 = vadd.f32 %v4010, %v4148
  %v4176 = vadd.f32 %v4011, %v4153
  %v4177 = vadd.f32 %v4012, %v4156
  %v4178 = vadd.f32 %v4013, %v4161
  %v4179 = vadd.f32 %v4014, %v4164
  %v4180 = vadd.f32 %v4015, %v4169
  %v4181 = vld [vmem:[%s2] sm:$0x1]
  %v4183 = vlaneseq
  %v4184 = vshrl.u32 %v4183, 7
  %v4185 = vsub.s32 0, %v4184
  %v4186 = vrot.slane %v4181, %v4185
  %v4188 = vadd.f32 %v4174, %v4186
  %v4189 = vadd.f32 %v4175, %v4186
  %v4190 = vadd.f32 %v4176, %v4186
  %v4191 = vadd.f32 %v4177, %v4186
  %v4192 = vadd.f32 %v4178, %v4186
  %v4193 = vadd.f32 %v4179, %v4186
  %v4194 = vadd.f32 %v4180, %v4186
  %v4195 = vmax.f32 %v4188, 0.0
  %v4196 = vmax.f32 %v4189, 0.0
  %v4197 = vmax.f32 %v4190, 0.0
  %v4198 = vmax.f32 %v4191, 0.0
  %v4199 = vmax.f32 %v4192, 0.0
  %v4200 = vmax.f32 %v4193, 0.0
  %v4201 = vmax.f32 %v4194, 0.0
  %s4202 = scalar_lea.vmem [#allocation2], 488
  %4203 = vst [vmem:[%s4202] sm:$0xff] %v4195
  %4204 = vst [vmem:[%s4202 + $0x8] sm:$0xff] %v4196
  %4205 = vst [vmem:[%s4202 + $0x10] sm:$0xff] %v4197
  %4206 = vst [vmem:[%s4202 + $0x18] sm:$0xff] %v4198
  %4207 = vst [vmem:[%s4202 + $0x20] sm:$0xff] %v4199
  %4208 = vst [vmem:[%s4202 + $0x28] sm:$0xff] %v4200
  %4209 = vst [vmem:[%s4202 + $0x30] sm:$0xff] %v4201
  %v4210 = vld [vmem:[%s3851] sm:$0xf]
  %v4211 = vld [vmem:[%s3851 + $0x4] sm:$0xf]
  %v4212 = vld [vmem:[%s3851 + $0x8] sm:$0xf]
  %v4213 = vld [vmem:[%s3851 + $0xc] sm:$0xf]
  %v4214 = vld [vmem:[%s3851 + $0x10] sm:$0xf]
  %v4215 = vld [vmem:[%s3851 + $0x14] sm:$0xf]
  %v4216 = vld [vmem:[%s3851 + $0x18] sm:$0xf]
  %v4217 = vld [vmem:[%s1] sm:$0xf]
  %v4218 = vld [vmem:[%s1 + $0x4] sm:$0xf]
  %v4219 = vld [vmem:[%s1 + $0x8] sm:$0xf]
  %v4220 = vld [vmem:[%s1 + $0xc] sm:$0xf]
  %v4221 = vld [vmem:[%s1 + $0x10] sm:$0xf]
  %v4222 = vld [vmem:[%s1 + $0x14] sm:$0xf]
  %v4223 = vld [vmem:[%s1 + $0x18] sm:$0xf]
  %v4224 = vld [vmem:[%s1 + $0x1c] sm:$0xf]
  %v4225 = vld [vmem:[%s1 + $0x20] sm:$0xf]
  %v4226 = vld [vmem:[%s1 + $0x24] sm:$0xf]
  %v4227 = vld [vmem:[%s1 + $0x28] sm:$0xf]
  %v4228 = vld [vmem:[%s1 + $0x2c] sm:$0xf]
  %v4229 = vld [vmem:[%s1 + $0x30] sm:$0xf]
  %v4230 = vld [vmem:[%s1 + $0x34] sm:$0xf]
  %v4231 = vld [vmem:[%s1 + $0x38] sm:$0xf]
  %v4232 = vld [vmem:[%s1 + $0x3c] sm:$0xf]
  %v4233 = vld [vmem:[%s4016] sm:$0xf]
  %v4234 = vld [vmem:[%s4016 + $0x4] sm:$0xf]
  %v4235 = vld [vmem:[%s4016 + $0x8] sm:$0xf]
  %v4236 = vld [vmem:[%s4016 + $0xc] sm:$0xf]
  %v4237 = vld [vmem:[%s4016 + $0x10] sm:$0xf]
  %v4238 = vld [vmem:[%s4016 + $0x14] sm:$0xf]
  %v4239 = vld [vmem:[%s4016 + $0x18] sm:$0xf]
  %v4240 = vld [vmem:[%s199] sm:$0xf]
  %v4241 = vld [vmem:[%s199 + $0x4] sm:$0xf]
  %v4242 = vld [vmem:[%s199 + $0x8] sm:$0xf]
  %v4243 = vld [vmem:[%s199 + $0xc] sm:$0xf]
  %v4244 = vld [vmem:[%s199 + $0x10] sm:$0xf]
  %v4245 = vld [vmem:[%s199 + $0x14] sm:$0xf]
  %v4246 = vld [vmem:[%s199 + $0x18] sm:$0xf]
  %v4247 = vld [vmem:[%s199 + $0x1c] sm:$0xf]
  %v4248 = vld [vmem:[%s199 + $0x20] sm:$0xf]
  %v4249 = vld [vmem:[%s199 + $0x24] sm:$0xf]
  %v4250 = vld [vmem:[%s199 + $0x28] sm:$0xf]
  %v4251 = vld [vmem:[%s199 + $0x2c] sm:$0xf]
  %v4252 = vld [vmem:[%s199 + $0x30] sm:$0xf]
  %v4253 = vld [vmem:[%s199 + $0x34] sm:$0xf]
  %v4254 = vld [vmem:[%s199 + $0x38] sm:$0xf]
  %v4255 = vld [vmem:[%s199 + $0x3c] sm:$0xf]
  %v4263 = vunpack.c.l.b16 %v4233
  %v4264 = vunpack.c.l.b16 %v4234
  %v4265 = vunpack.c.l.b16 %v4235
  %v4266 = vunpack.c.l.b16 %v4236
  %v4267 = vunpack.c.l.b16 %v4237
  %v4268 = vunpack.c.l.b16 %v4238
  %v4269 = vunpack.c.l.b16 %v4239
  %v4270 = vpack.c.b16 %v4264, %v4263
  %v4271 = vpack.c.b16 %v4266, %v4265
  %v4272 = vpack.c.b16 %v4268, %v4267
  %v4273 = vpack.c.b16 %v4269, %v4269
  %v4294 = vunpack.c.l.b16 %v4240
  %v4295 = vunpack.c.l.b16 %v4241
  %v4296 = vunpack.c.l.b16 %v4242
  %v4297 = vunpack.c.l.b16 %v4243
  %v4298 = vunpack.c.l.b16 %v4244
  %v4299 = vunpack.c.l.b16 %v4245
  %v4300 = vunpack.c.l.b16 %v4246
  %v4301 = vunpack.c.l.b16 %v4247
  %v4302 = vunpack.c.l.b16 %v4248
  %v4303 = vunpack.c.l.b16 %v4249
  %v4304 = vunpack.c.l.b16 %v4250
  %v4305 = vunpack.c.l.b16 %v4251
  %v4306 = vunpack.c.l.b16 %v4252
  %v4307 = vunpack.c.l.b16 %v4253
  %v4308 = vunpack.c.l.b16 %v4254
  %v4309 = vunpack.c.l.b16 %v4255
  %v4310 = vpack.c.b16 %v4295, %v4294
  %v4311 = vpack.c.b16 %v4297, %v4296
  %v4312 = vpack.c.b16 %v4299, %v4298
  %v4313 = vpack.c.b16 %v4301, %v4300
  %v4314 = vpack.c.b16 %v4303, %v4302
  %v4315 = vpack.c.b16 %v4305, %v4304
  %v4316 = vpack.c.b16 %v4307, %v4306
  %v4317 = vpack.c.b16 %v4309, %v4308
  %4326 = vmatprep.subr.bf16.mxu0 0
  %4327 = vmatpush1.bf16.msra.mxu0 %v4310
  %4328 = vmatprep.subr.bf16.mxu0 0
  %4329 = vmatpush1.bf16.msra.mxu0 %v4311
  %4330 = vmatprep.subr.bf16.mxu0 0
  %4331 = vmatpush1.bf16.msra.mxu0 %v4312
  %4332 = vmatprep.subr.bf16.mxu0 0
  %4333 = vmatpush1.bf16.msra.mxu0 %v4313
  %4334 = vmatprep.subr.bf16.mxu0 0
  %4335 = vmatpush1.bf16.msra.mxu0 %v4314
  %4336 = vmatprep.subr.bf16.mxu0 0
  %4337 = vmatpush1.bf16.msra.mxu0 %v4315
  %4338 = vmatprep.subr.bf16.mxu0 0
  %4339 = vmatpush1.bf16.msra.mxu0 %v4316
  %4340 = vmatprep.subr.bf16.mxu0 0
  %4341 = vmatpush1.bf16.msra.mxu0 %v4317
  %4342 = vmatprep.subr.bf16.mxu0 0
  %4343 = vmatpush1.bf16.msra.mxu0 0
  %4344 = vmatprep.subr.bf16.mxu0 0
  %4345 = vmatpush1.bf16.msra.mxu0 0
  %4346 = vmatprep.subr.bf16.mxu0 0
  %4347 = vmatpush1.bf16.msra.mxu0 0
  %4348 = vmatprep.subr.bf16.mxu0 0
  %4349 = vmatpush1.bf16.msra.mxu0 0
  %4350 = vmatprep.subr.bf16.mxu0 0
  %4351 = vmatpush1.bf16.msra.mxu0 0
  %4352 = vmatprep.subr.bf16.mxu0 0
  %4353 = vmatpush1.bf16.msra.mxu0 0
  %4354 = vmatprep.subr.bf16.mxu0 0
  %4355 = vmatpush1.bf16.msra.mxu0 0
  %4356 = vmatprep.subr.bf16.mxu0 0
  %4357 = vmatpush1.bf16.msra.mxu0 0
  %4358 = vmatprep.mubr.bf16.mxu0 0
  %4359 = vmatmul.mubr.bf16.gmra.mrb[0].mxu0 %v4270
  %v4360 = vpop.f32.mrb[0].mxu0
  %v4361 = vadd.f32 0.0, %v4360
  %v4362 = vpop.f32.mrb[0].mxu0
  %v4363 = vpop.f32.mrb[0].mxu0
  %v4364 = vadd.f32 0.0, %v4363
  %v4365 = vpop.f32.mrb[0].mxu0
  %4366 = vmatprep.mubr.bf16.mxu0 0
  %4367 = vmatmul.mubr.bf16.gmra.mrb[0].mxu0 %v4271
  %v4368 = vpop.f32.mrb[0].mxu0
  %v4369 = vadd.f32 0.0, %v4368
  %v4370 = vpop.f32.mrb[0].mxu0
  %v4371 = vpop.f32.mrb[0].mxu0
  %v4372 = vadd.f32 0.0, %v4371
  %v4373 = vpop.f32.mrb[0].mxu0
  %4374 = vmatprep.mubr.bf16.mxu0 0
  %4375 = vmatmul.mubr.bf16.gmra.mrb[0].mxu0 %v4272
  %v4376 = vpop.f32.mrb[0].mxu0
  %v4377 = vadd.f32 0.0, %v4376
  %v4378 = vpop.f32.mrb[0].mxu0
  %v4379 = vpop.f32.mrb[0].mxu0
  %v4380 = vadd.f32 0.0, %v4379
  %v4381 = vpop.f32.mrb[0].mxu0
  %4382 = vmatprep.mubr.bf16.mxu0 0
  %4383 = vmatmul.mubr.bf16.gmra.mrb[0].mxu0 %v4273
  %v4384 = vpop.f32.mrb[0].mxu0
  %v4385 = vadd.f32 0.0, %v4384
  %v4386 = vpop.f32.mrb[0].mxu0
  %v4387 = vpop.f32.mrb[0].mxu0
  %v4388 = vpop.f32.mrb[0].mxu0
  %4389 = vdwg.mxu0
  %v4397 = vunpack.c.l.b16 %v4210
  %v4398 = vunpack.c.l.b16 %v4211
  %v4399 = vunpack.c.l.b16 %v4212
  %v4400 = vunpack.c.l.b16 %v4213
  %v4401 = vunpack.c.l.b16 %v4214
  %v4402 = vunpack.c.l.b16 %v4215
  %v4403 = vunpack.c.l.b16 %v4216
  %v4404 = vpack.c.b16 %v4398, %v4397
  %v4405 = vpack.c.b16 %v4400, %v4399
  %v4406 = vpack.c.b16 %v4402, %v4401
  %v4407 = vpack.c.b16 %v4403, %v4403
  %v4428 = vunpack.c.l.b16 %v4217
  %v4429 = vunpack.c.l.b16 %v4218
  %v4430 = vunpack.c.l.b16 %v4219
  %v4431 = vunpack.c.l.b16 %v4220
  %v4432 = vunpack.c.l.b16 %v4221
  %v4433 = vunpack.c.l.b16 %v4222
  %v4434 = vunpack.c.l.b16 %v4223
  %v4435 = vunpack.c.l.b16 %v4224
  %v4436 = vunpack.c.l.b16 %v4225
  %v4437 = vunpack.c.l.b16 %v4226
  %v4438 = vunpack.c.l.b16 %v4227
  %v4439 = vunpack.c.l.b16 %v4228
  %v4440 = vunpack.c.l.b16 %v4229
  %v4441 = vunpack.c.l.b16 %v4230
  %v4442 = vunpack.c.l.b16 %v4231
  %v4443 = vunpack.c.l.b16 %v4232
  %v4444 = vpack.c.b16 %v4429, %v4428
  %v4445 = vpack.c.b16 %v4431, %v4430
  %v4446 = vpack.c.b16 %v4433, %v4432
  %v4447 = vpack.c.b16 %v4435, %v4434
  %v4448 = vpack.c.b16 %v4437, %v4436
  %v4449 = vpack.c.b16 %v4439, %v4438
  %v4450 = vpack.c.b16 %v4441, %v4440
  %v4451 = vpack.c.b16 %v4443, %v4442
  %4460 = vmatprep.subr.bf16.mxu0 0
  %4461 = vmatpush1.bf16.msra.mxu0 %v4444
  %4462 = vmatprep.subr.bf16.mxu0 0
  %4463 = vmatpush1.bf16.msra.mxu0 %v4445
  %4464 = vmatprep.subr.bf16.mxu0 0
  %4465 = vmatpush1.bf16.msra.mxu0 %v4446
  %4466 = vmatprep.subr.bf16.mxu0 0
  %4467 = vmatpush1.bf16.msra.mxu0 %v4447
  %4468 = vmatprep.subr.bf16.mxu0 0
  %4469 = vmatpush1.bf16.msra.mxu0 %v4448
  %4470 = vmatprep.subr.bf16.mxu0 0
  %4471 = vmatpush1.bf16.msra.mxu0 %v4449
  %4472 = vmatprep.subr.bf16.mxu0 0
  %4473 = vmatpush1.bf16.msra.mxu0 %v4450
  %4474 = vmatprep.subr.bf16.mxu0 0
  %4475 = vmatpush1.bf16.msra.mxu0 %v4451
  %4476 = vmatprep.subr.bf16.mxu0 0
  %4477 = vmatpush1.bf16.msra.mxu0 0
  %4478 = vmatprep.subr.bf16.mxu0 0
  %4479 = vmatpush1.bf16.msra.mxu0 0
  %4480 = vmatprep.subr.bf16.mxu0 0
  %4481 = vmatpush1.bf16.msra.mxu0 0
  %4482 = vmatprep.subr.bf16.mxu0 0
  %4483 = vmatpush1.bf16.msra.mxu0 0
  %4484 = vmatprep.subr.bf16.mxu0 0
  %4485 = vmatpush1.bf16.msra.mxu0 0
  %4486 = vmatprep.subr.bf16.mxu0 0
  %4487 = vmatpush1.bf16.msra.mxu0 0
  %4488 = vmatprep.subr.bf16.mxu0 0
  %4489 = vmatpush1.bf16.msra.mxu0 0
  %4490 = vmatprep.subr.bf16.mxu0 0
  %4491 = vmatpush1.bf16.msra.mxu0 0
  %4492 = vmatprep.mubr.bf16.mxu0 0
  %4493 = vmatmul.mubr.bf16.gmra.mrb[0].mxu0 %v4404
  %v4494 = vpop.f32.mrb[0].mxu0
  %v4495 = vadd.f32 %v4361, %v4494
  %v4496 = vpop.f32.mrb[0].mxu0
  %v4497 = vpop.f32.mrb[0].mxu0
  %v4498 = vadd.f32 %v4364, %v4497
  %v4499 = vpop.f32.mrb[0].mxu0
  %4500 = vmatprep.mubr.bf16.mxu0 0
  %4501 = vmatmul.mubr.bf16.gmra.mrb[0].mxu0 %v4405
  %v4502 = vpop.f32.mrb[0].mxu0
  %v4503 = vadd.f32 %v4369, %v4502
  %v4504 = vpop.f32.mrb[0].mxu0
  %v4505 = vpop.f32.mrb[0].mxu0
  %v4506 = vadd.f32 %v4372, %v4505
  %v4507 = vpop.f32.mrb[0].mxu0
  %4508 = vmatprep.mubr.bf16.mxu0 0
  %4509 = vmatmul.mubr.bf16.gmra.mrb[0].mxu0 %v4406
  %v4510 = vpop.f32.mrb[0].mxu0
  %v4511 = vadd.f32 %v4377, %v4510
  %v4512 = vpop.f32.mrb[0].mxu0
  %v4513 = vpop.f32.mrb[0].mxu0
  %v4514 = vadd.f32 %v4380, %v4513
  %v4515 = vpop.f32.mrb[0].mxu0
  %4516 = vmatprep.mubr.bf16.mxu0 0
  %4517 = vmatmul.mubr.bf16.gmra.mrb[0].mxu0 %v4407
  %v4518 = vpop.f32.mrb[0].mxu0
  %v4519 = vadd.f32 %v4385, %v4518
  %v4520 = vpop.f32.mrb[0].mxu0
  %v4521 = vpop.f32.mrb[0].mxu0
  %v4522 = vpop.f32.mrb[0].mxu0
  %4523 = vdwg.mxu0
  %s4524 = scalar_lea.vmem %s0, 252
  %v4525 = vld [vmem:[%s4524] sm:$0xf]
  %v4526 = vld [vmem:[%s4524 + $0x4] sm:$0xf]
  %v4527 = vld [vmem:[%s4524 + $0x8] sm:$0xf]
  %v4528 = vld [vmem:[%s4524 + $0xc] sm:$0xf]
  %v4529 = vld [vmem:[%s4524 + $0x10] sm:$0xf]
  %v4530 = vld [vmem:[%s4524 + $0x14] sm:$0xf]
  %v4531 = vld [vmem:[%s4524 + $0x18] sm:$0xf]
  %v4532 = vld [vmem:[%s492] sm:$0xf]
  %v4533 = vld [vmem:[%s492 + $0x4] sm:$0xf]
  %v4534 = vld [vmem:[%s492 + $0x8] sm:$0xf]
  %v4535 = vld [vmem:[%s492 + $0xc] sm:$0xf]
  %v4536 = vld [vmem:[%s492 + $0x10] sm:$0xf]
  %v4537 = vld [vmem:[%s492 + $0x14] sm:$0xf]
  %v4538 = vld [vmem:[%s492 + $0x18] sm:$0xf]
  %v4539 = vld [vmem:[%s492 + $0x1c] sm:$0xf]
  %v4540 = vld [vmem:[%s492 + $0x20] sm:$0xf]
  %v4541 = vld [vmem:[%s492 + $0x24] sm:$0xf]
  %v4542 = vld [vmem:[%s492 + $0x28] sm:$0xf]
  %v4543 = vld [vmem:[%s492 + $0x2c] sm:$0xf]
  %v4544 = vld [vmem:[%s492 + $0x30] sm:$0xf]
  %v4545 = vld [vmem:[%s492 + $0x34] sm:$0xf]
  %v4546 = vld [vmem:[%s492 + $0x38] sm:$0xf]
  %v4547 = vld [vmem:[%s492 + $0x3c] sm:$0xf]
  %v4555 = vunpack.c.l.b16 %v4525
  %v4556 = vunpack.c.l.b16 %v4526
  %v4557 = vunpack.c.l.b16 %v4527
  %v4558 = vunpack.c.l.b16 %v4528
  %v4559 = vunpack.c.l.b16 %v4529
  %v4560 = vunpack.c.l.b16 %v4530
  %v4561 = vunpack.c.l.b16 %v4531
  %v4562 = vpack.c.b16 %v4556, %v4555
  %v4563 = vpack.c.b16 %v4558, %v4557
  %v4564 = vpack.c.b16 %v4560, %v4559
  %v4565 = vpack.c.b16 %v4561, %v4561
  %v4586 = vunpack.c.l.b16 %v4532
  %v4587 = vunpack.c.l.b16 %v4533
  %v4588 = vunpack.c.l.b16 %v4534
  %v4589 = vunpack.c.l.b16 %v4535
  %v4590 = vunpack.c.l.b16 %v4536
  %v4591 = vunpack.c.l.b16 %v4537
  %v4592 = vunpack.c.l.b16 %v4538
  %v4593 = vunpack.c.l.b16 %v4539
  %v4594 = vunpack.c.l.b16 %v4540
  %v4595 = vunpack.c.l.b16 %v4541
  %v4596 = vunpack.c.l.b16 %v4542
  %v4597 = vunpack.c.l.b16 %v4543
  %v4598 = vunpack.c.l.b16 %v4544
  %v4599 = vunpack.c.l.b16 %v4545
  %v4600 = vunpack.c.l.b16 %v4546
  %v4601 = vunpack.c.l.b16 %v4547
  %v4602 = vpack.c.b16 %v4587, %v4586
  %v4603 = vpack.c.b16 %v4589, %v4588
  %v4604 = vpack.c.b16 %v4591, %v4590
  %v4605 = vpack.c.b16 %v4593, %v4592
  %v4606 = vpack.c.b16 %v4595, %v4594
  %v4607 = vpack.c.b16 %v4597, %v4596
  %v4608 = vpack.c.b16 %v4599, %v4598
  %v4609 = vpack.c.b16 %v4601, %v4600
  %4618 = vmatprep.subr.bf16.mxu0 0
  %4619 = vmatpush1.bf16.msra.mxu0 %v4602
  %4620 = vmatprep.subr.bf16.mxu0 0
  %4621 = vmatpush1.bf16.msra.mxu0 %v4603
  %4622 = vmatprep.subr.bf16.mxu0 0
  %4623 = vmatpush1.bf16.msra.mxu0 %v4604
  %4624 = vmatprep.subr.bf16.mxu0 0
  %4625 = vmatpush1.bf16.msra.mxu0 %v4605
  %4626 = vmatprep.subr.bf16.mxu0 0
  %4627 = vmatpush1.bf16.msra.mxu0 %v4606
  %4628 = vmatprep.subr.bf16.mxu0 0
  %4629 = vmatpush1.bf16.msra.mxu0 %v4607
  %4630 = vmatprep.subr.bf16.mxu0 0
  %4631 = vmatpush1.bf16.msra.mxu0 %v4608
  %4632 = vmatprep.subr.bf16.mxu0 0
  %4633 = vmatpush1.bf16.msra.mxu0 %v4609
  %4634 = vmatprep.subr.bf16.mxu0 0
  %4635 = vmatpush1.bf16.msra.mxu0 0
  %4636 = vmatprep.subr.bf16.mxu0 0
  %4637 = vmatpush1.bf16.msra.mxu0 0
  %4638 = vmatprep.subr.bf16.mxu0 0
  %4639 = vmatpush1.bf16.msra.mxu0 0
  %4640 = vmatprep.subr.bf16.mxu0 0
  %4641 = vmatpush1.bf16.msra.mxu0 0
  %4642 = vmatprep.subr.bf16.mxu0 0
  %4643 = vmatpush1.bf16.msra.mxu0 0
  %4644 = vmatprep.subr.bf16.mxu0 0
  %4645 = vmatpush1.bf16.msra.mxu0 0
  %4646 = vmatprep.subr.bf16.mxu0 0
  %4647 = vmatpush1.bf16.msra.mxu0 0
  %4648 = vmatprep.subr.bf16.mxu0 0
  %4649 = vmatpush1.bf16.msra.mxu0 0
  %4650 = vmatprep.mubr.bf16.mxu0 0
  %4651 = vmatmul.mubr.bf16.gmra.mrb[0].mxu0 %v4562
  %v4652 = vpop.f32.mrb[0].mxu0
  %v4653 = vadd.f32 0.0, %v4652
  %v4654 = vpop.f32.mrb[0].mxu0
  %v4655 = vpop.f32.mrb[0].mxu0
  %v4656 = vadd.f32 0.0, %v4655
  %v4657 = vpop.f32.mrb[0].mxu0
  %4658 = vmatprep.mubr.bf16.mxu0 0
  %4659 = vmatmul.mubr.bf16.gmra.mrb[0].mxu0 %v4563
  %v4660 = vpop.f32.mrb[0].mxu0
  %v4661 = vadd.f32 0.0, %v4660
  %v4662 = vpop.f32.mrb[0].mxu0
  %v4663 = vpop.f32.mrb[0].mxu0
  %v4664 = vadd.f32 0.0, %v4663
  %v4665 = vpop.f32.mrb[0].mxu0
  %4666 = vmatprep.mubr.bf16.mxu0 0
  %4667 = vmatmul.mubr.bf16.gmra.mrb[0].mxu0 %v4564
  %v4668 = vpop.f32.mrb[0].mxu0
  %v4669 = vadd.f32 0.0, %v4668
  %v4670 = vpop.f32.mrb[0].mxu0
  %v4671 = vpop.f32.mrb[0].mxu0
  %v4672 = vadd.f32 0.0, %v4671
  %v4673 = vpop.f32.mrb[0].mxu0
  %4674 = vmatprep.mubr.bf16.mxu0 0
  %4675 = vmatmul.mubr.bf16.gmra.mrb[0].mxu0 %v4565
  %v4676 = vpop.f32.mrb[0].mxu0
  %v4677 = vadd.f32 0.0, %v4676
  %v4678 = vpop.f32.mrb[0].mxu0
  %v4679 = vpop.f32.mrb[0].mxu0
  %v4680 = vpop.f32.mrb[0].mxu0
  %4681 = vdwg.mxu0
  %v4682 = vadd.f32 %v4495, %v4653
  %v4683 = vadd.f32 %v4498, %v4656
  %v4684 = vadd.f32 %v4503, %v4661
  %v4685 = vadd.f32 %v4506, %v4664
  %v4686 = vadd.f32 %v4511, %v4669
  %v4687 = vadd.f32 %v4514, %v4672
  %v4688 = vadd.f32 %v4519, %v4677
  %s4689 = scalar_lea.vmem %s0, 256
  %v4690 = vld [vmem:[%s4689] sm:$0xf]
  %v4691 = vld [vmem:[%s4689 + $0x4] sm:$0xf]
  %v4692 = vld [vmem:[%s4689 + $0x8] sm:$0xf]
  %v4693 = vld [vmem:[%s4689 + $0xc] sm:$0xf]
  %v4694 = vld [vmem:[%s4689 + $0x10] sm:$0xf]
  %v4695 = vld [vmem:[%s4689 + $0x14] sm:$0xf]
  %v4696 = vld [vmem:[%s4689 + $0x18] sm:$0xf]
  %v4697 = vld [vmem:[%s658] sm:$0xf]
  %v4698 = vld [vmem:[%s658 + $0x4] sm:$0xf]
  %v4699 = vld [vmem:[%s658 + $0x8] sm:$0xf]
  %v4700 = vld [vmem:[%s658 + $0xc] sm:$0xf]
  %v4701 = vld [vmem:[%s658 + $0x10] sm:$0xf]
  %v4702 = vld [vmem:[%s658 + $0x14] sm:$0xf]
  %v4703 = vld [vmem:[%s658 + $0x18] sm:$0xf]
  %v4704 = vld [vmem:[%s658 + $0x1c] sm:$0xf]
  %v4705 = vld [vmem:[%s658 + $0x20] sm:$0xf]
  %v4706 = vld [vmem:[%s658 + $0x24] sm:$0xf]
  %v4707 = vld [vmem:[%s658 + $0x28] sm:$0xf]
  %v4708 = vld [vmem:[%s658 + $0x2c] sm:$0xf]
  %v4709 = vld [vmem:[%s658 + $0x30] sm:$0xf]
  %v4710 = vld [vmem:[%s658 + $0x34] sm:$0xf]
  %v4711 = vld [vmem:[%s658 + $0x38] sm:$0xf]
  %v4712 = vld [vmem:[%s658 + $0x3c] sm:$0xf]
  %v4720 = vunpack.c.l.b16 %v4690
  %v4721 = vunpack.c.l.b16 %v4691
  %v4722 = vunpack.c.l.b16 %v4692
  %v4723 = vunpack.c.l.b16 %v4693
  %v4724 = vunpack.c.l.b16 %v4694
  %v4725 = vunpack.c.l.b16 %v4695
  %v4726 = vunpack.c.l.b16 %v4696
  %v4727 = vpack.c.b16 %v4721, %v4720
  %v4728 = vpack.c.b16 %v4723, %v4722
  %v4729 = vpack.c.b16 %v4725, %v4724
  %v4730 = vpack.c.b16 %v4726, %v4726
  %v4751 = vunpack.c.l.b16 %v4697
  %v4752 = vunpack.c.l.b16 %v4698
  %v4753 = vunpack.c.l.b16 %v4699
  %v4754 = vunpack.c.l.b16 %v4700
  %v4755 = vunpack.c.l.b16 %v4701
  %v4756 = vunpack.c.l.b16 %v4702
  %v4757 = vunpack.c.l.b16 %v4703
  %v4758 = vunpack.c.l.b16 %v4704
  %v4759 = vunpack.c.l.b16 %v4705
  %v4760 = vunpack.c.l.b16 %v4706
  %v4761 = vunpack.c.l.b16 %v4707
  %v4762 = vunpack.c.l.b16 %v4708
  %v4763 = vunpack.c.l.b16 %v4709
  %v4764 = vunpack.c.l.b16 %v4710
  %v4765 = vunpack.c.l.b16 %v4711
  %v4766 = vunpack.c.l.b16 %v4712
  %v4767 = vpack.c.b16 %v4752, %v4751
  %v4768 = vpack.c.b16 %v4754, %v4753
  %v4769 = vpack.c.b16 %v4756, %v4755
  %v4770 = vpack.c.b16 %v4758, %v4757
  %v4771 = vpack.c.b16 %v4760, %v4759
  %v4772 = vpack.c.b16 %v4762, %v4761
  %v4773 = vpack.c.b16 %v4764, %v4763
  %v4774 = vpack.c.b16 %v4766, %v4765
  %4783 = vmatprep.subr.bf16.mxu0 0
  %4784 = vmatpush1.bf16.msra.mxu0 %v4767
  %4785 = vmatprep.subr.bf16.mxu0 0
  %4786 = vmatpush1.bf16.msra.mxu0 %v4768
  %4787 = vmatprep.subr.bf16.mxu0 0
  %4788 = vmatpush1.bf16.msra.mxu0 %v4769
  %4789 = vmatprep.subr.bf16.mxu0 0
  %4790 = vmatpush1.bf16.msra.mxu0 %v4770
  %4791 = vmatprep.subr.bf16.mxu0 0
  %4792 = vmatpush1.bf16.msra.mxu0 %v4771
  %4793 = vmatprep.subr.bf16.mxu0 0
  %4794 = vmatpush1.bf16.msra.mxu0 %v4772
  %4795 = vmatprep.subr.bf16.mxu0 0
  %4796 = vmatpush1.bf16.msra.mxu0 %v4773
  %4797 = vmatprep.subr.bf16.mxu0 0
  %4798 = vmatpush1.bf16.msra.mxu0 %v4774
  %4799 = vmatprep.subr.bf16.mxu0 0
  %4800 = vmatpush1.bf16.msra.mxu0 0
  %4801 = vmatprep.subr.bf16.mxu0 0
  %4802 = vmatpush1.bf16.msra.mxu0 0
  %4803 = vmatprep.subr.bf16.mxu0 0
  %4804 = vmatpush1.bf16.msra.mxu0 0
  %4805 = vmatprep.subr.bf16.mxu0 0
  %4806 = vmatpush1.bf16.msra.mxu0 0
  %4807 = vmatprep.subr.bf16.mxu0 0
  %4808 = vmatpush1.bf16.msra.mxu0 0
  %4809 = vmatprep.subr.bf16.mxu0 0
  %4810 = vmatpush1.bf16.msra.mxu0 0
  %4811 = vmatprep.subr.bf16.mxu0 0
  %4812 = vmatpush1.bf16.msra.mxu0 0
  %4813 = vmatprep.subr.bf16.mxu0 0
  %4814 = vmatpush1.bf16.msra.mxu0 0
  %4815 = vmatprep.mubr.bf16.mxu0 0
  %4816 = vmatmul.mubr.bf16.gmra.mrb[0].mxu0 %v4727
  %v4817 = vpop.f32.mrb[0].mxu0
  %v4818 = vadd.f32 0.0, %v4817
  %v4819 = vpop.f32.mrb[0].mxu0
  %v4820 = vpop.f32.mrb[0].mxu0
  %v4821 = vadd.f32 0.0, %v4820
  %v4822 = vpop.f32.mrb[0].mxu0
  %4823 = vmatprep.mubr.bf16.mxu0 0
  %4824 = vmatmul.mubr.bf16.gmra.mrb[0].mxu0 %v4728
  %v4825 = vpop.f32.mrb[0].mxu0
  %v4826 = vadd.f32 0.0, %v4825
  %v4827 = vpop.f32.mrb[0].mxu0
  %v4828 = vpop.f32.mrb[0].mxu0
  %v4829 = vadd.f32 0.0, %v4828
  %v4830 = vpop.f32.mrb[0].mxu0
  %4831 = vmatprep.mubr.bf16.mxu0 0
  %4832 = vmatmul.mubr.bf16.gmra.mrb[0].mxu0 %v4729
  %v4833 = vpop.f32.mrb[0].mxu0
  %v4834 = vadd.f32 0.0, %v4833
  %v4835 = vpop.f32.mrb[0].mxu0
  %v4836 = vpop.f32.mrb[0].mxu0
  %v4837 = vadd.f32 0.0, %v4836
  %v4838 = vpop.f32.mrb[0].mxu0
  %4839 = vmatprep.mubr.bf16.mxu0 0
  %4840 = vmatmul.mubr.bf16.gmra.mrb[0].mxu0 %v4730
  %v4841 = vpop.f32.mrb[0].mxu0
  %v4842 = vadd.f32 0.0, %v4841
  %v4843 = vpop.f32.mrb[0].mxu0
  %v4844 = vpop.f32.mrb[0].mxu0
  %v4845 = vpop.f32.mrb[0].mxu0
  %4846 = vdwg.mxu0
  %v4847 = vadd.f32 %v4682, %v4818
  %v4848 = vadd.f32 %v4683, %v4821
  %v4849 = vadd.f32 %v4684, %v4826
  %v4850 = vadd.f32 %v4685, %v4829
  %v4851 = vadd.f32 %v4686, %v4834
  %v4852 = vadd.f32 %v4687, %v4837
  %v4853 = vadd.f32 %v4688, %v4842
  %v4854 = vld [vmem:[%s2] sm:$0x1]
  %v4856 = vlaneseq
  %v4857 = vshrl.u32 %v4856, 7
  %v4858 = vsub.s32 0, %v4857
  %v4859 = vrot.slane %v4854, %v4858
  %v4861 = vadd.f32 %v4847, %v4859
  %v4862 = vadd.f32 %v4848, %v4859
  %v4863 = vadd.f32 %v4849, %v4859
  %v4864 = vadd.f32 %v4850, %v4859
  %v4865 = vadd.f32 %v4851, %v4859
  %v4866 = vadd.f32 %v4852, %v4859
  %v4867 = vadd.f32 %v4853, %v4859
  %v4868 = vmax.f32 %v4861, 0.0
  %v4869 = vmax.f32 %v4862, 0.0
  %v4870 = vmax.f32 %v4863, 0.0
  %v4871 = vmax.f32 %v4864, 0.0
  %v4872 = vmax.f32 %v4865, 0.0
  %v4873 = vmax.f32 %v4866, 0.0
  %v4874 = vmax.f32 %v4867, 0.0
  %s4875 = scalar_lea.vmem [#allocation2], 568
  %4876 = vst [vmem:[%s4875] sm:$0xff] %v4868
  %4877 = vst [vmem:[%s4875 + $0x8] sm:$0xff] %v4869
  %4878 = vst [vmem:[%s4875 + $0x10] sm:$0xff] %v4870
  %4879 = vst [vmem:[%s4875 + $0x18] sm:$0xff] %v4871
  %4880 = vst [vmem:[%s4875 + $0x20] sm:$0xff] %v4872
  %4881 = vst [vmem:[%s4875 + $0x28] sm:$0xff] %v4873
  %4882 = vst [vmem:[%s4875 + $0x30] sm:$0xff] %v4874
  %v4883 = vld [vmem:[#allocation2] sm:$0xff]
  %v4884 = vld [vmem:[#allocation2 + $0x10] sm:$0xff]
  %v4885 = vld [vmem:[#allocation2 + $0x20] sm:$0xff]
  %v4886 = vld [vmem:[#allocation2 + $0xa0] sm:$0xff]
  %v4887 = vld [vmem:[#allocation2 + $0xb0] sm:$0xff]
  %v4888 = vld [vmem:[#allocation2 + $0xc0] sm:$0xff]
  %v4889 = vld [vmem:[#allocation2 + $0x140] sm:$0xff]
  %v4890 = vld [vmem:[#allocation2 + $0x150] sm:$0xff]
  %v4891 = vld [vmem:[#allocation2 + $0x160] sm:$0xff]
  %v4892 = vpack.c.bf16 %v4884, %v4883
  %v4893 = vpack.c.bf16 %v4886, %v4885
  %v4894 = vpack.c.bf16 %v4888, %v4887
  %v4895 = vpack.c.bf16 %v4890, %v4889
  %v4896 = vpack.c.bf16 %v4891, %v4891
  %v4897 = vld [vmem:[%s3] sm:$0xf]
  %v4898 = vld [vmem:[%s3 + $0x4] sm:$0xf]
  %v4899 = vld [vmem:[%s3 + $0x8] sm:$0xf]
  %v4900 = vld [vmem:[%s3 + $0xc] sm:$0xf]
  %v4901 = vld [vmem:[%s3 + $0x10] sm:$0xf]
  %v4902 = vld [vmem:[%s3 + $0x14] sm:$0xf]
  %v4903 = vld [vmem:[%s3 + $0x18] sm:$0xf]
  %v4904 = vld [vmem:[%s3 + $0x1c] sm:$0xf]
  %v4905 = vld [vmem:[%s3 + $0x20] sm:$0xf]
  %v4906 = vld [vmem:[%s3 + $0x24] sm:$0xf]
  %v4907 = vld [vmem:[%s3 + $0x28] sm:$0xf]
  %v4908 = vld [vmem:[%s3 + $0x2c] sm:$0xf]
  %v4909 = vld [vmem:[%s3 + $0x30] sm:$0xf]
  %v4910 = vld [vmem:[%s3 + $0x34] sm:$0xf]
  %v4911 = vld [vmem:[%s3 + $0x38] sm:$0xf]
  %v4912 = vld [vmem:[%s3 + $0x3c] sm:$0xf]
  %s4913 = scalar_lea.vmem [#allocation2], 8
  %v4914 = vld [vmem:[%s4913] sm:$0xff]
  %v4915 = vld [vmem:[%s4913 + $0x10] sm:$0xff]
  %v4916 = vld [vmem:[%s4913 + $0x20] sm:$0xff]
  %v4917 = vld [vmem:[%s4913 + $0xa0] sm:$0xff]
  %v4918 = vld [vmem:[%s4913 + $0xb0] sm:$0xff]
  %v4919 = vld [vmem:[%s4913 + $0xc0] sm:$0xff]
  %v4920 = vld [vmem:[%s4913 + $0x140] sm:$0xff]
  %v4921 = vld [vmem:[%s4913 + $0x150] sm:$0xff]
  %v4922 = vld [vmem:[%s4913 + $0x160] sm:$0xff]
  %v4923 = vpack.c.bf16 %v4915, %v4914
  %v4924 = vpack.c.bf16 %v4917, %v4916
  %v4925 = vpack.c.bf16 %v4919, %v4918
  %v4926 = vpack.c.bf16 %v4921, %v4920
  %v4927 = vpack.c.bf16 %v4922, %v4922
  %s4928 = scalar_lea.vmem %s3, 64
  %v4929 = vld [vmem:[%s4928] sm:$0xf]
  %v4930 = vld [vmem:[%s4928 + $0x4] sm:$0xf]
  %v4931 = vld [vmem:[%s4928 + $0x8] sm:$0xf]
  %v4932 = vld [vmem:[%s4928 + $0xc] sm:$0xf]
  %v4933 = vld [vmem:[%s4928 + $0x10] sm:$0xf]
  %v4934 = vld [vmem:[%s4928 + $0x14] sm:$0xf]
  %v4935 = vld [vmem:[%s4928 + $0x18] sm:$0xf]
  %v4936 = vld [vmem:[%s4928 + $0x1c] sm:$0xf]
  %v4937 = vld [vmem:[%s4928 + $0x20] sm:$0xf]
  %v4938 = vld [vmem:[%s4928 + $0x24] sm:$0xf]
  %v4939 = vld [vmem:[%s4928 + $0x28] sm:$0xf]
  %v4940 = vld [vmem:[%s4928 + $0x2c] sm:$0xf]
  %v4941 = vld [vmem:[%s4928 + $0x30] sm:$0xf]
  %v4942 = vld [vmem:[%s4928 + $0x34] sm:$0xf]
  %v4943 = vld [vmem:[%s4928 + $0x38] sm:$0xf]
  %v4944 = vld [vmem:[%s4928 + $0x3c] sm:$0xf]
  %v4961 = vunpack.c.l.b16 %v4929
  %v4962 = vunpack.c.l.b16 %v4930
  %v4963 = vunpack.c.l.b16 %v4931
  %v4964 = vunpack.c.l.b16 %v4932
  %v4965 = vunpack.c.l.b16 %v4933
  %v4966 = vunpack.c.l.b16 %v4934
  %v4967 = vunpack.c.l.b16 %v4935
  %v4968 = vunpack.c.l.b16 %v4936
  %v4969 = vunpack.c.l.b16 %v4937
  %v4970 = vunpack.c.l.b16 %v4938
  %v4971 = vunpack.c.l.b16 %v4939
  %v4972 = vunpack.c.l.b16 %v4940
  %v4973 = vunpack.c.l.b16 %v4941
  %v4974 = vunpack.c.l.b16 %v4942
  %v4975 = vunpack.c.l.b16 %v4943
  %v4976 = vunpack.c.l.b16 %v4944
  %v4977 = vpack.c.b16 %v4962, %v4961
  %v4978 = vpack.c.b16 %v4964, %v4963
  %v4979 = vpack.c.b16 %v4966, %v4965
  %v4980 = vpack.c.b16 %v4968, %v4967
  %v4981 = vpack.c.b16 %v4970, %v4969
  %v4982 = vpack.c.b16 %v4972, %v4971
  %v4983 = vpack.c.b16 %v4974, %v4973
  %v4984 = vpack.c.b16 %v4976, %v4975
  %4993 = vmatprep.subr.bf16.mxu0 0
  %4994 = vmatpush1.bf16.msra.mxu0 %v4977
  %4995 = vmatprep.subr.bf16.mxu0 0
  %4996 = vmatpush1.bf16.msra.mxu0 %v4978
  %4997 = vmatprep.subr.bf16.mxu0 0
  %4998 = vmatpush1.bf16.msra.mxu0 %v4979
  %4999 = vmatprep.subr.bf16.mxu0 0
  %5000 = vmatpush1.bf16.msra.mxu0 %v4980
  %5001 = vmatprep.subr.bf16.mxu0 0
  %5002 = vmatpush1.bf16.msra.mxu0 %v4981
  %5003 = vmatprep.subr.bf16.mxu0 0
  %5004 = vmatpush1.bf16.msra.mxu0 %v4982
  %5005 = vmatprep.subr.bf16.mxu0 0
  %5006 = vmatpush1.bf16.msra.mxu0 %v4983
  %5007 = vmatprep.subr.bf16.mxu0 0
  %5008 = vmatpush1.bf16.msra.mxu0 %v4984
  %5009 = vmatprep.subr.bf16.mxu0 0
  %5010 = vmatpush1.bf16.msra.mxu0 0
  %5011 = vmatprep.subr.bf16.mxu0 0
  %5012 = vmatpush1.bf16.msra.mxu0 0
  %5013 = vmatprep.subr.bf16.mxu0 0
  %5014 = vmatpush1.bf16.msra.mxu0 0
  %5015 = vmatprep.subr.bf16.mxu0 0
  %5016 = vmatpush1.bf16.msra.mxu0 0
  %5017 = vmatprep.subr.bf16.mxu0 0
  %5018 = vmatpush1.bf16.msra.mxu0 0
  %5019 = vmatprep.subr.bf16.mxu0 0
  %5020 = vmatpush1.bf16.msra.mxu0 0
  %5021 = vmatprep.subr.bf16.mxu0 0
  %5022 = vmatpush1.bf16.msra.mxu0 0
  %5023 = vmatprep.subr.bf16.mxu0 0
  %5024 = vmatpush1.bf16.msra.mxu0 0
  %5025 = vmatprep.mubr.bf16.mxu0 0
  %5026 = vmatmul.mubr.bf16.gmra.mrb[0].mxu0 %v4923
  %v5027 = vpop.f32.mrb[0].mxu0
  %v5028 = vadd.f32 0.0, %v5027
  %v5029 = vpop.f32.mrb[0].mxu0
  %v5030 = vpop.f32.mrb[0].mxu0
  %v5031 = vadd.f32 0.0, %v5030
  %v5032 = vpop.f32.mrb[0].mxu0
  %5033 = vmatprep.mubr.bf16.mxu0 0
  %5034 = vmatmul.mubr.bf16.gmra.mrb[0].mxu0 %v4924
  %v5035 = vpop.f32.mrb[0].mxu0
  %v5036 = vadd.f32 0.0, %v5035
  %v5037 = vpop.f32.mrb[0].mxu0
  %v5038 = vpop.f32.mrb[0].mxu0
  %v5039 = vadd.f32 0.0, %v5038
  %v5040 = vpop.f32.mrb[0].mxu0
  %5041 = vmatprep.mubr.bf16.mxu0 0
  %5042 = vmatmul.mubr.bf16.gmra.mrb[0].mxu0 %v4925
  %v5043 = vpop.f32.mrb[0].mxu0
  %v5044 = vadd.f32 0.0, %v5043
  %v5045 = vpop.f32.mrb[0].mxu0
  %v5046 = vpop.f32.mrb[0].mxu0
  %v5047 = vadd.f32 0.0, %v5046
  %v5048 = vpop.f32.mrb[0].mxu0
  %5049 = vmatprep.mubr.bf16.mxu0 0
  %5050 = vmatmul.mubr.bf16.gmra.mrb[0].mxu0 %v4926
  %v5051 = vpop.f32.mrb[0].mxu0
  %v5052 = vadd.f32 0.0, %v5051
  %v5053 = vpop.f32.mrb[0].mxu0
  %v5054 = vpop.f32.mrb[0].mxu0
  %v5055 = vadd.f32 0.0, %v5054
  %v5056 = vpop.f32.mrb[0].mxu0
  %5057 = vmatprep.mubr.bf16.mxu0 0
  %5058 = vmatmul.mubr.bf16.gmra.mrb[0].mxu0 %v4927
  %v5059 = vpop.f32.mrb[0].mxu0
  %v5060 = vadd.f32 0.0, %v5059
  %v5061 = vpop.f32.mrb[0].mxu0
  %v5062 = vpop.f32.mrb[0].mxu0
  %v5063 = vpop.f32.mrb[0].mxu0
  %5064 = vdwg.mxu0
  %v5081 = vunpack.c.l.b16 %v4897
  %v5082 = vunpack.c.l.b16 %v4898
  %v5083 = vunpack.c.l.b16 %v4899
  %v5084 = vunpack.c.l.b16 %v4900
  %v5085 = vunpack.c.l.b16 %v4901
  %v5086 = vunpack.c.l.b16 %v4902
  %v5087 = vunpack.c.l.b16 %v4903
  %v5088 = vunpack.c.l.b16 %v4904
  %v5089 = vunpack.c.l.b16 %v4905
  %v5090 = vunpack.c.l.b16 %v4906
  %v5091 = vunpack.c.l.b16 %v4907
  %v5092 = vunpack.c.l.b16 %v4908
  %v5093 = vunpack.c.l.b16 %v4909
  %v5094 = vunpack.c.l.b16 %v4910
  %v5095 = vunpack.c.l.b16 %v4911
  %v5096 = vunpack.c.l.b16 %v4912
  %v5097 = vpack.c.b16 %v5082, %v5081
  %v5098 = vpack.c.b16 %v5084, %v5083
  %v5099 = vpack.c.b16 %v5086, %v5085
  %v5100 = vpack.c.b16 %v5088, %v5087
  %v5101 = vpack.c.b16 %v5090, %v5089
  %v5102 = vpack.c.b16 %v5092, %v5091
  %v5103 = vpack.c.b16 %v5094, %v5093
  %v5104 = vpack.c.b16 %v5096, %v5095
  %5113 = vmatprep.subr.bf16.mxu0 0
  %5114 = vmatpush1.bf16.msra.mxu0 %v5097
  %5115 = vmatprep.subr.bf16.mxu0 0
  %5116 = vmatpush1.bf16.msra.mxu0 %v5098
  %5117 = vmatprep.subr.bf16.mxu0 0
  %5118 = vmatpush1.bf16.msra.mxu0 %v5099
  %5119 = vmatprep.subr.bf16.mxu0 0
  %5120 = vmatpush1.bf16.msra.mxu0 %v5100
  %5121 = vmatprep.subr.bf16.mxu0 0
  %5122 = vmatpush1.bf16.msra.mxu0 %v5101
  %5123 = vmatprep.subr.bf16.mxu0 0
  %5124 = vmatpush1.bf16.msra.mxu0 %v5102
  %5125 = vmatprep.subr.bf16.mxu0 0
  %5126 = vmatpush1.bf16.msra.mxu0 %v5103
  %5127 = vmatprep.subr.bf16.mxu0 0
  %5128 = vmatpush1.bf16.msra.mxu0 %v5104
  %5129 = vmatprep.subr.bf16.mxu0 0
  %5130 = vmatpush1.bf16.msra.mxu0 0
  %5131 = vmatprep.subr.bf16.mxu0 0
  %5132 = vmatpush1.bf16.msra.mxu0 0
  %5133 = vmatprep.subr.bf16.mxu0 0
  %5134 = vmatpush1.bf16.msra.mxu0 0
  %5135 = vmatprep.subr.bf16.mxu0 0
  %5136 = vmatpush1.bf16.msra.mxu0 0
  %5137 = vmatprep.subr.bf16.mxu0 0
  %5138 = vmatpush1.bf16.msra.mxu0 0
  %5139 = vmatprep.subr.bf16.mxu0 0
  %5140 = vmatpush1.bf16.msra.mxu0 0
  %5141 = vmatprep.subr.bf16.mxu0 0
  %5142 = vmatpush1.bf16.msra.mxu0 0
  %5143 = vmatprep.subr.bf16.mxu0 0
  %5144 = vmatpush1.bf16.msra.mxu0 0
  %5145 = vmatprep.mubr.bf16.mxu0 0
  %5146 = vmatmul.mubr.bf16.gmra.mrb[0].mxu0 %v4892
  %v5147 = vpop.f32.mrb[0].mxu0
  %v5148 = vadd.f32 %v5028, %v5147
  %v5149 = vpop.f32.mrb[0].mxu0
  %v5150 = vpop.f32.mrb[0].mxu0
  %v5151 = vadd.f32 %v5031, %v5150
  %v5152 = vpop.f32.mrb[0].mxu0
  %5153 = vmatprep.mubr.bf16.mxu0 0
  %5154 = vmatmul.mubr.bf16.gmra.mrb[0].mxu0 %v4893
  %v5155 = vpop.f32.mrb[0].mxu0
  %v5156 = vadd.f32 %v5036, %v5155
  %v5157 = vpop.f32.mrb[0].mxu0
  %v5158 = vpop.f32.mrb[0].mxu0
  %v5159 = vadd.f32 %v5039, %v5158
  %v5160 = vpop.f32.mrb[0].mxu0
  %5161 = vmatprep.mubr.bf16.mxu0 0
  %5162 = vmatmul.mubr.bf16.gmra.mrb[0].mxu0 %v4894
  %v5163 = vpop.f32.mrb[0].mxu0
  %v5164 = vadd.f32 %v5044, %v5163
  %v5165 = vpop.f32.mrb[0].mxu0
  %v5166 = vpop.f32.mrb[0].mxu0
  %v5167 = vadd.f32 %v5047, %v5166
  %v5168 = vpop.f32.mrb[0].mxu0
  %5169 = vmatprep.mubr.bf16.mxu0 0
  %5170 = vmatmul.mubr.bf16.gmra.mrb[0].mxu0 %v4895
  %v5171 = vpop.f32.mrb[0].mxu0
  %v5172 = vadd.f32 %v5052, %v5171
  %v5173 = vpop.f32.mrb[0].mxu0
  %v5174 = vpop.f32.mrb[0].mxu0
  %v5175 = vadd.f32 %v5055, %v5174
  %v5176 = vpop.f32.mrb[0].mxu0
  %5177 = vmatprep.mubr.bf16.mxu0 0
  %5178 = vmatmul.mubr.bf16.gmra.mrb[0].mxu0 %v4896
  %v5179 = vpop.f32.mrb[0].mxu0
  %v5180 = vadd.f32 %v5060, %v5179
  %v5181 = vpop.f32.mrb[0].mxu0
  %v5182 = vpop.f32.mrb[0].mxu0
  %v5183 = vpop.f32.mrb[0].mxu0
  %5184 = vdwg.mxu0
  %s5185 = scalar_lea.vmem [#allocation2], 16
  %v5186 = vld [vmem:[%s5185] sm:$0xff]
  %v5187 = vld [vmem:[%s5185 + $0x10] sm:$0xff]
  %v5188 = vld [vmem:[%s5185 + $0x20] sm:$0xff]
  %v5189 = vld [vmem:[%s5185 + $0xa0] sm:$0xff]
  %v5190 = vld [vmem:[%s5185 + $0xb0] sm:$0xff]
  %v5191 = vld [vmem:[%s5185 + $0xc0] sm:$0xff]
  %v5192 = vld [vmem:[%s5185 + $0x140] sm:$0xff]
  %v5193 = vld [vmem:[%s5185 + $0x150] sm:$0xff]
  %v5194 = vld [vmem:[%s5185 + $0x160] sm:$0xff]
  %v5195 = vpack.c.bf16 %v5187, %v5186
  %v5196 = vpack.c.bf16 %v5189, %v5188
  %v5197 = vpack.c.bf16 %v5191, %v5190
  %v5198 = vpack.c.bf16 %v5193, %v5192
  %v5199 = vpack.c.bf16 %v5194, %v5194
  %s5200 = scalar_lea.vmem %s3, 128
  %v5201 = vld [vmem:[%s5200] sm:$0xf]
  %v5202 = vld [vmem:[%s5200 + $0x4] sm:$0xf]
  %v5203 = vld [vmem:[%s5200 + $0x8] sm:$0xf]
  %v5204 = vld [vmem:[%s5200 + $0xc] sm:$0xf]
  %v5205 = vld [vmem:[%s5200 + $0x10] sm:$0xf]
  %v5206 = vld [vmem:[%s5200 + $0x14] sm:$0xf]
  %v5207 = vld [vmem:[%s5200 + $0x18] sm:$0xf]
  %v5208 = vld [vmem:[%s5200 + $0x1c] sm:$0xf]
  %v5209 = vld [vmem:[%s5200 + $0x20] sm:$0xf]
  %v5210 = vld [vmem:[%s5200 + $0x24] sm:$0xf]
  %v5211 = vld [vmem:[%s5200 + $0x28] sm:$0xf]
  %v5212 = vld [vmem:[%s5200 + $0x2c] sm:$0xf]
  %v5213 = vld [vmem:[%s5200 + $0x30] sm:$0xf]
  %v5214 = vld [vmem:[%s5200 + $0x34] sm:$0xf]
  %v5215 = vld [vmem:[%s5200 + $0x38] sm:$0xf]
  %v5216 = vld [vmem:[%s5200 + $0x3c] sm:$0xf]
  %v5233 = vunpack.c.l.b16 %v5201
  %v5234 = vunpack.c.l.b16 %v5202
  %v5235 = vunpack.c.l.b16 %v5203
  %v5236 = vunpack.c.l.b16 %v5204
  %v5237 = vunpack.c.l.b16 %v5205
  %v5238 = vunpack.c.l.b16 %v5206
  %v5239 = vunpack.c.l.b16 %v5207
  %v5240 = vunpack.c.l.b16 %v5208
  %v5241 = vunpack.c.l.b16 %v5209
  %v5242 = vunpack.c.l.b16 %v5210
  %v5243 = vunpack.c.l.b16 %v5211
  %v5244 = vunpack.c.l.b16 %v5212
  %v5245 = vunpack.c.l.b16 %v5213
  %v5246 = vunpack.c.l.b16 %v5214
  %v5247 = vunpack.c.l.b16 %v5215
  %v5248 = vunpack.c.l.b16 %v5216
  %v5249 = vpack.c.b16 %v5234, %v5233
  %v5250 = vpack.c.b16 %v5236, %v5235
  %v5251 = vpack.c.b16 %v5238, %v5237
  %v5252 = vpack.c.b16 %v5240, %v5239
  %v5253 = vpack.c.b16 %v5242, %v5241
  %v5254 = vpack.c.b16 %v5244, %v5243
  %v5255 = vpack.c.b16 %v5246, %v5245
  %v5256 = vpack.c.b16 %v5248, %v5247
  %5265 = vmatprep.subr.bf16.mxu0 0
  %5266 = vmatpush1.bf16.msra.mxu0 %v5249
  %5267 = vmatprep.subr.bf16.mxu0 0
  %5268 = vmatpush1.bf16.msra.mxu0 %v5250
  %5269 = vmatprep.subr.bf16.mxu0 0
  %5270 = vmatpush1.bf16.msra.mxu0 %v5251
  %5271 = vmatprep.subr.bf16.mxu0 0
  %5272 = vmatpush1.bf16.msra.mxu0 %v5252
  %5273 = vmatprep.subr.bf16.mxu0 0
  %5274 = vmatpush1.bf16.msra.mxu0 %v5253
  %5275 = vmatprep.subr.bf16.mxu0 0
  %5276 = vmatpush1.bf16.msra.mxu0 %v5254
  %5277 = vmatprep.subr.bf16.mxu0 0
  %5278 = vmatpush1.bf16.msra.mxu0 %v5255
  %5279 = vmatprep.subr.bf16.mxu0 0
  %5280 = vmatpush1.bf16.msra.mxu0 %v5256
  %5281 = vmatprep.subr.bf16.mxu0 0
  %5282 = vmatpush1.bf16.msra.mxu0 0
  %5283 = vmatprep.subr.bf16.mxu0 0
  %5284 = vmatpush1.bf16.msra.mxu0 0
  %5285 = vmatprep.subr.bf16.mxu0 0
  %5286 = vmatpush1.bf16.msra.mxu0 0
  %5287 = vmatprep.subr.bf16.mxu0 0
  %5288 = vmatpush1.bf16.msra.mxu0 0
  %5289 = vmatprep.subr.bf16.mxu0 0
  %5290 = vmatpush1.bf16.msra.mxu0 0
  %5291 = vmatprep.subr.bf16.mxu0 0
  %5292 = vmatpush1.bf16.msra.mxu0 0
  %5293 = vmatprep.subr.bf16.mxu0 0
  %5294 = vmatpush1.bf16.msra.mxu0 0
  %5295 = vmatprep.subr.bf16.mxu0 0
  %5296 = vmatpush1.bf16.msra.mxu0 0
  %5297 = vmatprep.mubr.bf16.mxu0 0
  %5298 = vmatmul.mubr.bf16.gmra.mrb[0].mxu0 %v5195
  %v5299 = vpop.f32.mrb[0].mxu0
  %v5300 = vadd.f32 0.0, %v5299
  %v5301 = vpop.f32.mrb[0].mxu0
  %v5302 = vpop.f32.mrb[0].mxu0
  %v5303 = vadd.f32 0.0, %v5302
  %v5304 = vpop.f32.mrb[0].mxu0
  %5305 = vmatprep.mubr.bf16.mxu0 0
  %5306 = vmatmul.mubr.bf16.gmra.mrb[0].mxu0 %v5196
  %v5307 = vpop.f32.mrb[0].mxu0
  %v5308 = vadd.f32 0.0, %v5307
  %v5309 = vpop.f32.mrb[0].mxu0
  %v5310 = vpop.f32.mrb[0].mxu0
  %v5311 = vadd.f32 0.0, %v5310
  %v5312 = vpop.f32.mrb[0].mxu0
  %5313 = vmatprep.mubr.bf16.mxu0 0
  %5314 = vmatmul.mubr.bf16.gmra.mrb[0].mxu0 %v5197
  %v5315 = vpop.f32.mrb[0].mxu0
  %v5316 = vadd.f32 0.0, %v5315
  %v5317 = vpop.f32.mrb[0].mxu0
  %v5318 = vpop.f32.mrb[0].mxu0
  %v5319 = vadd.f32 0.0, %v5318
  %v5320 = vpop.f32.mrb[0].mxu0
  %5321 = vmatprep.mubr.bf16.mxu0 0
  %5322 = vmatmul.mubr.bf16.gmra.mrb[0].mxu0 %v5198
  %v5323 = vpop.f32.mrb[0].mxu0
  %v5324 = vadd.f32 0.0, %v5323
  %v5325 = vpop.f32.mrb[0].mxu0
  %v5326 = vpop.f32.mrb[0].mxu0
  %v5327 = vadd.f32 0.0, %v5326
  %v5328 = vpop.f32.mrb[0].mxu0
  %5329 = vmatprep.mubr.bf16.mxu0 0
  %5330 = vmatmul.mubr.bf16.gmra.mrb[0].mxu0 %v5199
  %v5331 = vpop.f32.mrb[0].mxu0
  %v5332 = vadd.f32 0.0, %v5331
  %v5333 = vpop.f32.mrb[0].mxu0
  %v5334 = vpop.f32.mrb[0].mxu0
  %v5335 = vpop.f32.mrb[0].mxu0
  %5336 = vdwg.mxu0
  %v5337 = vadd.f32 %v5148, %v5300
  %v5338 = vadd.f32 %v5151, %v5303
  %v5339 = vadd.f32 %v5156, %v5308
  %v5340 = vadd.f32 %v5159, %v5311
  %v5341 = vadd.f32 %v5164, %v5316
  %v5342 = vadd.f32 %v5167, %v5319
  %v5343 = vadd.f32 %v5172, %v5324
  %v5344 = vadd.f32 %v5175, %v5327
  %v5345 = vadd.f32 %v5180, %v5332
  %s5346 = scalar_lea.vmem [#allocation2], 24
  %v5347 = vld [vmem:[%s5346] sm:$0xff]
  %v5348 = vld [vmem:[%s5346 + $0x10] sm:$0xff]
  %v5349 = vld [vmem:[%s5346 + $0x20] sm:$0xff]
  %v5350 = vld [vmem:[%s5346 + $0xa0] sm:$0xff]
  %v5351 = vld [vmem:[%s5346 + $0xb0] sm:$0xff]
  %v5352 = vld [vmem:[%s5346 + $0xc0] sm:$0xff]
  %v5353 = vld [vmem:[%s5346 + $0x140] sm:$0xff]
  %v5354 = vld [vmem:[%s5346 + $0x150] sm:$0xff]
  %v5355 = vld [vmem:[%s5346 + $0x160] sm:$0xff]
  %v5356 = vpack.c.bf16 %v5348, %v5347
  %v5357 = vpack.c.bf16 %v5350, %v5349
  %v5358 = vpack.c.bf16 %v5352, %v5351
  %v5359 = vpack.c.bf16 %v5354, %v5353
  %v5360 = vpack.c.bf16 %v5355, %v5355
  %s5361 = scalar_lea.vmem %s3, 192
  %v5362 = vld [vmem:[%s5361] sm:$0xf]
  %v5363 = vld [vmem:[%s5361 + $0x4] sm:$0xf]
  %v5364 = vld [vmem:[%s5361 + $0x8] sm:$0xf]
  %v5365 = vld [vmem:[%s5361 + $0xc] sm:$0xf]
  %v5366 = vld [vmem:[%s5361 + $0x10] sm:$0xf]
  %v5367 = vld [vmem:[%s5361 + $0x14] sm:$0xf]
  %v5368 = vld [vmem:[%s5361 + $0x18] sm:$0xf]
  %v5369 = vld [vmem:[%s5361 + $0x1c] sm:$0xf]
  %v5370 = vld [vmem:[%s5361 + $0x20] sm:$0xf]
  %v5371 = vld [vmem:[%s5361 + $0x24] sm:$0xf]
  %v5372 = vld [vmem:[%s5361 + $0x28] sm:$0xf]
  %v5373 = vld [vmem:[%s5361 + $0x2c] sm:$0xf]
  %v5374 = vld [vmem:[%s5361 + $0x30] sm:$0xf]
  %v5375 = vld [vmem:[%s5361 + $0x34] sm:$0xf]
  %v5376 = vld [vmem:[%s5361 + $0x38] sm:$0xf]
  %v5377 = vld [vmem:[%s5361 + $0x3c] sm:$0xf]
  %v5394 = vunpack.c.l.b16 %v5362
  %v5395 = vunpack.c.l.b16 %v5363
  %v5396 = vunpack.c.l.b16 %v5364
  %v5397 = vunpack.c.l.b16 %v5365
  %v5398 = vunpack.c.l.b16 %v5366
  %v5399 = vunpack.c.l.b16 %v5367
  %v5400 = vunpack.c.l.b16 %v5368
  %v5401 = vunpack.c.l.b16 %v5369
  %v5402 = vunpack.c.l.b16 %v5370
  %v5403 = vunpack.c.l.b16 %v5371
  %v5404 = vunpack.c.l.b16 %v5372
  %v5405 = vunpack.c.l.b16 %v5373
  %v5406 = vunpack.c.l.b16 %v5374
  %v5407 = vunpack.c.l.b16 %v5375
  %v5408 = vunpack.c.l.b16 %v5376
  %v5409 = vunpack.c.l.b16 %v5377
  %v5410 = vpack.c.b16 %v5395, %v5394
  %v5411 = vpack.c.b16 %v5397, %v5396
  %v5412 = vpack.c.b16 %v5399, %v5398
  %v5413 = vpack.c.b16 %v5401, %v5400
  %v5414 = vpack.c.b16 %v5403, %v5402
  %v5415 = vpack.c.b16 %v5405, %v5404
  %v5416 = vpack.c.b16 %v5407, %v5406
  %v5417 = vpack.c.b16 %v5409, %v5408
  %5426 = vmatprep.subr.bf16.mxu0 0
  %5427 = vmatpush1.bf16.msra.mxu0 %v5410
  %5428 = vmatprep.subr.bf16.mxu0 0
  %5429 = vmatpush1.bf16.msra.mxu0 %v5411
  %5430 = vmatprep.subr.bf16.mxu0 0
  %5431 = vmatpush1.bf16.msra.mxu0 %v5412
  %5432 = vmatprep.subr.bf16.mxu0 0
  %5433 = vmatpush1.bf16.msra.mxu0 %v5413
  %5434 = vmatprep.subr.bf16.mxu0 0
  %5435 = vmatpush1.bf16.msra.mxu0 %v5414
  %5436 = vmatprep.subr.bf16.mxu0 0
  %5437 = vmatpush1.bf16.msra.mxu0 %v5415
  %5438 = vmatprep.subr.bf16.mxu0 0
  %5439 = vmatpush1.bf16.msra.mxu0 %v5416
  %5440 = vmatprep.subr.bf16.mxu0 0
  %5441 = vmatpush1.bf16.msra.mxu0 %v5417
  %5442 = vmatprep.subr.bf16.mxu0 0
  %5443 = vmatpush1.bf16.msra.mxu0 0
  %5444 = vmatprep.subr.bf16.mxu0 0
  %5445 = vmatpush1.bf16.msra.mxu0 0
  %5446 = vmatprep.subr.bf16.mxu0 0
  %5447 = vmatpush1.bf16.msra.mxu0 0
  %5448 = vmatprep.subr.bf16.mxu0 0
  %5449 = vmatpush1.bf16.msra.mxu0 0
  %5450 = vmatprep.subr.bf16.mxu0 0
  %5451 = vmatpush1.bf16.msra.mxu0 0
  %5452 = vmatprep.subr.bf16.mxu0 0
  %5453 = vmatpush1.bf16.msra.mxu0 0
  %5454 = vmatprep.subr.bf16.mxu0 0
  %5455 = vmatpush1.bf16.msra.mxu0 0
  %5456 = vmatprep.subr.bf16.mxu0 0
  %5457 = vmatpush1.bf16.msra.mxu0 0
  %5458 = vmatprep.mubr.bf16.mxu0 0
  %5459 = vmatmul.mubr.bf16.gmra.mrb[0].mxu0 %v5356
  %v5460 = vpop.f32.mrb[0].mxu0
  %v5461 = vadd.f32 0.0, %v5460
  %v5462 = vpop.f32.mrb[0].mxu0
  %v5463 = vpop.f32.mrb[0].mxu0
  %v5464 = vadd.f32 0.0, %v5463
  %v5465 = vpop.f32.mrb[0].mxu0
  %5466 = vmatprep.mubr.bf16.mxu0 0
  %5467 = vmatmul.mubr.bf16.gmra.mrb[0].mxu0 %v5357
  %v5468 = vpop.f32.mrb[0].mxu0
  %v5469 = vadd.f32 0.0, %v5468
  %v5470 = vpop.f32.mrb[0].mxu0
  %v5471 = vpop.f32.mrb[0].mxu0
  %v5472 = vadd.f32 0.0, %v5471
  %v5473 = vpop.f32.mrb[0].mxu0
  %5474 = vmatprep.mubr.bf16.mxu0 0
  %5475 = vmatmul.mubr.bf16.gmra.mrb[0].mxu0 %v5358
  %v5476 = vpop.f32.mrb[0].mxu0
  %v5477 = vadd.f32 0.0, %v5476
  %v5478 = vpop.f32.mrb[0].mxu0
  %v5479 = vpop.f32.mrb[0].mxu0
  %v5480 = vadd.f32 0.0, %v5479
  %v5481 = vpop.f32.mrb[0].mxu0
  %5482 = vmatprep.mubr.bf16.mxu0 0
  %5483 = vmatmul.mubr.bf16.gmra.mrb[0].mxu0 %v5359
  %v5484 = vpop.f32.mrb[0].mxu0
  %v5485 = vadd.f32 0.0, %v5484
  %v5486 = vpop.f32.mrb[0].mxu0
  %v5487 = vpop.f32.mrb[0].mxu0
  %v5488 = vadd.f32 0.0, %v5487
  %v5489 = vpop.f32.mrb[0].mxu0
  %5490 = vmatprep.mubr.bf16.mxu0 0
  %5491 = vmatmul.mubr.bf16.gmra.mrb[0].mxu0 %v5360
  %v5492 = vpop.f32.mrb[0].mxu0
  %v5493 = vadd.f32 0.0, %v5492
  %v5494 = vpop.f32.mrb[0].mxu0
  %v5495 = vpop.f32.mrb[0].mxu0
  %v5496 = vpop.f32.mrb[0].mxu0
  %5497 = vdwg.mxu0
  %v5498 = vadd.f32 %v5337, %v5461
  %v5499 = vadd.f32 %v5338, %v5464
  %v5500 = vadd.f32 %v5339, %v5469
  %v5501 = vadd.f32 %v5340, %v5472
  %v5502 = vadd.f32 %v5341, %v5477
  %v5503 = vadd.f32 %v5342, %v5480
  %v5504 = vadd.f32 %v5343, %v5485
  %v5505 = vadd.f32 %v5344, %v5488
  %v5506 = vadd.f32 %v5345, %v5493
  %s5507 = scalar_lea.vmem [#allocation2], 32
  %v5508 = vld [vmem:[%s5507] sm:$0xff]
  %v5509 = vld [vmem:[%s5507 + $0x10] sm:$0xff]
  %v5510 = vld [vmem:[%s5507 + $0x20] sm:$0xff]
  %v5511 = vld [vmem:[%s5507 + $0xa0] sm:$0xff]
  %v5512 = vld [vmem:[%s5507 + $0xb0] sm:$0xff]
  %v5513 = vld [vmem:[%s5507 + $0xc0] sm:$0xff]
  %v5514 = vld [vmem:[%s5507 + $0x140] sm:$0xff]
  %v5515 = vld [vmem:[%s5507 + $0x150] sm:$0xff]
  %v5516 = vld [vmem:[%s5507 + $0x160] sm:$0xff]
  %v5517 = vpack.c.bf16 %v5509, %v5508
  %v5518 = vpack.c.bf16 %v5511, %v5510
  %v5519 = vpack.c.bf16 %v5513, %v5512
  %v5520 = vpack.c.bf16 %v5515, %v5514
  %v5521 = vpack.c.bf16 %v5516, %v5516
  %s5522 = scalar_lea.vmem %s3, 256
  %v5523 = vld [vmem:[%s5522] sm:$0xf]
  %v5524 = vld [vmem:[%s5522 + $0x4] sm:$0xf]
  %v5525 = vld [vmem:[%s5522 + $0x8] sm:$0xf]
  %v5526 = vld [vmem:[%s5522 + $0xc] sm:$0xf]
  %v5527 = vld [vmem:[%s5522 + $0x10] sm:$0xf]
  %v5528 = vld [vmem:[%s5522 + $0x14] sm:$0xf]
  %v5529 = vld [vmem:[%s5522 + $0x18] sm:$0xf]
  %v5530 = vld [vmem:[%s5522 + $0x1c] sm:$0xf]
  %v5531 = vld [vmem:[%s5522 + $0x20] sm:$0xf]
  %v5532 = vld [vmem:[%s5522 + $0x24] sm:$0xf]
  %v5533 = vld [vmem:[%s5522 + $0x28] sm:$0xf]
  %v5534 = vld [vmem:[%s5522 + $0x2c] sm:$0xf]
  %v5535 = vld [vmem:[%s5522 + $0x30] sm:$0xf]
  %v5536 = vld [vmem:[%s5522 + $0x34] sm:$0xf]
  %v5537 = vld [vmem:[%s5522 + $0x38] sm:$0xf]
  %v5538 = vld [vmem:[%s5522 + $0x3c] sm:$0xf]
  %v5555 = vunpack.c.l.b16 %v5523
  %v5556 = vunpack.c.l.b16 %v5524
  %v5557 = vunpack.c.l.b16 %v5525
  %v5558 = vunpack.c.l.b16 %v5526
  %v5559 = vunpack.c.l.b16 %v5527
  %v5560 = vunpack.c.l.b16 %v5528
  %v5561 = vunpack.c.l.b16 %v5529
  %v5562 = vunpack.c.l.b16 %v5530
  %v5563 = vunpack.c.l.b16 %v5531
  %v5564 = vunpack.c.l.b16 %v5532
  %v5565 = vunpack.c.l.b16 %v5533
  %v5566 = vunpack.c.l.b16 %v5534
  %v5567 = vunpack.c.l.b16 %v5535
  %v5568 = vunpack.c.l.b16 %v5536
  %v5569 = vunpack.c.l.b16 %v5537
  %v5570 = vunpack.c.l.b16 %v5538
  %v5571 = vpack.c.b16 %v5556, %v5555
  %v5572 = vpack.c.b16 %v5558, %v5557
  %v5573 = vpack.c.b16 %v5560, %v5559
  %v5574 = vpack.c.b16 %v5562, %v5561
  %v5575 = vpack.c.b16 %v5564, %v5563
  %v5576 = vpack.c.b16 %v5566, %v5565
  %v5577 = vpack.c.b16 %v5568, %v5567
  %v5578 = vpack.c.b16 %v5570, %v5569
  %5587 = vmatprep.subr.bf16.mxu0 0
  %5588 = vmatpush1.bf16.msra.mxu0 %v5571
  %5589 = vmatprep.subr.bf16.mxu0 0
  %5590 = vmatpush1.bf16.msra.mxu0 %v5572
  %5591 = vmatprep.subr.bf16.mxu0 0
  %5592 = vmatpush1.bf16.msra.mxu0 %v5573
  %5593 = vmatprep.subr.bf16.mxu0 0
  %5594 = vmatpush1.bf16.msra.mxu0 %v5574
  %5595 = vmatprep.subr.bf16.mxu0 0
  %5596 = vmatpush1.bf16.msra.mxu0 %v5575
  %5597 = vmatprep.subr.bf16.mxu0 0
  %5598 = vmatpush1.bf16.msra.mxu0 %v5576
  %5599 = vmatprep.subr.bf16.mxu0 0
  %5600 = vmatpush1.bf16.msra.mxu0 %v5577
  %5601 = vmatprep.subr.bf16.mxu0 0
  %5602 = vmatpush1.bf16.msra.mxu0 %v5578
  %5603 = vmatprep.subr.bf16.mxu0 0
  %5604 = vmatpush1.bf16.msra.mxu0 0
  %5605 = vmatprep.subr.bf16.mxu0 0
  %5606 = vmatpush1.bf16.msra.mxu0 0
  %5607 = vmatprep.subr.bf16.mxu0 0
  %5608 = vmatpush1.bf16.msra.mxu0 0
  %5609 = vmatprep.subr.bf16.mxu0 0
  %5610 = vmatpush1.bf16.msra.mxu0 0
  %5611 = vmatprep.subr.bf16.mxu0 0
  %5612 = vmatpush1.bf16.msra.mxu0 0
  %5613 = vmatprep.subr.bf16.mxu0 0
  %5614 = vmatpush1.bf16.msra.mxu0 0
  %5615 = vmatprep.subr.bf16.mxu0 0
  %5616 = vmatpush1.bf16.msra.mxu0 0
  %5617 = vmatprep.subr.bf16.mxu0 0
  %5618 = vmatpush1.bf16.msra.mxu0 0
  %5619 = vmatprep.mubr.bf16.mxu0 0
  %5620 = vmatmul.mubr.bf16.gmra.mrb[0].mxu0 %v5517
  %v5621 = vpop.f32.mrb[0].mxu0
  %v5622 = vadd.f32 0.0, %v5621
  %v5623 = vpop.f32.mrb[0].mxu0
  %v5624 = vpop.f32.mrb[0].mxu0
  %v5625 = vadd.f32 0.0, %v5624
  %v5626 = vpop.f32.mrb[0].mxu0
  %5627 = vmatprep.mubr.bf16.mxu0 0
  %5628 = vmatmul.mubr.bf16.gmra.mrb[0].mxu0 %v5518
  %v5629 = vpop.f32.mrb[0].mxu0
  %v5630 = vadd.f32 0.0, %v5629
  %v5631 = vpop.f32.mrb[0].mxu0
  %v5632 = vpop.f32.mrb[0].mxu0
  %v5633 = vadd.f32 0.0, %v5632
  %v5634 = vpop.f32.mrb[0].mxu0
  %5635 = vmatprep.mubr.bf16.mxu0 0
  %5636 = vmatmul.mubr.bf16.gmra.mrb[0].mxu0 %v5519
  %v5637 = vpop.f32.mrb[0].mxu0
  %v5638 = vadd.f32 0.0, %v5637
  %v5639 = vpop.f32.mrb[0].mxu0
  %v5640 = vpop.f32.mrb[0].mxu0
  %v5641 = vadd.f32 0.0, %v5640
  %v5642 = vpop.f32.mrb[0].mxu0
  %5643 = vmatprep.mubr.bf16.mxu0 0
  %5644 = vmatmul.mubr.bf16.gmra.mrb[0].mxu0 %v5520
  %v5645 = vpop.f32.mrb[0].mxu0
  %v5646 = vadd.f32 0.0, %v5645
  %v5647 = vpop.f32.mrb[0].mxu0
  %v5648 = vpop.f32.mrb[0].mxu0
  %v5649 = vadd.f32 0.0, %v5648
  %v5650 = vpop.f32.mrb[0].mxu0
  %5651 = vmatprep.mubr.bf16.mxu0 0
  %5652 = vmatmul.mubr.bf16.gmra.mrb[0].mxu0 %v5521
  %v5653 = vpop.f32.mrb[0].mxu0
  %v5654 = vadd.f32 0.0, %v5653
  %v5655 = vpop.f32.mrb[0].mxu0
  %v5656 = vpop.f32.mrb[0].mxu0
  %v5657 = vpop.f32.mrb[0].mxu0
  %5658 = vdwg.mxu0
  %v5659 = vadd.f32 %v5498, %v5622
  %v5660 = vadd.f32 %v5499, %v5625
  %v5661 = vadd.f32 %v5500, %v5630
  %v5662 = vadd.f32 %v5501, %v5633
  %v5663 = vadd.f32 %v5502, %v5638
  %v5664 = vadd.f32 %v5503, %v5641
  %v5665 = vadd.f32 %v5504, %v5646
  %v5666 = vadd.f32 %v5505, %v5649
  %v5667 = vadd.f32 %v5506, %v5654
  %v5668 = vld [vmem:[%s70] sm:$0xff]
  %v5669 = vld [vmem:[%s70 + $0x10] sm:$0xff]
  %v5670 = vld [vmem:[%s70 + $0x20] sm:$0xff]
  %v5671 = vld [vmem:[%s70 + $0xa0] sm:$0xff]
  %v5672 = vld [vmem:[%s70 + $0xb0] sm:$0xff]
  %v5673 = vld [vmem:[%s70 + $0xc0] sm:$0xff]
  %v5674 = vld [vmem:[%s70 + $0x140] sm:$0xff]
  %v5675 = vld [vmem:[%s70 + $0x150] sm:$0xff]
  %v5676 = vld [vmem:[%s70 + $0x160] sm:$0xff]
  %v5677 = vpack.c.bf16 %v5669, %v5668
  %v5678 = vpack.c.bf16 %v5671, %v5670
  %v5679 = vpack.c.bf16 %v5673, %v5672
  %v5680 = vpack.c.bf16 %v5675, %v5674
  %v5681 = vpack.c.bf16 %v5676, %v5676
  %s5682 = scalar_lea.vmem %s3, 320
  %v5683 = vld [vmem:[%s5682] sm:$0xf]
  %v5684 = vld [vmem:[%s5682 + $0x4] sm:$0xf]
  %v5685 = vld [vmem:[%s5682 + $0x8] sm:$0xf]
  %v5686 = vld [vmem:[%s5682 + $0xc] sm:$0xf]
  %v5687 = vld [vmem:[%s5682 + $0x10] sm:$0xf]
  %v5688 = vld [vmem:[%s5682 + $0x14] sm:$0xf]
  %v5689 = vld [vmem:[%s5682 + $0x18] sm:$0xf]
  %v5690 = vld [vmem:[%s5682 + $0x1c] sm:$0xf]
  %v5691 = vld [vmem:[%s5682 + $0x20] sm:$0xf]
  %v5692 = vld [vmem:[%s5682 + $0x24] sm:$0xf]
  %v5693 = vld [vmem:[%s5682 + $0x28] sm:$0xf]
  %v5694 = vld [vmem:[%s5682 + $0x2c] sm:$0xf]
  %v5695 = vld [vmem:[%s5682 + $0x30] sm:$0xf]
  %v5696 = vld [vmem:[%s5682 + $0x34] sm:$0xf]
  %v5697 = vld [vmem:[%s5682 + $0x38] sm:$0xf]
  %v5698 = vld [vmem:[%s5682 + $0x3c] sm:$0xf]
  %v5715 = vunpack.c.l.b16 %v5683
  %v5716 = vunpack.c.l.b16 %v5684
  %v5717 = vunpack.c.l.b16 %v5685
  %v5718 = vunpack.c.l.b16 %v5686
  %v5719 = vunpack.c.l.b16 %v5687
  %v5720 = vunpack.c.l.b16 %v5688
  %v5721 = vunpack.c.l.b16 %v5689
  %v5722 = vunpack.c.l.b16 %v5690
  %v5723 = vunpack.c.l.b16 %v5691
  %v5724 = vunpack.c.l.b16 %v5692
  %v5725 = vunpack.c.l.b16 %v5693
  %v5726 = vunpack.c.l.b16 %v5694
  %v5727 = vunpack.c.l.b16 %v5695
  %v5728 = vunpack.c.l.b16 %v5696
  %v5729 = vunpack.c.l.b16 %v5697
  %v5730 = vunpack.c.l.b16 %v5698
  %v5731 = vpack.c.b16 %v5716, %v5715
  %v5732 = vpack.c.b16 %v5718, %v5717
  %v5733 = vpack.c.b16 %v5720, %v5719
  %v5734 = vpack.c.b16 %v5722, %v5721
  %v5735 = vpack.c.b16 %v5724, %v5723
  %v5736 = vpack.c.b16 %v5726, %v5725
  %v5737 = vpack.c.b16 %v5728, %v5727
  %v5738 = vpack.c.b16 %v5730, %v5729
  %5747 = vmatprep.subr.bf16.mxu0 0
  %5748 = vmatpush1.bf16.msra.mxu0 %v5731
  %5749 = vmatprep.subr.bf16.mxu0 0
  %5750 = vmatpush1.bf16.msra.mxu0 %v5732
  %5751 = vmatprep.subr.bf16.mxu0 0
  %5752 = vmatpush1.bf16.msra.mxu0 %v5733
  %5753 = vmatprep.subr.bf16.mxu0 0
  %5754 = vmatpush1.bf16.msra.mxu0 %v5734
  %5755 = vmatprep.subr.bf16.mxu0 0
  %5756 = vmatpush1.bf16.msra.mxu0 %v5735
  %5757 = vmatprep.subr.bf16.mxu0 0
  %5758 = vmatpush1.bf16.msra.mxu0 %v5736
  %5759 = vmatprep.subr.bf16.mxu0 0
  %5760 = vmatpush1.bf16.msra.mxu0 %v5737
  %5761 = vmatprep.subr.bf16.mxu0 0
  %5762 = vmatpush1.bf16.msra.mxu0 %v5738
  %5763 = vmatprep.subr.bf16.mxu0 0
  %5764 = vmatpush1.bf16.msra.mxu0 0
  %5765 = vmatprep.subr.bf16.mxu0 0
  %5766 = vmatpush1.bf16.msra.mxu0 0
  %5767 = vmatprep.subr.bf16.mxu0 0
  %5768 = vmatpush1.bf16.msra.mxu0 0
  %5769 = vmatprep.subr.bf16.mxu0 0
  %5770 = vmatpush1.bf16.msra.mxu0 0
  %5771 = vmatprep.subr.bf16.mxu0 0
  %5772 = vmatpush1.bf16.msra.mxu0 0
  %5773 = vmatprep.subr.bf16.mxu0 0
  %5774 = vmatpush1.bf16.msra.mxu0 0
  %5775 = vmatprep.subr.bf16.mxu0 0
  %5776 = vmatpush1.bf16.msra.mxu0 0
  %5777 = vmatprep.subr.bf16.mxu0 0
  %5778 = vmatpush1.bf16.msra.mxu0 0
  %5779 = vmatprep.mubr.bf16.mxu0 0
  %5780 = vmatmul.mubr.bf16.gmra.mrb[0].mxu0 %v5677
  %v5781 = vpop.f32.mrb[0].mxu0
  %v5782 = vadd.f32 0.0, %v5781
  %v5783 = vpop.f32.mrb[0].mxu0
  %v5784 = vpop.f32.mrb[0].mxu0
  %v5785 = vadd.f32 0.0, %v5784
  %v5786 = vpop.f32.mrb[0].mxu0
  %5787 = vmatprep.mubr.bf16.mxu0 0
  %5788 = vmatmul.mubr.bf16.gmra.mrb[0].mxu0 %v5678
  %v5789 = vpop.f32.mrb[0].mxu0
  %v5790 = vadd.f32 0.0, %v5789
  %v5791 = vpop.f32.mrb[0].mxu0
  %v5792 = vpop.f32.mrb[0].mxu0
  %v5793 = vadd.f32 0.0, %v5792
  %v5794 = vpop.f32.mrb[0].mxu0
  %5795 = vmatprep.mubr.bf16.mxu0 0
  %5796 = vmatmul.mubr.bf16.gmra.mrb[0].mxu0 %v5679
  %v5797 = vpop.f32.mrb[0].mxu0
  %v5798 = vadd.f32 0.0, %v5797
  %v5799 = vpop.f32.mrb[0].mxu0
  %v5800 = vpop.f32.mrb[0].mxu0
  %v5801 = vadd.f32 0.0, %v5800
  %v5802 = vpop.f32.mrb[0].mxu0
  %5803 = vmatprep.mubr.bf16.mxu0 0
  %5804 = vmatmul.mubr.bf16.gmra.mrb[0].mxu0 %v5680
  %v5805 = vpop.f32.mrb[0].mxu0
  %v5806 = vadd.f32 0.0, %v5805
  %v5807 = vpop.f32.mrb[0].mxu0
  %v5808 = vpop.f32.mrb[0].mxu0
  %v5809 = vadd.f32 0.0, %v5808
  %v5810 = vpop.f32.mrb[0].mxu0
  %5811 = vmatprep.mubr.bf16.mxu0 0
  %5812 = vmatmul.mubr.bf16.gmra.mrb[0].mxu0 %v5681
  %v5813 = vpop.f32.mrb[0].mxu0
  %v5814 = vadd.f32 0.0, %v5813
  %v5815 = vpop.f32.mrb[0].mxu0
  %v5816 = vpop.f32.mrb[0].mxu0
  %v5817 = vpop.f32.mrb[0].mxu0
  %5818 = vdwg.mxu0
  %v5819 = vadd.f32 %v5659, %v5782
  %v5820 = vadd.f32 %v5660, %v5785
  %v5821 = vadd.f32 %v5661, %v5790
  %v5822 = vadd.f32 %v5662, %v5793
  %v5823 = vadd.f32 %v5663, %v5798
  %v5824 = vadd.f32 %v5664, %v5801
  %v5825 = vadd.f32 %v5665, %v5806
  %v5826 = vadd.f32 %v5666, %v5809
  %v5827 = vadd.f32 %v5667, %v5814
  %v5828 = vld [vmem:[%s837] sm:$0xff]
  %v5829 = vld [vmem:[%s837 + $0x10] sm:$0xff]
  %v5830 = vld [vmem:[%s837 + $0x20] sm:$0xff]
  %v5831 = vld [vmem:[%s837 + $0xa0] sm:$0xff]
  %v5832 = vld [vmem:[%s837 + $0xb0] sm:$0xff]
  %v5833 = vld [vmem:[%s837 + $0xc0] sm:$0xff]
  %v5834 = vld [vmem:[%s837 + $0x140] sm:$0xff]
  %v5835 = vld [vmem:[%s837 + $0x150] sm:$0xff]
  %v5836 = vld [vmem:[%s837 + $0x160] sm:$0xff]
  %v5837 = vpack.c.bf16 %v5829, %v5828
  %v5838 = vpack.c.bf16 %v5831, %v5830
  %v5839 = vpack.c.bf16 %v5833, %v5832
  %v5840 = vpack.c.bf16 %v5835, %v5834
  %v5841 = vpack.c.bf16 %v5836, %v5836
  %s5842 = scalar_lea.vmem %s3, 384
  %v5843 = vld [vmem:[%s5842] sm:$0xf]
  %v5844 = vld [vmem:[%s5842 + $0x4] sm:$0xf]
  %v5845 = vld [vmem:[%s5842 + $0x8] sm:$0xf]
  %v5846 = vld [vmem:[%s5842 + $0xc] sm:$0xf]
  %v5847 = vld [vmem:[%s5842 + $0x10] sm:$0xf]
  %v5848 = vld [vmem:[%s5842 + $0x14] sm:$0xf]
  %v5849 = vld [vmem:[%s5842 + $0x18] sm:$0xf]
  %v5850 = vld [vmem:[%s5842 + $0x1c] sm:$0xf]
  %v5851 = vld [vmem:[%s5842 + $0x20] sm:$0xf]
  %v5852 = vld [vmem:[%s5842 + $0x24] sm:$0xf]
  %v5853 = vld [vmem:[%s5842 + $0x28] sm:$0xf]
  %v5854 = vld [vmem:[%s5842 + $0x2c] sm:$0xf]
  %v5855 = vld [vmem:[%s5842 + $0x30] sm:$0xf]
  %v5856 = vld [vmem:[%s5842 + $0x34] sm:$0xf]
  %v5857 = vld [vmem:[%s5842 + $0x38] sm:$0xf]
  %v5858 = vld [vmem:[%s5842 + $0x3c] sm:$0xf]
  %v5875 = vunpack.c.l.b16 %v5843
  %v5876 = vunpack.c.l.b16 %v5844
  %v5877 = vunpack.c.l.b16 %v5845
  %v5878 = vunpack.c.l.b16 %v5846
  %v5879 = vunpack.c.l.b16 %v5847
  %v5880 = vunpack.c.l.b16 %v5848
  %v5881 = vunpack.c.l.b16 %v5849
  %v5882 = vunpack.c.l.b16 %v5850
  %v5883 = vunpack.c.l.b16 %v5851
  %v5884 = vunpack.c.l.b16 %v5852
  %v5885 = vunpack.c.l.b16 %v5853
  %v5886 = vunpack.c.l.b16 %v5854
  %v5887 = vunpack.c.l.b16 %v5855
  %v5888 = vunpack.c.l.b16 %v5856
  %v5889 = vunpack.c.l.b16 %v5857
  %v5890 = vunpack.c.l.b16 %v5858
  %v5891 = vpack.c.b16 %v5876, %v5875
  %v5892 = vpack.c.b16 %v5878, %v5877
  %v5893 = vpack.c.b16 %v5880, %v5879
  %v5894 = vpack.c.b16 %v5882, %v5881
  %v5895 = vpack.c.b16 %v5884, %v5883
  %v5896 = vpack.c.b16 %v5886, %v5885
  %v5897 = vpack.c.b16 %v5888, %v5887
  %v5898 = vpack.c.b16 %v5890, %v5889
  %5907 = vmatprep.subr.bf16.mxu0 0
  %5908 = vmatpush1.bf16.msra.mxu0 %v5891
  %5909 = vmatprep.subr.bf16.mxu0 0
  %5910 = vmatpush1.bf16.msra.mxu0 %v5892
  %5911 = vmatprep.subr.bf16.mxu0 0
  %5912 = vmatpush1.bf16.msra.mxu0 %v5893
  %5913 = vmatprep.subr.bf16.mxu0 0
  %5914 = vmatpush1.bf16.msra.mxu0 %v5894
  %5915 = vmatprep.subr.bf16.mxu0 0
  %5916 = vmatpush1.bf16.msra.mxu0 %v5895
  %5917 = vmatprep.subr.bf16.mxu0 0
  %5918 = vmatpush1.bf16.msra.mxu0 %v5896
  %5919 = vmatprep.subr.bf16.mxu0 0
  %5920 = vmatpush1.bf16.msra.mxu0 %v5897
  %5921 = vmatprep.subr.bf16.mxu0 0
  %5922 = vmatpush1.bf16.msra.mxu0 %v5898
  %5923 = vmatprep.subr.bf16.mxu0 0
  %5924 = vmatpush1.bf16.msra.mxu0 0
  %5925 = vmatprep.subr.bf16.mxu0 0
  %5926 = vmatpush1.bf16.msra.mxu0 0
  %5927 = vmatprep.subr.bf16.mxu0 0
  %5928 = vmatpush1.bf16.msra.mxu0 0
  %5929 = vmatprep.subr.bf16.mxu0 0
  %5930 = vmatpush1.bf16.msra.mxu0 0
  %5931 = vmatprep.subr.bf16.mxu0 0
  %5932 = vmatpush1.bf16.msra.mxu0 0
  %5933 = vmatprep.subr.bf16.mxu0 0
  %5934 = vmatpush1.bf16.msra.mxu0 0
  %5935 = vmatprep.subr.bf16.mxu0 0
  %5936 = vmatpush1.bf16.msra.mxu0 0
  %5937 = vmatprep.subr.bf16.mxu0 0
  %5938 = vmatpush1.bf16.msra.mxu0 0
  %5939 = vmatprep.mubr.bf16.mxu0 0
  %5940 = vmatmul.mubr.bf16.gmra.mrb[0].mxu0 %v5837
  %v5941 = vpop.f32.mrb[0].mxu0
  %v5942 = vadd.f32 0.0, %v5941
  %v5943 = vpop.f32.mrb[0].mxu0
  %v5944 = vpop.f32.mrb[0].mxu0
  %v5945 = vadd.f32 0.0, %v5944
  %v5946 = vpop.f32.mrb[0].mxu0
  %5947 = vmatprep.mubr.bf16.mxu0 0
  %5948 = vmatmul.mubr.bf16.gmra.mrb[0].mxu0 %v5838
  %v5949 = vpop.f32.mrb[0].mxu0
  %v5950 = vadd.f32 0.0, %v5949
  %v5951 = vpop.f32.mrb[0].mxu0
  %v5952 = vpop.f32.mrb[0].mxu0
  %v5953 = vadd.f32 0.0, %v5952
  %v5954 = vpop.f32.mrb[0].mxu0
  %5955 = vmatprep.mubr.bf16.mxu0 0
  %5956 = vmatmul.mubr.bf16.gmra.mrb[0].mxu0 %v5839
  %v5957 = vpop.f32.mrb[0].mxu0
  %v5958 = vadd.f32 0.0, %v5957
  %v5959 = vpop.f32.mrb[0].mxu0
  %v5960 = vpop.f32.mrb[0].mxu0
  %v5961 = vadd.f32 0.0, %v5960
  %v5962 = vpop.f32.mrb[0].mxu0
  %5963 = vmatprep.mubr.bf16.mxu0 0
  %5964 = vmatmul.mubr.bf16.gmra.mrb[0].mxu0 %v5840
  %v5965 = vpop.f32.mrb[0].mxu0
  %v5966 = vadd.f32 0.0, %v5965
  %v5967 = vpop.f32.mrb[0].mxu0
  %v5968 = vpop.f32.mrb[0].mxu0
  %v5969 = vadd.f32 0.0, %v5968
  %v5970 = vpop.f32.mrb[0].mxu0
  %5971 = vmatprep.mubr.bf16.mxu0 0
  %5972 = vmatmul.mubr.bf16.gmra.mrb[0].mxu0 %v5841
  %v5973 = vpop.f32.mrb[0].mxu0
  %v5974 = vadd.f32 0.0, %v5973
  %v5975 = vpop.f32.mrb[0].mxu0
  %v5976 = vpop.f32.mrb[0].mxu0
  %v5977 = vpop.f32.mrb[0].mxu0
  %5978 = vdwg.mxu0
  %v5979 = vadd.f32 %v5819, %v5942
  %v5980 = vadd.f32 %v5820, %v5945
  %v5981 = vadd.f32 %v5821, %v5950
  %v5982 = vadd.f32 %v5822, %v5953
  %v5983 = vadd.f32 %v5823, %v5958
  %v5984 = vadd.f32 %v5824, %v5961
  %v5985 = vadd.f32 %v5825, %v5966
  %v5986 = vadd.f32 %v5826, %v5969
  %v5987 = vadd.f32 %v5827, %v5974
  %s5988 = scalar_lea.vmem [#allocation2], 96
  %v5989 = vld [vmem:[%s5988] sm:$0xff]
  %v5990 = vld [vmem:[%s5988 + $0x10] sm:$0xff]
  %v5991 = vld [vmem:[%s5988 + $0x20] sm:$0xff]
  %v5992 = vld [vmem:[%s5988 + $0xa0] sm:$0xff]
  %v5993 = vld [vmem:[%s5988 + $0xb0] sm:$0xff]
  %v5994 = vld [vmem:[%s5988 + $0xc0] sm:$0xff]
  %v5995 = vld [vmem:[%s5988 + $0x140] sm:$0xff]
  %v5996 = vld [vmem:[%s5988 + $0x150] sm:$0xff]
  %v5997 = vld [vmem:[%s5988 + $0x160] sm:$0xff]
  %v5998 = vpack.c.bf16 %v5990, %v5989
  %v5999 = vpack.c.bf16 %v5992, %v5991
  %v6000 = vpack.c.bf16 %v5994, %v5993
  %v6001 = vpack.c.bf16 %v5996, %v5995
  %v6002 = vpack.c.bf16 %v5997, %v5997
  %s6003 = scalar_lea.vmem %s3, 448
  %v6004 = vld [vmem:[%s6003] sm:$0xf]
  %v6005 = vld [vmem:[%s6003 + $0x4] sm:$0xf]
  %v6006 = vld [vmem:[%s6003 + $0x8] sm:$0xf]
  %v6007 = vld [vmem:[%s6003 + $0xc] sm:$0xf]
  %v6008 = vld [vmem:[%s6003 + $0x10] sm:$0xf]
  %v6009 = vld [vmem:[%s6003 + $0x14] sm:$0xf]
  %v6010 = vld [vmem:[%s6003 + $0x18] sm:$0xf]
  %v6011 = vld [vmem:[%s6003 + $0x1c] sm:$0xf]
  %v6012 = vld [vmem:[%s6003 + $0x20] sm:$0xf]
  %v6013 = vld [vmem:[%s6003 + $0x24] sm:$0xf]
  %v6014 = vld [vmem:[%s6003 + $0x28] sm:$0xf]
  %v6015 = vld [vmem:[%s6003 + $0x2c] sm:$0xf]
  %v6016 = vld [vmem:[%s6003 + $0x30] sm:$0xf]
  %v6017 = vld [vmem:[%s6003 + $0x34] sm:$0xf]
  %v6018 = vld [vmem:[%s6003 + $0x38] sm:$0xf]
  %v6019 = vld [vmem:[%s6003 + $0x3c] sm:$0xf]
  %v6036 = vunpack.c.l.b16 %v6004
  %v6037 = vunpack.c.l.b16 %v6005
  %v6038 = vunpack.c.l.b16 %v6006
  %v6039 = vunpack.c.l.b16 %v6007
  %v6040 = vunpack.c.l.b16 %v6008
  %v6041 = vunpack.c.l.b16 %v6009
  %v6042 = vunpack.c.l.b16 %v6010
  %v6043 = vunpack.c.l.b16 %v6011
  %v6044 = vunpack.c.l.b16 %v6012
  %v6045 = vunpack.c.l.b16 %v6013
  %v6046 = vunpack.c.l.b16 %v6014
  %v6047 = vunpack.c.l.b16 %v6015
  %v6048 = vunpack.c.l.b16 %v6016
  %v6049 = vunpack.c.l.b16 %v6017
  %v6050 = vunpack.c.l.b16 %v6018
  %v6051 = vunpack.c.l.b16 %v6019
  %v6052 = vpack.c.b16 %v6037, %v6036
  %v6053 = vpack.c.b16 %v6039, %v6038
  %v6054 = vpack.c.b16 %v6041, %v6040
  %v6055 = vpack.c.b16 %v6043, %v6042
  %v6056 = vpack.c.b16 %v6045, %v6044
  %v6057 = vpack.c.b16 %v6047, %v6046
  %v6058 = vpack.c.b16 %v6049, %v6048
  %v6059 = vpack.c.b16 %v6051, %v6050
  %6068 = vmatprep.subr.bf16.mxu0 0
  %6069 = vmatpush1.bf16.msra.mxu0 %v6052
  %6070 = vmatprep.subr.bf16.mxu0 0
  %6071 = vmatpush1.bf16.msra.mxu0 %v6053
  %6072 = vmatprep.subr.bf16.mxu0 0
  %6073 = vmatpush1.bf16.msra.mxu0 %v6054
  %6074 = vmatprep.subr.bf16.mxu0 0
  %6075 = vmatpush1.bf16.msra.mxu0 %v6055
  %6076 = vmatprep.subr.bf16.mxu0 0
  %6077 = vmatpush1.bf16.msra.mxu0 %v6056
  %6078 = vmatprep.subr.bf16.mxu0 0
  %6079 = vmatpush1.bf16.msra.mxu0 %v6057
  %6080 = vmatprep.subr.bf16.mxu0 0
  %6081 = vmatpush1.bf16.msra.mxu0 %v6058
  %6082 = vmatprep.subr.bf16.mxu0 0
  %6083 = vmatpush1.bf16.msra.mxu0 %v6059
  %6084 = vmatprep.subr.bf16.mxu0 0
  %6085 = vmatpush1.bf16.msra.mxu0 0
  %6086 = vmatprep.subr.bf16.mxu0 0
  %6087 = vmatpush1.bf16.msra.mxu0 0
  %6088 = vmatprep.subr.bf16.mxu0 0
  %6089 = vmatpush1.bf16.msra.mxu0 0
  %6090 = vmatprep.subr.bf16.mxu0 0
  %6091 = vmatpush1.bf16.msra.mxu0 0
  %6092 = vmatprep.subr.bf16.mxu0 0
  %6093 = vmatpush1.bf16.msra.mxu0 0
  %6094 = vmatprep.subr.bf16.mxu0 0
  %6095 = vmatpush1.bf16.msra.mxu0 0
  %6096 = vmatprep.subr.bf16.mxu0 0
  %6097 = vmatpush1.bf16.msra.mxu0 0
  %6098 = vmatprep.subr.bf16.mxu0 0
  %6099 = vmatpush1.bf16.msra.mxu0 0
  %6100 = vmatprep.mubr.bf16.mxu0 0
  %6101 = vmatmul.mubr.bf16.gmra.mrb[0].mxu0 %v5998
  %v6102 = vpop.f32.mrb[0].mxu0
  %v6103 = vadd.f32 0.0, %v6102
  %v6104 = vpop.f32.mrb[0].mxu0
  %v6105 = vpop.f32.mrb[0].mxu0
  %v6106 = vadd.f32 0.0, %v6105
  %v6107 = vpop.f32.mrb[0].mxu0
  %6108 = vmatprep.mubr.bf16.mxu0 0
  %6109 = vmatmul.mubr.bf16.gmra.mrb[0].mxu0 %v5999
  %v6110 = vpop.f32.mrb[0].mxu0
  %v6111 = vadd.f32 0.0, %v6110
  %v6112 = vpop.f32.mrb[0].mxu0
  %v6113 = vpop.f32.mrb[0].mxu0
  %v6114 = vadd.f32 0.0, %v6113
  %v6115 = vpop.f32.mrb[0].mxu0
  %6116 = vmatprep.mubr.bf16.mxu0 0
  %6117 = vmatmul.mubr.bf16.gmra.mrb[0].mxu0 %v6000
  %v6118 = vpop.f32.mrb[0].mxu0
  %v6119 = vadd.f32 0.0, %v6118
  %v6120 = vpop.f32.mrb[0].mxu0
  %v6121 = vpop.f32.mrb[0].mxu0
  %v6122 = vadd.f32 0.0, %v6121
  %v6123 = vpop.f32.mrb[0].mxu0
  %6124 = vmatprep.mubr.bf16.mxu0 0
  %6125 = vmatmul.mubr.bf16.gmra.mrb[0].mxu0 %v6001
  %v6126 = vpop.f32.mrb[0].mxu0
  %v6127 = vadd.f32 0.0, %v6126
  %v6128 = vpop.f32.mrb[0].mxu0
  %v6129 = vpop.f32.mrb[0].mxu0
  %v6130 = vadd.f32 0.0, %v6129
  %v6131 = vpop.f32.mrb[0].mxu0
  %6132 = vmatprep.mubr.bf16.mxu0 0
  %6133 = vmatmul.mubr.bf16.gmra.mrb[0].mxu0 %v6002
  %v6134 = vpop.f32.mrb[0].mxu0
  %v6135 = vadd.f32 0.0, %v6134
  %v6136 = vpop.f32.mrb[0].mxu0
  %v6137 = vpop.f32.mrb[0].mxu0
  %v6138 = vpop.f32.mrb[0].mxu0
  %6139 = vdwg.mxu0
  %v6140 = vadd.f32 %v5979, %v6103
  %v6141 = vadd.f32 %v5980, %v6106
  %v6142 = vadd.f32 %v5981, %v6111
  %v6143 = vadd.f32 %v5982, %v6114
  %v6144 = vadd.f32 %v5983, %v6119
  %v6145 = vadd.f32 %v5984, %v6122
  %v6146 = vadd.f32 %v5985, %v6127
  %v6147 = vadd.f32 %v5986, %v6130
  %v6148 = vadd.f32 %v5987, %v6135
  %s6149 = scalar_lea.vmem [#allocation2], 104
  %v6150 = vld [vmem:[%s6149] sm:$0xff]
  %v6151 = vld [vmem:[%s6149 + $0x10] sm:$0xff]
  %v6152 = vld [vmem:[%s6149 + $0x20] sm:$0xff]
  %v6153 = vld [vmem:[%s6149 + $0xa0] sm:$0xff]
  %v6154 = vld [vmem:[%s6149 + $0xb0] sm:$0xff]
  %v6155 = vld [vmem:[%s6149 + $0xc0] sm:$0xff]
  %v6156 = vld [vmem:[%s6149 + $0x140] sm:$0xff]
  %v6157 = vld [vmem:[%s6149 + $0x150] sm:$0xff]
  %v6158 = vld [vmem:[%s6149 + $0x160] sm:$0xff]
  %v6159 = vpack.c.bf16 %v6151, %v6150
  %v6160 = vpack.c.bf16 %v6153, %v6152
  %v6161 = vpack.c.bf16 %v6155, %v6154
  %v6162 = vpack.c.bf16 %v6157, %v6156
  %v6163 = vpack.c.bf16 %v6158, %v6158
  %s6164 = scalar_lea.vmem %s3, 512
  %v6165 = vld [vmem:[%s6164] sm:$0xf]
  %v6166 = vld [vmem:[%s6164 + $0x4] sm:$0xf]
  %v6167 = vld [vmem:[%s6164 + $0x8] sm:$0xf]
  %v6168 = vld [vmem:[%s6164 + $0xc] sm:$0xf]
  %v6169 = vld [vmem:[%s6164 + $0x10] sm:$0xf]
  %v6170 = vld [vmem:[%s6164 + $0x14] sm:$0xf]
  %v6171 = vld [vmem:[%s6164 + $0x18] sm:$0xf]
  %v6172 = vld [vmem:[%s6164 + $0x1c] sm:$0xf]
  %v6173 = vld [vmem:[%s6164 + $0x20] sm:$0xf]
  %v6174 = vld [vmem:[%s6164 + $0x24] sm:$0xf]
  %v6175 = vld [vmem:[%s6164 + $0x28] sm:$0xf]
  %v6176 = vld [vmem:[%s6164 + $0x2c] sm:$0xf]
  %v6177 = vld [vmem:[%s6164 + $0x30] sm:$0xf]
  %v6178 = vld [vmem:[%s6164 + $0x34] sm:$0xf]
  %v6179 = vld [vmem:[%s6164 + $0x38] sm:$0xf]
  %v6180 = vld [vmem:[%s6164 + $0x3c] sm:$0xf]
  %v6197 = vunpack.c.l.b16 %v6165
  %v6198 = vunpack.c.l.b16 %v6166
  %v6199 = vunpack.c.l.b16 %v6167
  %v6200 = vunpack.c.l.b16 %v6168
  %v6201 = vunpack.c.l.b16 %v6169
  %v6202 = vunpack.c.l.b16 %v6170
  %v6203 = vunpack.c.l.b16 %v6171
  %v6204 = vunpack.c.l.b16 %v6172
  %v6205 = vunpack.c.l.b16 %v6173
  %v6206 = vunpack.c.l.b16 %v6174
  %v6207 = vunpack.c.l.b16 %v6175
  %v6208 = vunpack.c.l.b16 %v6176
  %v6209 = vunpack.c.l.b16 %v6177
  %v6210 = vunpack.c.l.b16 %v6178
  %v6211 = vunpack.c.l.b16 %v6179
  %v6212 = vunpack.c.l.b16 %v6180
  %v6213 = vpack.c.b16 %v6198, %v6197
  %v6214 = vpack.c.b16 %v6200, %v6199
  %v6215 = vpack.c.b16 %v6202, %v6201
  %v6216 = vpack.c.b16 %v6204, %v6203
  %v6217 = vpack.c.b16 %v6206, %v6205
  %v6218 = vpack.c.b16 %v6208, %v6207
  %v6219 = vpack.c.b16 %v6210, %v6209
  %v6220 = vpack.c.b16 %v6212, %v6211
  %6229 = vmatprep.subr.bf16.mxu0 0
  %6230 = vmatpush1.bf16.msra.mxu0 %v6213
  %6231 = vmatprep.subr.bf16.mxu0 0
  %6232 = vmatpush1.bf16.msra.mxu0 %v6214
  %6233 = vmatprep.subr.bf16.mxu0 0
  %6234 = vmatpush1.bf16.msra.mxu0 %v6215
  %6235 = vmatprep.subr.bf16.mxu0 0
  %6236 = vmatpush1.bf16.msra.mxu0 %v6216
  %6237 = vmatprep.subr.bf16.mxu0 0
  %6238 = vmatpush1.bf16.msra.mxu0 %v6217
  %6239 = vmatprep.subr.bf16.mxu0 0
  %6240 = vmatpush1.bf16.msra.mxu0 %v6218
  %6241 = vmatprep.subr.bf16.mxu0 0
  %6242 = vmatpush1.bf16.msra.mxu0 %v6219
  %6243 = vmatprep.subr.bf16.mxu0 0
  %6244 = vmatpush1.bf16.msra.mxu0 %v6220
  %6245 = vmatprep.subr.bf16.mxu0 0
  %6246 = vmatpush1.bf16.msra.mxu0 0
  %6247 = vmatprep.subr.bf16.mxu0 0
  %6248 = vmatpush1.bf16.msra.mxu0 0
  %6249 = vmatprep.subr.bf16.mxu0 0
  %6250 = vmatpush1.bf16.msra.mxu0 0
  %6251 = vmatprep.subr.bf16.mxu0 0
  %6252 = vmatpush1.bf16.msra.mxu0 0
  %6253 = vmatprep.subr.bf16.mxu0 0
  %6254 = vmatpush1.bf16.msra.mxu0 0
  %6255 = vmatprep.subr.bf16.mxu0 0
  %6256 = vmatpush1.bf16.msra.mxu0 0
  %6257 = vmatprep.subr.bf16.mxu0 0
  %6258 = vmatpush1.bf16.msra.mxu0 0
  %6259 = vmatprep.subr.bf16.mxu0 0
  %6260 = vmatpush1.bf16.msra.mxu0 0
  %6261 = vmatprep.mubr.bf16.mxu0 0
  %6262 = vmatmul.mubr.bf16.gmra.mrb[0].mxu0 %v6159
  %v6263 = vpop.f32.mrb[0].mxu0
  %v6264 = vadd.f32 0.0, %v6263
  %v6265 = vpop.f32.mrb[0].mxu0
  %v6266 = vpop.f32.mrb[0].mxu0
  %v6267 = vadd.f32 0.0, %v6266
  %v6268 = vpop.f32.mrb[0].mxu0
  %6269 = vmatprep.mubr.bf16.mxu0 0
  %6270 = vmatmul.mubr.bf16.gmra.mrb[0].mxu0 %v6160
  %v6271 = vpop.f32.mrb[0].mxu0
  %v6272 = vadd.f32 0.0, %v6271
  %v6273 = vpop.f32.mrb[0].mxu0
  %v6274 = vpop.f32.mrb[0].mxu0
  %v6275 = vadd.f32 0.0, %v6274
  %v6276 = vpop.f32.mrb[0].mxu0
  %6277 = vmatprep.mubr.bf16.mxu0 0
  %6278 = vmatmul.mubr.bf16.gmra.mrb[0].mxu0 %v6161
  %v6279 = vpop.f32.mrb[0].mxu0
  %v6280 = vadd.f32 0.0, %v6279
  %v6281 = vpop.f32.mrb[0].mxu0
  %v6282 = vpop.f32.mrb[0].mxu0
  %v6283 = vadd.f32 0.0, %v6282
  %v6284 = vpop.f32.mrb[0].mxu0
  %6285 = vmatprep.mubr.bf16.mxu0 0
  %6286 = vmatmul.mubr.bf16.gmra.mrb[0].mxu0 %v6162
  %v6287 = vpop.f32.mrb[0].mxu0
  %v6288 = vadd.f32 0.0, %v6287
  %v6289 = vpop.f32.mrb[0].mxu0
  %v6290 = vpop.f32.mrb[0].mxu0
  %v6291 = vadd.f32 0.0, %v6290
  %v6292 = vpop.f32.mrb[0].mxu0
  %6293 = vmatprep.mubr.bf16.mxu0 0
  %6294 = vmatmul.mubr.bf16.gmra.mrb[0].mxu0 %v6163
  %v6295 = vpop.f32.mrb[0].mxu0
  %v6296 = vadd.f32 0.0, %v6295
  %v6297 = vpop.f32.mrb[0].mxu0
  %v6298 = vpop.f32.mrb[0].mxu0
  %v6299 = vpop.f32.mrb[0].mxu0
  %6300 = vdwg.mxu0
  %v6301 = vadd.f32 %v6140, %v6264
  %v6302 = vadd.f32 %v6141, %v6267
  %v6303 = vadd.f32 %v6142, %v6272
  %v6304 = vadd.f32 %v6143, %v6275
  %v6305 = vadd.f32 %v6144, %v6280
  %v6306 = vadd.f32 %v6145, %v6283
  %v6307 = vadd.f32 %v6146, %v6288
  %v6308 = vadd.f32 %v6147, %v6291
  %v6309 = vadd.f32 %v6148, %v6296
  %s6310 = scalar_lea.vmem [#allocation2], 112
  %v6311 = vld [vmem:[%s6310] sm:$0xff]
  %v6312 = vld [vmem:[%s6310 + $0x10] sm:$0xff]
  %v6313 = vld [vmem:[%s6310 + $0x20] sm:$0xff]
  %v6314 = vld [vmem:[%s6310 + $0xa0] sm:$0xff]
  %v6315 = vld [vmem:[%s6310 + $0xb0] sm:$0xff]
  %v6316 = vld [vmem:[%s6310 + $0xc0] sm:$0xff]
  %v6317 = vld [vmem:[%s6310 + $0x140] sm:$0xff]
  %v6318 = vld [vmem:[%s6310 + $0x150] sm:$0xff]
  %v6319 = vld [vmem:[%s6310 + $0x160] sm:$0xff]
  %v6320 = vpack.c.bf16 %v6312, %v6311
  %v6321 = vpack.c.bf16 %v6314, %v6313
  %v6322 = vpack.c.bf16 %v6316, %v6315
  %v6323 = vpack.c.bf16 %v6318, %v6317
  %v6324 = vpack.c.bf16 %v6319, %v6319
  %s6325 = scalar_lea.vmem %s3, 576
  %v6326 = vld [vmem:[%s6325] sm:$0xf]
  %v6327 = vld [vmem:[%s6325 + $0x4] sm:$0xf]
  %v6328 = vld [vmem:[%s6325 + $0x8] sm:$0xf]
  %v6329 = vld [vmem:[%s6325 + $0xc] sm:$0xf]
  %v6330 = vld [vmem:[%s6325 + $0x10] sm:$0xf]
  %v6331 = vld [vmem:[%s6325 + $0x14] sm:$0xf]
  %v6332 = vld [vmem:[%s6325 + $0x18] sm:$0xf]
  %v6333 = vld [vmem:[%s6325 + $0x1c] sm:$0xf]
  %v6334 = vld [vmem:[%s6325 + $0x20] sm:$0xf]
  %v6335 = vld [vmem:[%s6325 + $0x24] sm:$0xf]
  %v6336 = vld [vmem:[%s6325 + $0x28] sm:$0xf]
  %v6337 = vld [vmem:[%s6325 + $0x2c] sm:$0xf]
  %v6338 = vld [vmem:[%s6325 + $0x30] sm:$0xf]
  %v6339 = vld [vmem:[%s6325 + $0x34] sm:$0xf]
  %v6340 = vld [vmem:[%s6325 + $0x38] sm:$0xf]
  %v6341 = vld [vmem:[%s6325 + $0x3c] sm:$0xf]
  %v6358 = vunpack.c.l.b16 %v6326
  %v6359 = vunpack.c.l.b16 %v6327
  %v6360 = vunpack.c.l.b16 %v6328
  %v6361 = vunpack.c.l.b16 %v6329
  %v6362 = vunpack.c.l.b16 %v6330
  %v6363 = vunpack.c.l.b16 %v6331
  %v6364 = vunpack.c.l.b16 %v6332
  %v6365 = vunpack.c.l.b16 %v6333
  %v6366 = vunpack.c.l.b16 %v6334
  %v6367 = vunpack.c.l.b16 %v6335
  %v6368 = vunpack.c.l.b16 %v6336
  %v6369 = vunpack.c.l.b16 %v6337
  %v6370 = vunpack.c.l.b16 %v6338
  %v6371 = vunpack.c.l.b16 %v6339
  %v6372 = vunpack.c.l.b16 %v6340
  %v6373 = vunpack.c.l.b16 %v6341
  %v6374 = vpack.c.b16 %v6359, %v6358
  %v6375 = vpack.c.b16 %v6361, %v6360
  %v6376 = vpack.c.b16 %v6363, %v6362
  %v6377 = vpack.c.b16 %v6365, %v6364
  %v6378 = vpack.c.b16 %v6367, %v6366
  %v6379 = vpack.c.b16 %v6369, %v6368
  %v6380 = vpack.c.b16 %v6371, %v6370
  %v6381 = vpack.c.b16 %v6373, %v6372
  %6390 = vmatprep.subr.bf16.mxu0 0
  %6391 = vmatpush1.bf16.msra.mxu0 %v6374
  %6392 = vmatprep.subr.bf16.mxu0 0
  %6393 = vmatpush1.bf16.msra.mxu0 %v6375
  %6394 = vmatprep.subr.bf16.mxu0 0
  %6395 = vmatpush1.bf16.msra.mxu0 %v6376
  %6396 = vmatprep.subr.bf16.mxu0 0
  %6397 = vmatpush1.bf16.msra.mxu0 %v6377
  %6398 = vmatprep.subr.bf16.mxu0 0
  %6399 = vmatpush1.bf16.msra.mxu0 %v6378
  %6400 = vmatprep.subr.bf16.mxu0 0
  %6401 = vmatpush1.bf16.msra.mxu0 %v6379
  %6402 = vmatprep.subr.bf16.mxu0 0
  %6403 = vmatpush1.bf16.msra.mxu0 %v6380
  %6404 = vmatprep.subr.bf16.mxu0 0
  %6405 = vmatpush1.bf16.msra.mxu0 %v6381
  %6406 = vmatprep.subr.bf16.mxu0 0
  %6407 = vmatpush1.bf16.msra.mxu0 0
  %6408 = vmatprep.subr.bf16.mxu0 0
  %6409 = vmatpush1.bf16.msra.mxu0 0
  %6410 = vmatprep.subr.bf16.mxu0 0
  %6411 = vmatpush1.bf16.msra.mxu0 0
  %6412 = vmatprep.subr.bf16.mxu0 0
  %6413 = vmatpush1.bf16.msra.mxu0 0
  %6414 = vmatprep.subr.bf16.mxu0 0
  %6415 = vmatpush1.bf16.msra.mxu0 0
  %6416 = vmatprep.subr.bf16.mxu0 0
  %6417 = vmatpush1.bf16.msra.mxu0 0
  %6418 = vmatprep.subr.bf16.mxu0 0
  %6419 = vmatpush1.bf16.msra.mxu0 0
  %6420 = vmatprep.subr.bf16.mxu0 0
  %6421 = vmatpush1.bf16.msra.mxu0 0
  %6422 = vmatprep.mubr.bf16.mxu0 0
  %6423 = vmatmul.mubr.bf16.gmra.mrb[0].mxu0 %v6320
  %v6424 = vpop.f32.mrb[0].mxu0
  %v6425 = vadd.f32 0.0, %v6424
  %v6426 = vpop.f32.mrb[0].mxu0
  %v6427 = vpop.f32.mrb[0].mxu0
  %v6428 = vadd.f32 0.0, %v6427
  %v6429 = vpop.f32.mrb[0].mxu0
  %6430 = vmatprep.mubr.bf16.mxu0 0
  %6431 = vmatmul.mubr.bf16.gmra.mrb[0].mxu0 %v6321
  %v6432 = vpop.f32.mrb[0].mxu0
  %v6433 = vadd.f32 0.0, %v6432
  %v6434 = vpop.f32.mrb[0].mxu0
  %v6435 = vpop.f32.mrb[0].mxu0
  %v6436 = vadd.f32 0.0, %v6435
  %v6437 = vpop.f32.mrb[0].mxu0
  %6438 = vmatprep.mubr.bf16.mxu0 0
  %6439 = vmatmul.mubr.bf16.gmra.mrb[0].mxu0 %v6322
  %v6440 = vpop.f32.mrb[0].mxu0
  %v6441 = vadd.f32 0.0, %v6440
  %v6442 = vpop.f32.mrb[0].mxu0
  %v6443 = vpop.f32.mrb[0].mxu0
  %v6444 = vadd.f32 0.0, %v6443
  %v6445 = vpop.f32.mrb[0].mxu0
  %6446 = vmatprep.mubr.bf16.mxu0 0
  %6447 = vmatmul.mubr.bf16.gmra.mrb[0].mxu0 %v6323
  %v6448 = vpop.f32.mrb[0].mxu0
  %v6449 = vadd.f32 0.0, %v6448
  %v6450 = vpop.f32.mrb[0].mxu0
  %v6451 = vpop.f32.mrb[0].mxu0
  %v6452 = vadd.f32 0.0, %v6451
  %v6453 = vpop.f32.mrb[0].mxu0
  %6454 = vmatprep.mubr.bf16.mxu0 0
  %6455 = vmatmul.mubr.bf16.gmra.mrb[0].mxu0 %v6324
  %v6456 = vpop.f32.mrb[0].mxu0
  %v6457 = vadd.f32 0.0, %v6456
  %v6458 = vpop.f32.mrb[0].mxu0
  %v6459 = vpop.f32.mrb[0].mxu0
  %v6460 = vpop.f32.mrb[0].mxu0
  %6461 = vdwg.mxu0
  %v6462 = vadd.f32 %v6301, %v6425
  %v6463 = vadd.f32 %v6302, %v6428
  %v6464 = vadd.f32 %v6303, %v6433
  %v6465 = vadd.f32 %v6304, %v6436
  %v6466 = vadd.f32 %v6305, %v6441
  %v6467 = vadd.f32 %v6306, %v6444
  %v6468 = vadd.f32 %v6307, %v6449
  %v6469 = vadd.f32 %v6308, %v6452
  %v6470 = vadd.f32 %v6309, %v6457
  %s6471 = scalar_lea.vmem [#allocation2], 160
  %v6472 = vld [vmem:[%s6471] sm:$0xff]
  %v6473 = vld [vmem:[%s6471 + $0x10] sm:$0xff]
  %v6474 = vld [vmem:[%s6471 + $0x20] sm:$0xff]
  %v6475 = vld [vmem:[%s6471 + $0xa0] sm:$0xff]
  %v6476 = vld [vmem:[%s6471 + $0xb0] sm:$0xff]
  %v6477 = vld [vmem:[%s6471 + $0xc0] sm:$0xff]
  %v6478 = vld [vmem:[%s6471 + $0x140] sm:$0xff]
  %v6479 = vld [vmem:[%s6471 + $0x150] sm:$0xff]
  %v6480 = vld [vmem:[%s6471 + $0x160] sm:$0xff]
  %v6481 = vpack.c.bf16 %v6473, %v6472
  %v6482 = vpack.c.bf16 %v6475, %v6474
  %v6483 = vpack.c.bf16 %v6477, %v6476
  %v6484 = vpack.c.bf16 %v6479, %v6478
  %v6485 = vpack.c.bf16 %v6480, %v6480
  %s6486 = scalar_lea.vmem %s3, 640
  %v6487 = vld [vmem:[%s6486] sm:$0xf]
  %v6488 = vld [vmem:[%s6486 + $0x4] sm:$0xf]
  %v6489 = vld [vmem:[%s6486 + $0x8] sm:$0xf]
  %v6490 = vld [vmem:[%s6486 + $0xc] sm:$0xf]
  %v6491 = vld [vmem:[%s6486 + $0x10] sm:$0xf]
  %v6492 = vld [vmem:[%s6486 + $0x14] sm:$0xf]
  %v6493 = vld [vmem:[%s6486 + $0x18] sm:$0xf]
  %v6494 = vld [vmem:[%s6486 + $0x1c] sm:$0xf]
  %v6495 = vld [vmem:[%s6486 + $0x20] sm:$0xf]
  %v6496 = vld [vmem:[%s6486 + $0x24] sm:$0xf]
  %v6497 = vld [vmem:[%s6486 + $0x28] sm:$0xf]
  %v6498 = vld [vmem:[%s6486 + $0x2c] sm:$0xf]
  %v6499 = vld [vmem:[%s6486 + $0x30] sm:$0xf]
  %v6500 = vld [vmem:[%s6486 + $0x34] sm:$0xf]
  %v6501 = vld [vmem:[%s6486 + $0x38] sm:$0xf]
  %v6502 = vld [vmem:[%s6486 + $0x3c] sm:$0xf]
  %v6519 = vunpack.c.l.b16 %v6487
  %v6520 = vunpack.c.l.b16 %v6488
  %v6521 = vunpack.c.l.b16 %v6489
  %v6522 = vunpack.c.l.b16 %v6490
  %v6523 = vunpack.c.l.b16 %v6491
  %v6524 = vunpack.c.l.b16 %v6492
  %v6525 = vunpack.c.l.b16 %v6493
  %v6526 = vunpack.c.l.b16 %v6494
  %v6527 = vunpack.c.l.b16 %v6495
  %v6528 = vunpack.c.l.b16 %v6496
  %v6529 = vunpack.c.l.b16 %v6497
  %v6530 = vunpack.c.l.b16 %v6498
  %v6531 = vunpack.c.l.b16 %v6499
  %v6532 = vunpack.c.l.b16 %v6500
  %v6533 = vunpack.c.l.b16 %v6501
  %v6534 = vunpack.c.l.b16 %v6502
  %v6535 = vpack.c.b16 %v6520, %v6519
  %v6536 = vpack.c.b16 %v6522, %v6521
  %v6537 = vpack.c.b16 %v6524, %v6523
  %v6538 = vpack.c.b16 %v6526, %v6525
  %v6539 = vpack.c.b16 %v6528, %v6527
  %v6540 = vpack.c.b16 %v6530, %v6529
  %v6541 = vpack.c.b16 %v6532, %v6531
  %v6542 = vpack.c.b16 %v6534, %v6533
  %6551 = vmatprep.subr.bf16.mxu0 0
  %6552 = vmatpush1.bf16.msra.mxu0 %v6535
  %6553 = vmatprep.subr.bf16.mxu0 0
  %6554 = vmatpush1.bf16.msra.mxu0 %v6536
  %6555 = vmatprep.subr.bf16.mxu0 0
  %6556 = vmatpush1.bf16.msra.mxu0 %v6537
  %6557 = vmatprep.subr.bf16.mxu0 0
  %6558 = vmatpush1.bf16.msra.mxu0 %v6538
  %6559 = vmatprep.subr.bf16.mxu0 0
  %6560 = vmatpush1.bf16.msra.mxu0 %v6539
  %6561 = vmatprep.subr.bf16.mxu0 0
  %6562 = vmatpush1.bf16.msra.mxu0 %v6540
  %6563 = vmatprep.subr.bf16.mxu0 0
  %6564 = vmatpush1.bf16.msra.mxu0 %v6541
  %6565 = vmatprep.subr.bf16.mxu0 0
  %6566 = vmatpush1.bf16.msra.mxu0 %v6542
  %6567 = vmatprep.subr.bf16.mxu0 0
  %6568 = vmatpush1.bf16.msra.mxu0 0
  %6569 = vmatprep.subr.bf16.mxu0 0
  %6570 = vmatpush1.bf16.msra.mxu0 0
  %6571 = vmatprep.subr.bf16.mxu0 0
  %6572 = vmatpush1.bf16.msra.mxu0 0
  %6573 = vmatprep.subr.bf16.mxu0 0
  %6574 = vmatpush1.bf16.msra.mxu0 0
  %6575 = vmatprep.subr.bf16.mxu0 0
  %6576 = vmatpush1.bf16.msra.mxu0 0
  %6577 = vmatprep.subr.bf16.mxu0 0
  %6578 = vmatpush1.bf16.msra.mxu0 0
  %6579 = vmatprep.subr.bf16.mxu0 0
  %6580 = vmatpush1.bf16.msra.mxu0 0
  %6581 = vmatprep.subr.bf16.mxu0 0
  %6582 = vmatpush1.bf16.msra.mxu0 0
  %6583 = vmatprep.mubr.bf16.mxu0 0
  %6584 = vmatmul.mubr.bf16.gmra.mrb[0].mxu0 %v6481
  %v6585 = vpop.f32.mrb[0].mxu0
  %v6586 = vadd.f32 0.0, %v6585
  %v6587 = vpop.f32.mrb[0].mxu0
  %v6588 = vpop.f32.mrb[0].mxu0
  %v6589 = vadd.f32 0.0, %v6588
  %v6590 = vpop.f32.mrb[0].mxu0
  %6591 = vmatprep.mubr.bf16.mxu0 0
  %6592 = vmatmul.mubr.bf16.gmra.mrb[0].mxu0 %v6482
  %v6593 = vpop.f32.mrb[0].mxu0
  %v6594 = vadd.f32 0.0, %v6593
  %v6595 = vpop.f32.mrb[0].mxu0
  %v6596 = vpop.f32.mrb[0].mxu0
  %v6597 = vadd.f32 0.0, %v6596
  %v6598 = vpop.f32.mrb[0].mxu0
  %6599 = vmatprep.mubr.bf16.mxu0 0
  %6600 = vmatmul.mubr.bf16.gmra.mrb[0].mxu0 %v6483
  %v6601 = vpop.f32.mrb[0].mxu0
  %v6602 = vadd.f32 0.0, %v6601
  %v6603 = vpop.f32.mrb[0].mxu0
  %v6604 = vpop.f32.mrb[0].mxu0
  %v6605 = vadd.f32 0.0, %v6604
  %v6606 = vpop.f32.mrb[0].mxu0
  %6607 = vmatprep.mubr.bf16.mxu0 0
  %6608 = vmatmul.mubr.bf16.gmra.mrb[0].mxu0 %v6484
  %v6609 = vpop.f32.mrb[0].mxu0
  %v6610 = vadd.f32 0.0, %v6609
  %v6611 = vpop.f32.mrb[0].mxu0
  %v6612 = vpop.f32.mrb[0].mxu0
  %v6613 = vadd.f32 0.0, %v6612
  %v6614 = vpop.f32.mrb[0].mxu0
  %6615 = vmatprep.mubr.bf16.mxu0 0
  %6616 = vmatmul.mubr.bf16.gmra.mrb[0].mxu0 %v6485
  %v6617 = vpop.f32.mrb[0].mxu0
  %v6618 = vadd.f32 0.0, %v6617
  %v6619 = vpop.f32.mrb[0].mxu0
  %v6620 = vpop.f32.mrb[0].mxu0
  %v6621 = vpop.f32.mrb[0].mxu0
  %6622 = vdwg.mxu0
  %v6623 = vadd.f32 %v6462, %v6586
  %v6624 = vadd.f32 %v6463, %v6589
  %v6625 = vadd.f32 %v6464, %v6594
  %v6626 = vadd.f32 %v6465, %v6597
  %v6627 = vadd.f32 %v6466, %v6602
  %v6628 = vadd.f32 %v6467, %v6605
  %v6629 = vadd.f32 %v6468, %v6610
  %v6630 = vadd.f32 %v6469, %v6613
  %v6631 = vadd.f32 %v6470, %v6618
  %v6632 = vld [vmem:[%s1510] sm:$0xff]
  %v6633 = vld [vmem:[%s1510 + $0x10] sm:$0xff]
  %v6634 = vld [vmem:[%s1510 + $0x20] sm:$0xff]
  %v6635 = vld [vmem:[%s1510 + $0xa0] sm:$0xff]
  %v6636 = vld [vmem:[%s1510 + $0xb0] sm:$0xff]
  %v6637 = vld [vmem:[%s1510 + $0xc0] sm:$0xff]
  %v6638 = vld [vmem:[%s1510 + $0x140] sm:$0xff]
  %v6639 = vld [vmem:[%s1510 + $0x150] sm:$0xff]
  %v6640 = vld [vmem:[%s1510 + $0x160] sm:$0xff]
  %v6641 = vpack.c.bf16 %v6633, %v6632
  %v6642 = vpack.c.bf16 %v6635, %v6634
  %v6643 = vpack.c.bf16 %v6637, %v6636
  %v6644 = vpack.c.bf16 %v6639, %v6638
  %v6645 = vpack.c.bf16 %v6640, %v6640
  %s6646 = scalar_lea.vmem %s3, 704
  %v6647 = vld [vmem:[%s6646] sm:$0xf]
  %v6648 = vld [vmem:[%s6646 + $0x4] sm:$0xf]
  %v6649 = vld [vmem:[%s6646 + $0x8] sm:$0xf]
  %v6650 = vld [vmem:[%s6646 + $0xc] sm:$0xf]
  %v6651 = vld [vmem:[%s6646 + $0x10] sm:$0xf]
  %v6652 = vld [vmem:[%s6646 + $0x14] sm:$0xf]
  %v6653 = vld [vmem:[%s6646 + $0x18] sm:$0xf]
  %v6654 = vld [vmem:[%s6646 + $0x1c] sm:$0xf]
  %v6655 = vld [vmem:[%s6646 + $0x20] sm:$0xf]
  %v6656 = vld [vmem:[%s6646 + $0x24] sm:$0xf]
  %v6657 = vld [vmem:[%s6646 + $0x28] sm:$0xf]
  %v6658 = vld [vmem:[%s6646 + $0x2c] sm:$0xf]
  %v6659 = vld [vmem:[%s6646 + $0x30] sm:$0xf]
  %v6660 = vld [vmem:[%s6646 + $0x34] sm:$0xf]
  %v6661 = vld [vmem:[%s6646 + $0x38] sm:$0xf]
  %v6662 = vld [vmem:[%s6646 + $0x3c] sm:$0xf]
  %v6679 = vunpack.c.l.b16 %v6647
  %v6680 = vunpack.c.l.b16 %v6648
  %v6681 = vunpack.c.l.b16 %v6649
  %v6682 = vunpack.c.l.b16 %v6650
  %v6683 = vunpack.c.l.b16 %v6651
  %v6684 = vunpack.c.l.b16 %v6652
  %v6685 = vunpack.c.l.b16 %v6653
  %v6686 = vunpack.c.l.b16 %v6654
  %v6687 = vunpack.c.l.b16 %v6655
  %v6688 = vunpack.c.l.b16 %v6656
  %v6689 = vunpack.c.l.b16 %v6657
  %v6690 = vunpack.c.l.b16 %v6658
  %v6691 = vunpack.c.l.b16 %v6659
  %v6692 = vunpack.c.l.b16 %v6660
  %v6693 = vunpack.c.l.b16 %v6661
  %v6694 = vunpack.c.l.b16 %v6662
  %v6695 = vpack.c.b16 %v6680, %v6679
  %v6696 = vpack.c.b16 %v6682, %v6681
  %v6697 = vpack.c.b16 %v6684, %v6683
  %v6698 = vpack.c.b16 %v6686, %v6685
  %v6699 = vpack.c.b16 %v6688, %v6687
  %v6700 = vpack.c.b16 %v6690, %v6689
  %v6701 = vpack.c.b16 %v6692, %v6691
  %v6702 = vpack.c.b16 %v6694, %v6693
  %6711 = vmatprep.subr.bf16.mxu0 0
  %6712 = vmatpush1.bf16.msra.mxu0 %v6695
  %6713 = vmatprep.subr.bf16.mxu0 0
  %6714 = vmatpush1.bf16.msra.mxu0 %v6696
  %6715 = vmatprep.subr.bf16.mxu0 0
  %6716 = vmatpush1.bf16.msra.mxu0 %v6697
  %6717 = vmatprep.subr.bf16.mxu0 0
  %6718 = vmatpush1.bf16.msra.mxu0 %v6698
  %6719 = vmatprep.subr.bf16.mxu0 0
  %6720 = vmatpush1.bf16.msra.mxu0 %v6699
  %6721 = vmatprep.subr.bf16.mxu0 0
  %6722 = vmatpush1.bf16.msra.mxu0 %v6700
  %6723 = vmatprep.subr.bf16.mxu0 0
  %6724 = vmatpush1.bf16.msra.mxu0 %v6701
  %6725 = vmatprep.subr.bf16.mxu0 0
  %6726 = vmatpush1.bf16.msra.mxu0 %v6702
  %6727 = vmatprep.subr.bf16.mxu0 0
  %6728 = vmatpush1.bf16.msra.mxu0 0
  %6729 = vmatprep.subr.bf16.mxu0 0
  %6730 = vmatpush1.bf16.msra.mxu0 0
  %6731 = vmatprep.subr.bf16.mxu0 0
  %6732 = vmatpush1.bf16.msra.mxu0 0
  %6733 = vmatprep.subr.bf16.mxu0 0
  %6734 = vmatpush1.bf16.msra.mxu0 0
  %6735 = vmatprep.subr.bf16.mxu0 0
  %6736 = vmatpush1.bf16.msra.mxu0 0
  %6737 = vmatprep.subr.bf16.mxu0 0
  %6738 = vmatpush1.bf16.msra.mxu0 0
  %6739 = vmatprep.subr.bf16.mxu0 0
  %6740 = vmatpush1.bf16.msra.mxu0 0
  %6741 = vmatprep.subr.bf16.mxu0 0
  %6742 = vmatpush1.bf16.msra.mxu0 0
  %6743 = vmatprep.mubr.bf16.mxu0 0
  %6744 = vmatmul.mubr.bf16.gmra.mrb[0].mxu0 %v6641
  %v6745 = vpop.f32.mrb[0].mxu0
  %v6746 = vadd.f32 0.0, %v6745
  %v6747 = vpop.f32.mrb[0].mxu0
  %v6748 = vpop.f32.mrb[0].mxu0
  %v6749 = vadd.f32 0.0, %v6748
  %v6750 = vpop.f32.mrb[0].mxu0
  %6751 = vmatprep.mubr.bf16.mxu0 0
  %6752 = vmatmul.mubr.bf16.gmra.mrb[0].mxu0 %v6642
  %v6753 = vpop.f32.mrb[0].mxu0
  %v6754 = vadd.f32 0.0, %v6753
  %v6755 = vpop.f32.mrb[0].mxu0
  %v6756 = vpop.f32.mrb[0].mxu0
  %v6757 = vadd.f32 0.0, %v6756
  %v6758 = vpop.f32.mrb[0].mxu0
  %6759 = vmatprep.mubr.bf16.mxu0 0
  %6760 = vmatmul.mubr.bf16.gmra.mrb[0].mxu0 %v6643
  %v6761 = vpop.f32.mrb[0].mxu0
  %v6762 = vadd.f32 0.0, %v6761
  %v6763 = vpop.f32.mrb[0].mxu0
  %v6764 = vpop.f32.mrb[0].mxu0
  %v6765 = vadd.f32 0.0, %v6764
  %v6766 = vpop.f32.mrb[0].mxu0
  %6767 = vmatprep.mubr.bf16.mxu0 0
  %6768 = vmatmul.mubr.bf16.gmra.mrb[0].mxu0 %v6644
  %v6769 = vpop.f32.mrb[0].mxu0
  %v6770 = vadd.f32 0.0, %v6769
  %v6771 = vpop.f32.mrb[0].mxu0
  %v6772 = vpop.f32.mrb[0].mxu0
  %v6773 = vadd.f32 0.0, %v6772
  %v6774 = vpop.f32.mrb[0].mxu0
  %6775 = vmatprep.mubr.bf16.mxu0 0
  %6776 = vmatmul.mubr.bf16.gmra.mrb[0].mxu0 %v6645
  %v6777 = vpop.f32.mrb[0].mxu0
  %v6778 = vadd.f32 0.0, %v6777
  %v6779 = vpop.f32.mrb[0].mxu0
  %v6780 = vpop.f32.mrb[0].mxu0
  %v6781 = vpop.f32.mrb[0].mxu0
  %6782 = vdwg.mxu0
  %v6783 = vadd.f32 %v6623, %v6746
  %v6784 = vadd.f32 %v6624, %v6749
  %v6785 = vadd.f32 %v6625, %v6754
  %v6786 = vadd.f32 %v6626, %v6757
  %v6787 = vadd.f32 %v6627, %v6762
  %v6788 = vadd.f32 %v6628, %v6765
  %v6789 = vadd.f32 %v6629, %v6770
  %v6790 = vadd.f32 %v6630, %v6773
  %v6791 = vadd.f32 %v6631, %v6778
  %s6792 = scalar_lea.vmem [#allocation2], 176
  %v6793 = vld [vmem:[%s6792] sm:$0xff]
  %v6794 = vld [vmem:[%s6792 + $0x10] sm:$0xff]
  %v6795 = vld [vmem:[%s6792 + $0x20] sm:$0xff]
  %v6796 = vld [vmem:[%s6792 + $0xa0] sm:$0xff]
  %v6797 = vld [vmem:[%s6792 + $0xb0] sm:$0xff]
  %v6798 = vld [vmem:[%s6792 + $0xc0] sm:$0xff]
  %v6799 = vld [vmem:[%s6792 + $0x140] sm:$0xff]
  %v6800 = vld [vmem:[%s6792 + $0x150] sm:$0xff]
  %v6801 = vld [vmem:[%s6792 + $0x160] sm:$0xff]
  %v6802 = vpack.c.bf16 %v6794, %v6793
  %v6803 = vpack.c.bf16 %v6796, %v6795
  %v6804 = vpack.c.bf16 %v6798, %v6797
  %v6805 = vpack.c.bf16 %v6800, %v6799
  %v6806 = vpack.c.bf16 %v6801, %v6801
  %s6807 = scalar_lea.vmem %s3, 768
  %v6808 = vld [vmem:[%s6807] sm:$0xf]
  %v6809 = vld [vmem:[%s6807 + $0x4] sm:$0xf]
  %v6810 = vld [vmem:[%s6807 + $0x8] sm:$0xf]
  %v6811 = vld [vmem:[%s6807 + $0xc] sm:$0xf]
  %v6812 = vld [vmem:[%s6807 + $0x10] sm:$0xf]
  %v6813 = vld [vmem:[%s6807 + $0x14] sm:$0xf]
  %v6814 = vld [vmem:[%s6807 + $0x18] sm:$0xf]
  %v6815 = vld [vmem:[%s6807 + $0x1c] sm:$0xf]
  %v6816 = vld [vmem:[%s6807 + $0x20] sm:$0xf]
  %v6817 = vld [vmem:[%s6807 + $0x24] sm:$0xf]
  %v6818 = vld [vmem:[%s6807 + $0x28] sm:$0xf]
  %v6819 = vld [vmem:[%s6807 + $0x2c] sm:$0xf]
  %v6820 = vld [vmem:[%s6807 + $0x30] sm:$0xf]
  %v6821 = vld [vmem:[%s6807 + $0x34] sm:$0xf]
  %v6822 = vld [vmem:[%s6807 + $0x38] sm:$0xf]
  %v6823 = vld [vmem:[%s6807 + $0x3c] sm:$0xf]
  %v6840 = vunpack.c.l.b16 %v6808
  %v6841 = vunpack.c.l.b16 %v6809
  %v6842 = vunpack.c.l.b16 %v6810
  %v6843 = vunpack.c.l.b16 %v6811
  %v6844 = vunpack.c.l.b16 %v6812
  %v6845 = vunpack.c.l.b16 %v6813
  %v6846 = vunpack.c.l.b16 %v6814
  %v6847 = vunpack.c.l.b16 %v6815
  %v6848 = vunpack.c.l.b16 %v6816
  %v6849 = vunpack.c.l.b16 %v6817
  %v6850 = vunpack.c.l.b16 %v6818
  %v6851 = vunpack.c.l.b16 %v6819
  %v6852 = vunpack.c.l.b16 %v6820
  %v6853 = vunpack.c.l.b16 %v6821
  %v6854 = vunpack.c.l.b16 %v6822
  %v6855 = vunpack.c.l.b16 %v6823
  %v6856 = vpack.c.b16 %v6841, %v6840
  %v6857 = vpack.c.b16 %v6843, %v6842
  %v6858 = vpack.c.b16 %v6845, %v6844
  %v6859 = vpack.c.b16 %v6847, %v6846
  %v6860 = vpack.c.b16 %v6849, %v6848
  %v6861 = vpack.c.b16 %v6851, %v6850
  %v6862 = vpack.c.b16 %v6853, %v6852
  %v6863 = vpack.c.b16 %v6855, %v6854
  %6872 = vmatprep.subr.bf16.mxu0 0
  %6873 = vmatpush1.bf16.msra.mxu0 %v6856
  %6874 = vmatprep.subr.bf16.mxu0 0
  %6875 = vmatpush1.bf16.msra.mxu0 %v6857
  %6876 = vmatprep.subr.bf16.mxu0 0
  %6877 = vmatpush1.bf16.msra.mxu0 %v6858
  %6878 = vmatprep.subr.bf16.mxu0 0
  %6879 = vmatpush1.bf16.msra.mxu0 %v6859
  %6880 = vmatprep.subr.bf16.mxu0 0
  %6881 = vmatpush1.bf16.msra.mxu0 %v6860
  %6882 = vmatprep.subr.bf16.mxu0 0
  %6883 = vmatpush1.bf16.msra.mxu0 %v6861
  %6884 = vmatprep.subr.bf16.mxu0 0
  %6885 = vmatpush1.bf16.msra.mxu0 %v6862
  %6886 = vmatprep.subr.bf16.mxu0 0
  %6887 = vmatpush1.bf16.msra.mxu0 %v6863
  %6888 = vmatprep.subr.bf16.mxu0 0
  %6889 = vmatpush1.bf16.msra.mxu0 0
  %6890 = vmatprep.subr.bf16.mxu0 0
  %6891 = vmatpush1.bf16.msra.mxu0 0
  %6892 = vmatprep.subr.bf16.mxu0 0
  %6893 = vmatpush1.bf16.msra.mxu0 0
  %6894 = vmatprep.subr.bf16.mxu0 0
  %6895 = vmatpush1.bf16.msra.mxu0 0
  %6896 = vmatprep.subr.bf16.mxu0 0
  %6897 = vmatpush1.bf16.msra.mxu0 0
  %6898 = vmatprep.subr.bf16.mxu0 0
  %6899 = vmatpush1.bf16.msra.mxu0 0
  %6900 = vmatprep.subr.bf16.mxu0 0
  %6901 = vmatpush1.bf16.msra.mxu0 0
  %6902 = vmatprep.subr.bf16.mxu0 0
  %6903 = vmatpush1.bf16.msra.mxu0 0
  %6904 = vmatprep.mubr.bf16.mxu0 0
  %6905 = vmatmul.mubr.bf16.gmra.mrb[0].mxu0 %v6802
  %v6906 = vpop.f32.mrb[0].mxu0
  %v6907 = vadd.f32 0.0, %v6906
  %v6908 = vpop.f32.mrb[0].mxu0
  %v6909 = vpop.f32.mrb[0].mxu0
  %v6910 = vadd.f32 0.0, %v6909
  %v6911 = vpop.f32.mrb[0].mxu0
  %6912 = vmatprep.mubr.bf16.mxu0 0
  %6913 = vmatmul.mubr.bf16.gmra.mrb[0].mxu0 %v6803
  %v6914 = vpop.f32.mrb[0].mxu0
  %v6915 = vadd.f32 0.0, %v6914
  %v6916 = vpop.f32.mrb[0].mxu0
  %v6917 = vpop.f32.mrb[0].mxu0
  %v6918 = vadd.f32 0.0, %v6917
  %v6919 = vpop.f32.mrb[0].mxu0
  %6920 = vmatprep.mubr.bf16.mxu0 0
  %6921 = vmatmul.mubr.bf16.gmra.mrb[0].mxu0 %v6804
  %v6922 = vpop.f32.mrb[0].mxu0
  %v6923 = vadd.f32 0.0, %v6922
  %v6924 = vpop.f32.mrb[0].mxu0
  %v6925 = vpop.f32.mrb[0].mxu0
  %v6926 = vadd.f32 0.0, %v6925
  %v6927 = vpop.f32.mrb[0].mxu0
  %6928 = vmatprep.mubr.bf16.mxu0 0
  %6929 = vmatmul.mubr.bf16.gmra.mrb[0].mxu0 %v6805
  %v6930 = vpop.f32.mrb[0].mxu0
  %v6931 = vadd.f32 0.0, %v6930
  %v6932 = vpop.f32.mrb[0].mxu0
  %v6933 = vpop.f32.mrb[0].mxu0
  %v6934 = vadd.f32 0.0, %v6933
  %v6935 = vpop.f32.mrb[0].mxu0
  %6936 = vmatprep.mubr.bf16.mxu0 0
  %6937 = vmatmul.mubr.bf16.gmra.mrb[0].mxu0 %v6806
  %v6938 = vpop.f32.mrb[0].mxu0
  %v6939 = vadd.f32 0.0, %v6938
  %v6940 = vpop.f32.mrb[0].mxu0
  %v6941 = vpop.f32.mrb[0].mxu0
  %v6942 = vpop.f32.mrb[0].mxu0
  %6943 = vdwg.mxu0
  %v6944 = vadd.f32 %v6783, %v6907
  %v6945 = vadd.f32 %v6784, %v6910
  %v6946 = vadd.f32 %v6785, %v6915
  %v6947 = vadd.f32 %v6786, %v6918
  %v6948 = vadd.f32 %v6787, %v6923
  %v6949 = vadd.f32 %v6788, %v6926
  %v6950 = vadd.f32 %v6789, %v6931
  %v6951 = vadd.f32 %v6790, %v6934
  %v6952 = vadd.f32 %v6791, %v6939
  %s6953 = scalar_lea.vmem [#allocation2], 184
  %v6954 = vld [vmem:[%s6953] sm:$0xff]
  %v6955 = vld [vmem:[%s6953 + $0x10] sm:$0xff]
  %v6956 = vld [vmem:[%s6953 + $0x20] sm:$0xff]
  %v6957 = vld [vmem:[%s6953 + $0xa0] sm:$0xff]
  %v6958 = vld [vmem:[%s6953 + $0xb0] sm:$0xff]
  %v6959 = vld [vmem:[%s6953 + $0xc0] sm:$0xff]
  %v6960 = vld [vmem:[%s6953 + $0x140] sm:$0xff]
  %v6961 = vld [vmem:[%s6953 + $0x150] sm:$0xff]
  %v6962 = vld [vmem:[%s6953 + $0x160] sm:$0xff]
  %v6963 = vpack.c.bf16 %v6955, %v6954
  %v6964 = vpack.c.bf16 %v6957, %v6956
  %v6965 = vpack.c.bf16 %v6959, %v6958
  %v6966 = vpack.c.bf16 %v6961, %v6960
  %v6967 = vpack.c.bf16 %v6962, %v6962
  %s6968 = scalar_lea.vmem %s3, 832
  %v6969 = vld [vmem:[%s6968] sm:$0xf]
  %v6970 = vld [vmem:[%s6968 + $0x4] sm:$0xf]
  %v6971 = vld [vmem:[%s6968 + $0x8] sm:$0xf]
  %v6972 = vld [vmem:[%s6968 + $0xc] sm:$0xf]
  %v6973 = vld [vmem:[%s6968 + $0x10] sm:$0xf]
  %v6974 = vld [vmem:[%s6968 + $0x14] sm:$0xf]
  %v6975 = vld [vmem:[%s6968 + $0x18] sm:$0xf]
  %v6976 = vld [vmem:[%s6968 + $0x1c] sm:$0xf]
  %v6977 = vld [vmem:[%s6968 + $0x20] sm:$0xf]
  %v6978 = vld [vmem:[%s6968 + $0x24] sm:$0xf]
  %v6979 = vld [vmem:[%s6968 + $0x28] sm:$0xf]
  %v6980 = vld [vmem:[%s6968 + $0x2c] sm:$0xf]
  %v6981 = vld [vmem:[%s6968 + $0x30] sm:$0xf]
  %v6982 = vld [vmem:[%s6968 + $0x34] sm:$0xf]
  %v6983 = vld [vmem:[%s6968 + $0x38] sm:$0xf]
  %v6984 = vld [vmem:[%s6968 + $0x3c] sm:$0xf]
  %v7001 = vunpack.c.l.b16 %v6969
  %v7002 = vunpack.c.l.b16 %v6970
  %v7003 = vunpack.c.l.b16 %v6971
  %v7004 = vunpack.c.l.b16 %v6972
  %v7005 = vunpack.c.l.b16 %v6973
  %v7006 = vunpack.c.l.b16 %v6974
  %v7007 = vunpack.c.l.b16 %v6975
  %v7008 = vunpack.c.l.b16 %v6976
  %v7009 = vunpack.c.l.b16 %v6977
  %v7010 = vunpack.c.l.b16 %v6978
  %v7011 = vunpack.c.l.b16 %v6979
  %v7012 = vunpack.c.l.b16 %v6980
  %v7013 = vunpack.c.l.b16 %v6981
  %v7014 = vunpack.c.l.b16 %v6982
  %v7015 = vunpack.c.l.b16 %v6983
  %v7016 = vunpack.c.l.b16 %v6984
  %v7017 = vpack.c.b16 %v7002, %v7001
  %v7018 = vpack.c.b16 %v7004, %v7003
  %v7019 = vpack.c.b16 %v7006, %v7005
  %v7020 = vpack.c.b16 %v7008, %v7007
  %v7021 = vpack.c.b16 %v7010, %v7009
  %v7022 = vpack.c.b16 %v7012, %v7011
  %v7023 = vpack.c.b16 %v7014, %v7013
  %v7024 = vpack.c.b16 %v7016, %v7015
  %7033 = vmatprep.subr.bf16.mxu0 0
  %7034 = vmatpush1.bf16.msra.mxu0 %v7017
  %7035 = vmatprep.subr.bf16.mxu0 0
  %7036 = vmatpush1.bf16.msra.mxu0 %v7018
  %7037 = vmatprep.subr.bf16.mxu0 0
  %7038 = vmatpush1.bf16.msra.mxu0 %v7019
  %7039 = vmatprep.subr.bf16.mxu0 0
  %7040 = vmatpush1.bf16.msra.mxu0 %v7020
  %7041 = vmatprep.subr.bf16.mxu0 0
  %7042 = vmatpush1.bf16.msra.mxu0 %v7021
  %7043 = vmatprep.subr.bf16.mxu0 0
  %7044 = vmatpush1.bf16.msra.mxu0 %v7022
  %7045 = vmatprep.subr.bf16.mxu0 0
  %7046 = vmatpush1.bf16.msra.mxu0 %v7023
  %7047 = vmatprep.subr.bf16.mxu0 0
  %7048 = vmatpush1.bf16.msra.mxu0 %v7024
  %7049 = vmatprep.subr.bf16.mxu0 0
  %7050 = vmatpush1.bf16.msra.mxu0 0
  %7051 = vmatprep.subr.bf16.mxu0 0
  %7052 = vmatpush1.bf16.msra.mxu0 0
  %7053 = vmatprep.subr.bf16.mxu0 0
  %7054 = vmatpush1.bf16.msra.mxu0 0
  %7055 = vmatprep.subr.bf16.mxu0 0
  %7056 = vmatpush1.bf16.msra.mxu0 0
  %7057 = vmatprep.subr.bf16.mxu0 0
  %7058 = vmatpush1.bf16.msra.mxu0 0
  %7059 = vmatprep.subr.bf16.mxu0 0
  %7060 = vmatpush1.bf16.msra.mxu0 0
  %7061 = vmatprep.subr.bf16.mxu0 0
  %7062 = vmatpush1.bf16.msra.mxu0 0
  %7063 = vmatprep.subr.bf16.mxu0 0
  %7064 = vmatpush1.bf16.msra.mxu0 0
  %7065 = vmatprep.mubr.bf16.mxu0 0
  %7066 = vmatmul.mubr.bf16.gmra.mrb[0].mxu0 %v6963
  %v7067 = vpop.f32.mrb[0].mxu0
  %v7068 = vadd.f32 0.0, %v7067
  %v7069 = vpop.f32.mrb[0].mxu0
  %v7070 = vpop.f32.mrb[0].mxu0
  %v7071 = vadd.f32 0.0, %v7070
  %v7072 = vpop.f32.mrb[0].mxu0
  %7073 = vmatprep.mubr.bf16.mxu0 0
  %7074 = vmatmul.mubr.bf16.gmra.mrb[0].mxu0 %v6964
  %v7075 = vpop.f32.mrb[0].mxu0
  %v7076 = vadd.f32 0.0, %v7075
  %v7077 = vpop.f32.mrb[0].mxu0
  %v7078 = vpop.f32.mrb[0].mxu0
  %v7079 = vadd.f32 0.0, %v7078
  %v7080 = vpop.f32.mrb[0].mxu0
  %7081 = vmatprep.mubr.bf16.mxu0 0
  %7082 = vmatmul.mubr.bf16.gmra.mrb[0].mxu0 %v6965
  %v7083 = vpop.f32.mrb[0].mxu0
  %v7084 = vadd.f32 0.0, %v7083
  %v7085 = vpop.f32.mrb[0].mxu0
  %v7086 = vpop.f32.mrb[0].mxu0
  %v7087 = vadd.f32 0.0, %v7086
  %v7088 = vpop.f32.mrb[0].mxu0
  %7089 = vmatprep.mubr.bf16.mxu0 0
  %7090 = vmatmul.mubr.bf16.gmra.mrb[0].mxu0 %v6966
  %v7091 = vpop.f32.mrb[0].mxu0
  %v7092 = vadd.f32 0.0, %v7091
  %v7093 = vpop.f32.mrb[0].mxu0
  %v7094 = vpop.f32.mrb[0].mxu0
  %v7095 = vadd.f32 0.0, %v7094
  %v7096 = vpop.f32.mrb[0].mxu0
  %7097 = vmatprep.mubr.bf16.mxu0 0
  %7098 = vmatmul.mubr.bf16.gmra.mrb[0].mxu0 %v6967
  %v7099 = vpop.f32.mrb[0].mxu0
  %v7100 = vadd.f32 0.0, %v7099
  %v7101 = vpop.f32.mrb[0].mxu0
  %v7102 = vpop.f32.mrb[0].mxu0
  %v7103 = vpop.f32.mrb[0].mxu0
  %7104 = vdwg.mxu0
  %v7105 = vadd.f32 %v6944, %v7068
  %v7106 = vadd.f32 %v6945, %v7071
  %v7107 = vadd.f32 %v6946, %v7076
  %v7108 = vadd.f32 %v6947, %v7079
  %v7109 = vadd.f32 %v6948, %v7084
  %v7110 = vadd.f32 %v6949, %v7087
  %v7111 = vadd.f32 %v6950, %v7092
  %v7112 = vadd.f32 %v6951, %v7095
  %v7113 = vadd.f32 %v6952, %v7100
  %s7114 = scalar_lea.vmem [#allocation2], 192
  %v7115 = vld [vmem:[%s7114] sm:$0xff]
  %v7116 = vld [vmem:[%s7114 + $0x10] sm:$0xff]
  %v7117 = vld [vmem:[%s7114 + $0x20] sm:$0xff]
  %v7118 = vld [vmem:[%s7114 + $0xa0] sm:$0xff]
  %v7119 = vld [vmem:[%s7114 + $0xb0] sm:$0xff]
  %v7120 = vld [vmem:[%s7114 + $0xc0] sm:$0xff]
  %v7121 = vld [vmem:[%s7114 + $0x140] sm:$0xff]
  %v7122 = vld [vmem:[%s7114 + $0x150] sm:$0xff]
  %v7123 = vld [vmem:[%s7114 + $0x160] sm:$0xff]
  %v7124 = vpack.c.bf16 %v7116, %v7115
  %v7125 = vpack.c.bf16 %v7118, %v7117
  %v7126 = vpack.c.bf16 %v7120, %v7119
  %v7127 = vpack.c.bf16 %v7122, %v7121
  %v7128 = vpack.c.bf16 %v7123, %v7123
  %s7129 = scalar_lea.vmem %s3, 896
  %v7130 = vld [vmem:[%s7129] sm:$0xf]
  %v7131 = vld [vmem:[%s7129 + $0x4] sm:$0xf]
  %v7132 = vld [vmem:[%s7129 + $0x8] sm:$0xf]
  %v7133 = vld [vmem:[%s7129 + $0xc] sm:$0xf]
  %v7134 = vld [vmem:[%s7129 + $0x10] sm:$0xf]
  %v7135 = vld [vmem:[%s7129 + $0x14] sm:$0xf]
  %v7136 = vld [vmem:[%s7129 + $0x18] sm:$0xf]
  %v7137 = vld [vmem:[%s7129 + $0x1c] sm:$0xf]
  %v7138 = vld [vmem:[%s7129 + $0x20] sm:$0xf]
  %v7139 = vld [vmem:[%s7129 + $0x24] sm:$0xf]
  %v7140 = vld [vmem:[%s7129 + $0x28] sm:$0xf]
  %v7141 = vld [vmem:[%s7129 + $0x2c] sm:$0xf]
  %v7142 = vld [vmem:[%s7129 + $0x30] sm:$0xf]
  %v7143 = vld [vmem:[%s7129 + $0x34] sm:$0xf]
  %v7144 = vld [vmem:[%s7129 + $0x38] sm:$0xf]
  %v7145 = vld [vmem:[%s7129 + $0x3c] sm:$0xf]
  %v7162 = vunpack.c.l.b16 %v7130
  %v7163 = vunpack.c.l.b16 %v7131
  %v7164 = vunpack.c.l.b16 %v7132
  %v7165 = vunpack.c.l.b16 %v7133
  %v7166 = vunpack.c.l.b16 %v7134
  %v7167 = vunpack.c.l.b16 %v7135
  %v7168 = vunpack.c.l.b16 %v7136
  %v7169 = vunpack.c.l.b16 %v7137
  %v7170 = vunpack.c.l.b16 %v7138
  %v7171 = vunpack.c.l.b16 %v7139
  %v7172 = vunpack.c.l.b16 %v7140
  %v7173 = vunpack.c.l.b16 %v7141
  %v7174 = vunpack.c.l.b16 %v7142
  %v7175 = vunpack.c.l.b16 %v7143
  %v7176 = vunpack.c.l.b16 %v7144
  %v7177 = vunpack.c.l.b16 %v7145
  %v7178 = vpack.c.b16 %v7163, %v7162
  %v7179 = vpack.c.b16 %v7165, %v7164
  %v7180 = vpack.c.b16 %v7167, %v7166
  %v7181 = vpack.c.b16 %v7169, %v7168
  %v7182 = vpack.c.b16 %v7171, %v7170
  %v7183 = vpack.c.b16 %v7173, %v7172
  %v7184 = vpack.c.b16 %v7175, %v7174
  %v7185 = vpack.c.b16 %v7177, %v7176
  %7194 = vmatprep.subr.bf16.mxu0 0
  %7195 = vmatpush1.bf16.msra.mxu0 %v7178
  %7196 = vmatprep.subr.bf16.mxu0 0
  %7197 = vmatpush1.bf16.msra.mxu0 %v7179
  %7198 = vmatprep.subr.bf16.mxu0 0
  %7199 = vmatpush1.bf16.msra.mxu0 %v7180
  %7200 = vmatprep.subr.bf16.mxu0 0
  %7201 = vmatpush1.bf16.msra.mxu0 %v7181
  %7202 = vmatprep.subr.bf16.mxu0 0
  %7203 = vmatpush1.bf16.msra.mxu0 %v7182
  %7204 = vmatprep.subr.bf16.mxu0 0
  %7205 = vmatpush1.bf16.msra.mxu0 %v7183
  %7206 = vmatprep.subr.bf16.mxu0 0
  %7207 = vmatpush1.bf16.msra.mxu0 %v7184
  %7208 = vmatprep.subr.bf16.mxu0 0
  %7209 = vmatpush1.bf16.msra.mxu0 %v7185
  %7210 = vmatprep.subr.bf16.mxu0 0
  %7211 = vmatpush1.bf16.msra.mxu0 0
  %7212 = vmatprep.subr.bf16.mxu0 0
  %7213 = vmatpush1.bf16.msra.mxu0 0
  %7214 = vmatprep.subr.bf16.mxu0 0
  %7215 = vmatpush1.bf16.msra.mxu0 0
  %7216 = vmatprep.subr.bf16.mxu0 0
  %7217 = vmatpush1.bf16.msra.mxu0 0
  %7218 = vmatprep.subr.bf16.mxu0 0
  %7219 = vmatpush1.bf16.msra.mxu0 0
  %7220 = vmatprep.subr.bf16.mxu0 0
  %7221 = vmatpush1.bf16.msra.mxu0 0
  %7222 = vmatprep.subr.bf16.mxu0 0
  %7223 = vmatpush1.bf16.msra.mxu0 0
  %7224 = vmatprep.subr.bf16.mxu0 0
  %7225 = vmatpush1.bf16.msra.mxu0 0
  %7226 = vmatprep.mubr.bf16.mxu0 0
  %7227 = vmatmul.mubr.bf16.gmra.mrb[0].mxu0 %v7124
  %v7228 = vpop.f32.mrb[0].mxu0
  %v7229 = vadd.f32 0.0, %v7228
  %v7230 = vpop.f32.mrb[0].mxu0
  %v7231 = vpop.f32.mrb[0].mxu0
  %v7232 = vadd.f32 0.0, %v7231
  %v7233 = vpop.f32.mrb[0].mxu0
  %7234 = vmatprep.mubr.bf16.mxu0 0
  %7235 = vmatmul.mubr.bf16.gmra.mrb[0].mxu0 %v7125
  %v7236 = vpop.f32.mrb[0].mxu0
  %v7237 = vadd.f32 0.0, %v7236
  %v7238 = vpop.f32.mrb[0].mxu0
  %v7239 = vpop.f32.mrb[0].mxu0
  %v7240 = vadd.f32 0.0, %v7239
  %v7241 = vpop.f32.mrb[0].mxu0
  %7242 = vmatprep.mubr.bf16.mxu0 0
  %7243 = vmatmul.mubr.bf16.gmra.mrb[0].mxu0 %v7126
  %v7244 = vpop.f32.mrb[0].mxu0
  %v7245 = vadd.f32 0.0, %v7244
  %v7246 = vpop.f32.mrb[0].mxu0
  %v7247 = vpop.f32.mrb[0].mxu0
  %v7248 = vadd.f32 0.0, %v7247
  %v7249 = vpop.f32.mrb[0].mxu0
  %7250 = vmatprep.mubr.bf16.mxu0 0
  %7251 = vmatmul.mubr.bf16.gmra.mrb[0].mxu0 %v7127
  %v7252 = vpop.f32.mrb[0].mxu0
  %v7253 = vadd.f32 0.0, %v7252
  %v7254 = vpop.f32.mrb[0].mxu0
  %v7255 = vpop.f32.mrb[0].mxu0
  %v7256 = vadd.f32 0.0, %v7255
  %v7257 = vpop.f32.mrb[0].mxu0
  %7258 = vmatprep.mubr.bf16.mxu0 0
  %7259 = vmatmul.mubr.bf16.gmra.mrb[0].mxu0 %v7128
  %v7260 = vpop.f32.mrb[0].mxu0
  %v7261 = vadd.f32 0.0, %v7260
  %v7262 = vpop.f32.mrb[0].mxu0
  %v7263 = vpop.f32.mrb[0].mxu0
  %v7264 = vpop.f32.mrb[0].mxu0
  %7265 = vdwg.mxu0
  %v7266 = vadd.f32 %v7105, %v7229
  %v7267 = vadd.f32 %v7106, %v7232
  %v7268 = vadd.f32 %v7107, %v7237
  %v7269 = vadd.f32 %v7108, %v7240
  %v7270 = vadd.f32 %v7109, %v7245
  %v7271 = vadd.f32 %v7110, %v7248
  %v7272 = vadd.f32 %v7111, %v7253
  %v7273 = vadd.f32 %v7112, %v7256
  %v7274 = vadd.f32 %v7113, %v7261
  %s7275 = scalar_lea.vmem [#allocation2], 240
  %v7276 = vld [vmem:[%s7275] sm:$0xff]
  %v7277 = vld [vmem:[%s7275 + $0x10] sm:$0xff]
  %v7278 = vld [vmem:[%s7275 + $0x20] sm:$0xff]
  %v7279 = vld [vmem:[%s7275 + $0xa0] sm:$0xff]
  %v7280 = vld [vmem:[%s7275 + $0xb0] sm:$0xff]
  %v7281 = vld [vmem:[%s7275 + $0xc0] sm:$0xff]
  %v7282 = vld [vmem:[%s7275 + $0x140] sm:$0xff]
  %v7283 = vld [vmem:[%s7275 + $0x150] sm:$0xff]
  %v7284 = vld [vmem:[%s7275 + $0x160] sm:$0xff]
  %v7285 = vpack.c.bf16 %v7277, %v7276
  %v7286 = vpack.c.bf16 %v7279, %v7278
  %v7287 = vpack.c.bf16 %v7281, %v7280
  %v7288 = vpack.c.bf16 %v7283, %v7282
  %v7289 = vpack.c.bf16 %v7284, %v7284
  %s7290 = scalar_lea.vmem %s3, 960
  %v7291 = vld [vmem:[%s7290] sm:$0xf]
  %v7292 = vld [vmem:[%s7290 + $0x4] sm:$0xf]
  %v7293 = vld [vmem:[%s7290 + $0x8] sm:$0xf]
  %v7294 = vld [vmem:[%s7290 + $0xc] sm:$0xf]
  %v7295 = vld [vmem:[%s7290 + $0x10] sm:$0xf]
  %v7296 = vld [vmem:[%s7290 + $0x14] sm:$0xf]
  %v7297 = vld [vmem:[%s7290 + $0x18] sm:$0xf]
  %v7298 = vld [vmem:[%s7290 + $0x1c] sm:$0xf]
  %v7299 = vld [vmem:[%s7290 + $0x20] sm:$0xf]
  %v7300 = vld [vmem:[%s7290 + $0x24] sm:$0xf]
  %v7301 = vld [vmem:[%s7290 + $0x28] sm:$0xf]
  %v7302 = vld [vmem:[%s7290 + $0x2c] sm:$0xf]
  %v7303 = vld [vmem:[%s7290 + $0x30] sm:$0xf]
  %v7304 = vld [vmem:[%s7290 + $0x34] sm:$0xf]
  %v7305 = vld [vmem:[%s7290 + $0x38] sm:$0xf]
  %v7306 = vld [vmem:[%s7290 + $0x3c] sm:$0xf]
  %v7323 = vunpack.c.l.b16 %v7291
  %v7324 = vunpack.c.l.b16 %v7292
  %v7325 = vunpack.c.l.b16 %v7293
  %v7326 = vunpack.c.l.b16 %v7294
  %v7327 = vunpack.c.l.b16 %v7295
  %v7328 = vunpack.c.l.b16 %v7296
  %v7329 = vunpack.c.l.b16 %v7297
  %v7330 = vunpack.c.l.b16 %v7298
  %v7331 = vunpack.c.l.b16 %v7299
  %v7332 = vunpack.c.l.b16 %v7300
  %v7333 = vunpack.c.l.b16 %v7301
  %v7334 = vunpack.c.l.b16 %v7302
  %v7335 = vunpack.c.l.b16 %v7303
  %v7336 = vunpack.c.l.b16 %v7304
  %v7337 = vunpack.c.l.b16 %v7305
  %v7338 = vunpack.c.l.b16 %v7306
  %v7339 = vpack.c.b16 %v7324, %v7323
  %v7340 = vpack.c.b16 %v7326, %v7325
  %v7341 = vpack.c.b16 %v7328, %v7327
  %v7342 = vpack.c.b16 %v7330, %v7329
  %v7343 = vpack.c.b16 %v7332, %v7331
  %v7344 = vpack.c.b16 %v7334, %v7333
  %v7345 = vpack.c.b16 %v7336, %v7335
  %v7346 = vpack.c.b16 %v7338, %v7337
  %7355 = vmatprep.subr.bf16.mxu0 0
  %7356 = vmatpush1.bf16.msra.mxu0 %v7339
  %7357 = vmatprep.subr.bf16.mxu0 0
  %7358 = vmatpush1.bf16.msra.mxu0 %v7340
  %7359 = vmatprep.subr.bf16.mxu0 0
  %7360 = vmatpush1.bf16.msra.mxu0 %v7341
  %7361 = vmatprep.subr.bf16.mxu0 0
  %7362 = vmatpush1.bf16.msra.mxu0 %v7342
  %7363 = vmatprep.subr.bf16.mxu0 0
  %7364 = vmatpush1.bf16.msra.mxu0 %v7343
  %7365 = vmatprep.subr.bf16.mxu0 0
  %7366 = vmatpush1.bf16.msra.mxu0 %v7344
  %7367 = vmatprep.subr.bf16.mxu0 0
  %7368 = vmatpush1.bf16.msra.mxu0 %v7345
  %7369 = vmatprep.subr.bf16.mxu0 0
  %7370 = vmatpush1.bf16.msra.mxu0 %v7346
  %7371 = vmatprep.subr.bf16.mxu0 0
  %7372 = vmatpush1.bf16.msra.mxu0 0
  %7373 = vmatprep.subr.bf16.mxu0 0
  %7374 = vmatpush1.bf16.msra.mxu0 0
  %7375 = vmatprep.subr.bf16.mxu0 0
  %7376 = vmatpush1.bf16.msra.mxu0 0
  %7377 = vmatprep.subr.bf16.mxu0 0
  %7378 = vmatpush1.bf16.msra.mxu0 0
  %7379 = vmatprep.subr.bf16.mxu0 0
  %7380 = vmatpush1.bf16.msra.mxu0 0
  %7381 = vmatprep.subr.bf16.mxu0 0
  %7382 = vmatpush1.bf16.msra.mxu0 0
  %7383 = vmatprep.subr.bf16.mxu0 0
  %7384 = vmatpush1.bf16.msra.mxu0 0
  %7385 = vmatprep.subr.bf16.mxu0 0
  %7386 = vmatpush1.bf16.msra.mxu0 0
  %7387 = vmatprep.mubr.bf16.mxu0 0
  %7388 = vmatmul.mubr.bf16.gmra.mrb[0].mxu0 %v7285
  %v7389 = vpop.f32.mrb[0].mxu0
  %v7390 = vadd.f32 0.0, %v7389
  %v7391 = vpop.f32.mrb[0].mxu0
  %v7392 = vpop.f32.mrb[0].mxu0
  %v7393 = vadd.f32 0.0, %v7392
  %v7394 = vpop.f32.mrb[0].mxu0
  %7395 = vmatprep.mubr.bf16.mxu0 0
  %7396 = vmatmul.mubr.bf16.gmra.mrb[0].mxu0 %v7286
  %v7397 = vpop.f32.mrb[0].mxu0
  %v7398 = vadd.f32 0.0, %v7397
  %v7399 = vpop.f32.mrb[0].mxu0
  %v7400 = vpop.f32.mrb[0].mxu0
  %v7401 = vadd.f32 0.0, %v7400
  %v7402 = vpop.f32.mrb[0].mxu0
  %7403 = vmatprep.mubr.bf16.mxu0 0
  %7404 = vmatmul.mubr.bf16.gmra.mrb[0].mxu0 %v7287
  %v7405 = vpop.f32.mrb[0].mxu0
  %v7406 = vadd.f32 0.0, %v7405
  %v7407 = vpop.f32.mrb[0].mxu0
  %v7408 = vpop.f32.mrb[0].mxu0
  %v7409 = vadd.f32 0.0, %v7408
  %v7410 = vpop.f32.mrb[0].mxu0
  %7411 = vmatprep.mubr.bf16.mxu0 0
  %7412 = vmatmul.mubr.bf16.gmra.mrb[0].mxu0 %v7288
  %v7413 = vpop.f32.mrb[0].mxu0
  %v7414 = vadd.f32 0.0, %v7413
  %v7415 = vpop.f32.mrb[0].mxu0
  %v7416 = vpop.f32.mrb[0].mxu0
  %v7417 = vadd.f32 0.0, %v7416
  %v7418 = vpop.f32.mrb[0].mxu0
  %7419 = vmatprep.mubr.bf16.mxu0 0
  %7420 = vmatmul.mubr.bf16.gmra.mrb[0].mxu0 %v7289
  %v7421 = vpop.f32.mrb[0].mxu0
  %v7422 = vadd.f32 0.0, %v7421
  %v7423 = vpop.f32.mrb[0].mxu0
  %v7424 = vpop.f32.mrb[0].mxu0
  %v7425 = vpop.f32.mrb[0].mxu0
  %7426 = vdwg.mxu0
  %v7427 = vadd.f32 %v7266, %v7390
  %v7428 = vadd.f32 %v7267, %v7393
  %v7429 = vadd.f32 %v7268, %v7398
  %v7430 = vadd.f32 %v7269, %v7401
  %v7431 = vadd.f32 %v7270, %v7406
  %v7432 = vadd.f32 %v7271, %v7409
  %v7433 = vadd.f32 %v7272, %v7414
  %v7434 = vadd.f32 %v7273, %v7417
  %v7435 = vadd.f32 %v7274, %v7422
  %v7436 = vld [vmem:[%s2183] sm:$0xff]
  %v7437 = vld [vmem:[%s2183 + $0x10] sm:$0xff]
  %v7438 = vld [vmem:[%s2183 + $0x20] sm:$0xff]
  %v7439 = vld [vmem:[%s2183 + $0xa0] sm:$0xff]
  %v7440 = vld [vmem:[%s2183 + $0xb0] sm:$0xff]
  %v7441 = vld [vmem:[%s2183 + $0xc0] sm:$0xff]
  %v7442 = vld [vmem:[%s2183 + $0x140] sm:$0xff]
  %v7443 = vld [vmem:[%s2183 + $0x150] sm:$0xff]
  %v7444 = vld [vmem:[%s2183 + $0x160] sm:$0xff]
  %v7445 = vpack.c.bf16 %v7437, %v7436
  %v7446 = vpack.c.bf16 %v7439, %v7438
  %v7447 = vpack.c.bf16 %v7441, %v7440
  %v7448 = vpack.c.bf16 %v7443, %v7442
  %v7449 = vpack.c.bf16 %v7444, %v7444
  %s7450 = scalar_lea.vmem %s3, 1024
  %v7451 = vld [vmem:[%s7450] sm:$0xf]
  %v7452 = vld [vmem:[%s7450 + $0x4] sm:$0xf]
  %v7453 = vld [vmem:[%s7450 + $0x8] sm:$0xf]
  %v7454 = vld [vmem:[%s7450 + $0xc] sm:$0xf]
  %v7455 = vld [vmem:[%s7450 + $0x10] sm:$0xf]
  %v7456 = vld [vmem:[%s7450 + $0x14] sm:$0xf]
  %v7457 = vld [vmem:[%s7450 + $0x18] sm:$0xf]
  %v7458 = vld [vmem:[%s7450 + $0x1c] sm:$0xf]
  %v7459 = vld [vmem:[%s7450 + $0x20] sm:$0xf]
  %v7460 = vld [vmem:[%s7450 + $0x24] sm:$0xf]
  %v7461 = vld [vmem:[%s7450 + $0x28] sm:$0xf]
  %v7462 = vld [vmem:[%s7450 + $0x2c] sm:$0xf]
  %v7463 = vld [vmem:[%s7450 + $0x30] sm:$0xf]
  %v7464 = vld [vmem:[%s7450 + $0x34] sm:$0xf]
  %v7465 = vld [vmem:[%s7450 + $0x38] sm:$0xf]
  %v7466 = vld [vmem:[%s7450 + $0x3c] sm:$0xf]
  %v7483 = vunpack.c.l.b16 %v7451
  %v7484 = vunpack.c.l.b16 %v7452
  %v7485 = vunpack.c.l.b16 %v7453
  %v7486 = vunpack.c.l.b16 %v7454
  %v7487 = vunpack.c.l.b16 %v7455
  %v7488 = vunpack.c.l.b16 %v7456
  %v7489 = vunpack.c.l.b16 %v7457
  %v7490 = vunpack.c.l.b16 %v7458
  %v7491 = vunpack.c.l.b16 %v7459
  %v7492 = vunpack.c.l.b16 %v7460
  %v7493 = vunpack.c.l.b16 %v7461
  %v7494 = vunpack.c.l.b16 %v7462
  %v7495 = vunpack.c.l.b16 %v7463
  %v7496 = vunpack.c.l.b16 %v7464
  %v7497 = vunpack.c.l.b16 %v7465
  %v7498 = vunpack.c.l.b16 %v7466
  %v7499 = vpack.c.b16 %v7484, %v7483
  %v7500 = vpack.c.b16 %v7486, %v7485
  %v7501 = vpack.c.b16 %v7488, %v7487
  %v7502 = vpack.c.b16 %v7490, %v7489
  %v7503 = vpack.c.b16 %v7492, %v7491
  %v7504 = vpack.c.b16 %v7494, %v7493
  %v7505 = vpack.c.b16 %v7496, %v7495
  %v7506 = vpack.c.b16 %v7498, %v7497
  %7515 = vmatprep.subr.bf16.mxu0 0
  %7516 = vmatpush1.bf16.msra.mxu0 %v7499
  %7517 = vmatprep.subr.bf16.mxu0 0
  %7518 = vmatpush1.bf16.msra.mxu0 %v7500
  %7519 = vmatprep.subr.bf16.mxu0 0
  %7520 = vmatpush1.bf16.msra.mxu0 %v7501
  %7521 = vmatprep.subr.bf16.mxu0 0
  %7522 = vmatpush1.bf16.msra.mxu0 %v7502
  %7523 = vmatprep.subr.bf16.mxu0 0
  %7524 = vmatpush1.bf16.msra.mxu0 %v7503
  %7525 = vmatprep.subr.bf16.mxu0 0
  %7526 = vmatpush1.bf16.msra.mxu0 %v7504
  %7527 = vmatprep.subr.bf16.mxu0 0
  %7528 = vmatpush1.bf16.msra.mxu0 %v7505
  %7529 = vmatprep.subr.bf16.mxu0 0
  %7530 = vmatpush1.bf16.msra.mxu0 %v7506
  %7531 = vmatprep.subr.bf16.mxu0 0
  %7532 = vmatpush1.bf16.msra.mxu0 0
  %7533 = vmatprep.subr.bf16.mxu0 0
  %7534 = vmatpush1.bf16.msra.mxu0 0
  %7535 = vmatprep.subr.bf16.mxu0 0
  %7536 = vmatpush1.bf16.msra.mxu0 0
  %7537 = vmatprep.subr.bf16.mxu0 0
  %7538 = vmatpush1.bf16.msra.mxu0 0
  %7539 = vmatprep.subr.bf16.mxu0 0
  %7540 = vmatpush1.bf16.msra.mxu0 0
  %7541 = vmatprep.subr.bf16.mxu0 0
  %7542 = vmatpush1.bf16.msra.mxu0 0
  %7543 = vmatprep.subr.bf16.mxu0 0
  %7544 = vmatpush1.bf16.msra.mxu0 0
  %7545 = vmatprep.subr.bf16.mxu0 0
  %7546 = vmatpush1.bf16.msra.mxu0 0
  %7547 = vmatprep.mubr.bf16.mxu0 0
  %7548 = vmatmul.mubr.bf16.gmra.mrb[0].mxu0 %v7445
  %v7549 = vpop.f32.mrb[0].mxu0
  %v7550 = vadd.f32 0.0, %v7549
  %v7551 = vpop.f32.mrb[0].mxu0
  %v7552 = vpop.f32.mrb[0].mxu0
  %v7553 = vadd.f32 0.0, %v7552
  %v7554 = vpop.f32.mrb[0].mxu0
  %7555 = vmatprep.mubr.bf16.mxu0 0
  %7556 = vmatmul.mubr.bf16.gmra.mrb[0].mxu0 %v7446
  %v7557 = vpop.f32.mrb[0].mxu0
  %v7558 = vadd.f32 0.0, %v7557
  %v7559 = vpop.f32.mrb[0].mxu0
  %v7560 = vpop.f32.mrb[0].mxu0
  %v7561 = vadd.f32 0.0, %v7560
  %v7562 = vpop.f32.mrb[0].mxu0
  %7563 = vmatprep.mubr.bf16.mxu0 0
  %7564 = vmatmul.mubr.bf16.gmra.mrb[0].mxu0 %v7447
  %v7565 = vpop.f32.mrb[0].mxu0
  %v7566 = vadd.f32 0.0, %v7565
  %v7567 = vpop.f32.mrb[0].mxu0
  %v7568 = vpop.f32.mrb[0].mxu0
  %v7569 = vadd.f32 0.0, %v7568
  %v7570 = vpop.f32.mrb[0].mxu0
  %7571 = vmatprep.mubr.bf16.mxu0 0
  %7572 = vmatmul.mubr.bf16.gmra.mrb[0].mxu0 %v7448
  %v7573 = vpop.f32.mrb[0].mxu0
  %v7574 = vadd.f32 0.0, %v7573
  %v7575 = vpop.f32.mrb[0].mxu0
  %v7576 = vpop.f32.mrb[0].mxu0
  %v7577 = vadd.f32 0.0, %v7576
  %v7578 = vpop.f32.mrb[0].mxu0
  %7579 = vmatprep.mubr.bf16.mxu0 0
  %7580 = vmatmul.mubr.bf16.gmra.mrb[0].mxu0 %v7449
  %v7581 = vpop.f32.mrb[0].mxu0
  %v7582 = vadd.f32 0.0, %v7581
  %v7583 = vpop.f32.mrb[0].mxu0
  %v7584 = vpop.f32.mrb[0].mxu0
  %v7585 = vpop.f32.mrb[0].mxu0
  %7586 = vdwg.mxu0
  %v7587 = vadd.f32 %v7427, %v7550
  %v7588 = vadd.f32 %v7428, %v7553
  %v7589 = vadd.f32 %v7429, %v7558
  %v7590 = vadd.f32 %v7430, %v7561
  %v7591 = vadd.f32 %v7431, %v7566
  %v7592 = vadd.f32 %v7432, %v7569
  %v7593 = vadd.f32 %v7433, %v7574
  %v7594 = vadd.f32 %v7434, %v7577
  %v7595 = vadd.f32 %v7435, %v7582
  %s7596 = scalar_lea.vmem [#allocation2], 256
  %v7597 = vld [vmem:[%s7596] sm:$0xff]
  %v7598 = vld [vmem:[%s7596 + $0x10] sm:$0xff]
  %v7599 = vld [vmem:[%s7596 + $0x20] sm:$0xff]
  %v7600 = vld [vmem:[%s7596 + $0xa0] sm:$0xff]
  %v7601 = vld [vmem:[%s7596 + $0xb0] sm:$0xff]
  %v7602 = vld [vmem:[%s7596 + $0xc0] sm:$0xff]
  %v7603 = vld [vmem:[%s7596 + $0x140] sm:$0xff]
  %v7604 = vld [vmem:[%s7596 + $0x150] sm:$0xff]
  %v7605 = vld [vmem:[%s7596 + $0x160] sm:$0xff]
  %v7606 = vpack.c.bf16 %v7598, %v7597
  %v7607 = vpack.c.bf16 %v7600, %v7599
  %v7608 = vpack.c.bf16 %v7602, %v7601
  %v7609 = vpack.c.bf16 %v7604, %v7603
  %v7610 = vpack.c.bf16 %v7605, %v7605
  %s7611 = scalar_lea.vmem %s3, 1088
  %v7612 = vld [vmem:[%s7611] sm:$0xf]
  %v7613 = vld [vmem:[%s7611 + $0x4] sm:$0xf]
  %v7614 = vld [vmem:[%s7611 + $0x8] sm:$0xf]
  %v7615 = vld [vmem:[%s7611 + $0xc] sm:$0xf]
  %v7616 = vld [vmem:[%s7611 + $0x10] sm:$0xf]
  %v7617 = vld [vmem:[%s7611 + $0x14] sm:$0xf]
  %v7618 = vld [vmem:[%s7611 + $0x18] sm:$0xf]
  %v7619 = vld [vmem:[%s7611 + $0x1c] sm:$0xf]
  %v7620 = vld [vmem:[%s7611 + $0x20] sm:$0xf]
  %v7621 = vld [vmem:[%s7611 + $0x24] sm:$0xf]
  %v7622 = vld [vmem:[%s7611 + $0x28] sm:$0xf]
  %v7623 = vld [vmem:[%s7611 + $0x2c] sm:$0xf]
  %v7624 = vld [vmem:[%s7611 + $0x30] sm:$0xf]
  %v7625 = vld [vmem:[%s7611 + $0x34] sm:$0xf]
  %v7626 = vld [vmem:[%s7611 + $0x38] sm:$0xf]
  %v7627 = vld [vmem:[%s7611 + $0x3c] sm:$0xf]
  %v7644 = vunpack.c.l.b16 %v7612
  %v7645 = vunpack.c.l.b16 %v7613
  %v7646 = vunpack.c.l.b16 %v7614
  %v7647 = vunpack.c.l.b16 %v7615
  %v7648 = vunpack.c.l.b16 %v7616
  %v7649 = vunpack.c.l.b16 %v7617
  %v7650 = vunpack.c.l.b16 %v7618
  %v7651 = vunpack.c.l.b16 %v7619
  %v7652 = vunpack.c.l.b16 %v7620
  %v7653 = vunpack.c.l.b16 %v7621
  %v7654 = vunpack.c.l.b16 %v7622
  %v7655 = vunpack.c.l.b16 %v7623
  %v7656 = vunpack.c.l.b16 %v7624
  %v7657 = vunpack.c.l.b16 %v7625
  %v7658 = vunpack.c.l.b16 %v7626
  %v7659 = vunpack.c.l.b16 %v7627
  %v7660 = vpack.c.b16 %v7645, %v7644
  %v7661 = vpack.c.b16 %v7647, %v7646
  %v7662 = vpack.c.b16 %v7649, %v7648
  %v7663 = vpack.c.b16 %v7651, %v7650
  %v7664 = vpack.c.b16 %v7653, %v7652
  %v7665 = vpack.c.b16 %v7655, %v7654
  %v7666 = vpack.c.b16 %v7657, %v7656
  %v7667 = vpack.c.b16 %v7659, %v7658
  %7676 = vmatprep.subr.bf16.mxu0 0
  %7677 = vmatpush1.bf16.msra.mxu0 %v7660
  %7678 = vmatprep.subr.bf16.mxu0 0
  %7679 = vmatpush1.bf16.msra.mxu0 %v7661
  %7680 = vmatprep.subr.bf16.mxu0 0
  %7681 = vmatpush1.bf16.msra.mxu0 %v7662
  %7682 = vmatprep.subr.bf16.mxu0 0
  %7683 = vmatpush1.bf16.msra.mxu0 %v7663
  %7684 = vmatprep.subr.bf16.mxu0 0
  %7685 = vmatpush1.bf16.msra.mxu0 %v7664
  %7686 = vmatprep.subr.bf16.mxu0 0
  %7687 = vmatpush1.bf16.msra.mxu0 %v7665
  %7688 = vmatprep.subr.bf16.mxu0 0
  %7689 = vmatpush1.bf16.msra.mxu0 %v7666
  %7690 = vmatprep.subr.bf16.mxu0 0
  %7691 = vmatpush1.bf16.msra.mxu0 %v7667
  %7692 = vmatprep.subr.bf16.mxu0 0
  %7693 = vmatpush1.bf16.msra.mxu0 0
  %7694 = vmatprep.subr.bf16.mxu0 0
  %7695 = vmatpush1.bf16.msra.mxu0 0
  %7696 = vmatprep.subr.bf16.mxu0 0
  %7697 = vmatpush1.bf16.msra.mxu0 0
  %7698 = vmatprep.subr.bf16.mxu0 0
  %7699 = vmatpush1.bf16.msra.mxu0 0
  %7700 = vmatprep.subr.bf16.mxu0 0
  %7701 = vmatpush1.bf16.msra.mxu0 0
  %7702 = vmatprep.subr.bf16.mxu0 0
  %7703 = vmatpush1.bf16.msra.mxu0 0
  %7704 = vmatprep.subr.bf16.mxu0 0
  %7705 = vmatpush1.bf16.msra.mxu0 0
  %7706 = vmatprep.subr.bf16.mxu0 0
  %7707 = vmatpush1.bf16.msra.mxu0 0
  %7708 = vmatprep.mubr.bf16.mxu0 0
  %7709 = vmatmul.mubr.bf16.gmra.mrb[0].mxu0 %v7606
  %v7710 = vpop.f32.mrb[0].mxu0
  %v7711 = vadd.f32 0.0, %v7710
  %v7712 = vpop.f32.mrb[0].mxu0
  %v7713 = vpop.f32.mrb[0].mxu0
  %v7714 = vadd.f32 0.0, %v7713
  %v7715 = vpop.f32.mrb[0].mxu0
  %7716 = vmatprep.mubr.bf16.mxu0 0
  %7717 = vmatmul.mubr.bf16.gmra.mrb[0].mxu0 %v7607
  %v7718 = vpop.f32.mrb[0].mxu0
  %v7719 = vadd.f32 0.0, %v7718
  %v7720 = vpop.f32.mrb[0].mxu0
  %v7721 = vpop.f32.mrb[0].mxu0
  %v7722 = vadd.f32 0.0, %v7721
  %v7723 = vpop.f32.mrb[0].mxu0
  %7724 = vmatprep.mubr.bf16.mxu0 0
  %7725 = vmatmul.mubr.bf16.gmra.mrb[0].mxu0 %v7608
  %v7726 = vpop.f32.mrb[0].mxu0
  %v7727 = vadd.f32 0.0, %v7726
  %v7728 = vpop.f32.mrb[0].mxu0
  %v7729 = vpop.f32.mrb[0].mxu0
  %v7730 = vadd.f32 0.0, %v7729
  %v7731 = vpop.f32.mrb[0].mxu0
  %7732 = vmatprep.mubr.bf16.mxu0 0
  %7733 = vmatmul.mubr.bf16.gmra.mrb[0].mxu0 %v7609
  %v7734 = vpop.f32.mrb[0].mxu0
  %v7735 = vadd.f32 0.0, %v7734
  %v7736 = vpop.f32.mrb[0].mxu0
  %v7737 = vpop.f32.mrb[0].mxu0
  %v7738 = vadd.f32 0.0, %v7737
  %v7739 = vpop.f32.mrb[0].mxu0
  %7740 = vmatprep.mubr.bf16.mxu0 0
  %7741 = vmatmul.mubr.bf16.gmra.mrb[0].mxu0 %v7610
  %v7742 = vpop.f32.mrb[0].mxu0
  %v7743 = vadd.f32 0.0, %v7742
  %v7744 = vpop.f32.mrb[0].mxu0
  %v7745 = vpop.f32.mrb[0].mxu0
  %v7746 = vpop.f32.mrb[0].mxu0
  %7747 = vdwg.mxu0
  %v7748 = vadd.f32 %v7587, %v7711
  %v7749 = vadd.f32 %v7588, %v7714
  %v7750 = vadd.f32 %v7589, %v7719
  %v7751 = vadd.f32 %v7590, %v7722
  %v7752 = vadd.f32 %v7591, %v7727
  %v7753 = vadd.f32 %v7592, %v7730
  %v7754 = vadd.f32 %v7593, %v7735
  %v7755 = vadd.f32 %v7594, %v7738
  %v7756 = vadd.f32 %v7595, %v7743
  %s7757 = scalar_lea.vmem [#allocation2], 264
  %v7758 = vld [vmem:[%s7757] sm:$0xff]
  %v7759 = vld [vmem:[%s7757 + $0x10] sm:$0xff]
  %v7760 = vld [vmem:[%s7757 + $0x20] sm:$0xff]
  %v7761 = vld [vmem:[%s7757 + $0xa0] sm:$0xff]
  %v7762 = vld [vmem:[%s7757 + $0xb0] sm:$0xff]
  %v7763 = vld [vmem:[%s7757 + $0xc0] sm:$0xff]
  %v7764 = vld [vmem:[%s7757 + $0x140] sm:$0xff]
  %v7765 = vld [vmem:[%s7757 + $0x150] sm:$0xff]
  %v7766 = vld [vmem:[%s7757 + $0x160] sm:$0xff]
  %v7767 = vpack.c.bf16 %v7759, %v7758
  %v7768 = vpack.c.bf16 %v7761, %v7760
  %v7769 = vpack.c.bf16 %v7763, %v7762
  %v7770 = vpack.c.bf16 %v7765, %v7764
  %v7771 = vpack.c.bf16 %v7766, %v7766
  %s7772 = scalar_lea.vmem %s3, 1152
  %v7773 = vld [vmem:[%s7772] sm:$0xf]
  %v7774 = vld [vmem:[%s7772 + $0x4] sm:$0xf]
  %v7775 = vld [vmem:[%s7772 + $0x8] sm:$0xf]
  %v7776 = vld [vmem:[%s7772 + $0xc] sm:$0xf]
  %v7777 = vld [vmem:[%s7772 + $0x10] sm:$0xf]
  %v7778 = vld [vmem:[%s7772 + $0x14] sm:$0xf]
  %v7779 = vld [vmem:[%s7772 + $0x18] sm:$0xf]
  %v7780 = vld [vmem:[%s7772 + $0x1c] sm:$0xf]
  %v7781 = vld [vmem:[%s7772 + $0x20] sm:$0xf]
  %v7782 = vld [vmem:[%s7772 + $0x24] sm:$0xf]
  %v7783 = vld [vmem:[%s7772 + $0x28] sm:$0xf]
  %v7784 = vld [vmem:[%s7772 + $0x2c] sm:$0xf]
  %v7785 = vld [vmem:[%s7772 + $0x30] sm:$0xf]
  %v7786 = vld [vmem:[%s7772 + $0x34] sm:$0xf]
  %v7787 = vld [vmem:[%s7772 + $0x38] sm:$0xf]
  %v7788 = vld [vmem:[%s7772 + $0x3c] sm:$0xf]
  %v7805 = vunpack.c.l.b16 %v7773
  %v7806 = vunpack.c.l.b16 %v7774
  %v7807 = vunpack.c.l.b16 %v7775
  %v7808 = vunpack.c.l.b16 %v7776
  %v7809 = vunpack.c.l.b16 %v7777
  %v7810 = vunpack.c.l.b16 %v7778
  %v7811 = vunpack.c.l.b16 %v7779
  %v7812 = vunpack.c.l.b16 %v7780
  %v7813 = vunpack.c.l.b16 %v7781
  %v7814 = vunpack.c.l.b16 %v7782
  %v7815 = vunpack.c.l.b16 %v7783
  %v7816 = vunpack.c.l.b16 %v7784
  %v7817 = vunpack.c.l.b16 %v7785
  %v7818 = vunpack.c.l.b16 %v7786
  %v7819 = vunpack.c.l.b16 %v7787
  %v7820 = vunpack.c.l.b16 %v7788
  %v7821 = vpack.c.b16 %v7806, %v7805
  %v7822 = vpack.c.b16 %v7808, %v7807
  %v7823 = vpack.c.b16 %v7810, %v7809
  %v7824 = vpack.c.b16 %v7812, %v7811
  %v7825 = vpack.c.b16 %v7814, %v7813
  %v7826 = vpack.c.b16 %v7816, %v7815
  %v7827 = vpack.c.b16 %v7818, %v7817
  %v7828 = vpack.c.b16 %v7820, %v7819
  %7837 = vmatprep.subr.bf16.mxu0 0
  %7838 = vmatpush1.bf16.msra.mxu0 %v7821
  %7839 = vmatprep.subr.bf16.mxu0 0
  %7840 = vmatpush1.bf16.msra.mxu0 %v7822
  %7841 = vmatprep.subr.bf16.mxu0 0
  %7842 = vmatpush1.bf16.msra.mxu0 %v7823
  %7843 = vmatprep.subr.bf16.mxu0 0
  %7844 = vmatpush1.bf16.msra.mxu0 %v7824
  %7845 = vmatprep.subr.bf16.mxu0 0
  %7846 = vmatpush1.bf16.msra.mxu0 %v7825
  %7847 = vmatprep.subr.bf16.mxu0 0
  %7848 = vmatpush1.bf16.msra.mxu0 %v7826
  %7849 = vmatprep.subr.bf16.mxu0 0
  %7850 = vmatpush1.bf16.msra.mxu0 %v7827
  %7851 = vmatprep.subr.bf16.mxu0 0
  %7852 = vmatpush1.bf16.msra.mxu0 %v7828
  %7853 = vmatprep.subr.bf16.mxu0 0
  %7854 = vmatpush1.bf16.msra.mxu0 0
  %7855 = vmatprep.subr.bf16.mxu0 0
  %7856 = vmatpush1.bf16.msra.mxu0 0
  %7857 = vmatprep.subr.bf16.mxu0 0
  %7858 = vmatpush1.bf16.msra.mxu0 0
  %7859 = vmatprep.subr.bf16.mxu0 0
  %7860 = vmatpush1.bf16.msra.mxu0 0
  %7861 = vmatprep.subr.bf16.mxu0 0
  %7862 = vmatpush1.bf16.msra.mxu0 0
  %7863 = vmatprep.subr.bf16.mxu0 0
  %7864 = vmatpush1.bf16.msra.mxu0 0
  %7865 = vmatprep.subr.bf16.mxu0 0
  %7866 = vmatpush1.bf16.msra.mxu0 0
  %7867 = vmatprep.subr.bf16.mxu0 0
  %7868 = vmatpush1.bf16.msra.mxu0 0
  %7869 = vmatprep.mubr.bf16.mxu0 0
  %7870 = vmatmul.mubr.bf16.gmra.mrb[0].mxu0 %v7767
  %v7871 = vpop.f32.mrb[0].mxu0
  %v7872 = vadd.f32 0.0, %v7871
  %v7873 = vpop.f32.mrb[0].mxu0
  %v7874 = vpop.f32.mrb[0].mxu0
  %v7875 = vadd.f32 0.0, %v7874
  %v7876 = vpop.f32.mrb[0].mxu0
  %7877 = vmatprep.mubr.bf16.mxu0 0
  %7878 = vmatmul.mubr.bf16.gmra.mrb[0].mxu0 %v7768
  %v7879 = vpop.f32.mrb[0].mxu0
  %v7880 = vadd.f32 0.0, %v7879
  %v7881 = vpop.f32.mrb[0].mxu0
  %v7882 = vpop.f32.mrb[0].mxu0
  %v7883 = vadd.f32 0.0, %v7882
  %v7884 = vpop.f32.mrb[0].mxu0
  %7885 = vmatprep.mubr.bf16.mxu0 0
  %7886 = vmatmul.mubr.bf16.gmra.mrb[0].mxu0 %v7769
  %v7887 = vpop.f32.mrb[0].mxu0
  %v7888 = vadd.f32 0.0, %v7887
  %v7889 = vpop.f32.mrb[0].mxu0
  %v7890 = vpop.f32.mrb[0].mxu0
  %v7891 = vadd.f32 0.0, %v7890
  %v7892 = vpop.f32.mrb[0].mxu0
  %7893 = vmatprep.mubr.bf16.mxu0 0
  %7894 = vmatmul.mubr.bf16.gmra.mrb[0].mxu0 %v7770
  %v7895 = vpop.f32.mrb[0].mxu0
  %v7896 = vadd.f32 0.0, %v7895
  %v7897 = vpop.f32.mrb[0].mxu0
  %v7898 = vpop.f32.mrb[0].mxu0
  %v7899 = vadd.f32 0.0, %v7898
  %v7900 = vpop.f32.mrb[0].mxu0
  %7901 = vmatprep.mubr.bf16.mxu0 0
  %7902 = vmatmul.mubr.bf16.gmra.mrb[0].mxu0 %v7771
  %v7903 = vpop.f32.mrb[0].mxu0
  %v7904 = vadd.f32 0.0, %v7903
  %v7905 = vpop.f32.mrb[0].mxu0
  %v7906 = vpop.f32.mrb[0].mxu0
  %v7907 = vpop.f32.mrb[0].mxu0
  %7908 = vdwg.mxu0
  %v7909 = vadd.f32 %v7748, %v7872
  %v7910 = vadd.f32 %v7749, %v7875
  %v7911 = vadd.f32 %v7750, %v7880
  %v7912 = vadd.f32 %v7751, %v7883
  %v7913 = vadd.f32 %v7752, %v7888
  %v7914 = vadd.f32 %v7753, %v7891
  %v7915 = vadd.f32 %v7754, %v7896
  %v7916 = vadd.f32 %v7755, %v7899
  %v7917 = vadd.f32 %v7756, %v7904
  %s7918 = scalar_lea.vmem [#allocation2], 272
  %v7919 = vld [vmem:[%s7918] sm:$0xff]
  %v7920 = vld [vmem:[%s7918 + $0x10] sm:$0xff]
  %v7921 = vld [vmem:[%s7918 + $0x20] sm:$0xff]
  %v7922 = vld [vmem:[%s7918 + $0xa0] sm:$0xff]
  %v7923 = vld [vmem:[%s7918 + $0xb0] sm:$0xff]
  %v7924 = vld [vmem:[%s7918 + $0xc0] sm:$0xff]
  %v7925 = vld [vmem:[%s7918 + $0x140] sm:$0xff]
  %v7926 = vld [vmem:[%s7918 + $0x150] sm:$0xff]
  %v7927 = vld [vmem:[%s7918 + $0x160] sm:$0xff]
  %v7928 = vpack.c.bf16 %v7920, %v7919
  %v7929 = vpack.c.bf16 %v7922, %v7921
  %v7930 = vpack.c.bf16 %v7924, %v7923
  %v7931 = vpack.c.bf16 %v7926, %v7925
  %v7932 = vpack.c.bf16 %v7927, %v7927
  %s7933 = scalar_lea.vmem %s3, 1216
  %v7934 = vld [vmem:[%s7933] sm:$0xf]
  %v7935 = vld [vmem:[%s7933 + $0x4] sm:$0xf]
  %v7936 = vld [vmem:[%s7933 + $0x8] sm:$0xf]
  %v7937 = vld [vmem:[%s7933 + $0xc] sm:$0xf]
  %v7938 = vld [vmem:[%s7933 + $0x10] sm:$0xf]
  %v7939 = vld [vmem:[%s7933 + $0x14] sm:$0xf]
  %v7940 = vld [vmem:[%s7933 + $0x18] sm:$0xf]
  %v7941 = vld [vmem:[%s7933 + $0x1c] sm:$0xf]
  %v7942 = vld [vmem:[%s7933 + $0x20] sm:$0xf]
  %v7943 = vld [vmem:[%s7933 + $0x24] sm:$0xf]
  %v7944 = vld [vmem:[%s7933 + $0x28] sm:$0xf]
  %v7945 = vld [vmem:[%s7933 + $0x2c] sm:$0xf]
  %v7946 = vld [vmem:[%s7933 + $0x30] sm:$0xf]
  %v7947 = vld [vmem:[%s7933 + $0x34] sm:$0xf]
  %v7948 = vld [vmem:[%s7933 + $0x38] sm:$0xf]
  %v7949 = vld [vmem:[%s7933 + $0x3c] sm:$0xf]
  %v7966 = vunpack.c.l.b16 %v7934
  %v7967 = vunpack.c.l.b16 %v7935
  %v7968 = vunpack.c.l.b16 %v7936
  %v7969 = vunpack.c.l.b16 %v7937
  %v7970 = vunpack.c.l.b16 %v7938
  %v7971 = vunpack.c.l.b16 %v7939
  %v7972 = vunpack.c.l.b16 %v7940
  %v7973 = vunpack.c.l.b16 %v7941
  %v7974 = vunpack.c.l.b16 %v7942
  %v7975 = vunpack.c.l.b16 %v7943
  %v7976 = vunpack.c.l.b16 %v7944
  %v7977 = vunpack.c.l.b16 %v7945
  %v7978 = vunpack.c.l.b16 %v7946
  %v7979 = vunpack.c.l.b16 %v7947
  %v7980 = vunpack.c.l.b16 %v7948
  %v7981 = vunpack.c.l.b16 %v7949
  %v7982 = vpack.c.b16 %v7967, %v7966
  %v7983 = vpack.c.b16 %v7969, %v7968
  %v7984 = vpack.c.b16 %v7971, %v7970
  %v7985 = vpack.c.b16 %v7973, %v7972
  %v7986 = vpack.c.b16 %v7975, %v7974
  %v7987 = vpack.c.b16 %v7977, %v7976
  %v7988 = vpack.c.b16 %v7979, %v7978
  %v7989 = vpack.c.b16 %v7981, %v7980
  %7998 = vmatprep.subr.bf16.mxu0 0
  %7999 = vmatpush1.bf16.msra.mxu0 %v7982
  %8000 = vmatprep.subr.bf16.mxu0 0
  %8001 = vmatpush1.bf16.msra.mxu0 %v7983
  %8002 = vmatprep.subr.bf16.mxu0 0
  %8003 = vmatpush1.bf16.msra.mxu0 %v7984
  %8004 = vmatprep.subr.bf16.mxu0 0
  %8005 = vmatpush1.bf16.msra.mxu0 %v7985
  %8006 = vmatprep.subr.bf16.mxu0 0
  %8007 = vmatpush1.bf16.msra.mxu0 %v7986
  %8008 = vmatprep.subr.bf16.mxu0 0
  %8009 = vmatpush1.bf16.msra.mxu0 %v7987
  %8010 = vmatprep.subr.bf16.mxu0 0
  %8011 = vmatpush1.bf16.msra.mxu0 %v7988
  %8012 = vmatprep.subr.bf16.mxu0 0
  %8013 = vmatpush1.bf16.msra.mxu0 %v7989
  %8014 = vmatprep.subr.bf16.mxu0 0
  %8015 = vmatpush1.bf16.msra.mxu0 0
  %8016 = vmatprep.subr.bf16.mxu0 0
  %8017 = vmatpush1.bf16.msra.mxu0 0
  %8018 = vmatprep.subr.bf16.mxu0 0
  %8019 = vmatpush1.bf16.msra.mxu0 0
  %8020 = vmatprep.subr.bf16.mxu0 0
  %8021 = vmatpush1.bf16.msra.mxu0 0
  %8022 = vmatprep.subr.bf16.mxu0 0
  %8023 = vmatpush1.bf16.msra.mxu0 0
  %8024 = vmatprep.subr.bf16.mxu0 0
  %8025 = vmatpush1.bf16.msra.mxu0 0
  %8026 = vmatprep.subr.bf16.mxu0 0
  %8027 = vmatpush1.bf16.msra.mxu0 0
  %8028 = vmatprep.subr.bf16.mxu0 0
  %8029 = vmatpush1.bf16.msra.mxu0 0
  %8030 = vmatprep.mubr.bf16.mxu0 0
  %8031 = vmatmul.mubr.bf16.gmra.mrb[0].mxu0 %v7928
  %v8032 = vpop.f32.mrb[0].mxu0
  %v8033 = vadd.f32 0.0, %v8032
  %v8034 = vpop.f32.mrb[0].mxu0
  %v8035 = vpop.f32.mrb[0].mxu0
  %v8036 = vadd.f32 0.0, %v8035
  %v8037 = vpop.f32.mrb[0].mxu0
  %8038 = vmatprep.mubr.bf16.mxu0 0
  %8039 = vmatmul.mubr.bf16.gmra.mrb[0].mxu0 %v7929
  %v8040 = vpop.f32.mrb[0].mxu0
  %v8041 = vadd.f32 0.0, %v8040
  %v8042 = vpop.f32.mrb[0].mxu0
  %v8043 = vpop.f32.mrb[0].mxu0
  %v8044 = vadd.f32 0.0, %v8043
  %v8045 = vpop.f32.mrb[0].mxu0
  %8046 = vmatprep.mubr.bf16.mxu0 0
  %8047 = vmatmul.mubr.bf16.gmra.mrb[0].mxu0 %v7930
  %v8048 = vpop.f32.mrb[0].mxu0
  %v8049 = vadd.f32 0.0, %v8048
  %v8050 = vpop.f32.mrb[0].mxu0
  %v8051 = vpop.f32.mrb[0].mxu0
  %v8052 = vadd.f32 0.0, %v8051
  %v8053 = vpop.f32.mrb[0].mxu0
  %8054 = vmatprep.mubr.bf16.mxu0 0
  %8055 = vmatmul.mubr.bf16.gmra.mrb[0].mxu0 %v7931
  %v8056 = vpop.f32.mrb[0].mxu0
  %v8057 = vadd.f32 0.0, %v8056
  %v8058 = vpop.f32.mrb[0].mxu0
  %v8059 = vpop.f32.mrb[0].mxu0
  %v8060 = vadd.f32 0.0, %v8059
  %v8061 = vpop.f32.mrb[0].mxu0
  %8062 = vmatprep.mubr.bf16.mxu0 0
  %8063 = vmatmul.mubr.bf16.gmra.mrb[0].mxu0 %v7932
  %v8064 = vpop.f32.mrb[0].mxu0
  %v8065 = vadd.f32 0.0, %v8064
  %v8066 = vpop.f32.mrb[0].mxu0
  %v8067 = vpop.f32.mrb[0].mxu0
  %v8068 = vpop.f32.mrb[0].mxu0
  %8069 = vdwg.mxu0
  %v8070 = vadd.f32 %v7909, %v8033
  %v8071 = vadd.f32 %v7910, %v8036
  %v8072 = vadd.f32 %v7911, %v8041
  %v8073 = vadd.f32 %v7912, %v8044
  %v8074 = vadd.f32 %v7913, %v8049
  %v8075 = vadd.f32 %v7914, %v8052
  %v8076 = vadd.f32 %v7915, %v8057
  %v8077 = vadd.f32 %v7916, %v8060
  %v8078 = vadd.f32 %v7917, %v8065
  %s8079 = scalar_lea.vmem [#allocation2], 320
  %v8080 = vld [vmem:[%s8079] sm:$0xff]
  %v8081 = vld [vmem:[%s8079 + $0x10] sm:$0xff]
  %v8082 = vld [vmem:[%s8079 + $0x20] sm:$0xff]
  %v8083 = vld [vmem:[%s8079 + $0xa0] sm:$0xff]
  %v8084 = vld [vmem:[%s8079 + $0xb0] sm:$0xff]
  %v8085 = vld [vmem:[%s8079 + $0xc0] sm:$0xff]
  %v8086 = vld [vmem:[%s8079 + $0x140] sm:$0xff]
  %v8087 = vld [vmem:[%s8079 + $0x150] sm:$0xff]
  %v8088 = vld [vmem:[%s8079 + $0x160] sm:$0xff]
  %v8089 = vpack.c.bf16 %v8081, %v8080
  %v8090 = vpack.c.bf16 %v8083, %v8082
  %v8091 = vpack.c.bf16 %v8085, %v8084
  %v8092 = vpack.c.bf16 %v8087, %v8086
  %v8093 = vpack.c.bf16 %v8088, %v8088
  %s8094 = scalar_lea.vmem %s3, 1280
  %v8095 = vld [vmem:[%s8094] sm:$0xf]
  %v8096 = vld [vmem:[%s8094 + $0x4] sm:$0xf]
  %v8097 = vld [vmem:[%s8094 + $0x8] sm:$0xf]
  %v8098 = vld [vmem:[%s8094 + $0xc] sm:$0xf]
  %v8099 = vld [vmem:[%s8094 + $0x10] sm:$0xf]
  %v8100 = vld [vmem:[%s8094 + $0x14] sm:$0xf]
  %v8101 = vld [vmem:[%s8094 + $0x18] sm:$0xf]
  %v8102 = vld [vmem:[%s8094 + $0x1c] sm:$0xf]
  %v8103 = vld [vmem:[%s8094 + $0x20] sm:$0xf]
  %v8104 = vld [vmem:[%s8094 + $0x24] sm:$0xf]
  %v8105 = vld [vmem:[%s8094 + $0x28] sm:$0xf]
  %v8106 = vld [vmem:[%s8094 + $0x2c] sm:$0xf]
  %v8107 = vld [vmem:[%s8094 + $0x30] sm:$0xf]
  %v8108 = vld [vmem:[%s8094 + $0x34] sm:$0xf]
  %v8109 = vld [vmem:[%s8094 + $0x38] sm:$0xf]
  %v8110 = vld [vmem:[%s8094 + $0x3c] sm:$0xf]
  %v8127 = vunpack.c.l.b16 %v8095
  %v8128 = vunpack.c.l.b16 %v8096
  %v8129 = vunpack.c.l.b16 %v8097
  %v8130 = vunpack.c.l.b16 %v8098
  %v8131 = vunpack.c.l.b16 %v8099
  %v8132 = vunpack.c.l.b16 %v8100
  %v8133 = vunpack.c.l.b16 %v8101
  %v8134 = vunpack.c.l.b16 %v8102
  %v8135 = vunpack.c.l.b16 %v8103
  %v8136 = vunpack.c.l.b16 %v8104
  %v8137 = vunpack.c.l.b16 %v8105
  %v8138 = vunpack.c.l.b16 %v8106
  %v8139 = vunpack.c.l.b16 %v8107
  %v8140 = vunpack.c.l.b16 %v8108
  %v8141 = vunpack.c.l.b16 %v8109
  %v8142 = vunpack.c.l.b16 %v8110
  %v8143 = vpack.c.b16 %v8128, %v8127
  %v8144 = vpack.c.b16 %v8130, %v8129
  %v8145 = vpack.c.b16 %v8132, %v8131
  %v8146 = vpack.c.b16 %v8134, %v8133
  %v8147 = vpack.c.b16 %v8136, %v8135
  %v8148 = vpack.c.b16 %v8138, %v8137
  %v8149 = vpack.c.b16 %v8140, %v8139
  %v8150 = vpack.c.b16 %v8142, %v8141
  %8159 = vmatprep.subr.bf16.mxu0 0
  %8160 = vmatpush1.bf16.msra.mxu0 %v8143
  %8161 = vmatprep.subr.bf16.mxu0 0
  %8162 = vmatpush1.bf16.msra.mxu0 %v8144
  %8163 = vmatprep.subr.bf16.mxu0 0
  %8164 = vmatpush1.bf16.msra.mxu0 %v8145
  %8165 = vmatprep.subr.bf16.mxu0 0
  %8166 = vmatpush1.bf16.msra.mxu0 %v8146
  %8167 = vmatprep.subr.bf16.mxu0 0
  %8168 = vmatpush1.bf16.msra.mxu0 %v8147
  %8169 = vmatprep.subr.bf16.mxu0 0
  %8170 = vmatpush1.bf16.msra.mxu0 %v8148
  %8171 = vmatprep.subr.bf16.mxu0 0
  %8172 = vmatpush1.bf16.msra.mxu0 %v8149
  %8173 = vmatprep.subr.bf16.mxu0 0
  %8174 = vmatpush1.bf16.msra.mxu0 %v8150
  %8175 = vmatprep.subr.bf16.mxu0 0
  %8176 = vmatpush1.bf16.msra.mxu0 0
  %8177 = vmatprep.subr.bf16.mxu0 0
  %8178 = vmatpush1.bf16.msra.mxu0 0
  %8179 = vmatprep.subr.bf16.mxu0 0
  %8180 = vmatpush1.bf16.msra.mxu0 0
  %8181 = vmatprep.subr.bf16.mxu0 0
  %8182 = vmatpush1.bf16.msra.mxu0 0
  %8183 = vmatprep.subr.bf16.mxu0 0
  %8184 = vmatpush1.bf16.msra.mxu0 0
  %8185 = vmatprep.subr.bf16.mxu0 0
  %8186 = vmatpush1.bf16.msra.mxu0 0
  %8187 = vmatprep.subr.bf16.mxu0 0
  %8188 = vmatpush1.bf16.msra.mxu0 0
  %8189 = vmatprep.subr.bf16.mxu0 0
  %8190 = vmatpush1.bf16.msra.mxu0 0
  %8191 = vmatprep.mubr.bf16.mxu0 0
  %8192 = vmatmul.mubr.bf16.gmra.mrb[0].mxu0 %v8089
  %v8193 = vpop.f32.mrb[0].mxu0
  %v8194 = vadd.f32 0.0, %v8193
  %v8195 = vpop.f32.mrb[0].mxu0
  %v8196 = vpop.f32.mrb[0].mxu0
  %v8197 = vadd.f32 0.0, %v8196
  %v8198 = vpop.f32.mrb[0].mxu0
  %8199 = vmatprep.mubr.bf16.mxu0 0
  %8200 = vmatmul.mubr.bf16.gmra.mrb[0].mxu0 %v8090
  %v8201 = vpop.f32.mrb[0].mxu0
  %v8202 = vadd.f32 0.0, %v8201
  %v8203 = vpop.f32.mrb[0].mxu0
  %v8204 = vpop.f32.mrb[0].mxu0
  %v8205 = vadd.f32 0.0, %v8204
  %v8206 = vpop.f32.mrb[0].mxu0
  %8207 = vmatprep.mubr.bf16.mxu0 0
  %8208 = vmatmul.mubr.bf16.gmra.mrb[0].mxu0 %v8091
  %v8209 = vpop.f32.mrb[0].mxu0
  %v8210 = vadd.f32 0.0, %v8209
  %v8211 = vpop.f32.mrb[0].mxu0
  %v8212 = vpop.f32.mrb[0].mxu0
  %v8213 = vadd.f32 0.0, %v8212
  %v8214 = vpop.f32.mrb[0].mxu0
  %8215 = vmatprep.mubr.bf16.mxu0 0
  %8216 = vmatmul.mubr.bf16.gmra.mrb[0].mxu0 %v8092
  %v8217 = vpop.f32.mrb[0].mxu0
  %v8218 = vadd.f32 0.0, %v8217
  %v8219 = vpop.f32.mrb[0].mxu0
  %v8220 = vpop.f32.mrb[0].mxu0
  %v8221 = vadd.f32 0.0, %v8220
  %v8222 = vpop.f32.mrb[0].mxu0
  %8223 = vmatprep.mubr.bf16.mxu0 0
  %8224 = vmatmul.mubr.bf16.gmra.mrb[0].mxu0 %v8093
  %v8225 = vpop.f32.mrb[0].mxu0
  %v8226 = vadd.f32 0.0, %v8225
  %v8227 = vpop.f32.mrb[0].mxu0
  %v8228 = vpop.f32.mrb[0].mxu0
  %v8229 = vpop.f32.mrb[0].mxu0
  %8230 = vdwg.mxu0
  %v8231 = vadd.f32 %v8070, %v8194
  %v8232 = vadd.f32 %v8071, %v8197
  %v8233 = vadd.f32 %v8072, %v8202
  %v8234 = vadd.f32 %v8073, %v8205
  %v8235 = vadd.f32 %v8074, %v8210
  %v8236 = vadd.f32 %v8075, %v8213
  %v8237 = vadd.f32 %v8076, %v8218
  %v8238 = vadd.f32 %v8077, %v8221
  %v8239 = vadd.f32 %v8078, %v8226
  %v8240 = vld [vmem:[%s2856] sm:$0xff]
  %v8241 = vld [vmem:[%s2856 + $0x10] sm:$0xff]
  %v8242 = vld [vmem:[%s2856 + $0x20] sm:$0xff]
  %v8243 = vld [vmem:[%s2856 + $0xa0] sm:$0xff]
  %v8244 = vld [vmem:[%s2856 + $0xb0] sm:$0xff]
  %v8245 = vld [vmem:[%s2856 + $0xc0] sm:$0xff]
  %v8246 = vld [vmem:[%s2856 + $0x140] sm:$0xff]
  %v8247 = vld [vmem:[%s2856 + $0x150] sm:$0xff]
  %v8248 = vld [vmem:[%s2856 + $0x160] sm:$0xff]
  %v8249 = vpack.c.bf16 %v8241, %v8240
  %v8250 = vpack.c.bf16 %v8243, %v8242
  %v8251 = vpack.c.bf16 %v8245, %v8244
  %v8252 = vpack.c.bf16 %v8247, %v8246
  %v8253 = vpack.c.bf16 %v8248, %v8248
  %s8254 = scalar_lea.vmem %s3, 1344
  %v8255 = vld [vmem:[%s8254] sm:$0xf]
  %v8256 = vld [vmem:[%s8254 + $0x4] sm:$0xf]
  %v8257 = vld [vmem:[%s8254 + $0x8] sm:$0xf]
  %v8258 = vld [vmem:[%s8254 + $0xc] sm:$0xf]
  %v8259 = vld [vmem:[%s8254 + $0x10] sm:$0xf]
  %v8260 = vld [vmem:[%s8254 + $0x14] sm:$0xf]
  %v8261 = vld [vmem:[%s8254 + $0x18] sm:$0xf]
  %v8262 = vld [vmem:[%s8254 + $0x1c] sm:$0xf]
  %v8263 = vld [vmem:[%s8254 + $0x20] sm:$0xf]
  %v8264 = vld [vmem:[%s8254 + $0x24] sm:$0xf]
  %v8265 = vld [vmem:[%s8254 + $0x28] sm:$0xf]
  %v8266 = vld [vmem:[%s8254 + $0x2c] sm:$0xf]
  %v8267 = vld [vmem:[%s8254 + $0x30] sm:$0xf]
  %v8268 = vld [vmem:[%s8254 + $0x34] sm:$0xf]
  %v8269 = vld [vmem:[%s8254 + $0x38] sm:$0xf]
  %v8270 = vld [vmem:[%s8254 + $0x3c] sm:$0xf]
  %v8287 = vunpack.c.l.b16 %v8255
  %v8288 = vunpack.c.l.b16 %v8256
  %v8289 = vunpack.c.l.b16 %v8257
  %v8290 = vunpack.c.l.b16 %v8258
  %v8291 = vunpack.c.l.b16 %v8259
  %v8292 = vunpack.c.l.b16 %v8260
  %v8293 = vunpack.c.l.b16 %v8261
  %v8294 = vunpack.c.l.b16 %v8262
  %v8295 = vunpack.c.l.b16 %v8263
  %v8296 = vunpack.c.l.b16 %v8264
  %v8297 = vunpack.c.l.b16 %v8265
  %v8298 = vunpack.c.l.b16 %v8266
  %v8299 = vunpack.c.l.b16 %v8267
  %v8300 = vunpack.c.l.b16 %v8268
  %v8301 = vunpack.c.l.b16 %v8269
  %v8302 = vunpack.c.l.b16 %v8270
  %v8303 = vpack.c.b16 %v8288, %v8287
  %v8304 = vpack.c.b16 %v8290, %v8289
  %v8305 = vpack.c.b16 %v8292, %v8291
  %v8306 = vpack.c.b16 %v8294, %v8293
  %v8307 = vpack.c.b16 %v8296, %v8295
  %v8308 = vpack.c.b16 %v8298, %v8297
  %v8309 = vpack.c.b16 %v8300, %v8299
  %v8310 = vpack.c.b16 %v8302, %v8301
  %8319 = vmatprep.subr.bf16.mxu0 0
  %8320 = vmatpush1.bf16.msra.mxu0 %v8303
  %8321 = vmatprep.subr.bf16.mxu0 0
  %8322 = vmatpush1.bf16.msra.mxu0 %v8304
  %8323 = vmatprep.subr.bf16.mxu0 0
  %8324 = vmatpush1.bf16.msra.mxu0 %v8305
  %8325 = vmatprep.subr.bf16.mxu0 0
  %8326 = vmatpush1.bf16.msra.mxu0 %v8306
  %8327 = vmatprep.subr.bf16.mxu0 0
  %8328 = vmatpush1.bf16.msra.mxu0 %v8307
  %8329 = vmatprep.subr.bf16.mxu0 0
  %8330 = vmatpush1.bf16.msra.mxu0 %v8308
  %8331 = vmatprep.subr.bf16.mxu0 0
  %8332 = vmatpush1.bf16.msra.mxu0 %v8309
  %8333 = vmatprep.subr.bf16.mxu0 0
  %8334 = vmatpush1.bf16.msra.mxu0 %v8310
  %8335 = vmatprep.subr.bf16.mxu0 0
  %8336 = vmatpush1.bf16.msra.mxu0 0
  %8337 = vmatprep.subr.bf16.mxu0 0
  %8338 = vmatpush1.bf16.msra.mxu0 0
  %8339 = vmatprep.subr.bf16.mxu0 0
  %8340 = vmatpush1.bf16.msra.mxu0 0
  %8341 = vmatprep.subr.bf16.mxu0 0
  %8342 = vmatpush1.bf16.msra.mxu0 0
  %8343 = vmatprep.subr.bf16.mxu0 0
  %8344 = vmatpush1.bf16.msra.mxu0 0
  %8345 = vmatprep.subr.bf16.mxu0 0
  %8346 = vmatpush1.bf16.msra.mxu0 0
  %8347 = vmatprep.subr.bf16.mxu0 0
  %8348 = vmatpush1.bf16.msra.mxu0 0
  %8349 = vmatprep.subr.bf16.mxu0 0
  %8350 = vmatpush1.bf16.msra.mxu0 0
  %8351 = vmatprep.mubr.bf16.mxu0 0
  %8352 = vmatmul.mubr.bf16.gmra.mrb[0].mxu0 %v8249
  %v8353 = vpop.f32.mrb[0].mxu0
  %v8354 = vadd.f32 0.0, %v8353
  %v8355 = vpop.f32.mrb[0].mxu0
  %v8356 = vpop.f32.mrb[0].mxu0
  %v8357 = vadd.f32 0.0, %v8356
  %v8358 = vpop.f32.mrb[0].mxu0
  %8359 = vmatprep.mubr.bf16.mxu0 0
  %8360 = vmatmul.mubr.bf16.gmra.mrb[0].mxu0 %v8250
  %v8361 = vpop.f32.mrb[0].mxu0
  %v8362 = vadd.f32 0.0, %v8361
  %v8363 = vpop.f32.mrb[0].mxu0
  %v8364 = vpop.f32.mrb[0].mxu0
  %v8365 = vadd.f32 0.0, %v8364
  %v8366 = vpop.f32.mrb[0].mxu0
  %8367 = vmatprep.mubr.bf16.mxu0 0
  %8368 = vmatmul.mubr.bf16.gmra.mrb[0].mxu0 %v8251
  %v8369 = vpop.f32.mrb[0].mxu0
  %v8370 = vadd.f32 0.0, %v8369
  %v8371 = vpop.f32.mrb[0].mxu0
  %v8372 = vpop.f32.mrb[0].mxu0
  %v8373 = vadd.f32 0.0, %v8372
  %v8374 = vpop.f32.mrb[0].mxu0
  %8375 = vmatprep.mubr.bf16.mxu0 0
  %8376 = vmatmul.mubr.bf16.gmra.mrb[0].mxu0 %v8252
  %v8377 = vpop.f32.mrb[0].mxu0
  %v8378 = vadd.f32 0.0, %v8377
  %v8379 = vpop.f32.mrb[0].mxu0
  %v8380 = vpop.f32.mrb[0].mxu0
  %v8381 = vadd.f32 0.0, %v8380
  %v8382 = vpop.f32.mrb[0].mxu0
  %8383 = vmatprep.mubr.bf16.mxu0 0
  %8384 = vmatmul.mubr.bf16.gmra.mrb[0].mxu0 %v8253
  %v8385 = vpop.f32.mrb[0].mxu0
  %v8386 = vadd.f32 0.0, %v8385
  %v8387 = vpop.f32.mrb[0].mxu0
  %v8388 = vpop.f32.mrb[0].mxu0
  %v8389 = vpop.f32.mrb[0].mxu0
  %8390 = vdwg.mxu0
  %v8391 = vadd.f32 %v8231, %v8354
  %v8392 = vadd.f32 %v8232, %v8357
  %v8393 = vadd.f32 %v8233, %v8362
  %v8394 = vadd.f32 %v8234, %v8365
  %v8395 = vadd.f32 %v8235, %v8370
  %v8396 = vadd.f32 %v8236, %v8373
  %v8397 = vadd.f32 %v8237, %v8378
  %v8398 = vadd.f32 %v8238, %v8381
  %v8399 = vadd.f32 %v8239, %v8386
  %s8400 = scalar_lea.vmem [#allocation2], 336
  %v8401 = vld [vmem:[%s8400] sm:$0xff]
  %v8402 = vld [vmem:[%s8400 + $0x10] sm:$0xff]
  %v8403 = vld [vmem:[%s8400 + $0x20] sm:$0xff]
  %v8404 = vld [vmem:[%s8400 + $0xa0] sm:$0xff]
  %v8405 = vld [vmem:[%s8400 + $0xb0] sm:$0xff]
  %v8406 = vld [vmem:[%s8400 + $0xc0] sm:$0xff]
  %v8407 = vld [vmem:[%s8400 + $0x140] sm:$0xff]
  %v8408 = vld [vmem:[%s8400 + $0x150] sm:$0xff]
  %v8409 = vld [vmem:[%s8400 + $0x160] sm:$0xff]
  %v8410 = vpack.c.bf16 %v8402, %v8401
  %v8411 = vpack.c.bf16 %v8404, %v8403
  %v8412 = vpack.c.bf16 %v8406, %v8405
  %v8413 = vpack.c.bf16 %v8408, %v8407
  %v8414 = vpack.c.bf16 %v8409, %v8409
  %s8415 = scalar_lea.vmem %s3, 1408
  %v8416 = vld [vmem:[%s8415] sm:$0xf]
  %v8417 = vld [vmem:[%s8415 + $0x4] sm:$0xf]
  %v8418 = vld [vmem:[%s8415 + $0x8] sm:$0xf]
  %v8419 = vld [vmem:[%s8415 + $0xc] sm:$0xf]
  %v8420 = vld [vmem:[%s8415 + $0x10] sm:$0xf]
  %v8421 = vld [vmem:[%s8415 + $0x14] sm:$0xf]
  %v8422 = vld [vmem:[%s8415 + $0x18] sm:$0xf]
  %v8423 = vld [vmem:[%s8415 + $0x1c] sm:$0xf]
  %v8424 = vld [vmem:[%s8415 + $0x20] sm:$0xf]
  %v8425 = vld [vmem:[%s8415 + $0x24] sm:$0xf]
  %v8426 = vld [vmem:[%s8415 + $0x28] sm:$0xf]
  %v8427 = vld [vmem:[%s8415 + $0x2c] sm:$0xf]
  %v8428 = vld [vmem:[%s8415 + $0x30] sm:$0xf]
  %v8429 = vld [vmem:[%s8415 + $0x34] sm:$0xf]
  %v8430 = vld [vmem:[%s8415 + $0x38] sm:$0xf]
  %v8431 = vld [vmem:[%s8415 + $0x3c] sm:$0xf]
  %v8448 = vunpack.c.l.b16 %v8416
  %v8449 = vunpack.c.l.b16 %v8417
  %v8450 = vunpack.c.l.b16 %v8418
  %v8451 = vunpack.c.l.b16 %v8419
  %v8452 = vunpack.c.l.b16 %v8420
  %v8453 = vunpack.c.l.b16 %v8421
  %v8454 = vunpack.c.l.b16 %v8422
  %v8455 = vunpack.c.l.b16 %v8423
  %v8456 = vunpack.c.l.b16 %v8424
  %v8457 = vunpack.c.l.b16 %v8425
  %v8458 = vunpack.c.l.b16 %v8426
  %v8459 = vunpack.c.l.b16 %v8427
  %v8460 = vunpack.c.l.b16 %v8428
  %v8461 = vunpack.c.l.b16 %v8429
  %v8462 = vunpack.c.l.b16 %v8430
  %v8463 = vunpack.c.l.b16 %v8431
  %v8464 = vpack.c.b16 %v8449, %v8448
  %v8465 = vpack.c.b16 %v8451, %v8450
  %v8466 = vpack.c.b16 %v8453, %v8452
  %v8467 = vpack.c.b16 %v8455, %v8454
  %v8468 = vpack.c.b16 %v8457, %v8456
  %v8469 = vpack.c.b16 %v8459, %v8458
  %v8470 = vpack.c.b16 %v8461, %v8460
  %v8471 = vpack.c.b16 %v8463, %v8462
  %8480 = vmatprep.subr.bf16.mxu0 0
  %8481 = vmatpush1.bf16.msra.mxu0 %v8464
  %8482 = vmatprep.subr.bf16.mxu0 0
  %8483 = vmatpush1.bf16.msra.mxu0 %v8465
  %8484 = vmatprep.subr.bf16.mxu0 0
  %8485 = vmatpush1.bf16.msra.mxu0 %v8466
  %8486 = vmatprep.subr.bf16.mxu0 0
  %8487 = vmatpush1.bf16.msra.mxu0 %v8467
  %8488 = vmatprep.subr.bf16.mxu0 0
  %8489 = vmatpush1.bf16.msra.mxu0 %v8468
  %8490 = vmatprep.subr.bf16.mxu0 0
  %8491 = vmatpush1.bf16.msra.mxu0 %v8469
  %8492 = vmatprep.subr.bf16.mxu0 0
  %8493 = vmatpush1.bf16.msra.mxu0 %v8470
  %8494 = vmatprep.subr.bf16.mxu0 0
  %8495 = vmatpush1.bf16.msra.mxu0 %v8471
  %8496 = vmatprep.subr.bf16.mxu0 0
  %8497 = vmatpush1.bf16.msra.mxu0 0
  %8498 = vmatprep.subr.bf16.mxu0 0
  %8499 = vmatpush1.bf16.msra.mxu0 0
  %8500 = vmatprep.subr.bf16.mxu0 0
  %8501 = vmatpush1.bf16.msra.mxu0 0
  %8502 = vmatprep.subr.bf16.mxu0 0
  %8503 = vmatpush1.bf16.msra.mxu0 0
  %8504 = vmatprep.subr.bf16.mxu0 0
  %8505 = vmatpush1.bf16.msra.mxu0 0
  %8506 = vmatprep.subr.bf16.mxu0 0
  %8507 = vmatpush1.bf16.msra.mxu0 0
  %8508 = vmatprep.subr.bf16.mxu0 0
  %8509 = vmatpush1.bf16.msra.mxu0 0
  %8510 = vmatprep.subr.bf16.mxu0 0
  %8511 = vmatpush1.bf16.msra.mxu0 0
  %8512 = vmatprep.mubr.bf16.mxu0 0
  %8513 = vmatmul.mubr.bf16.gmra.mrb[0].mxu0 %v8410
  %v8514 = vpop.f32.mrb[0].mxu0
  %v8515 = vadd.f32 0.0, %v8514
  %v8516 = vpop.f32.mrb[0].mxu0
  %v8517 = vpop.f32.mrb[0].mxu0
  %v8518 = vadd.f32 0.0, %v8517
  %v8519 = vpop.f32.mrb[0].mxu0
  %8520 = vmatprep.mubr.bf16.mxu0 0
  %8521 = vmatmul.mubr.bf16.gmra.mrb[0].mxu0 %v8411
  %v8522 = vpop.f32.mrb[0].mxu0
  %v8523 = vadd.f32 0.0, %v8522
  %v8524 = vpop.f32.mrb[0].mxu0
  %v8525 = vpop.f32.mrb[0].mxu0
  %v8526 = vadd.f32 0.0, %v8525
  %v8527 = vpop.f32.mrb[0].mxu0
  %8528 = vmatprep.mubr.bf16.mxu0 0
  %8529 = vmatmul.mubr.bf16.gmra.mrb[0].mxu0 %v8412
  %v8530 = vpop.f32.mrb[0].mxu0
  %v8531 = vadd.f32 0.0, %v8530
  %v8532 = vpop.f32.mrb[0].mxu0
  %v8533 = vpop.f32.mrb[0].mxu0
  %v8534 = vadd.f32 0.0, %v8533
  %v8535 = vpop.f32.mrb[0].mxu0
  %8536 = vmatprep.mubr.bf16.mxu0 0
  %8537 = vmatmul.mubr.bf16.gmra.mrb[0].mxu0 %v8413
  %v8538 = vpop.f32.mrb[0].mxu0
  %v8539 = vadd.f32 0.0, %v8538
  %v8540 = vpop.f32.mrb[0].mxu0
  %v8541 = vpop.f32.mrb[0].mxu0
  %v8542 = vadd.f32 0.0, %v8541
  %v8543 = vpop.f32.mrb[0].mxu0
  %8544 = vmatprep.mubr.bf16.mxu0 0
  %8545 = vmatmul.mubr.bf16.gmra.mrb[0].mxu0 %v8414
  %v8546 = vpop.f32.mrb[0].mxu0
  %v8547 = vadd.f32 0.0, %v8546
  %v8548 = vpop.f32.mrb[0].mxu0
  %v8549 = vpop.f32.mrb[0].mxu0
  %v8550 = vpop.f32.mrb[0].mxu0
  %8551 = vdwg.mxu0
  %v8552 = vadd.f32 %v8391, %v8515
  %v8553 = vadd.f32 %v8392, %v8518
  %v8554 = vadd.f32 %v8393, %v8523
  %v8555 = vadd.f32 %v8394, %v8526
  %v8556 = vadd.f32 %v8395, %v8531
  %v8557 = vadd.f32 %v8396, %v8534
  %v8558 = vadd.f32 %v8397, %v8539
  %v8559 = vadd.f32 %v8398, %v8542
  %v8560 = vadd.f32 %v8399, %v8547
  %s8561 = scalar_lea.vmem [#allocation2], 344
  %v8562 = vld [vmem:[%s8561] sm:$0xff]
  %v8563 = vld [vmem:[%s8561 + $0x10] sm:$0xff]
  %v8564 = vld [vmem:[%s8561 + $0x20] sm:$0xff]
  %v8565 = vld [vmem:[%s8561 + $0xa0] sm:$0xff]
  %v8566 = vld [vmem:[%s8561 + $0xb0] sm:$0xff]
  %v8567 = vld [vmem:[%s8561 + $0xc0] sm:$0xff]
  %v8568 = vld [vmem:[%s8561 + $0x140] sm:$0xff]
  %v8569 = vld [vmem:[%s8561 + $0x150] sm:$0xff]
  %v8570 = vld [vmem:[%s8561 + $0x160] sm:$0xff]
  %v8571 = vpack.c.bf16 %v8563, %v8562
  %v8572 = vpack.c.bf16 %v8565, %v8564
  %v8573 = vpack.c.bf16 %v8567, %v8566
  %v8574 = vpack.c.bf16 %v8569, %v8568
  %v8575 = vpack.c.bf16 %v8570, %v8570
  %s8576 = scalar_lea.vmem %s3, 1472
  %v8577 = vld [vmem:[%s8576] sm:$0xf]
  %v8578 = vld [vmem:[%s8576 + $0x4] sm:$0xf]
  %v8579 = vld [vmem:[%s8576 + $0x8] sm:$0xf]
  %v8580 = vld [vmem:[%s8576 + $0xc] sm:$0xf]
  %v8581 = vld [vmem:[%s8576 + $0x10] sm:$0xf]
  %v8582 = vld [vmem:[%s8576 + $0x14] sm:$0xf]
  %v8583 = vld [vmem:[%s8576 + $0x18] sm:$0xf]
  %v8584 = vld [vmem:[%s8576 + $0x1c] sm:$0xf]
  %v8585 = vld [vmem:[%s8576 + $0x20] sm:$0xf]
  %v8586 = vld [vmem:[%s8576 + $0x24] sm:$0xf]
  %v8587 = vld [vmem:[%s8576 + $0x28] sm:$0xf]
  %v8588 = vld [vmem:[%s8576 + $0x2c] sm:$0xf]
  %v8589 = vld [vmem:[%s8576 + $0x30] sm:$0xf]
  %v8590 = vld [vmem:[%s8576 + $0x34] sm:$0xf]
  %v8591 = vld [vmem:[%s8576 + $0x38] sm:$0xf]
  %v8592 = vld [vmem:[%s8576 + $0x3c] sm:$0xf]
  %v8609 = vunpack.c.l.b16 %v8577
  %v8610 = vunpack.c.l.b16 %v8578
  %v8611 = vunpack.c.l.b16 %v8579
  %v8612 = vunpack.c.l.b16 %v8580
  %v8613 = vunpack.c.l.b16 %v8581
  %v8614 = vunpack.c.l.b16 %v8582
  %v8615 = vunpack.c.l.b16 %v8583
  %v8616 = vunpack.c.l.b16 %v8584
  %v8617 = vunpack.c.l.b16 %v8585
  %v8618 = vunpack.c.l.b16 %v8586
  %v8619 = vunpack.c.l.b16 %v8587
  %v8620 = vunpack.c.l.b16 %v8588
  %v8621 = vunpack.c.l.b16 %v8589
  %v8622 = vunpack.c.l.b16 %v8590
  %v8623 = vunpack.c.l.b16 %v8591
  %v8624 = vunpack.c.l.b16 %v8592
  %v8625 = vpack.c.b16 %v8610, %v8609
  %v8626 = vpack.c.b16 %v8612, %v8611
  %v8627 = vpack.c.b16 %v8614, %v8613
  %v8628 = vpack.c.b16 %v8616, %v8615
  %v8629 = vpack.c.b16 %v8618, %v8617
  %v8630 = vpack.c.b16 %v8620, %v8619
  %v8631 = vpack.c.b16 %v8622, %v8621
  %v8632 = vpack.c.b16 %v8624, %v8623
  %8641 = vmatprep.subr.bf16.mxu0 0
  %8642 = vmatpush1.bf16.msra.mxu0 %v8625
  %8643 = vmatprep.subr.bf16.mxu0 0
  %8644 = vmatpush1.bf16.msra.mxu0 %v8626
  %8645 = vmatprep.subr.bf16.mxu0 0
  %8646 = vmatpush1.bf16.msra.mxu0 %v8627
  %8647 = vmatprep.subr.bf16.mxu0 0
  %8648 = vmatpush1.bf16.msra.mxu0 %v8628
  %8649 = vmatprep.subr.bf16.mxu0 0
  %8650 = vmatpush1.bf16.msra.mxu0 %v8629
  %8651 = vmatprep.subr.bf16.mxu0 0
  %8652 = vmatpush1.bf16.msra.mxu0 %v8630
  %8653 = vmatprep.subr.bf16.mxu0 0
  %8654 = vmatpush1.bf16.msra.mxu0 %v8631
  %8655 = vmatprep.subr.bf16.mxu0 0
  %8656 = vmatpush1.bf16.msra.mxu0 %v8632
  %8657 = vmatprep.subr.bf16.mxu0 0
  %8658 = vmatpush1.bf16.msra.mxu0 0
  %8659 = vmatprep.subr.bf16.mxu0 0
  %8660 = vmatpush1.bf16.msra.mxu0 0
  %8661 = vmatprep.subr.bf16.mxu0 0
  %8662 = vmatpush1.bf16.msra.mxu0 0
  %8663 = vmatprep.subr.bf16.mxu0 0
  %8664 = vmatpush1.bf16.msra.mxu0 0
  %8665 = vmatprep.subr.bf16.mxu0 0
  %8666 = vmatpush1.bf16.msra.mxu0 0
  %8667 = vmatprep.subr.bf16.mxu0 0
  %8668 = vmatpush1.bf16.msra.mxu0 0
  %8669 = vmatprep.subr.bf16.mxu0 0
  %8670 = vmatpush1.bf16.msra.mxu0 0
  %8671 = vmatprep.subr.bf16.mxu0 0
  %8672 = vmatpush1.bf16.msra.mxu0 0
  %8673 = vmatprep.mubr.bf16.mxu0 0
  %8674 = vmatmul.mubr.bf16.gmra.mrb[0].mxu0 %v8571
  %v8675 = vpop.f32.mrb[0].mxu0
  %v8676 = vadd.f32 0.0, %v8675
  %v8677 = vpop.f32.mrb[0].mxu0
  %v8678 = vpop.f32.mrb[0].mxu0
  %v8679 = vadd.f32 0.0, %v8678
  %v8680 = vpop.f32.mrb[0].mxu0
  %8681 = vmatprep.mubr.bf16.mxu0 0
  %8682 = vmatmul.mubr.bf16.gmra.mrb[0].mxu0 %v8572
  %v8683 = vpop.f32.mrb[0].mxu0
  %v8684 = vadd.f32 0.0, %v8683
  %v8685 = vpop.f32.mrb[0].mxu0
  %v8686 = vpop.f32.mrb[0].mxu0
  %v8687 = vadd.f32 0.0, %v8686
  %v8688 = vpop.f32.mrb[0].mxu0
  %8689 = vmatprep.mubr.bf16.mxu0 0
  %8690 = vmatmul.mubr.bf16.gmra.mrb[0].mxu0 %v8573
  %v8691 = vpop.f32.mrb[0].mxu0
  %v8692 = vadd.f32 0.0, %v8691
  %v8693 = vpop.f32.mrb[0].mxu0
  %v8694 = vpop.f32.mrb[0].mxu0
  %v8695 = vadd.f32 0.0, %v8694
  %v8696 = vpop.f32.mrb[0].mxu0
  %8697 = vmatprep.mubr.bf16.mxu0 0
  %8698 = vmatmul.mubr.bf16.gmra.mrb[0].mxu0 %v8574
  %v8699 = vpop.f32.mrb[0].mxu0
  %v8700 = vadd.f32 0.0, %v8699
  %v8701 = vpop.f32.mrb[0].mxu0
  %v8702 = vpop.f32.mrb[0].mxu0
  %v8703 = vadd.f32 0.0, %v8702
  %v8704 = vpop.f32.mrb[0].mxu0
  %8705 = vmatprep.mubr.bf16.mxu0 0
  %8706 = vmatmul.mubr.bf16.gmra.mrb[0].mxu0 %v8575
  %v8707 = vpop.f32.mrb[0].mxu0
  %v8708 = vadd.f32 0.0, %v8707
  %v8709 = vpop.f32.mrb[0].mxu0
  %v8710 = vpop.f32.mrb[0].mxu0
  %v8711 = vpop.f32.mrb[0].mxu0
  %8712 = vdwg.mxu0
  %v8713 = vadd.f32 %v8552, %v8676
  %v8714 = vadd.f32 %v8553, %v8679
  %v8715 = vadd.f32 %v8554, %v8684
  %v8716 = vadd.f32 %v8555, %v8687
  %v8717 = vadd.f32 %v8556, %v8692
  %v8718 = vadd.f32 %v8557, %v8695
  %v8719 = vadd.f32 %v8558, %v8700
  %v8720 = vadd.f32 %v8559, %v8703
  %v8721 = vadd.f32 %v8560, %v8708
  %s8722 = scalar_lea.vmem [#allocation2], 352
  %v8723 = vld [vmem:[%s8722] sm:$0xff]
  %v8724 = vld [vmem:[%s8722 + $0x10] sm:$0xff]
  %v8725 = vld [vmem:[%s8722 + $0x20] sm:$0xff]
  %v8726 = vld [vmem:[%s8722 + $0xa0] sm:$0xff]
  %v8727 = vld [vmem:[%s8722 + $0xb0] sm:$0xff]
  %v8728 = vld [vmem:[%s8722 + $0xc0] sm:$0xff]
  %v8729 = vld [vmem:[%s8722 + $0x140] sm:$0xff]
  %v8730 = vld [vmem:[%s8722 + $0x150] sm:$0xff]
  %v8731 = vld [vmem:[%s8722 + $0x160] sm:$0xff]
  %v8732 = vpack.c.bf16 %v8724, %v8723
  %v8733 = vpack.c.bf16 %v8726, %v8725
  %v8734 = vpack.c.bf16 %v8728, %v8727
  %v8735 = vpack.c.bf16 %v8730, %v8729
  %v8736 = vpack.c.bf16 %v8731, %v8731
  %s8737 = scalar_lea.vmem %s3, 1536
  %v8738 = vld [vmem:[%s8737] sm:$0xf]
  %v8739 = vld [vmem:[%s8737 + $0x4] sm:$0xf]
  %v8740 = vld [vmem:[%s8737 + $0x8] sm:$0xf]
  %v8741 = vld [vmem:[%s8737 + $0xc] sm:$0xf]
  %v8742 = vld [vmem:[%s8737 + $0x10] sm:$0xf]
  %v8743 = vld [vmem:[%s8737 + $0x14] sm:$0xf]
  %v8744 = vld [vmem:[%s8737 + $0x18] sm:$0xf]
  %v8745 = vld [vmem:[%s8737 + $0x1c] sm:$0xf]
  %v8746 = vld [vmem:[%s8737 + $0x20] sm:$0xf]
  %v8747 = vld [vmem:[%s8737 + $0x24] sm:$0xf]
  %v8748 = vld [vmem:[%s8737 + $0x28] sm:$0xf]
  %v8749 = vld [vmem:[%s8737 + $0x2c] sm:$0xf]
  %v8750 = vld [vmem:[%s8737 + $0x30] sm:$0xf]
  %v8751 = vld [vmem:[%s8737 + $0x34] sm:$0xf]
  %v8752 = vld [vmem:[%s8737 + $0x38] sm:$0xf]
  %v8753 = vld [vmem:[%s8737 + $0x3c] sm:$0xf]
  %v8770 = vunpack.c.l.b16 %v8738
  %v8771 = vunpack.c.l.b16 %v8739
  %v8772 = vunpack.c.l.b16 %v8740
  %v8773 = vunpack.c.l.b16 %v8741
  %v8774 = vunpack.c.l.b16 %v8742
  %v8775 = vunpack.c.l.b16 %v8743
  %v8776 = vunpack.c.l.b16 %v8744
  %v8777 = vunpack.c.l.b16 %v8745
  %v8778 = vunpack.c.l.b16 %v8746
  %v8779 = vunpack.c.l.b16 %v8747
  %v8780 = vunpack.c.l.b16 %v8748
  %v8781 = vunpack.c.l.b16 %v8749
  %v8782 = vunpack.c.l.b16 %v8750
  %v8783 = vunpack.c.l.b16 %v8751
  %v8784 = vunpack.c.l.b16 %v8752
  %v8785 = vunpack.c.l.b16 %v8753
  %v8786 = vpack.c.b16 %v8771, %v8770
  %v8787 = vpack.c.b16 %v8773, %v8772
  %v8788 = vpack.c.b16 %v8775, %v8774
  %v8789 = vpack.c.b16 %v8777, %v8776
  %v8790 = vpack.c.b16 %v8779, %v8778
  %v8791 = vpack.c.b16 %v8781, %v8780
  %v8792 = vpack.c.b16 %v8783, %v8782
  %v8793 = vpack.c.b16 %v8785, %v8784
  %8802 = vmatprep.subr.bf16.mxu0 0
  %8803 = vmatpush1.bf16.msra.mxu0 %v8786
  %8804 = vmatprep.subr.bf16.mxu0 0
  %8805 = vmatpush1.bf16.msra.mxu0 %v8787
  %8806 = vmatprep.subr.bf16.mxu0 0
  %8807 = vmatpush1.bf16.msra.mxu0 %v8788
  %8808 = vmatprep.subr.bf16.mxu0 0
  %8809 = vmatpush1.bf16.msra.mxu0 %v8789
  %8810 = vmatprep.subr.bf16.mxu0 0
  %8811 = vmatpush1.bf16.msra.mxu0 %v8790
  %8812 = vmatprep.subr.bf16.mxu0 0
  %8813 = vmatpush1.bf16.msra.mxu0 %v8791
  %8814 = vmatprep.subr.bf16.mxu0 0
  %8815 = vmatpush1.bf16.msra.mxu0 %v8792
  %8816 = vmatprep.subr.bf16.mxu0 0
  %8817 = vmatpush1.bf16.msra.mxu0 %v8793
  %8818 = vmatprep.subr.bf16.mxu0 0
  %8819 = vmatpush1.bf16.msra.mxu0 0
  %8820 = vmatprep.subr.bf16.mxu0 0
  %8821 = vmatpush1.bf16.msra.mxu0 0
  %8822 = vmatprep.subr.bf16.mxu0 0
  %8823 = vmatpush1.bf16.msra.mxu0 0
  %8824 = vmatprep.subr.bf16.mxu0 0
  %8825 = vmatpush1.bf16.msra.mxu0 0
  %8826 = vmatprep.subr.bf16.mxu0 0
  %8827 = vmatpush1.bf16.msra.mxu0 0
  %8828 = vmatprep.subr.bf16.mxu0 0
  %8829 = vmatpush1.bf16.msra.mxu0 0
  %8830 = vmatprep.subr.bf16.mxu0 0
  %8831 = vmatpush1.bf16.msra.mxu0 0
  %8832 = vmatprep.subr.bf16.mxu0 0
  %8833 = vmatpush1.bf16.msra.mxu0 0
  %8834 = vmatprep.mubr.bf16.mxu0 0
  %8835 = vmatmul.mubr.bf16.gmra.mrb[0].mxu0 %v8732
  %v8836 = vpop.f32.mrb[0].mxu0
  %v8837 = vadd.f32 0.0, %v8836
  %v8838 = vpop.f32.mrb[0].mxu0
  %v8839 = vpop.f32.mrb[0].mxu0
  %v8840 = vadd.f32 0.0, %v8839
  %v8841 = vpop.f32.mrb[0].mxu0
  %8842 = vmatprep.mubr.bf16.mxu0 0
  %8843 = vmatmul.mubr.bf16.gmra.mrb[0].mxu0 %v8733
  %v8844 = vpop.f32.mrb[0].mxu0
  %v8845 = vadd.f32 0.0, %v8844
  %v8846 = vpop.f32.mrb[0].mxu0
  %v8847 = vpop.f32.mrb[0].mxu0
  %v8848 = vadd.f32 0.0, %v8847
  %v8849 = vpop.f32.mrb[0].mxu0
  %8850 = vmatprep.mubr.bf16.mxu0 0
  %8851 = vmatmul.mubr.bf16.gmra.mrb[0].mxu0 %v8734
  %v8852 = vpop.f32.mrb[0].mxu0
  %v8853 = vadd.f32 0.0, %v8852
  %v8854 = vpop.f32.mrb[0].mxu0
  %v8855 = vpop.f32.mrb[0].mxu0
  %v8856 = vadd.f32 0.0, %v8855
  %v8857 = vpop.f32.mrb[0].mxu0
  %8858 = vmatprep.mubr.bf16.mxu0 0
  %8859 = vmatmul.mubr.bf16.gmra.mrb[0].mxu0 %v8735
  %v8860 = vpop.f32.mrb[0].mxu0
  %v8861 = vadd.f32 0.0, %v8860
  %v8862 = vpop.f32.mrb[0].mxu0
  %v8863 = vpop.f32.mrb[0].mxu0
  %v8864 = vadd.f32 0.0, %v8863
  %v8865 = vpop.f32.mrb[0].mxu0
  %8866 = vmatprep.mubr.bf16.mxu0 0
  %8867 = vmatmul.mubr.bf16.gmra.mrb[0].mxu0 %v8736
  %v8868 = vpop.f32.mrb[0].mxu0
  %v8869 = vadd.f32 0.0, %v8868
  %v8870 = vpop.f32.mrb[0].mxu0
  %v8871 = vpop.f32.mrb[0].mxu0
  %v8872 = vpop.f32.mrb[0].mxu0
  %8873 = vdwg.mxu0
  %v8874 = vadd.f32 %v8713, %v8837
  %v8875 = vadd.f32 %v8714, %v8840
  %v8876 = vadd.f32 %v8715, %v8845
  %v8877 = vadd.f32 %v8716, %v8848
  %v8878 = vadd.f32 %v8717, %v8853
  %v8879 = vadd.f32 %v8718, %v8856
  %v8880 = vadd.f32 %v8719, %v8861
  %v8881 = vadd.f32 %v8720, %v8864
  %v8882 = vadd.f32 %v8721, %v8869
  %v8883 = vld [vmem:[%s4] sm:$0x1]
  %v8885 = vlaneseq
  %v8886 = vshrl.u32 %v8885, 7
  %v8887 = vsub.s32 0, %v8886
  %v8888 = vrot.slane %v8883, %v8887
  %v8890 = vadd.f32 %v8874, %v8888
  %v8891 = vadd.f32 %v8875, %v8888
  %v8892 = vadd.f32 %v8876, %v8888
  %v8893 = vadd.f32 %v8877, %v8888
  %v8894 = vadd.f32 %v8878, %v8888
  %v8895 = vadd.f32 %v8879, %v8888
  %v8896 = vadd.f32 %v8880, %v8888
  %v8897 = vadd.f32 %v8881, %v8888
  %v8898 = vadd.f32 %v8882, %v8888
  %v8899 = vmax.f32 %v8890, 0.0
  %v8900 = vmax.f32 %v8891, 0.0
  %v8901 = vmax.f32 %v8892, 0.0
  %v8902 = vmax.f32 %v8893, 0.0
  %v8903 = vmax.f32 %v8894, 0.0
  %v8904 = vmax.f32 %v8895, 0.0
  %v8905 = vmax.f32 %v8896, 0.0
  %v8906 = vmax.f32 %v8897, 0.0
  %v8907 = vmax.f32 %v8898, 0.0
  %s8908 = scalar_lea.vmem [#allocation3], 56
  %8909 = vst [vmem:[%s8908] sm:$0xff] %v8899
  %8910 = vst [vmem:[%s8908 + $0x8] sm:$0xff] %v8900
  %8911 = vst [vmem:[%s8908 + $0x10] sm:$0xff] %v8901
  %8912 = vst [vmem:[%s8908 + $0x30] sm:$0xff] %v8902
  %8913 = vst [vmem:[%s8908 + $0x38] sm:$0xff] %v8903
  %8914 = vst [vmem:[%s8908 + $0x40] sm:$0xff] %v8904
  %8915 = vst [vmem:[%s8908 + $0x60] sm:$0xff] %v8905
  %8916 = vst [vmem:[%s8908 + $0x68] sm:$0xff] %v8906
  %8917 = vst [vmem:[%s8908 + $0x70] sm:$0xff] %v8907
  %v8918 = vld [vmem:[#allocation3] sm:$0xff]
  %v8919 = vld [vmem:[#allocation3 + $0x10] sm:$0xff]
  %v8920 = vld [vmem:[#allocation3 + $0x60] sm:$0xff]
  %v8921 = vld [vmem:[#allocation3 + $0x70] sm:$0xff]
  %s8922 = scalar_lea.vmem [#allocation3], 8
  %v8923 = vld [vmem:[%s8922] sm:$0xff]
  %v8924 = vld [vmem:[%s8922 + $0x10] sm:$0xff]
  %v8925 = vld [vmem:[%s8922 + $0x60] sm:$0xff]
  %v8926 = vld [vmem:[%s8922 + $0x70] sm:$0xff]
  %v8927 = vmax.f32 %v8918, %v8923
  %v8928 = vmax.f32 %v8919, %v8924
  %v8929 = vmax.f32 %v8920, %v8925
  %v8930 = vmax.f32 %v8921, %v8926
  %s8931 = scalar_lea.vmem [#allocation3], 16
  %v8932 = vld [vmem:[%s8931] sm:$0xff]
  %v8933 = vld [vmem:[%s8931 + $0x10] sm:$0xff]
  %v8934 = vld [vmem:[%s8931 + $0x60] sm:$0xff]
  %v8935 = vld [vmem:[%s8931 + $0x70] sm:$0xff]
  %v8936 = vmax.f32 %v8927, %v8932
  %v8937 = vmax.f32 %v8928, %v8933
  %v8938 = vmax.f32 %v8929, %v8934
  %v8939 = vmax.f32 %v8930, %v8935
  %v8940 = vld [vmem:[%s112] sm:$0xff]
  %v8941 = vld [vmem:[%s112 + $0x10] sm:$0xff]
  %v8942 = vld [vmem:[%s112 + $0x60] sm:$0xff]
  %v8943 = vld [vmem:[%s112 + $0x70] sm:$0xff]
  %v8944 = vmax.f32 %v8936, %v8940
  %v8945 = vmax.f32 %v8937, %v8941
  %v8946 = vmax.f32 %v8938, %v8942
  %v8947 = vmax.f32 %v8939, %v8943
  %v8948 = vld [vmem:[%s8908] sm:$0xff]
  %v8949 = vld [vmem:[%s8908 + $0x10] sm:$0xff]
  %v8950 = vld [vmem:[%s8908 + $0x60] sm:$0xff]
  %v8951 = vld [vmem:[%s8908 + $0x70] sm:$0xff]
  %v8952 = vmax.f32 %v8944, %v8948
  %v8953 = vmax.f32 %v8945, %v8949
  %v8954 = vmax.f32 %v8946, %v8950
  %v8955 = vmax.f32 %v8947, %v8951
  %s8956 = scalar_lea.vmem [#allocation3], 64
  %v8957 = vld [vmem:[%s8956] sm:$0xff]
  %v8958 = vld [vmem:[%s8956 + $0x10] sm:$0xff]
  %v8959 = vld [vmem:[%s8956 + $0x60] sm:$0xff]
  %v8960 = vld [vmem:[%s8956 + $0x70] sm:$0xff]
  %v8961 = vmax.f32 %v8952, %v8957
  %v8962 = vmax.f32 %v8953, %v8958
  %v8963 = vmax.f32 %v8954, %v8959
  %v8964 = vmax.f32 %v8955, %v8960
  %s8965 = scalar_lea.vmem [#allocation3], 96
  %v8966 = vld [vmem:[%s8965] sm:$0xff]
  %v8967 = vld [vmem:[%s8965 + $0x10] sm:$0xff]
  %v8968 = vld [vmem:[%s8965 + $0x60] sm:$0xff]
  %v8969 = vld [vmem:[%s8965 + $0x70] sm:$0xff]
  %v8970 = vmax.f32 %v8961, %v8966
  %v8971 = vmax.f32 %v8962, %v8967
  %v8972 = vmax.f32 %v8963, %v8968
  %v8973 = vmax.f32 %v8964, %v8969
  %s8974 = scalar_lea.vmem [#allocation3], 104
  %v8975 = vld [vmem:[%s8974] sm:$0xff]
  %v8976 = vld [vmem:[%s8974 + $0x10] sm:$0xff]
  %v8977 = vld [vmem:[%s8974 + $0x60] sm:$0xff]
  %v8978 = vld [vmem:[%s8974 + $0x70] sm:$0xff]
  %v8979 = vmax.f32 %v8970, %v8975
  %v8980 = vmax.f32 %v8971, %v8976
  %v8981 = vmax.f32 %v8972, %v8977
  %v8982 = vmax.f32 %v8973, %v8978
  %s8983 = scalar_lea.vmem [#allocation3], 112
  %v8984 = vld [vmem:[%s8983] sm:$0xff]
  %v8985 = vld [vmem:[%s8983 + $0x10] sm:$0xff]
  %v8986 = vld [vmem:[%s8983 + $0x60] sm:$0xff]
  %v8987 = vld [vmem:[%s8983 + $0x70] sm:$0xff]
  %v8988 = vmax.f32 %v8979, %v8984
  %v8989 = vmax.f32 %v8980, %v8985
  %v8990 = vmax.f32 %v8981, %v8986
  %v8991 = vmax.f32 %v8982, %v8987
  %s8992 = scalar_lea.vmem [#allocation4], 40
  %8993 = vst [vmem:[%s8992] sm:$0xff] %v8988
  %8994 = vst [vmem:[%s8992 + $0x8] sm:$0xff] %v8989
  %8995 = vst [vmem:[%s8992 + $0x20] sm:$0xff] %v8990
  %8996 = vst [vmem:[%s8992 + $0x28] sm:$0xff] %v8991
  %v8997 = vld [vmem:[#allocation4] sm:$0xff]
  %v8998 = vpack.c.bf16 %v8997, %v8997
  %v8999 = vld [vmem:[%s5] sm:$0xf]
  %v9000 = vld [vmem:[%s5 + $0x4] sm:$0xf]
  %v9001 = vld [vmem:[%s5 + $0x8] sm:$0xf]
  %v9002 = vld [vmem:[%s5 + $0xc] sm:$0xf]
  %v9003 = vld [vmem:[%s5 + $0x10] sm:$0xf]
  %v9004 = vld [vmem:[%s5 + $0x14] sm:$0xf]
  %v9005 = vld [vmem:[%s5 + $0x18] sm:$0xf]
  %v9006 = vld [vmem:[%s5 + $0x1c] sm:$0xf]
  %v9007 = vld [vmem:[%s5 + $0x20] sm:$0xf]
  %v9008 = vld [vmem:[%s5 + $0x24] sm:$0xf]
  %v9009 = vld [vmem:[%s5 + $0x28] sm:$0xf]
  %v9010 = vld [vmem:[%s5 + $0x2c] sm:$0xf]
  %v9011 = vld [vmem:[%s5 + $0x30] sm:$0xf]
  %v9012 = vld [vmem:[%s5 + $0x34] sm:$0xf]
  %v9013 = vld [vmem:[%s5 + $0x38] sm:$0xf]
  %v9014 = vld [vmem:[%s5 + $0x3c] sm:$0xf]
  %s9015 = scalar_lea.vmem [#allocation4], 8
  %v9016 = vld [vmem:[%s9015] sm:$0xff]
  %v9017 = vpack.c.bf16 %v9016, %v9016
  %s9018 = scalar_lea.vmem %s5, 64
  %v9019 = vld [vmem:[%s9018] sm:$0xf]
  %v9020 = vld [vmem:[%s9018 + $0x4] sm:$0xf]
  %v9021 = vld [vmem:[%s9018 + $0x8] sm:$0xf]
  %v9022 = vld [vmem:[%s9018 + $0xc] sm:$0xf]
  %v9023 = vld [vmem:[%s9018 + $0x10] sm:$0xf]
  %v9024 = vld [vmem:[%s9018 + $0x14] sm:$0xf]
  %v9025 = vld [vmem:[%s9018 + $0x18] sm:$0xf]
  %v9026 = vld [vmem:[%s9018 + $0x1c] sm:$0xf]
  %v9027 = vld [vmem:[%s9018 + $0x20] sm:$0xf]
  %v9028 = vld [vmem:[%s9018 + $0x24] sm:$0xf]
  %v9029 = vld [vmem:[%s9018 + $0x28] sm:$0xf]
  %v9030 = vld [vmem:[%s9018 + $0x2c] sm:$0xf]
  %v9031 = vld [vmem:[%s9018 + $0x30] sm:$0xf]
  %v9032 = vld [vmem:[%s9018 + $0x34] sm:$0xf]
  %v9033 = vld [vmem:[%s9018 + $0x38] sm:$0xf]
  %v9034 = vld [vmem:[%s9018 + $0x3c] sm:$0xf]
  %v9051 = vunpack.c.l.b16 %v9019
  %v9052 = vunpack.c.l.b16 %v9020
  %v9053 = vunpack.c.l.b16 %v9021
  %v9054 = vunpack.c.l.b16 %v9022
  %v9055 = vunpack.c.l.b16 %v9023
  %v9056 = vunpack.c.l.b16 %v9024
  %v9057 = vunpack.c.l.b16 %v9025
  %v9058 = vunpack.c.l.b16 %v9026
  %v9059 = vunpack.c.l.b16 %v9027
  %v9060 = vunpack.c.l.b16 %v9028
  %v9061 = vunpack.c.l.b16 %v9029
  %v9062 = vunpack.c.l.b16 %v9030
  %v9063 = vunpack.c.l.b16 %v9031
  %v9064 = vunpack.c.l.b16 %v9032
  %v9065 = vunpack.c.l.b16 %v9033
  %v9066 = vunpack.c.l.b16 %v9034
  %v9067 = vpack.c.b16 %v9052, %v9051
  %v9068 = vpack.c.b16 %v9054, %v9053
  %v9069 = vpack.c.b16 %v9056, %v9055
  %v9070 = vpack.c.b16 %v9058, %v9057
  %v9071 = vpack.c.b16 %v9060, %v9059
  %v9072 = vpack.c.b16 %v9062, %v9061
  %v9073 = vpack.c.b16 %v9064, %v9063
  %v9074 = vpack.c.b16 %v9066, %v9065
  %9083 = vmatprep.subr.bf16.mxu0 0
  %9084 = vmatpush1.bf16.msra.mxu0 %v9067
  %9085 = vmatprep.subr.bf16.mxu0 0
  %9086 = vmatpush1.bf16.msra.mxu0 %v9068
  %9087 = vmatprep.subr.bf16.mxu0 0
  %9088 = vmatpush1.bf16.msra.mxu0 %v9069
  %9089 = vmatprep.subr.bf16.mxu0 0
  %9090 = vmatpush1.bf16.msra.mxu0 %v9070
  %9091 = vmatprep.subr.bf16.mxu0 0
  %9092 = vmatpush1.bf16.msra.mxu0 %v9071
  %9093 = vmatprep.subr.bf16.mxu0 0
  %9094 = vmatpush1.bf16.msra.mxu0 %v9072
  %9095 = vmatprep.subr.bf16.mxu0 0
  %9096 = vmatpush1.bf16.msra.mxu0 %v9073
  %9097 = vmatprep.subr.bf16.mxu0 0
  %9098 = vmatpush1.bf16.msra.mxu0 %v9074
  %9099 = vmatprep.subr.bf16.mxu0 0
  %9100 = vmatpush1.bf16.msra.mxu0 0
  %9101 = vmatprep.subr.bf16.mxu0 0
  %9102 = vmatpush1.bf16.msra.mxu0 0
  %9103 = vmatprep.subr.bf16.mxu0 0
  %9104 = vmatpush1.bf16.msra.mxu0 0
  %9105 = vmatprep.subr.bf16.mxu0 0
  %9106 = vmatpush1.bf16.msra.mxu0 0
  %9107 = vmatprep.subr.bf16.mxu0 0
  %9108 = vmatpush1.bf16.msra.mxu0 0
  %9109 = vmatprep.subr.bf16.mxu0 0
  %9110 = vmatpush1.bf16.msra.mxu0 0
  %9111 = vmatprep.subr.bf16.mxu0 0
  %9112 = vmatpush1.bf16.msra.mxu0 0
  %9113 = vmatprep.subr.bf16.mxu0 0
  %9114 = vmatpush1.bf16.msra.mxu0 0
  %9115 = vmatprep.mubr.bf16.mxu0 0
  %9116 = vmatmul.mubr.bf16.gmra.mrb[0].mxu0 %v9017
  %v9117 = vpop.f32.mrb[0].mxu0
  %v9118 = vadd.f32 0.0, %v9117
  %v9119 = vpop.f32.mrb[0].mxu0
  %v9120 = vpop.f32.mrb[0].mxu0
  %v9121 = vpop.f32.mrb[0].mxu0
  %9122 = vdwg.mxu0
  %v9139 = vunpack.c.l.b16 %v8999
  %v9140 = vunpack.c.l.b16 %v9000
  %v9141 = vunpack.c.l.b16 %v9001
  %v9142 = vunpack.c.l.b16 %v9002
  %v9143 = vunpack.c.l.b16 %v9003
  %v9144 = vunpack.c.l.b16 %v9004
  %v9145 = vunpack.c.l.b16 %v9005
  %v9146 = vunpack.c.l.b16 %v9006
  %v9147 = vunpack.c.l.b16 %v9007
  %v9148 = vunpack.c.l.b16 %v9008
  %v9149 = vunpack.c.l.b16 %v9009
  %v9150 = vunpack.c.l.b16 %v9010
  %v9151 = vunpack.c.l.b16 %v9011
  %v9152 = vunpack.c.l.b16 %v9012
  %v9153 = vunpack.c.l.b16 %v9013
  %v9154 = vunpack.c.l.b16 %v9014
  %v9155 = vpack.c.b16 %v9140, %v9139
  %v9156 = vpack.c.b16 %v9142, %v9141
  %v9157 = vpack.c.b16 %v9144, %v9143
  %v9158 = vpack.c.b16 %v9146, %v9145
  %v9159 = vpack.c.b16 %v9148, %v9147
  %v9160 = vpack.c.b16 %v9150, %v9149
  %v9161 = vpack.c.b16 %v9152, %v9151
  %v9162 = vpack.c.b16 %v9154, %v9153
  %9171 = vmatprep.subr.bf16.mxu0 0
  %9172 = vmatpush1.bf16.msra.mxu0 %v9155
  %9173 = vmatprep.subr.bf16.mxu0 0
  %9174 = vmatpush1.bf16.msra.mxu0 %v9156
  %9175 = vmatprep.subr.bf16.mxu0 0
  %9176 = vmatpush1.bf16.msra.mxu0 %v9157
  %9177 = vmatprep.subr.bf16.mxu0 0
  %9178 = vmatpush1.bf16.msra.mxu0 %v9158
  %9179 = vmatprep.subr.bf16.mxu0 0
  %9180 = vmatpush1.bf16.msra.mxu0 %v9159
  %9181 = vmatprep.subr.bf16.mxu0 0
  %9182 = vmatpush1.bf16.msra.mxu0 %v9160
  %9183 = vmatprep.subr.bf16.mxu0 0
  %9184 = vmatpush1.bf16.msra.mxu0 %v9161
  %9185 = vmatprep.subr.bf16.mxu0 0
  %9186 = vmatpush1.bf16.msra.mxu0 %v9162
  %9187 = vmatprep.subr.bf16.mxu0 0
  %9188 = vmatpush1.bf16.msra.mxu0 0
  %9189 = vmatprep.subr.bf16.mxu0 0
  %9190 = vmatpush1.bf16.msra.mxu0 0
  %9191 = vmatprep.subr.bf16.mxu0 0
  %9192 = vmatpush1.bf16.msra.mxu0 0
  %9193 = vmatprep.subr.bf16.mxu0 0
  %9194 = vmatpush1.bf16.msra.mxu0 0
  %9195 = vmatprep.subr.bf16.mxu0 0
  %9196 = vmatpush1.bf16.msra.mxu0 0
  %9197 = vmatprep.subr.bf16.mxu0 0
  %9198 = vmatpush1.bf16.msra.mxu0 0
  %9199 = vmatprep.subr.bf16.mxu0 0
  %9200 = vmatpush1.bf16.msra.mxu0 0
  %9201 = vmatprep.subr.bf16.mxu0 0
  %9202 = vmatpush1.bf16.msra.mxu0 0
  %9203 = vmatprep.mubr.bf16.mxu0 0
  %9204 = vmatmul.mubr.bf16.gmra.mrb[0].mxu0 %v8998
  %v9205 = vpop.f32.mrb[0].mxu0
  %v9206 = vadd.f32 %v9118, %v9205
  %v9207 = vpop.f32.mrb[0].mxu0
  %v9208 = vpop.f32.mrb[0].mxu0
  %v9209 = vpop.f32.mrb[0].mxu0
  %9210 = vdwg.mxu0
  %s9211 = scalar_lea.vmem [#allocation4], 16
  %v9212 = vld [vmem:[%s9211] sm:$0xff]
  %v9213 = vpack.c.bf16 %v9212, %v9212
  %s9214 = scalar_lea.vmem %s5, 128
  %v9215 = vld [vmem:[%s9214] sm:$0xf]
  %v9216 = vld [vmem:[%s9214 + $0x4] sm:$0xf]
  %v9217 = vld [vmem:[%s9214 + $0x8] sm:$0xf]
  %v9218 = vld [vmem:[%s9214 + $0xc] sm:$0xf]
  %v9219 = vld [vmem:[%s9214 + $0x10] sm:$0xf]
  %v9220 = vld [vmem:[%s9214 + $0x14] sm:$0xf]
  %v9221 = vld [vmem:[%s9214 + $0x18] sm:$0xf]
  %v9222 = vld [vmem:[%s9214 + $0x1c] sm:$0xf]
  %v9223 = vld [vmem:[%s9214 + $0x20] sm:$0xf]
  %v9224 = vld [vmem:[%s9214 + $0x24] sm:$0xf]
  %v9225 = vld [vmem:[%s9214 + $0x28] sm:$0xf]
  %v9226 = vld [vmem:[%s9214 + $0x2c] sm:$0xf]
  %v9227 = vld [vmem:[%s9214 + $0x30] sm:$0xf]
  %v9228 = vld [vmem:[%s9214 + $0x34] sm:$0xf]
  %v9229 = vld [vmem:[%s9214 + $0x38] sm:$0xf]
  %v9230 = vld [vmem:[%s9214 + $0x3c] sm:$0xf]
  %v9247 = vunpack.c.l.b16 %v9215
  %v9248 = vunpack.c.l.b16 %v9216
  %v9249 = vunpack.c.l.b16 %v9217
  %v9250 = vunpack.c.l.b16 %v9218
  %v9251 = vunpack.c.l.b16 %v9219
  %v9252 = vunpack.c.l.b16 %v9220
  %v9253 = vunpack.c.l.b16 %v9221
  %v9254 = vunpack.c.l.b16 %v9222
  %v9255 = vunpack.c.l.b16 %v9223
  %v9256 = vunpack.c.l.b16 %v9224
  %v9257 = vunpack.c.l.b16 %v9225
  %v9258 = vunpack.c.l.b16 %v9226
  %v9259 = vunpack.c.l.b16 %v9227
  %v9260 = vunpack.c.l.b16 %v9228
  %v9261 = vunpack.c.l.b16 %v9229
  %v9262 = vunpack.c.l.b16 %v9230
  %v9263 = vpack.c.b16 %v9248, %v9247
  %v9264 = vpack.c.b16 %v9250, %v9249
  %v9265 = vpack.c.b16 %v9252, %v9251
  %v9266 = vpack.c.b16 %v9254, %v9253
  %v9267 = vpack.c.b16 %v9256, %v9255
  %v9268 = vpack.c.b16 %v9258, %v9257
  %v9269 = vpack.c.b16 %v9260, %v9259
  %v9270 = vpack.c.b16 %v9262, %v9261
  %9279 = vmatprep.subr.bf16.mxu0 0
  %9280 = vmatpush1.bf16.msra.mxu0 %v9263
  %9281 = vmatprep.subr.bf16.mxu0 0
  %9282 = vmatpush1.bf16.msra.mxu0 %v9264
  %9283 = vmatprep.subr.bf16.mxu0 0
  %9284 = vmatpush1.bf16.msra.mxu0 %v9265
  %9285 = vmatprep.subr.bf16.mxu0 0
  %9286 = vmatpush1.bf16.msra.mxu0 %v9266
  %9287 = vmatprep.subr.bf16.mxu0 0
  %9288 = vmatpush1.bf16.msra.mxu0 %v9267
  %9289 = vmatprep.subr.bf16.mxu0 0
  %9290 = vmatpush1.bf16.msra.mxu0 %v9268
  %9291 = vmatprep.subr.bf16.mxu0 0
  %9292 = vmatpush1.bf16.msra.mxu0 %v9269
  %9293 = vmatprep.subr.bf16.mxu0 0
  %9294 = vmatpush1.bf16.msra.mxu0 %v9270
  %9295 = vmatprep.subr.bf16.mxu0 0
  %9296 = vmatpush1.bf16.msra.mxu0 0
  %9297 = vmatprep.subr.bf16.mxu0 0
  %9298 = vmatpush1.bf16.msra.mxu0 0
  %9299 = vmatprep.subr.bf16.mxu0 0
  %9300 = vmatpush1.bf16.msra.mxu0 0
  %9301 = vmatprep.subr.bf16.mxu0 0
  %9302 = vmatpush1.bf16.msra.mxu0 0
  %9303 = vmatprep.subr.bf16.mxu0 0
  %9304 = vmatpush1.bf16.msra.mxu0 0
  %9305 = vmatprep.subr.bf16.mxu0 0
  %9306 = vmatpush1.bf16.msra.mxu0 0
  %9307 = vmatprep.subr.bf16.mxu0 0
  %9308 = vmatpush1.bf16.msra.mxu0 0
  %9309 = vmatprep.subr.bf16.mxu0 0
  %9310 = vmatpush1.bf16.msra.mxu0 0
  %9311 = vmatprep.mubr.bf16.mxu0 0
  %9312 = vmatmul.mubr.bf16.gmra.mrb[0].mxu0 %v9213
  %v9313 = vpop.f32.mrb[0].mxu0
  %v9314 = vadd.f32 0.0, %v9313
  %v9315 = vpop.f32.mrb[0].mxu0
  %v9316 = vpop.f32.mrb[0].mxu0
  %v9317 = vpop.f32.mrb[0].mxu0
  %9318 = vdwg.mxu0
  %v9319 = vadd.f32 %v9206, %v9314
  %v9320 = vld [vmem:[%s132] sm:$0xff]
  %v9321 = vpack.c.bf16 %v9320, %v9320
  %s9322 = scalar_lea.vmem %s5, 192
  %v9323 = vld [vmem:[%s9322] sm:$0xf]
  %v9324 = vld [vmem:[%s9322 + $0x4] sm:$0xf]
  %v9325 = vld [vmem:[%s9322 + $0x8] sm:$0xf]
  %v9326 = vld [vmem:[%s9322 + $0xc] sm:$0xf]
  %v9327 = vld [vmem:[%s9322 + $0x10] sm:$0xf]
  %v9328 = vld [vmem:[%s9322 + $0x14] sm:$0xf]
  %v9329 = vld [vmem:[%s9322 + $0x18] sm:$0xf]
  %v9330 = vld [vmem:[%s9322 + $0x1c] sm:$0xf]
  %v9331 = vld [vmem:[%s9322 + $0x20] sm:$0xf]
  %v9332 = vld [vmem:[%s9322 + $0x24] sm:$0xf]
  %v9333 = vld [vmem:[%s9322 + $0x28] sm:$0xf]
  %v9334 = vld [vmem:[%s9322 + $0x2c] sm:$0xf]
  %v9335 = vld [vmem:[%s9322 + $0x30] sm:$0xf]
  %v9336 = vld [vmem:[%s9322 + $0x34] sm:$0xf]
  %v9337 = vld [vmem:[%s9322 + $0x38] sm:$0xf]
  %v9338 = vld [vmem:[%s9322 + $0x3c] sm:$0xf]
  %v9355 = vunpack.c.l.b16 %v9323
  %v9356 = vunpack.c.l.b16 %v9324
  %v9357 = vunpack.c.l.b16 %v9325
  %v9358 = vunpack.c.l.b16 %v9326
  %v9359 = vunpack.c.l.b16 %v9327
  %v9360 = vunpack.c.l.b16 %v9328
  %v9361 = vunpack.c.l.b16 %v9329
  %v9362 = vunpack.c.l.b16 %v9330
  %v9363 = vunpack.c.l.b16 %v9331
  %v9364 = vunpack.c.l.b16 %v9332
  %v9365 = vunpack.c.l.b16 %v9333
  %v9366 = vunpack.c.l.b16 %v9334
  %v9367 = vunpack.c.l.b16 %v9335
  %v9368 = vunpack.c.l.b16 %v9336
  %v9369 = vunpack.c.l.b16 %v9337
  %v9370 = vunpack.c.l.b16 %v9338
  %v9371 = vpack.c.b16 %v9356, %v9355
  %v9372 = vpack.c.b16 %v9358, %v9357
  %v9373 = vpack.c.b16 %v9360, %v9359
  %v9374 = vpack.c.b16 %v9362, %v9361
  %v9375 = vpack.c.b16 %v9364, %v9363
  %v9376 = vpack.c.b16 %v9366, %v9365
  %v9377 = vpack.c.b16 %v9368, %v9367
  %v9378 = vpack.c.b16 %v9370, %v9369
  %9387 = vmatprep.subr.bf16.mxu0 0
  %9388 = vmatpush1.bf16.msra.mxu0 %v9371
  %9389 = vmatprep.subr.bf16.mxu0 0
  %9390 = vmatpush1.bf16.msra.mxu0 %v9372
  %9391 = vmatprep.subr.bf16.mxu0 0
  %9392 = vmatpush1.bf16.msra.mxu0 %v9373
  %9393 = vmatprep.subr.bf16.mxu0 0
  %9394 = vmatpush1.bf16.msra.mxu0 %v9374
  %9395 = vmatprep.subr.bf16.mxu0 0
  %9396 = vmatpush1.bf16.msra.mxu0 %v9375
  %9397 = vmatprep.subr.bf16.mxu0 0
  %9398 = vmatpush1.bf16.msra.mxu0 %v9376
  %9399 = vmatprep.subr.bf16.mxu0 0
  %9400 = vmatpush1.bf16.msra.mxu0 %v9377
  %9401 = vmatprep.subr.bf16.mxu0 0
  %9402 = vmatpush1.bf16.msra.mxu0 %v9378
  %9403 = vmatprep.subr.bf16.mxu0 0
  %9404 = vmatpush1.bf16.msra.mxu0 0
  %9405 = vmatprep.subr.bf16.mxu0 0
  %9406 = vmatpush1.bf16.msra.mxu0 0
  %9407 = vmatprep.subr.bf16.mxu0 0
  %9408 = vmatpush1.bf16.msra.mxu0 0
  %9409 = vmatprep.subr.bf16.mxu0 0
  %9410 = vmatpush1.bf16.msra.mxu0 0
  %9411 = vmatprep.subr.bf16.mxu0 0
  %9412 = vmatpush1.bf16.msra.mxu0 0
  %9413 = vmatprep.subr.bf16.mxu0 0
  %9414 = vmatpush1.bf16.msra.mxu0 0
  %9415 = vmatprep.subr.bf16.mxu0 0
  %9416 = vmatpush1.bf16.msra.mxu0 0
  %9417 = vmatprep.subr.bf16.mxu0 0
  %9418 = vmatpush1.bf16.msra.mxu0 0
  %9419 = vmatprep.mubr.bf16.mxu0 0
  %9420 = vmatmul.mubr.bf16.gmra.mrb[0].mxu0 %v9321
  %v9421 = vpop.f32.mrb[0].mxu0
  %v9422 = vadd.f32 0.0, %v9421
  %v9423 = vpop.f32.mrb[0].mxu0
  %v9424 = vpop.f32.mrb[0].mxu0
  %v9425 = vpop.f32.mrb[0].mxu0
  %9426 = vdwg.mxu0
  %v9427 = vadd.f32 %v9319, %v9422
  %v9428 = vld [vmem:[%s8992] sm:$0xff]
  %v9429 = vpack.c.bf16 %v9428, %v9428
  %s9430 = scalar_lea.vmem %s5, 256
  %v9431 = vld [vmem:[%s9430] sm:$0xf]
  %v9432 = vld [vmem:[%s9430 + $0x4] sm:$0xf]
  %v9433 = vld [vmem:[%s9430 + $0x8] sm:$0xf]
  %v9434 = vld [vmem:[%s9430 + $0xc] sm:$0xf]
  %v9435 = vld [vmem:[%s9430 + $0x10] sm:$0xf]
  %v9436 = vld [vmem:[%s9430 + $0x14] sm:$0xf]
  %v9437 = vld [vmem:[%s9430 + $0x18] sm:$0xf]
  %v9438 = vld [vmem:[%s9430 + $0x1c] sm:$0xf]
  %v9439 = vld [vmem:[%s9430 + $0x20] sm:$0xf]
  %v9440 = vld [vmem:[%s9430 + $0x24] sm:$0xf]
  %v9441 = vld [vmem:[%s9430 + $0x28] sm:$0xf]
  %v9442 = vld [vmem:[%s9430 + $0x2c] sm:$0xf]
  %v9443 = vld [vmem:[%s9430 + $0x30] sm:$0xf]
  %v9444 = vld [vmem:[%s9430 + $0x34] sm:$0xf]
  %v9445 = vld [vmem:[%s9430 + $0x38] sm:$0xf]
  %v9446 = vld [vmem:[%s9430 + $0x3c] sm:$0xf]
  %v9463 = vunpack.c.l.b16 %v9431
  %v9464 = vunpack.c.l.b16 %v9432
  %v9465 = vunpack.c.l.b16 %v9433
  %v9466 = vunpack.c.l.b16 %v9434
  %v9467 = vunpack.c.l.b16 %v9435
  %v9468 = vunpack.c.l.b16 %v9436
  %v9469 = vunpack.c.l.b16 %v9437
  %v9470 = vunpack.c.l.b16 %v9438
  %v9471 = vunpack.c.l.b16 %v9439
  %v9472 = vunpack.c.l.b16 %v9440
  %v9473 = vunpack.c.l.b16 %v9441
  %v9474 = vunpack.c.l.b16 %v9442
  %v9475 = vunpack.c.l.b16 %v9443
  %v9476 = vunpack.c.l.b16 %v9444
  %v9477 = vunpack.c.l.b16 %v9445
  %v9478 = vunpack.c.l.b16 %v9446
  %v9479 = vpack.c.b16 %v9464, %v9463
  %v9480 = vpack.c.b16 %v9466, %v9465
  %v9481 = vpack.c.b16 %v9468, %v9467
  %v9482 = vpack.c.b16 %v9470, %v9469
  %v9483 = vpack.c.b16 %v9472, %v9471
  %v9484 = vpack.c.b16 %v9474, %v9473
  %v9485 = vpack.c.b16 %v9476, %v9475
  %v9486 = vpack.c.b16 %v9478, %v9477
  %9495 = vmatprep.subr.bf16.mxu0 0
  %9496 = vmatpush1.bf16.msra.mxu0 %v9479
  %9497 = vmatprep.subr.bf16.mxu0 0
  %9498 = vmatpush1.bf16.msra.mxu0 %v9480
  %9499 = vmatprep.subr.bf16.mxu0 0
  %9500 = vmatpush1.bf16.msra.mxu0 %v9481
  %9501 = vmatprep.subr.bf16.mxu0 0
  %9502 = vmatpush1.bf16.msra.mxu0 %v9482
  %9503 = vmatprep.subr.bf16.mxu0 0
  %9504 = vmatpush1.bf16.msra.mxu0 %v9483
  %9505 = vmatprep.subr.bf16.mxu0 0
  %9506 = vmatpush1.bf16.msra.mxu0 %v9484
  %9507 = vmatprep.subr.bf16.mxu0 0
  %9508 = vmatpush1.bf16.msra.mxu0 %v9485
  %9509 = vmatprep.subr.bf16.mxu0 0
  %9510 = vmatpush1.bf16.msra.mxu0 %v9486
  %9511 = vmatprep.subr.bf16.mxu0 0
  %9512 = vmatpush1.bf16.msra.mxu0 0
  %9513 = vmatprep.subr.bf16.mxu0 0
  %9514 = vmatpush1.bf16.msra.mxu0 0
  %9515 = vmatprep.subr.bf16.mxu0 0
  %9516 = vmatpush1.bf16.msra.mxu0 0
  %9517 = vmatprep.subr.bf16.mxu0 0
  %9518 = vmatpush1.bf16.msra.mxu0 0
  %9519 = vmatprep.subr.bf16.mxu0 0
  %9520 = vmatpush1.bf16.msra.mxu0 0
  %9521 = vmatprep.subr.bf16.mxu0 0
  %9522 = vmatpush1.bf16.msra.mxu0 0
  %9523 = vmatprep.subr.bf16.mxu0 0
  %9524 = vmatpush1.bf16.msra.mxu0 0
  %9525 = vmatprep.subr.bf16.mxu0 0
  %9526 = vmatpush1.bf16.msra.mxu0 0
  %9527 = vmatprep.mubr.bf16.mxu0 0
  %9528 = vmatmul.mubr.bf16.gmra.mrb[0].mxu0 %v9429
  %v9529 = vpop.f32.mrb[0].mxu0
  %v9530 = vadd.f32 0.0, %v9529
  %v9531 = vpop.f32.mrb[0].mxu0
  %v9532 = vpop.f32.mrb[0].mxu0
  %v9533 = vpop.f32.mrb[0].mxu0
  %9534 = vdwg.mxu0
  %v9535 = vadd.f32 %v9427, %v9530
  %s9536 = scalar_lea.vmem [#allocation4], 48
  %v9537 = vld [vmem:[%s9536] sm:$0xff]
  %v9538 = vpack.c.bf16 %v9537, %v9537
  %s9539 = scalar_lea.vmem %s5, 320
  %v9540 = vld [vmem:[%s9539] sm:$0xf]
  %v9541 = vld [vmem:[%s9539 + $0x4] sm:$0xf]
  %v9542 = vld [vmem:[%s9539 + $0x8] sm:$0xf]
  %v9543 = vld [vmem:[%s9539 + $0xc] sm:$0xf]
  %v9544 = vld [vmem:[%s9539 + $0x10] sm:$0xf]
  %v9545 = vld [vmem:[%s9539 + $0x14] sm:$0xf]
  %v9546 = vld [vmem:[%s9539 + $0x18] sm:$0xf]
  %v9547 = vld [vmem:[%s9539 + $0x1c] sm:$0xf]
  %v9548 = vld [vmem:[%s9539 + $0x20] sm:$0xf]
  %v9549 = vld [vmem:[%s9539 + $0x24] sm:$0xf]
  %v9550 = vld [vmem:[%s9539 + $0x28] sm:$0xf]
  %v9551 = vld [vmem:[%s9539 + $0x2c] sm:$0xf]
  %v9552 = vld [vmem:[%s9539 + $0x30] sm:$0xf]
  %v9553 = vld [vmem:[%s9539 + $0x34] sm:$0xf]
  %v9554 = vld [vmem:[%s9539 + $0x38] sm:$0xf]
  %v9555 = vld [vmem:[%s9539 + $0x3c] sm:$0xf]
  %v9572 = vunpack.c.l.b16 %v9540
  %v9573 = vunpack.c.l.b16 %v9541
  %v9574 = vunpack.c.l.b16 %v9542
  %v9575 = vunpack.c.l.b16 %v9543
  %v9576 = vunpack.c.l.b16 %v9544
  %v9577 = vunpack.c.l.b16 %v9545
  %v9578 = vunpack.c.l.b16 %v9546
  %v9579 = vunpack.c.l.b16 %v9547
  %v9580 = vunpack.c.l.b16 %v9548
  %v9581 = vunpack.c.l.b16 %v9549
  %v9582 = vunpack.c.l.b16 %v9550
  %v9583 = vunpack.c.l.b16 %v9551
  %v9584 = vunpack.c.l.b16 %v9552
  %v9585 = vunpack.c.l.b16 %v9553
  %v9586 = vunpack.c.l.b16 %v9554
  %v9587 = vunpack.c.l.b16 %v9555
  %v9588 = vpack.c.b16 %v9573, %v9572
  %v9589 = vpack.c.b16 %v9575, %v9574
  %v9590 = vpack.c.b16 %v9577, %v9576
  %v9591 = vpack.c.b16 %v9579, %v9578
  %v9592 = vpack.c.b16 %v9581, %v9580
  %v9593 = vpack.c.b16 %v9583, %v9582
  %v9594 = vpack.c.b16 %v9585, %v9584
  %v9595 = vpack.c.b16 %v9587, %v9586
  %9604 = vmatprep.subr.bf16.mxu0 0
  %9605 = vmatpush1.bf16.msra.mxu0 %v9588
  %9606 = vmatprep.subr.bf16.mxu0 0
  %9607 = vmatpush1.bf16.msra.mxu0 %v9589
  %9608 = vmatprep.subr.bf16.mxu0 0
  %9609 = vmatpush1.bf16.msra.mxu0 %v9590
  %9610 = vmatprep.subr.bf16.mxu0 0
  %9611 = vmatpush1.bf16.msra.mxu0 %v9591
  %9612 = vmatprep.subr.bf16.mxu0 0
  %9613 = vmatpush1.bf16.msra.mxu0 %v9592
  %9614 = vmatprep.subr.bf16.mxu0 0
  %9615 = vmatpush1.bf16.msra.mxu0 %v9593
  %9616 = vmatprep.subr.bf16.mxu0 0
  %9617 = vmatpush1.bf16.msra.mxu0 %v9594
  %9618 = vmatprep.subr.bf16.mxu0 0
  %9619 = vmatpush1.bf16.msra.mxu0 %v9595
  %9620 = vmatprep.subr.bf16.mxu0 0
  %9621 = vmatpush1.bf16.msra.mxu0 0
  %9622 = vmatprep.subr.bf16.mxu0 0
  %9623 = vmatpush1.bf16.msra.mxu0 0
  %9624 = vmatprep.subr.bf16.mxu0 0
  %9625 = vmatpush1.bf16.msra.mxu0 0
  %9626 = vmatprep.subr.bf16.mxu0 0
  %9627 = vmatpush1.bf16.msra.mxu0 0
  %9628 = vmatprep.subr.bf16.mxu0 0
  %9629 = vmatpush1.bf16.msra.mxu0 0
  %9630 = vmatprep.subr.bf16.mxu0 0
  %9631 = vmatpush1.bf16.msra.mxu0 0
  %9632 = vmatprep.subr.bf16.mxu0 0
  %9633 = vmatpush1.bf16.msra.mxu0 0
  %9634 = vmatprep.subr.bf16.mxu0 0
  %9635 = vmatpush1.bf16.msra.mxu0 0
  %9636 = vmatprep.mubr.bf16.mxu0 0
  %9637 = vmatmul.mubr.bf16.gmra.mrb[0].mxu0 %v9538
  %v9638 = vpop.f32.mrb[0].mxu0
  %v9639 = vadd.f32 0.0, %v9638
  %v9640 = vpop.f32.mrb[0].mxu0
  %v9641 = vpop.f32.mrb[0].mxu0
  %v9642 = vpop.f32.mrb[0].mxu0
  %9643 = vdwg.mxu0
  %v9644 = vadd.f32 %v9535, %v9639
  %s9645 = scalar_lea.vmem [#allocation4], 64
  %v9646 = vld [vmem:[%s9645] sm:$0xff]
  %v9647 = vpack.c.bf16 %v9646, %v9646
  %s9648 = scalar_lea.vmem %s5, 384
  %v9649 = vld [vmem:[%s9648] sm:$0xf]
  %v9650 = vld [vmem:[%s9648 + $0x4] sm:$0xf]
  %v9651 = vld [vmem:[%s9648 + $0x8] sm:$0xf]
  %v9652 = vld [vmem:[%s9648 + $0xc] sm:$0xf]
  %v9653 = vld [vmem:[%s9648 + $0x10] sm:$0xf]
  %v9654 = vld [vmem:[%s9648 + $0x14] sm:$0xf]
  %v9655 = vld [vmem:[%s9648 + $0x18] sm:$0xf]
  %v9656 = vld [vmem:[%s9648 + $0x1c] sm:$0xf]
  %v9657 = vld [vmem:[%s9648 + $0x20] sm:$0xf]
  %v9658 = vld [vmem:[%s9648 + $0x24] sm:$0xf]
  %v9659 = vld [vmem:[%s9648 + $0x28] sm:$0xf]
  %v9660 = vld [vmem:[%s9648 + $0x2c] sm:$0xf]
  %v9661 = vld [vmem:[%s9648 + $0x30] sm:$0xf]
  %v9662 = vld [vmem:[%s9648 + $0x34] sm:$0xf]
  %v9663 = vld [vmem:[%s9648 + $0x38] sm:$0xf]
  %v9664 = vld [vmem:[%s9648 + $0x3c] sm:$0xf]
  %v9681 = vunpack.c.l.b16 %v9649
  %v9682 = vunpack.c.l.b16 %v9650
  %v9683 = vunpack.c.l.b16 %v9651
  %v9684 = vunpack.c.l.b16 %v9652
  %v9685 = vunpack.c.l.b16 %v9653
  %v9686 = vunpack.c.l.b16 %v9654
  %v9687 = vunpack.c.l.b16 %v9655
  %v9688 = vunpack.c.l.b16 %v9656
  %v9689 = vunpack.c.l.b16 %v9657
  %v9690 = vunpack.c.l.b16 %v9658
  %v9691 = vunpack.c.l.b16 %v9659
  %v9692 = vunpack.c.l.b16 %v9660
  %v9693 = vunpack.c.l.b16 %v9661
  %v9694 = vunpack.c.l.b16 %v9662
  %v9695 = vunpack.c.l.b16 %v9663
  %v9696 = vunpack.c.l.b16 %v9664
  %v9697 = vpack.c.b16 %v9682, %v9681
  %v9698 = vpack.c.b16 %v9684, %v9683
  %v9699 = vpack.c.b16 %v9686, %v9685
  %v9700 = vpack.c.b16 %v9688, %v9687
  %v9701 = vpack.c.b16 %v9690, %v9689
  %v9702 = vpack.c.b16 %v9692, %v9691
  %v9703 = vpack.c.b16 %v9694, %v9693
  %v9704 = vpack.c.b16 %v9696, %v9695
  %9713 = vmatprep.subr.bf16.mxu0 0
  %9714 = vmatpush1.bf16.msra.mxu0 %v9697
  %9715 = vmatprep.subr.bf16.mxu0 0
  %9716 = vmatpush1.bf16.msra.mxu0 %v9698
  %9717 = vmatprep.subr.bf16.mxu0 0
  %9718 = vmatpush1.bf16.msra.mxu0 %v9699
  %9719 = vmatprep.subr.bf16.mxu0 0
  %9720 = vmatpush1.bf16.msra.mxu0 %v9700
  %9721 = vmatprep.subr.bf16.mxu0 0
  %9722 = vmatpush1.bf16.msra.mxu0 %v9701
  %9723 = vmatprep.subr.bf16.mxu0 0
  %9724 = vmatpush1.bf16.msra.mxu0 %v9702
  %9725 = vmatprep.subr.bf16.mxu0 0
  %9726 = vmatpush1.bf16.msra.mxu0 %v9703
  %9727 = vmatprep.subr.bf16.mxu0 0
  %9728 = vmatpush1.bf16.msra.mxu0 %v9704
  %9729 = vmatprep.subr.bf16.mxu0 0
  %9730 = vmatpush1.bf16.msra.mxu0 0
  %9731 = vmatprep.subr.bf16.mxu0 0
  %9732 = vmatpush1.bf16.msra.mxu0 0
  %9733 = vmatprep.subr.bf16.mxu0 0
  %9734 = vmatpush1.bf16.msra.mxu0 0
  %9735 = vmatprep.subr.bf16.mxu0 0
  %9736 = vmatpush1.bf16.msra.mxu0 0
  %9737 = vmatprep.subr.bf16.mxu0 0
  %9738 = vmatpush1.bf16.msra.mxu0 0
  %9739 = vmatprep.subr.bf16.mxu0 0
  %9740 = vmatpush1.bf16.msra.mxu0 0
  %9741 = vmatprep.subr.bf16.mxu0 0
  %9742 = vmatpush1.bf16.msra.mxu0 0
  %9743 = vmatprep.subr.bf16.mxu0 0
  %9744 = vmatpush1.bf16.msra.mxu0 0
  %9745 = vmatprep.mubr.bf16.mxu0 0
  %9746 = vmatmul.mubr.bf16.gmra.mrb[0].mxu0 %v9647
  %v9747 = vpop.f32.mrb[0].mxu0
  %v9748 = vadd.f32 0.0, %v9747
  %v9749 = vpop.f32.mrb[0].mxu0
  %v9750 = vpop.f32.mrb[0].mxu0
  %v9751 = vpop.f32.mrb[0].mxu0
  %9752 = vdwg.mxu0
  %v9753 = vadd.f32 %v9644, %v9748
  %s9754 = scalar_lea.vmem [#allocation4], 72
  %v9755 = vld [vmem:[%s9754] sm:$0xff]
  %v9756 = vpack.c.bf16 %v9755, %v9755
  %s9757 = scalar_lea.vmem %s5, 448
  %v9758 = vld [vmem:[%s9757] sm:$0xf]
  %v9759 = vld [vmem:[%s9757 + $0x4] sm:$0xf]
  %v9760 = vld [vmem:[%s9757 + $0x8] sm:$0xf]
  %v9761 = vld [vmem:[%s9757 + $0xc] sm:$0xf]
  %v9762 = vld [vmem:[%s9757 + $0x10] sm:$0xf]
  %v9763 = vld [vmem:[%s9757 + $0x14] sm:$0xf]
  %v9764 = vld [vmem:[%s9757 + $0x18] sm:$0xf]
  %v9765 = vld [vmem:[%s9757 + $0x1c] sm:$0xf]
  %v9766 = vld [vmem:[%s9757 + $0x20] sm:$0xf]
  %v9767 = vld [vmem:[%s9757 + $0x24] sm:$0xf]
  %v9768 = vld [vmem:[%s9757 + $0x28] sm:$0xf]
  %v9769 = vld [vmem:[%s9757 + $0x2c] sm:$0xf]
  %v9770 = vld [vmem:[%s9757 + $0x30] sm:$0xf]
  %v9771 = vld [vmem:[%s9757 + $0x34] sm:$0xf]
  %v9772 = vld [vmem:[%s9757 + $0x38] sm:$0xf]
  %v9773 = vld [vmem:[%s9757 + $0x3c] sm:$0xf]
  %v9790 = vunpack.c.l.b16 %v9758
  %v9791 = vunpack.c.l.b16 %v9759
  %v9792 = vunpack.c.l.b16 %v9760
  %v9793 = vunpack.c.l.b16 %v9761
  %v9794 = vunpack.c.l.b16 %v9762
  %v9795 = vunpack.c.l.b16 %v9763
  %v9796 = vunpack.c.l.b16 %v9764
  %v9797 = vunpack.c.l.b16 %v9765
  %v9798 = vunpack.c.l.b16 %v9766
  %v9799 = vunpack.c.l.b16 %v9767
  %v9800 = vunpack.c.l.b16 %v9768
  %v9801 = vunpack.c.l.b16 %v9769
  %v9802 = vunpack.c.l.b16 %v9770
  %v9803 = vunpack.c.l.b16 %v9771
  %v9804 = vunpack.c.l.b16 %v9772
  %v9805 = vunpack.c.l.b16 %v9773
  %v9806 = vpack.c.b16 %v9791, %v9790
  %v9807 = vpack.c.b16 %v9793, %v9792
  %v9808 = vpack.c.b16 %v9795, %v9794
  %v9809 = vpack.c.b16 %v9797, %v9796
  %v9810 = vpack.c.b16 %v9799, %v9798
  %v9811 = vpack.c.b16 %v9801, %v9800
  %v9812 = vpack.c.b16 %v9803, %v9802
  %v9813 = vpack.c.b16 %v9805, %v9804
  %9822 = vmatprep.subr.bf16.mxu0 0
  %9823 = vmatpush1.bf16.msra.mxu0 %v9806
  %9824 = vmatprep.subr.bf16.mxu0 0
  %9825 = vmatpush1.bf16.msra.mxu0 %v9807
  %9826 = vmatprep.subr.bf16.mxu0 0
  %9827 = vmatpush1.bf16.msra.mxu0 %v9808
  %9828 = vmatprep.subr.bf16.mxu0 0
  %9829 = vmatpush1.bf16.msra.mxu0 %v9809
  %9830 = vmatprep.subr.bf16.mxu0 0
  %9831 = vmatpush1.bf16.msra.mxu0 %v9810
  %9832 = vmatprep.subr.bf16.mxu0 0
  %9833 = vmatpush1.bf16.msra.mxu0 %v9811
  %9834 = vmatprep.subr.bf16.mxu0 0
  %9835 = vmatpush1.bf16.msra.mxu0 %v9812
  %9836 = vmatprep.subr.bf16.mxu0 0
  %9837 = vmatpush1.bf16.msra.mxu0 %v9813
  %9838 = vmatprep.subr.bf16.mxu0 0
  %9839 = vmatpush1.bf16.msra.mxu0 0
  %9840 = vmatprep.subr.bf16.mxu0 0
  %9841 = vmatpush1.bf16.msra.mxu0 0
  %9842 = vmatprep.subr.bf16.mxu0 0
  %9843 = vmatpush1.bf16.msra.mxu0 0
  %9844 = vmatprep.subr.bf16.mxu0 0
  %9845 = vmatpush1.bf16.msra.mxu0 0
  %9846 = vmatprep.subr.bf16.mxu0 0
  %9847 = vmatpush1.bf16.msra.mxu0 0
  %9848 = vmatprep.subr.bf16.mxu0 0
  %9849 = vmatpush1.bf16.msra.mxu0 0
  %9850 = vmatprep.subr.bf16.mxu0 0
  %9851 = vmatpush1.bf16.msra.mxu0 0
  %9852 = vmatprep.subr.bf16.mxu0 0
  %9853 = vmatpush1.bf16.msra.mxu0 0
  %9854 = vmatprep.mubr.bf16.mxu0 0
  %9855 = vmatmul.mubr.bf16.gmra.mrb[0].mxu0 %v9756
  %v9856 = vpop.f32.mrb[0].mxu0
  %v9857 = vadd.f32 0.0, %v9856
  %v9858 = vpop.f32.mrb[0].mxu0
  %v9859 = vpop.f32.mrb[0].mxu0
  %v9860 = vpop.f32.mrb[0].mxu0
  %9861 = vdwg.mxu0
  %v9862 = vadd.f32 %v9753, %v9857
  %s9863 = scalar_lea.vmem [#allocation4], 80
  %v9864 = vld [vmem:[%s9863] sm:$0xff]
  %v9865 = vpack.c.bf16 %v9864, %v9864
  %s9866 = scalar_lea.vmem %s5, 512
  %v9867 = vld [vmem:[%s9866] sm:$0xf]
  %v9868 = vld [vmem:[%s9866 + $0x4] sm:$0xf]
  %v9869 = vld [vmem:[%s9866 + $0x8] sm:$0xf]
  %v9870 = vld [vmem:[%s9866 + $0xc] sm:$0xf]
  %v9871 = vld [vmem:[%s9866 + $0x10] sm:$0xf]
  %v9872 = vld [vmem:[%s9866 + $0x14] sm:$0xf]
  %v9873 = vld [vmem:[%s9866 + $0x18] sm:$0xf]
  %v9874 = vld [vmem:[%s9866 + $0x1c] sm:$0xf]
  %v9875 = vld [vmem:[%s9866 + $0x20] sm:$0xf]
  %v9876 = vld [vmem:[%s9866 + $0x24] sm:$0xf]
  %v9877 = vld [vmem:[%s9866 + $0x28] sm:$0xf]
  %v9878 = vld [vmem:[%s9866 + $0x2c] sm:$0xf]
  %v9879 = vld [vmem:[%s9866 + $0x30] sm:$0xf]
  %v9880 = vld [vmem:[%s9866 + $0x34] sm:$0xf]
  %v9881 = vld [vmem:[%s9866 + $0x38] sm:$0xf]
  %v9882 = vld [vmem:[%s9866 + $0x3c] sm:$0xf]
  %v9899 = vunpack.c.l.b16 %v9867
  %v9900 = vunpack.c.l.b16 %v9868
  %v9901 = vunpack.c.l.b16 %v9869
  %v9902 = vunpack.c.l.b16 %v9870
  %v9903 = vunpack.c.l.b16 %v9871
  %v9904 = vunpack.c.l.b16 %v9872
  %v9905 = vunpack.c.l.b16 %v9873
  %v9906 = vunpack.c.l.b16 %v9874
  %v9907 = vunpack.c.l.b16 %v9875
  %v9908 = vunpack.c.l.b16 %v9876
  %v9909 = vunpack.c.l.b16 %v9877
  %v9910 = vunpack.c.l.b16 %v9878
  %v9911 = vunpack.c.l.b16 %v9879
  %v9912 = vunpack.c.l.b16 %v9880
  %v9913 = vunpack.c.l.b16 %v9881
  %v9914 = vunpack.c.l.b16 %v9882
  %v9915 = vpack.c.b16 %v9900, %v9899
  %v9916 = vpack.c.b16 %v9902, %v9901
  %v9917 = vpack.c.b16 %v9904, %v9903
  %v9918 = vpack.c.b16 %v9906, %v9905
  %v9919 = vpack.c.b16 %v9908, %v9907
  %v9920 = vpack.c.b16 %v9910, %v9909
  %v9921 = vpack.c.b16 %v9912, %v9911
  %v9922 = vpack.c.b16 %v9914, %v9913
  %9931 = vmatprep.subr.bf16.mxu0 0
  %9932 = vmatpush1.bf16.msra.mxu0 %v9915
  %9933 = vmatprep.subr.bf16.mxu0 0
  %9934 = vmatpush1.bf16.msra.mxu0 %v9916
  %9935 = vmatprep.subr.bf16.mxu0 0
  %9936 = vmatpush1.bf16.msra.mxu0 %v9917
  %9937 = vmatprep.subr.bf16.mxu0 0
  %9938 = vmatpush1.bf16.msra.mxu0 %v9918
  %9939 = vmatprep.subr.bf16.mxu0 0
  %9940 = vmatpush1.bf16.msra.mxu0 %v9919
  %9941 = vmatprep.subr.bf16.mxu0 0
  %9942 = vmatpush1.bf16.msra.mxu0 %v9920
  %9943 = vmatprep.subr.bf16.mxu0 0
  %9944 = vmatpush1.bf16.msra.mxu0 %v9921
  %9945 = vmatprep.subr.bf16.mxu0 0
  %9946 = vmatpush1.bf16.msra.mxu0 %v9922
  %9947 = vmatprep.subr.bf16.mxu0 0
  %9948 = vmatpush1.bf16.msra.mxu0 0
  %9949 = vmatprep.subr.bf16.mxu0 0
  %9950 = vmatpush1.bf16.msra.mxu0 0
  %9951 = vmatprep.subr.bf16.mxu0 0
  %9952 = vmatpush1.bf16.msra.mxu0 0
  %9953 = vmatprep.subr.bf16.mxu0 0
  %9954 = vmatpush1.bf16.msra.mxu0 0
  %9955 = vmatprep.subr.bf16.mxu0 0
  %9956 = vmatpush1.bf16.msra.mxu0 0
  %9957 = vmatprep.subr.bf16.mxu0 0
  %9958 = vmatpush1.bf16.msra.mxu0 0
  %9959 = vmatprep.subr.bf16.mxu0 0
  %9960 = vmatpush1.bf16.msra.mxu0 0
  %9961 = vmatprep.subr.bf16.mxu0 0
  %9962 = vmatpush1.bf16.msra.mxu0 0
  %9963 = vmatprep.mubr.bf16.mxu0 0
  %9964 = vmatmul.mubr.bf16.gmra.mrb[0].mxu0 %v9865
  %v9965 = vpop.f32.mrb[0].mxu0
  %v9966 = vadd.f32 0.0, %v9965
  %v9967 = vpop.f32.mrb[0].mxu0
  %v9968 = vpop.f32.mrb[0].mxu0
  %v9969 = vpop.f32.mrb[0].mxu0
  %9970 = vdwg.mxu0
  %v9971 = vadd.f32 %v9862, %v9966
  %v9972 = vld [vmem:[%s6] sm:$0x1]
  %v9974 = vlaneseq
  %v9975 = vshrl.u32 %v9974, 7
  %v9976 = vsub.s32 0, %v9975
  %v9977 = vrot.slane %v9972, %v9976
  %v9979 = vadd.f32 %v9971, %v9977
  %v9980 = vmax.f32 %v9979, 0.0
  %s9981 = scalar_lea.vmem [#allocation5], 32
  %9982 = vst [vmem:[%s9981] sm:$0xff] %v9980
  %v9983 = vld [vmem:[#allocation5] sm:$0xff]
  %v9984 = vld [vmem:[#allocation5 + $0x8] sm:$0xff]
  %v9985 = vld [vmem:[#allocation5 + $0x10] sm:$0xff]
  %v9986 = vld [vmem:[#allocation5 + $0x18] sm:$0xff]
  %v9987 = vld [vmem:[#allocation5 + $0x20] sm:$0xff]
  %v9988 = vld [vmem:[#allocation5 + $0x28] sm:$0xff]
  %v9989 = vld [vmem:[#allocation5 + $0x30] sm:$0xff]
  %v9990 = vld [vmem:[#allocation5 + $0x38] sm:$0xff]
  %v9991 = vld [vmem:[#allocation5 + $0x40] sm:$0xff]
  %v9992 = vpack.c.bf16 %v9984, %v9983
  %v9993 = vpack.c.bf16 %v9986, %v9985
  %v9994 = vpack.c.bf16 %v9988, %v9987
  %v9995 = vpack.c.bf16 %v9990, %v9989
  %v9996 = vpack.c.bf16 %v9991, %v9991
  %v9997 = vld [vmem:[%s7] sm:$0xf]
  %v9998 = vld [vmem:[%s7 + $0x4] sm:$0xf]
  %v9999 = vld [vmem:[%s7 + $0x8] sm:$0xf]
  %v10000 = vld [vmem:[%s7 + $0xc] sm:$0xf]
  %v10001 = vld [vmem:[%s7 + $0x10] sm:$0xf]
  %v10002 = vld [vmem:[%s7 + $0x14] sm:$0xf]
  %v10003 = vld [vmem:[%s7 + $0x18] sm:$0xf]
  %v10004 = vld [vmem:[%s7 + $0x1c] sm:$0xf]
  %v10005 = vld [vmem:[%s7 + $0x20] sm:$0xf]
  %v10006 = vld [vmem:[%s7 + $0x24] sm:$0xf]
  %v10007 = vld [vmem:[%s7 + $0x28] sm:$0xf]
  %v10008 = vld [vmem:[%s7 + $0x2c] sm:$0xf]
  %v10009 = vld [vmem:[%s7 + $0x30] sm:$0xf]
  %v10010 = vld [vmem:[%s7 + $0x34] sm:$0xf]
  %v10011 = vld [vmem:[%s7 + $0x38] sm:$0xf]
  %v10012 = vld [vmem:[%s7 + $0x3c] sm:$0xf]
  %v10013 = vld [vmem:[%s8] sm:$0x1]
  %v10015 = vlaneseq
  %v10016 = vshrl.u32 %v10015, 7
  %v10017 = vsub.s32 0, %v10016
  %v10018 = vrot.slane %v10013, %v10017
  %v10036 = vunpack.c.l.b16 %v9997
  %v10037 = vunpack.c.l.b16 %v9998
  %v10038 = vunpack.c.l.b16 %v9999
  %v10039 = vunpack.c.l.b16 %v10000
  %v10040 = vunpack.c.l.b16 %v10001
  %v10041 = vunpack.c.l.b16 %v10002
  %v10042 = vunpack.c.l.b16 %v10003
  %v10043 = vunpack.c.l.b16 %v10004
  %v10044 = vunpack.c.l.b16 %v10005
  %v10045 = vunpack.c.l.b16 %v10006
  %v10046 = vunpack.c.l.b16 %v10007
  %v10047 = vunpack.c.l.b16 %v10008
  %v10048 = vunpack.c.l.b16 %v10009
  %v10049 = vunpack.c.l.b16 %v10010
  %v10050 = vunpack.c.l.b16 %v10011
  %v10051 = vunpack.c.l.b16 %v10012
  %v10052 = vpack.c.b16 %v10037, %v10036
  %v10053 = vpack.c.b16 %v10039, %v10038
  %v10054 = vpack.c.b16 %v10041, %v10040
  %v10055 = vpack.c.b16 %v10043, %v10042
  %v10056 = vpack.c.b16 %v10045, %v10044
  %v10057 = vpack.c.b16 %v10047, %v10046
  %v10058 = vpack.c.b16 %v10049, %v10048
  %v10059 = vpack.c.b16 %v10051, %v10050
  %10068 = vmatprep.subr.bf16.mxu0 0
  %10069 = vmatpush1.bf16.msra.mxu0 %v10052
  %10070 = vmatprep.subr.bf16.mxu0 0
  %10071 = vmatpush1.bf16.msra.mxu0 %v10053
  %10072 = vmatprep.subr.bf16.mxu0 0
  %10073 = vmatpush1.bf16.msra.mxu0 %v10054
  %10074 = vmatprep.subr.bf16.mxu0 0
  %10075 = vmatpush1.bf16.msra.mxu0 %v10055
  %10076 = vmatprep.subr.bf16.mxu0 0
  %10077 = vmatpush1.bf16.msra.mxu0 %v10056
  %10078 = vmatprep.subr.bf16.mxu0 0
  %10079 = vmatpush1.bf16.msra.mxu0 %v10057
  %10080 = vmatprep.subr.bf16.mxu0 0
  %10081 = vmatpush1.bf16.msra.mxu0 %v10058
  %10082 = vmatprep.subr.bf16.mxu0 0
  %10083 = vmatpush1.bf16.msra.mxu0 %v10059
  %10084 = vmatprep.subr.bf16.mxu0 0
  %10085 = vmatpush1.bf16.msra.mxu0 0
  %10086 = vmatprep.subr.bf16.mxu0 0
  %10087 = vmatpush1.bf16.msra.mxu0 0
  %10088 = vmatprep.subr.bf16.mxu0 0
  %10089 = vmatpush1.bf16.msra.mxu0 0
  %10090 = vmatprep.subr.bf16.mxu0 0
  %10091 = vmatpush1.bf16.msra.mxu0 0
  %10092 = vmatprep.subr.bf16.mxu0 0
  %10093 = vmatpush1.bf16.msra.mxu0 0
  %10094 = vmatprep.subr.bf16.mxu0 0
  %10095 = vmatpush1.bf16.msra.mxu0 0
  %10096 = vmatprep.subr.bf16.mxu0 0
  %10097 = vmatpush1.bf16.msra.mxu0 0
  %10098 = vmatprep.subr.bf16.mxu0 0
  %10099 = vmatpush1.bf16.msra.mxu0 0
  %10100 = vmatprep.mubr.bf16.mxu0 0
  %10101 = vmatmul.mubr.bf16.gmra.mrb[0].mxu0 %v9992
  %v10102 = vpop.f32.mrb[0].mxu0
  %v10103 = vadd.f32 %v10018, %v10102
  %v10104 = vpop.f32.mrb[0].mxu0
  %v10105 = vpop.f32.mrb[0].mxu0
  %v10106 = vadd.f32 %v10018, %v10105
  %v10107 = vpop.f32.mrb[0].mxu0
  %10108 = vmatprep.mubr.bf16.mxu0 0
  %10109 = vmatmul.mubr.bf16.gmra.mrb[0].mxu0 %v9993
  %v10110 = vpop.f32.mrb[0].mxu0
  %v10111 = vadd.f32 %v10018, %v10110
  %v10112 = vpop.f32.mrb[0].mxu0
  %v10113 = vpop.f32.mrb[0].mxu0
  %v10114 = vadd.f32 %v10018, %v10113
  %v10115 = vpop.f32.mrb[0].mxu0
  %10116 = vmatprep.mubr.bf16.mxu0 0
  %10117 = vmatmul.mubr.bf16.gmra.mrb[0].mxu0 %v9994
  %v10118 = vpop.f32.mrb[0].mxu0
  %v10119 = vadd.f32 %v10018, %v10118
  %v10120 = vpop.f32.mrb[0].mxu0
  %v10121 = vpop.f32.mrb[0].mxu0
  %v10122 = vadd.f32 %v10018, %v10121
  %v10123 = vpop.f32.mrb[0].mxu0
  %10124 = vmatprep.mubr.bf16.mxu0 0
  %10125 = vmatmul.mubr.bf16.gmra.mrb[0].mxu0 %v9995
  %v10126 = vpop.f32.mrb[0].mxu0
  %v10127 = vadd.f32 %v10018, %v10126
  %v10128 = vpop.f32.mrb[0].mxu0
  %v10129 = vpop.f32.mrb[0].mxu0
  %v10130 = vadd.f32 %v10018, %v10129
  %v10131 = vpop.f32.mrb[0].mxu0
  %10132 = vmatprep.mubr.bf16.mxu0 0
  %10133 = vmatmul.mubr.bf16.gmra.mrb[0].mxu0 %v9996
  %v10134 = vpop.f32.mrb[0].mxu0
  %v10135 = vadd.f32 %v10018, %v10134
  %v10136 = vpop.f32.mrb[0].mxu0
  %v10137 = vpop.f32.mrb[0].mxu0
  %v10138 = vpop.f32.mrb[0].mxu0
  %10139 = vdwg.mxu0
  %v10140 = vmax.f32 %v10103, 0.0
  %v10141 = vmax.f32 %v10106, 0.0
  %v10142 = vmax.f32 %v10111, 0.0
  %v10143 = vmax.f32 %v10114, 0.0
  %v10144 = vmax.f32 %v10119, 0.0
  %v10145 = vmax.f32 %v10122, 0.0
  %v10146 = vmax.f32 %v10127, 0.0
  %v10147 = vmax.f32 %v10130, 0.0
  %v10148 = vmax.f32 %v10135, 0.0
  %s10149 = scalar_lea.vmem [#allocation6], 48
  %10150 = vst [vmem:[%s10149] sm:$0xff] %v10140
  %10151 = vst [vmem:[%s10149 + $0x8] sm:$0xff] %v10141
  %10152 = vst [vmem:[%s10149 + $0x10] sm:$0xff] %v10142
  %10153 = vst [vmem:[%s10149 + $0x28] sm:$0xff] %v10143
  %10154 = vst [vmem:[%s10149 + $0x30] sm:$0xff] %v10144
  %10155 = vst [vmem:[%s10149 + $0x38] sm:$0xff] %v10145
  %10156 = vst [vmem:[%s10149 + $0x50] sm:$0xff] %v10146
  %10157 = vst [vmem:[%s10149 + $0x58] sm:$0xff] %v10147
  %10158 = vst [vmem:[%s10149 + $0x60] sm:$0xff] %v10148
  %v10159 = vld [vmem:[#allocation6] sm:$0xff]
  %v10160 = vld [vmem:[#allocation6 + $0x8] sm:$0xff]
  %v10161 = vld [vmem:[#allocation6 + $0x10] sm:$0xff]
  %v10162 = vld [vmem:[#allocation6 + $0x18] sm:$0xff]
  %v10163 = vld [vmem:[#allocation6 + $0x20] sm:$0xff]
  %v10164 = vld [vmem:[#allocation6 + $0x28] sm:$0xff]
  %v10165 = vld [vmem:[#allocation6 + $0x30] sm:$0xff]
  %v10166 = vld [vmem:[#allocation6 + $0x38] sm:$0xff]
  %v10167 = vld [vmem:[#allocation6 + $0x40] sm:$0xff]
  %v10168 = vld [vmem:[#allocation6 + $0x48] sm:$0xff]
  %v10169 = vld [vmem:[#allocation6 + $0x50] sm:$0xff]
  %v10170 = vld [vmem:[#allocation6 + $0x58] sm:$0xff]
  %v10171 = vld [vmem:[#allocation6 + $0x60] sm:$0xff]
  %v10172 = vld [vmem:[#allocation6 + $0x68] sm:$0xff]
  %v10173 = vld [vmem:[#allocation6 + $0x70] sm:$0xff]
  %v10174 = vld [vmem:[#allocation6 + $0x78] sm:$0xff]
  %v10175 = vld [vmem:[#allocation6 + $0x80] sm:$0xff]
  %v10176 = vld [vmem:[#allocation6 + $0x88] sm:$0xff]
  %v10177 = vld [vmem:[#allocation6 + $0x90] sm:$0xff]
  %v10178 = vld [vmem:[#allocation6 + $0x98] sm:$0xff]
  %v10179 = vld [vmem:[#allocation6 + $0xa0] sm:$0xff]
  %v10180 = vld [vmem:[#allocation6 + $0xa8] sm:$0xff]
  %v10181 = vld [vmem:[#allocation6 + $0xb0] sm:$0xff]
  %v10182 = vld [vmem:[#allocation6 + $0xb8] sm:$0xff]
  %v10183 = vld [vmem:[#allocation6 + $0xc0] sm:$0xff]
  %v10184 = vpack.c.bf16 %v10160, %v10159
  %v10185 = vpack.c.bf16 %v10162, %v10161
  %v10186 = vpack.c.bf16 %v10164, %v10163
  %v10187 = vpack.c.bf16 %v10166, %v10165
  %v10188 = vpack.c.bf16 %v10168, %v10167
  %v10189 = vpack.c.bf16 %v10170, %v10169
  %v10190 = vpack.c.bf16 %v10172, %v10171
  %v10191 = vpack.c.bf16 %v10174, %v10173
  %v10192 = vpack.c.bf16 %v10176, %v10175
  %v10193 = vpack.c.bf16 %v10178, %v10177
  %v10194 = vpack.c.bf16 %v10180, %v10179
  %v10195 = vpack.c.bf16 %v10182, %v10181
  %v10196 = vpack.c.bf16 %v10183, %v10183
  %v10197 = vld [vmem:[%s9] sm:$0xf]
  %v10198 = vld [vmem:[%s9 + $0x4] sm:$0xf]
  %v10199 = vld [vmem:[%s9 + $0x8] sm:$0xf]
  %v10200 = vld [vmem:[%s9 + $0xc] sm:$0xf]
  %v10201 = vld [vmem:[%s9 + $0x10] sm:$0xf]
  %v10202 = vld [vmem:[%s9 + $0x14] sm:$0xf]
  %v10203 = vld [vmem:[%s9 + $0x18] sm:$0xf]
  %v10204 = vld [vmem:[%s9 + $0x1c] sm:$0xf]
  %v10205 = vld [vmem:[%s9 + $0x20] sm:$0xf]
  %v10206 = vld [vmem:[%s9 + $0x24] sm:$0xf]
  %v10207 = vld [vmem:[%s9 + $0x28] sm:$0xf]
  %v10208 = vld [vmem:[%s9 + $0x2c] sm:$0xf]
  %v10209 = vld [vmem:[%s9 + $0x30] sm:$0xf]
  %v10210 = vld [vmem:[%s9 + $0x34] sm:$0xf]
  %v10211 = vld [vmem:[%s9 + $0x38] sm:$0xf]
  %v10212 = vld [vmem:[%s9 + $0x3c] sm:$0xf]
  %v10213 = vld [vmem:[%s10] sm:$0x1]
  %v10215 = vlaneseq
  %v10216 = vshrl.u32 %v10215, 7
  %v10217 = vsub.s32 0, %v10216
  %v10218 = vrot.slane %v10213, %v10217
  %v10236 = vunpack.c.l.b16 %v10197
  %v10237 = vunpack.c.l.b16 %v10198
  %v10238 = vunpack.c.l.b16 %v10199
  %v10239 = vunpack.c.l.b16 %v10200
  %v10240 = vunpack.c.l.b16 %v10201
  %v10241 = vunpack.c.l.b16 %v10202
  %v10242 = vunpack.c.l.b16 %v10203
  %v10243 = vunpack.c.l.b16 %v10204
  %v10244 = vunpack.c.l.b16 %v10205
  %v10245 = vunpack.c.l.b16 %v10206
  %v10246 = vunpack.c.l.b16 %v10207
  %v10247 = vunpack.c.l.b16 %v10208
  %v10248 = vunpack.c.l.b16 %v10209
  %v10249 = vunpack.c.l.b16 %v10210
  %v10250 = vunpack.c.l.b16 %v10211
  %v10251 = vunpack.c.l.b16 %v10212
  %v10252 = vpack.c.b16 %v10237, %v10236
  %v10253 = vpack.c.b16 %v10239, %v10238
  %v10254 = vpack.c.b16 %v10241, %v10240
  %v10255 = vpack.c.b16 %v10243, %v10242
  %v10256 = vpack.c.b16 %v10245, %v10244
  %v10257 = vpack.c.b16 %v10247, %v10246
  %v10258 = vpack.c.b16 %v10249, %v10248
  %v10259 = vpack.c.b16 %v10251, %v10250
  %10268 = vmatprep.subr.bf16.mxu0 0
  %10269 = vmatpush1.bf16.msra.mxu0 %v10252
  %10270 = vmatprep.subr.bf16.mxu0 0
  %10271 = vmatpush1.bf16.msra.mxu0 %v10253
  %10272 = vmatprep.subr.bf16.mxu0 0
  %10273 = vmatpush1.bf16.msra.mxu0 %v10254
  %10274 = vmatprep.subr.bf16.mxu0 0
  %10275 = vmatpush1.bf16.msra.mxu0 %v10255
  %10276 = vmatprep.subr.bf16.mxu0 0
  %10277 = vmatpush1.bf16.msra.mxu0 %v10256
  %10278 = vmatprep.subr.bf16.mxu0 0
  %10279 = vmatpush1.bf16.msra.mxu0 %v10257
  %10280 = vmatprep.subr.bf16.mxu0 0
  %10281 = vmatpush1.bf16.msra.mxu0 %v10258
  %10282 = vmatprep.subr.bf16.mxu0 0
  %10283 = vmatpush1.bf16.msra.mxu0 %v10259
  %10284 = vmatprep.subr.bf16.mxu0 0
  %10285 = vmatpush1.bf16.msra.mxu0 0
  %10286 = vmatprep.subr.bf16.mxu0 0
  %10287 = vmatpush1.bf16.msra.mxu0 0
  %10288 = vmatprep.subr.bf16.mxu0 0
  %10289 = vmatpush1.bf16.msra.mxu0 0
  %10290 = vmatprep.subr.bf16.mxu0 0
  %10291 = vmatpush1.bf16.msra.mxu0 0
  %10292 = vmatprep.subr.bf16.mxu0 0
  %10293 = vmatpush1.bf16.msra.mxu0 0
  %10294 = vmatprep.subr.bf16.mxu0 0
  %10295 = vmatpush1.bf16.msra.mxu0 0
  %10296 = vmatprep.subr.bf16.mxu0 0
  %10297 = vmatpush1.bf16.msra.mxu0 0
  %10298 = vmatprep.subr.bf16.mxu0 0
  %10299 = vmatpush1.bf16.msra.mxu0 0
  %10300 = vmatprep.mubr.bf16.mxu0 0
  %10301 = vmatmul.mubr.bf16.gmra.mrb[0].mxu0 %v10184
  %v10302 = vpop.f32.mrb[0].mxu0
  %v10303 = vadd.f32 %v10218, %v10302
  %v10304 = vpop.f32.mrb[0].mxu0
  %v10305 = vpop.f32.mrb[0].mxu0
  %v10306 = vadd.f32 %v10218, %v10305
  %v10307 = vpop.f32.mrb[0].mxu0
  %10308 = vmatprep.mubr.bf16.mxu0 0
  %10309 = vmatmul.mubr.bf16.gmra.mrb[0].mxu0 %v10185
  %v10310 = vpop.f32.mrb[0].mxu0
  %v10311 = vadd.f32 %v10218, %v10310
  %v10312 = vpop.f32.mrb[0].mxu0
  %v10313 = vpop.f32.mrb[0].mxu0
  %v10314 = vadd.f32 %v10218, %v10313
  %v10315 = vpop.f32.mrb[0].mxu0
  %10316 = vmatprep.mubr.bf16.mxu0 0
  %10317 = vmatmul.mubr.bf16.gmra.mrb[0].mxu0 %v10186
  %v10318 = vpop.f32.mrb[0].mxu0
  %v10319 = vadd.f32 %v10218, %v10318
  %v10320 = vpop.f32.mrb[0].mxu0
  %v10321 = vpop.f32.mrb[0].mxu0
  %v10322 = vadd.f32 %v10218, %v10321
  %v10323 = vpop.f32.mrb[0].mxu0
  %10324 = vmatprep.mubr.bf16.mxu0 0
  %10325 = vmatmul.mubr.bf16.gmra.mrb[0].mxu0 %v10187
  %v10326 = vpop.f32.mrb[0].mxu0
  %v10327 = vadd.f32 %v10218, %v10326
  %v10328 = vpop.f32.mrb[0].mxu0
  %v10329 = vpop.f32.mrb[0].mxu0
  %v10330 = vadd.f32 %v10218, %v10329
  %v10331 = vpop.f32.mrb[0].mxu0
  %10332 = vmatprep.mubr.bf16.mxu0 0
  %10333 = vmatmul.mubr.bf16.gmra.mrb[0].mxu0 %v10188
  %v10334 = vpop.f32.mrb[0].mxu0
  %v10335 = vadd.f32 %v10218, %v10334
  %v10336 = vpop.f32.mrb[0].mxu0
  %v10337 = vpop.f32.mrb[0].mxu0
  %v10338 = vadd.f32 %v10218, %v10337
  %v10339 = vpop.f32.mrb[0].mxu0
  %10340 = vmatprep.mubr.bf16.mxu0 0
  %10341 = vmatmul.mubr.bf16.gmra.mrb[0].mxu0 %v10189
  %v10342 = vpop.f32.mrb[0].mxu0
  %v10343 = vadd.f32 %v10218, %v10342
  %v10344 = vpop.f32.mrb[0].mxu0
  %v10345 = vpop.f32.mrb[0].mxu0
  %v10346 = vadd.f32 %v10218, %v10345
  %v10347 = vpop.f32.mrb[0].mxu0
  %10348 = vmatprep.mubr.bf16.mxu0 0
  %10349 = vmatmul.mubr.bf16.gmra.mrb[0].mxu0 %v10190
  %v10350 = vpop.f32.mrb[0].mxu0
  %v10351 = vadd.f32 %v10218, %v10350
  %v10352 = vpop.f32.mrb[0].mxu0
  %v10353 = vpop.f32.mrb[0].mxu0
  %v10354 = vadd.f32 %v10218, %v10353
  %v10355 = vpop.f32.mrb[0].mxu0
  %10356 = vmatprep.mubr.bf16.mxu0 0
  %10357 = vmatmul.mubr.bf16.gmra.mrb[0].mxu0 %v10191
  %v10358 = vpop.f32.mrb[0].mxu0
  %v10359 = vadd.f32 %v10218, %v10358
  %v10360 = vpop.f32.mrb[0].mxu0
  %v10361 = vpop.f32.mrb[0].mxu0
  %v10362 = vadd.f32 %v10218, %v10361
  %v10363 = vpop.f32.mrb[0].mxu0
  %10364 = vmatprep.mubr.bf16.mxu0 0
  %10365 = vmatmul.mubr.bf16.gmra.mrb[0].mxu0 %v10192
  %v10366 = vpop.f32.mrb[0].mxu0
  %v10367 = vadd.f32 %v10218, %v10366
  %v10368 = vpop.f32.mrb[0].mxu0
  %v10369 = vpop.f32.mrb[0].mxu0
  %v10370 = vadd.f32 %v10218, %v10369
  %v10371 = vpop.f32.mrb[0].mxu0
  %10372 = vmatprep.mubr.bf16.mxu0 0
  %10373 = vmatmul.mubr.bf16.gmra.mrb[0].mxu0 %v10193
  %v10374 = vpop.f32.mrb[0].mxu0
  %v10375 = vadd.f32 %v10218, %v10374
  %v10376 = vpop.f32.mrb[0].mxu0
  %v10377 = vpop.f32.mrb[0].mxu0
  %v10378 = vadd.f32 %v10218, %v10377
  %v10379 = vpop.f32.mrb[0].mxu0
  %10380 = vmatprep.mubr.bf16.mxu0 0
  %10381 = vmatmul.mubr.bf16.gmra.mrb[0].mxu0 %v10194
  %v10382 = vpop.f32.mrb[0].mxu0
  %v10383 = vadd.f32 %v10218, %v10382
  %v10384 = vpop.f32.mrb[0].mxu0
  %v10385 = vpop.f32.mrb[0].mxu0
  %v10386 = vadd.f32 %v10218, %v10385
  %v10387 = vpop.f32.mrb[0].mxu0
  %10388 = vmatprep.mubr.bf16.mxu0 0
  %10389 = vmatmul.mubr.bf16.gmra.mrb[0].mxu0 %v10195
  %v10390 = vpop.f32.mrb[0].mxu0
  %v10391 = vadd.f32 %v10218, %v10390
  %v10392 = vpop.f32.mrb[0].mxu0
  %v10393 = vpop.f32.mrb[0].mxu0
  %v10394 = vadd.f32 %v10218, %v10393
  %v10395 = vpop.f32.mrb[0].mxu0
  %10396 = vmatprep.mubr.bf16.mxu0 0
  %10397 = vmatmul.mubr.bf16.gmra.mrb[0].mxu0 %v10196
  %v10398 = vpop.f32.mrb[0].mxu0
  %v10399 = vadd.f32 %v10218, %v10398
  %v10400 = vpop.f32.mrb[0].mxu0
  %v10401 = vpop.f32.mrb[0].mxu0
  %v10402 = vpop.f32.mrb[0].mxu0
  %10403 = vdwg.mxu0
  %v10404 = vmax.f32 %v10303, 0.0
  %v10405 = vmax.f32 %v10306, 0.0
  %v10406 = vmax.f32 %v10311, 0.0
  %v10407 = vmax.f32 %v10314, 0.0
  %v10408 = vmax.f32 %v10319, 0.0
  %v10409 = vmax.f32 %v10322, 0.0
  %v10410 = vmax.f32 %v10327, 0.0
  %v10411 = vmax.f32 %v10330, 0.0
  %v10412 = vmax.f32 %v10335, 0.0
  %v10413 = vmax.f32 %v10338, 0.0
  %v10414 = vmax.f32 %v10343, 0.0
  %v10415 = vmax.f32 %v10346, 0.0
  %v10416 = vmax.f32 %v10351, 0.0
  %v10417 = vmax.f32 %v10354, 0.0
  %v10418 = vmax.f32 %v10359, 0.0
  %v10419 = vmax.f32 %v10362, 0.0
  %v10420 = vmax.f32 %v10367, 0.0
  %v10421 = vmax.f32 %v10370, 0.0
  %v10422 = vmax.f32 %v10375, 0.0
  %v10423 = vmax.f32 %v10378, 0.0
  %v10424 = vmax.f32 %v10383, 0.0
  %v10425 = vmax.f32 %v10386, 0.0
  %v10426 = vmax.f32 %v10391, 0.0
  %v10427 = vmax.f32 %v10394, 0.0
  %v10428 = vmax.f32 %v10399, 0.0
  %10429 = vst [vmem:[%s11] sm:$0xff] %v10404
  %10430 = vst [vmem:[%s11 + $0x8] sm:$0xff] %v10405
  %10431 = vst [vmem:[%s11 + $0x10] sm:$0xff] %v10406
  %10432 = vst [vmem:[%s11 + $0x18] sm:$0xff] %v10407
  %10433 = vst [vmem:[%s11 + $0x20] sm:$0xff] %v10408
  %10434 = vst [vmem:[%s11 + $0x28] sm:$0xff] %v10409
  %10435 = vst [vmem:[%s11 + $0x30] sm:$0xff] %v10410
  %10436 = vst [vmem:[%s11 + $0x38] sm:$0xff] %v10411
  %10437 = vst [vmem:[%s11 + $0x40] sm:$0xff] %v10412
  %10438 = vst [vmem:[%s11 + $0x48] sm:$0xff] %v10413
  %10439 = vst [vmem:[%s11 + $0x50] sm:$0xff] %v10414
  %10440 = vst [vmem:[%s11 + $0x58] sm:$0xff] %v10415
  %10441 = vst [vmem:[%s11 + $0x60] sm:$0xff] %v10416
  %10442 = vst [vmem:[%s11 + $0x68] sm:$0xff] %v10417
  %10443 = vst [vmem:[%s11 + $0x70] sm:$0xff] %v10418
  %10444 = vst [vmem:[%s11 + $0x78] sm:$0xff] %v10419
  %10445 = vst [vmem:[%s11 + $0x80] sm:$0xff] %v10420
  %10446 = vst [vmem:[%s11 + $0x88] sm:$0xff] %v10421
  %10447 = vst [vmem:[%s11 + $0x90] sm:$0xff] %v10422
  %10448 = vst [vmem:[%s11 + $0x98] sm:$0xff] %v10423
  %10449 = vst [vmem:[%s11 + $0xa0] sm:$0xff] %v10424
  %10450 = vst [vmem:[%s11 + $0xa8] sm:$0xff] %v10425
  %10451 = vst [vmem:[%s11 + $0xb0] sm:$0xff] %v10426
  %10452 = vst [vmem:[%s11 + $0xb8] sm:$0xff] %v10427
  %10453 = vst [vmem:[%s11 + $0xc0] sm:$0xff] %v10428
  // Predicated region
  $region46: #{discriminator_forward.1} parent=0 // pred_check
    _
  $region47: #{discriminator_forward.1} parent=0 // pred_check_branch
    %10455 = sbr.rel (0) target = $region49
  $region48: #{discriminator_forward.1} parent=0 // pred_region
    _
  $region49: #{discriminator_forward.1} parent=0 // pred_fallthru
    _
  // Predicated region
  $region50: #{discriminator_forward.1} parent=0 // pred_check
    _
  $region51: #{discriminator_forward.1} parent=0 // pred_check_branch
    %10457 = sbr.rel (0) target = $region53
  $region52: #{discriminator_forward.1} parent=0 // pred_region
    _
  $region53: #{discriminator_forward.1} parent=0 // pred_fallthru
    _

</llo_original>
